<compile_context>
chip_gen: v6e
topology: v6e:2x2x1
jax: 0.10.0
libtpu: 0.0.40
codegen_flags: <defaults>
</compile_context>

<pallas_src>
import numpy as np
import jax
import jax.numpy as jnp
from jax.experimental import pallas as pl
from jax.experimental.pallas import tpu as pltpu

# ---------------- tiny synthetic ConvNeXt configuration ----------------
IMG, IN_CH = 16, 3
PATCH = 4                          # stem: conv 4x4 stride 4
H0 = W0 = IMG // PATCH             # 4x4 feature map after stem
N0 = H0 * W0                       # 16 tokens / sample (stage 0)
C0 = 128                           # stage-0 width (lane-dense)
H1 = W1 = H0 // 2                  # 2x2 after the 2x2/s2 downsample
N1 = H1 * W1                       # 4 tokens / sample (stage 1)
C1 = 256                           # stage-1 width (== head feature size)
DEPTH0 = DEPTH1 = 2                # ConvNeXt blocks per stage
MLP_RATIO = 4
DW_K, DW_PAD = 7, 3                # depthwise 7x7, padding 3
NUM_CLASSES = 2
PATCH_DIM = IN_CH * PATCH * PATCH  # 48
K_PAD = 128                        # stem matmul K padded lane-dense
HEAD_PAD = 128                     # lane-dense head output width
EPS = 1e-6

# packed small-parameter bank: one row (width VECW) per vector, lane offset 0
VECW = MLP_RATIO * C1              # 1024 (widest vector: stage-1 fc1 bias)
R_STEM_B, R_STEM_G, R_STEM_BE = 0, 1, 2
R_S0 = 3                           # DEPTH0 blocks x 6 rows: 3..14
R_DS_G = R_S0 + 6 * DEPTH0         # 15
R_DS_BE = R_DS_G + 1               # 16
R_DS_CB = R_DS_G + 2               # 17
R_S1 = R_DS_G + 3                  # 18; DEPTH1 blocks x 6 rows: 18..29
R_HEAD_B = R_S1 + 6 * DEPTH1       # 30
VROWS = R_HEAD_B + 1               # 31
# per-block rows: +0 dw bias, +1 ln gamma, +2 ln beta, +3 fc1 bias,
#                 +4 fc2 bias, +5 layer-scale gamma


# ---------------- in-kernel helpers ----------------
def _ln(x, g, b):
    mu = jnp.mean(x, axis=-1, keepdims=True)
    xc = x - mu
    var = jnp.mean(xc * xc, axis=-1, keepdims=True)
    return xc * jax.lax.rsqrt(var + EPS) * g + b


def _gelu(x):
    # TODO(synk): timm nn.GELU is erf-based; tanh approximation differs by <1e-3.
    c = 0.7978845608028654  # sqrt(2/pi)
    return 0.5 * x * (1.0 + jnp.tanh(c * (x + 0.044715 * x * x * x)))


def _tree_sum(terms):
    """Pairwise-tree reduction (avoids a deep serial add chain)."""
    while len(terms) > 1:
        nxt = []
        for i in range(0, len(terms) - 1, 2):
            nxt.append(terms[i] + terms[i + 1])
        if len(terms) % 2:
            nxt.append(terms[-1])
        terms = nxt
    return terms[0]


def _convnext_block(x, dwm_ref, w1_ref, w2_ref, blk, vec_ref, r0, c):
    """One ConvNeXt block on per-sample token rows x: (N, c) f32.

    dwm_ref: (depth, N, N, c) precomputed depthwise-7x7 multipliers, indexed
    [blk, shift, dst_row, ch] with shift = (src - dst) mod N; tap weights and
    spatial-validity masks are folded in host-side, so the depthwise conv is
    N cyclic row shifts + dense FMAs (no (B*N)^2 operator, no row broadcasts).
    """
    n = x.shape[0]
    dwb = vec_ref[r0 + 0:r0 + 1, :c]
    lng = vec_ref[r0 + 1:r0 + 2, :c]
    lnb = vec_ref[r0 + 2:r0 + 3, :c]
    b1 = vec_ref[r0 + 3:r0 + 4, :MLP_RATIO * c]
    b2 = vec_ref[r0 + 4:r0 + 5, :c]
    gam = vec_ref[r0 + 5:r0 + 6, :c]

    # depthwise 7x7 conv: y[r, ch] = sum_t dwm[t, r, ch] * x[(r + t) mod n, ch]
    terms = []
    for t in range(n):
        xs = x if t == 0 else jnp.concatenate([x[t:, :], x[:t, :]], axis=0)
        terms.append(dwm_ref[blk, t] * xs)
    y = _tree_sum(terms) + dwb

    y = _ln(y, lng, lnb)
    h = jnp.dot(y.astype(jnp.bfloat16), w1_ref[blk],
                preferred_element_type=jnp.float32) + b1
    h = _gelu(h)
    h = jnp.dot(h.astype(jnp.bfloat16), w2_ref[blk],
                preferred_element_type=jnp.float32) + b2
    return x + gam * h


# ---------------- the fused per-sample forward kernel ----------------
def convnext_kernel(patch_ref, wstem_ref, vec_ref,
                    dwm0_ref, w10_ref, w20_ref,
                    wds_ref, dwm1_ref, w11_ref, w21_ref, wh_ref,
                    o_ref):
    # ---- stem: conv4x4/s4 as one bf16 matmul over extracted patches + LN ----
    x = jnp.dot(patch_ref[0].astype(jnp.bfloat16), wstem_ref[...],
                preferred_element_type=jnp.float32)              # (N0, C0)
    x = x + vec_ref[R_STEM_B:R_STEM_B + 1, :C0]
    x = _ln(x, vec_ref[R_STEM_G:R_STEM_G + 1, :C0],
            vec_ref[R_STEM_BE:R_STEM_BE + 1, :C0])

    # ---- stage 0 ----
    for blk in range(DEPTH0):
        x = _convnext_block(x, dwm0_ref, w10_ref, w20_ref, blk, vec_ref,
                            R_S0 + 6 * blk, C0)

    # ---- downsample: LayerNorm + conv 2x2/s2 as ONE K=4*C0 matmul ----
    xd = _ln(x, vec_ref[R_DS_G:R_DS_G + 1, :C0],
             vec_ref[R_DS_BE:R_DS_BE + 1, :C0])
    taps = []
    for di in (0, 1):
        for dj in (0, 1):
            rows = []
            for i1 in range(H1):
                for j1 in range(W1):
                    r = (2 * i1 + di) * W0 + (2 * j1 + dj)
                    rows.append(xd[r:r + 1, :])
            taps.append(jnp.concatenate(rows, axis=0))           # (N1, C0)
    xcat = jnp.concatenate(taps, axis=-1).astype(jnp.bfloat16)   # (N1, 4*C0)
    x = jnp.dot(xcat, wds_ref[...], preferred_element_type=jnp.float32)
    x = x + vec_ref[R_DS_CB:R_DS_CB + 1, :C1]

    # ---- stage 1 ----
    for blk in range(DEPTH1):
        x = _convnext_block(x, dwm1_ref, w11_ref, w21_ref, blk, vec_ref,
                            R_S1 + 6 * blk, C1)

    # ---- global average pool over spatial == features.mean(dim=[2,3]) ----
    pooled = jnp.mean(x, axis=0, keepdims=True)                  # (1, C1)

    # ---- replaced head: plain Linear, lane-padded to 128 (sliced outside) ----
    logits = (jnp.dot(pooled.astype(jnp.bfloat16), wh_ref[...],
                      preferred_element_type=jnp.float32)
              + vec_ref[R_HEAD_B:R_HEAD_B + 1, :HEAD_PAD])       # (1, HEAD_PAD)
    o_ref[0] = logits


# ---------------- host-side parameter construction / packing ----------------
def init_params(key):
    keys = iter(jax.random.split(key, 128))
    nrm = lambda shape, s=0.02: (s * jax.random.normal(next(keys), shape)
                                 ).astype(jnp.float32)
    ones = lambda shape: jnp.ones(shape, jnp.float32)
    zeros = lambda shape: jnp.zeros(shape, jnp.float32)

    def block(c):
        return {
            "dw_w": nrm((c, DW_K, DW_K)), "dw_b": zeros((c,)),
            "ln_g": ones((c,)), "ln_b": zeros((c,)),
            "fc1_w": nrm((c, MLP_RATIO * c)), "fc1_b": zeros((MLP_RATIO * c,)),
            "fc2_w": nrm((MLP_RATIO * c, c)), "fc2_b": zeros((c,)),
            "gamma": 1e-6 * ones((c,)),     # ConvNeXt layer-scale init
        }

    return {
        "stem_w": nrm((C0, IN_CH, PATCH, PATCH)), "stem_b": zeros((C0,)),
        "stem_g": ones((C0,)), "stem_be": zeros((C0,)),
        "stage0": [block(C0) for _ in range(DEPTH0)],
        "ds_g": ones((C0,)), "ds_b": zeros((C0,)),
        "ds_w": nrm((C1, C0, 2, 2)), "ds_cb": zeros((C1,)),
        "stage1": [block(C1) for _ in range(DEPTH1)],
        "head_w": nrm((C1, NUM_CLASSES)), "head_b": zeros((NUM_CLASSES,)),
    }


def _dw_shift_multipliers(dw_w, h, w_):
    """Depthwise-7x7-pad3 (cross-correlation, matches PyTorch conv2d) as
    per-sample multipliers m[(src-dst) mod N, dst, ch]; out-of-bounds taps are
    simply absent (zero multiplier), so a cyclic row shift in-kernel is exact."""
    wk = np.asarray(dw_w, np.float32)                  # (c, 7, 7)
    c = wk.shape[0]
    n = h * w_
    m = np.zeros((n, n, c), np.float32)
    for i in range(h):
        for j in range(w_):
            r = i * w_ + j
            for ky in range(DW_K):
                for kx in range(DW_K):
                    si, sj = i + ky - DW_PAD, j + kx - DW_PAD
                    if 0 <= si < h and 0 <= sj < w_:
                        t = ((si * w_ + sj) - r) % n
                        m[t, r, :] += wk[:, ky, kx]
    return m


def pack_params(params):
    vec = np.zeros((VROWS, VECW), np.float32)

    def put(row, v):
        v = np.asarray(v, np.float32).reshape(-1)
        vec[row, :v.shape[0]] = v

    put(R_STEM_B, params["stem_b"]); put(R_STEM_G, params["stem_g"])
    put(R_STEM_BE, params["stem_be"])
    for base, blocks in ((R_S0, params["stage0"]), (R_S1, params["stage1"])):
        for k, blk in enumerate(blocks):
            r = base + 6 * k
            put(r + 0, blk["dw_b"]); put(r + 1, blk["ln_g"]); put(r + 2, blk["ln_b"])
            put(r + 3, blk["fc1_b"]); put(r + 4, blk["fc2_b"]); put(r + 5, blk["gamma"])
    put(R_DS_G, params["ds_g"]); put(R_DS_BE, params["ds_b"])
    put(R_DS_CB, params["ds_cb"])
    put(R_HEAD_B, params["head_b"])

    # stem conv (3->C0, 4x4/s4) as a lane-padded (K_PAD, C0) matmul weight
    wstem = np.zeros((K_PAD, C0), np.float32)
    wstem[:PATCH_DIM, :] = np.asarray(params["stem_w"],
                                      np.float32).reshape(C0, PATCH_DIM).T

    dwm0 = np.stack([_dw_shift_multipliers(b["dw_w"], H0, W0)
                     for b in params["stage0"]])                 # (D0, N0, N0, C0)
    w10 = np.stack([np.asarray(b["fc1_w"], np.float32) for b in params["stage0"]])
    w20 = np.stack([np.asarray(b["fc2_w"], np.float32) for b in params["stage0"]])
    dwm1 = np.stack([_dw_shift_multipliers(b["dw_w"], H1, W1)
                     for b in params["stage1"]])                 # (D1, N1, N1, C1)
    w11 = np.stack([np.asarray(b["fc1_w"], np.float32) for b in params["stage1"]])
    w21 = np.stack([np.asarray(b["fc2_w"], np.float32) for b in params["stage1"]])

    # downsample conv 2x2/s2: stack the 4 taps along K -> one (4*C0, C1) weight
    dsw = np.asarray(params["ds_w"], np.float32)                 # (C1, C0, 2, 2)
    wds = np.concatenate([dsw[:, :, di, dj].T
                          for di in (0, 1) for dj in (0, 1)], axis=0)

    # head weight lane-padded to 128 output columns
    wh = np.zeros((C1, HEAD_PAD), np.float32)
    wh[:, :NUM_CLASSES] = np.asarray(params["head_w"], np.float32)

    bf16 = lambda a: jnp.asarray(a, jnp.bfloat16)   # MXU operands in bf16
    f32 = lambda a: jnp.asarray(a, jnp.float32)     # VPU operands stay f32
    return {
        "wstem": bf16(wstem), "vec": f32(vec),
        "dwm0": f32(dwm0), "w10": bf16(w10), "w20": bf16(w20),
        "wds": bf16(wds),
        "dwm1": f32(dwm1), "w11": bf16(w11), "w21": bf16(w21),
        "wh": bf16(wh),
    }


# ---------------- forward ----------------
def extract_patches(x_nchw):
    """(B,3,16,16) -> (B, N0, K_PAD): 4x4 patches flattened (c,ph,pw), lane-padded."""
    b = x_nchw.shape[0]
    xp = x_nchw.reshape(b, IN_CH, H0, PATCH, W0, PATCH)
    xp = xp.transpose(0, 2, 4, 1, 3, 5).reshape(b, N0, PATCH_DIM)
    xp = xp.astype(jnp.float32)
    return jnp.pad(xp, ((0, 0), (0, 0), (0, K_PAD - PATCH_DIM)))


def convnext_forward(packed, x_nchw):
    b = x_nchw.shape[0]
    patches = extract_patches(x_nchw)                            # XLA-side glue

    in_specs = [
        pl.BlockSpec((1, N0, K_PAD), lambda i: (i, 0, 0)),               # patches
        pl.BlockSpec((K_PAD, C0), lambda i: (0, 0)),                     # wstem
        pl.BlockSpec((VROWS, VECW), lambda i: (0, 0)),                   # vec bank
        pl.BlockSpec((DEPTH0, N0, N0, C0), lambda i: (0, 0, 0, 0)),      # dwm0
        pl.BlockSpec((DEPTH0, C0, MLP_RATIO * C0), lambda i: (0, 0, 0)),  # w10
        pl.BlockSpec((DEPTH0, MLP_RATIO * C0, C0), lambda i: (0, 0, 0)),  # w20
        pl.BlockSpec((4 * C0, C1), lambda i: (0, 0)),                    # wds
        pl.BlockSpec((DEPTH1, N1, N1, C1), lambda i: (0, 0, 0, 0)),      # dwm1
        pl.BlockSpec((DEPTH1, C1, MLP_RATIO * C1), lambda i: (0, 0, 0)),  # w11
        pl.BlockSpec((DEPTH1, MLP_RATIO * C1, C1), lambda i: (0, 0, 0)),  # w21
        pl.BlockSpec((C1, HEAD_PAD), lambda i: (0, 0)),                  # wh
    ]
    out_specs = pl.BlockSpec((1, 1, HEAD_PAD), lambda i: (i, 0, 0))

    logits_pad = pl.pallas_call(
        convnext_kernel,
        out_shape=jax.ShapeDtypeStruct((b, 1, HEAD_PAD), jnp.float32),
        grid=(b,),
        in_specs=in_specs,
        out_specs=out_specs,
        compiler_params=pltpu.CompilerParams(
            dimension_semantics=("parallel",),          # both TCs on v7x
            vmem_limit_bytes=32 * 1024 * 1024),         # explicit, v7x-safe
    )(patches, packed["wstem"], packed["vec"],
      packed["dwm0"], packed["w10"], packed["w20"],
      packed["wds"],
      packed["dwm1"], packed["w11"], packed["w21"],
      packed["wh"])
    return logits_pad.reshape(b, HEAD_PAD)[:, :NUM_CLASSES]


if __name__ == "__main__":
    key = jax.random.PRNGKey(0)
    kx, kp = jax.random.split(key)
    x = jax.random.normal(kx, (2, IN_CH, IMG, IMG), dtype=jnp.float32)
    params = init_params(kp)
    packed = pack_params(params)

    logits = convnext_forward(packed, x)
    jax.block_until_ready(logits)
    assert logits.shape == (2, NUM_CLASSES)
    print("KERNEL_OK")
</pallas_src>

<mosaic_0001>
module attributes {stable_mosaic.version = 11 : i64} {
  func.func @convnext_kernel(%arg0: i32, %arg1: memref<1x16x128xf32, #tpu.memory_space<vmem>>, %arg2: memref<128x128xbf16, #tpu.memory_space<vmem>>, %arg3: memref<31x1024xf32, #tpu.memory_space<vmem>>, %arg4: memref<2x16x16x128xf32, #tpu.memory_space<vmem>>, %arg5: memref<2x128x512xbf16, #tpu.memory_space<vmem>>, %arg6: memref<2x512x128xbf16, #tpu.memory_space<vmem>>, %arg7: memref<512x256xbf16, #tpu.memory_space<vmem>>, %arg8: memref<2x4x4x256xf32, #tpu.memory_space<vmem>>, %arg9: memref<2x256x1024xbf16, #tpu.memory_space<vmem>>, %arg10: memref<2x1024x256xbf16, #tpu.memory_space<vmem>>, %arg11: memref<256x128xbf16, #tpu.memory_space<vmem>>, %arg12: memref<1x1x128xf32, #tpu.memory_space<vmem>>) attributes {dimension_semantics = [#tpu.dimension_semantics<parallel>], iteration_bounds = array<i64: 2>, scalar_prefetch = 0 : i64, scratch_operands = 0 : i64, tpu.core_type = #tpu.core_type<tc>, window_params = [{transform_indices = @transform_0, window_bounds = array<i64: 1, 16, 128>}, {pipeline_mode = #tpu.pipeline_mode<synchronous>, transform_indices = @transform_1, window_bounds = array<i64: 128, 128>}, {pipeline_mode = #tpu.pipeline_mode<synchronous>, transform_indices = @transform_2, window_bounds = array<i64: 31, 1024>}, {pipeline_mode = #tpu.pipeline_mode<synchronous>, transform_indices = @transform_3, window_bounds = array<i64: 2, 16, 16, 128>}, {pipeline_mode = #tpu.pipeline_mode<synchronous>, transform_indices = @transform_4, window_bounds = array<i64: 2, 128, 512>}, {pipeline_mode = #tpu.pipeline_mode<synchronous>, transform_indices = @transform_5, window_bounds = array<i64: 2, 512, 128>}, {pipeline_mode = #tpu.pipeline_mode<synchronous>, transform_indices = @transform_6, window_bounds = array<i64: 512, 256>}, {pipeline_mode = #tpu.pipeline_mode<synchronous>, transform_indices = @transform_7, window_bounds = array<i64: 2, 4, 4, 256>}, {pipeline_mode = #tpu.pipeline_mode<synchronous>, transform_indices = @transform_8, window_bounds = array<i64: 2, 256, 1024>}, {pipeline_mode = #tpu.pipeline_mode<synchronous>, transform_indices = @transform_9, window_bounds = array<i64: 2, 1024, 256>}, {pipeline_mode = #tpu.pipeline_mode<synchronous>, transform_indices = @transform_10, window_bounds = array<i64: 256, 128>}, {transform_indices = @transform_11, window_bounds = array<i64: 1, 1, 128>}]} {
    %c0 = arith.constant 0 : index
    %c0_0 = arith.constant 0 : index
    %c0_1 = arith.constant 0 : index
    %0 = vector.load %arg1[%c0, %c0_0, %c0_1] : memref<1x16x128xf32, #tpu.memory_space<vmem>>, vector<1x16x128xf32>
    %1 = vector.shape_cast %0 : vector<1x16x128xf32> to vector<16x128xf32>
    %2 = arith.truncf %1 : vector<16x128xf32> to vector<16x128xbf16>
    %c0_2 = arith.constant 0 : index
    %c0_3 = arith.constant 0 : index
    %3 = vector.load %arg2[%c0_2, %c0_3] : memref<128x128xbf16, #tpu.memory_space<vmem>>, vector<128x128xbf16>
    %cst = arith.constant dense<0.000000e+00> : vector<16x128xf32>
    %4 = tpu.matmul %2, %3, %cst {dimension_numbers = #tpu.dot_dimension_numbers<[1], [0], [0], [1], [0, 0, 1, 1], [], []>} : vector<16x128xbf16>, vector<128x128xbf16>, vector<16x128xf32> -> vector<16x128xf32>
    %c0_4 = arith.constant 0 : index
    %c0_5 = arith.constant 0 : index
    %5 = vector.load %arg3[%c0_4, %c0_5] : memref<31x1024xf32, #tpu.memory_space<vmem>>, vector<1x128xf32>
    %6 = vector.broadcast %5 : vector<1x128xf32> to vector<16x128xf32>
    %7 = arith.addf %4, %6 : vector<16x128xf32>
    %c1 = arith.constant 1 : index
    %c0_6 = arith.constant 0 : index
    %8 = vector.load %arg3[%c1, %c0_6] : memref<31x1024xf32, #tpu.memory_space<vmem>>, vector<1x128xf32>
    %c2 = arith.constant 2 : index
    %c0_7 = arith.constant 0 : index
    %9 = vector.load %arg3[%c2, %c0_7] : memref<31x1024xf32, #tpu.memory_space<vmem>>, vector<1x128xf32>
    %cst_8 = arith.constant dense<0.000000e+00> : vector<16xf32>
    %10 = vector.multi_reduction <add>, %7, %cst_8 [1] : vector<16x128xf32> to vector<16xf32>
    %11 = vector.shape_cast %10 : vector<16xf32> to vector<16x1xf32>
    %cst_9 = arith.constant 1.280000e+02 : f32
    %12 = vector.broadcast %cst_9 : f32 to vector<16x1xf32>
    %13 = arith.divf %11, %12 : vector<16x1xf32>
    %14 = vector.broadcast %13 : vector<16x1xf32> to vector<16x128xf32>
    %15 = arith.subf %7, %14 : vector<16x128xf32>
    %16 = arith.mulf %15, %15 : vector<16x128xf32>
    %cst_10 = arith.constant dense<0.000000e+00> : vector<16xf32>
    %17 = vector.multi_reduction <add>, %16, %cst_10 [1] : vector<16x128xf32> to vector<16xf32>
    %18 = vector.shape_cast %17 : vector<16xf32> to vector<16x1xf32>
    %cst_11 = arith.constant 1.280000e+02 : f32
    %19 = vector.broadcast %cst_11 : f32 to vector<16x1xf32>
    %20 = arith.divf %18, %19 : vector<16x1xf32>
    %cst_12 = arith.constant 9.99999997E-7 : f32
    %21 = vector.broadcast %cst_12 : f32 to vector<16x1xf32>
    %22 = arith.addf %20, %21 : vector<16x1xf32>
    %23 = math.rsqrt %22 : vector<16x1xf32>
    %24 = vector.broadcast %23 : vector<16x1xf32> to vector<16x128xf32>
    %25 = arith.mulf %15, %24 : vector<16x128xf32>
    %26 = vector.broadcast %8 : vector<1x128xf32> to vector<16x128xf32>
    %27 = arith.mulf %25, %26 : vector<16x128xf32>
    %28 = vector.broadcast %9 : vector<1x128xf32> to vector<16x128xf32>
    %29 = arith.addf %27, %28 : vector<16x128xf32>
    %c3 = arith.constant 3 : index
    %c0_13 = arith.constant 0 : index
    %30 = vector.load %arg3[%c3, %c0_13] : memref<31x1024xf32, #tpu.memory_space<vmem>>, vector<1x128xf32>
    %c4 = arith.constant 4 : index
    %c0_14 = arith.constant 0 : index
    %31 = vector.load %arg3[%c4, %c0_14] : memref<31x1024xf32, #tpu.memory_space<vmem>>, vector<1x128xf32>
    %c5 = arith.constant 5 : index
    %c0_15 = arith.constant 0 : index
    %32 = vector.load %arg3[%c5, %c0_15] : memref<31x1024xf32, #tpu.memory_space<vmem>>, vector<1x128xf32>
    %c6 = arith.constant 6 : index
    %c0_16 = arith.constant 0 : index
    %33 = vector.load %arg3[%c6, %c0_16] : memref<31x1024xf32, #tpu.memory_space<vmem>>, vector<1x512xf32>
    %c7 = arith.constant 7 : index
    %c0_17 = arith.constant 0 : index
    %34 = vector.load %arg3[%c7, %c0_17] : memref<31x1024xf32, #tpu.memory_space<vmem>>, vector<1x128xf32>
    %c8 = arith.constant 8 : index
    %c0_18 = arith.constant 0 : index
    %35 = vector.load %arg3[%c8, %c0_18] : memref<31x1024xf32, #tpu.memory_space<vmem>>, vector<1x128xf32>
    %c0_19 = arith.constant 0 : index
    %c0_20 = arith.constant 0 : index
    %c0_21 = arith.constant 0 : index
    %c0_22 = arith.constant 0 : index
    %36 = vector.load %arg4[%c0_19, %c0_20, %c0_21, %c0_22] : memref<2x16x16x128xf32, #tpu.memory_space<vmem>>, vector<1x1x16x128xf32>
    %37 = vector.shape_cast %36 : vector<1x1x16x128xf32> to vector<16x128xf32>
    %38 = arith.mulf %37, %29 : vector<16x128xf32>
    %39 = vector.extract_strided_slice %29 {offsets = [1, 0], sizes = [15, 128], strides = [1, 1]} : vector<16x128xf32> to vector<15x128xf32>
    %40 = vector.extract_strided_slice %29 {offsets = [0, 0], sizes = [1, 128], strides = [1, 1]} : vector<16x128xf32> to vector<1x128xf32>
    %41 = tpu.concatenate %39, %40 in 0 : vector<15x128xf32>, vector<1x128xf32> -> vector<16x128xf32>
    %c0_23 = arith.constant 0 : index
    %c1_24 = arith.constant 1 : index
    %c0_25 = arith.constant 0 : index
    %c0_26 = arith.constant 0 : index
    %42 = vector.load %arg4[%c0_23, %c1_24, %c0_25, %c0_26] : memref<2x16x16x128xf32, #tpu.memory_space<vmem>>, vector<1x1x16x128xf32>
    %43 = vector.shape_cast %42 : vector<1x1x16x128xf32> to vector<16x128xf32>
    %44 = arith.mulf %43, %41 : vector<16x128xf32>
    %45 = vector.extract_strided_slice %29 {offsets = [2, 0], sizes = [14, 128], strides = [1, 1]} : vector<16x128xf32> to vector<14x128xf32>
    %46 = vector.extract_strided_slice %29 {offsets = [0, 0], sizes = [2, 128], strides = [1, 1]} : vector<16x128xf32> to vector<2x128xf32>
    %47 = tpu.concatenate %45, %46 in 0 : vector<14x128xf32>, vector<2x128xf32> -> vector<16x128xf32>
    %c0_27 = arith.constant 0 : index
    %c2_28 = arith.constant 2 : index
    %c0_29 = arith.constant 0 : index
    %c0_30 = arith.constant 0 : index
    %48 = vector.load %arg4[%c0_27, %c2_28, %c0_29, %c0_30] : memref<2x16x16x128xf32, #tpu.memory_space<vmem>>, vector<1x1x16x128xf32>
    %49 = vector.shape_cast %48 : vector<1x1x16x128xf32> to vector<16x128xf32>
    %50 = arith.mulf %49, %47 : vector<16x128xf32>
    %51 = vector.extract_strided_slice %29 {offsets = [3, 0], sizes = [13, 128], strides = [1, 1]} : vector<16x128xf32> to vector<13x128xf32>
    %52 = vector.extract_strided_slice %29 {offsets = [0, 0], sizes = [3, 128], strides = [1, 1]} : vector<16x128xf32> to vector<3x128xf32>
    %53 = tpu.concatenate %51, %52 in 0 : vector<13x128xf32>, vector<3x128xf32> -> vector<16x128xf32>
    %c0_31 = arith.constant 0 : index
    %c3_32 = arith.constant 3 : index
    %c0_33 = arith.constant 0 : index
    %c0_34 = arith.constant 0 : index
    %54 = vector.load %arg4[%c0_31, %c3_32, %c0_33, %c0_34] : memref<2x16x16x128xf32, #tpu.memory_space<vmem>>, vector<1x1x16x128xf32>
    %55 = vector.shape_cast %54 : vector<1x1x16x128xf32> to vector<16x128xf32>
    %56 = arith.mulf %55, %53 : vector<16x128xf32>
    %57 = vector.extract_strided_slice %29 {offsets = [4, 0], sizes = [12, 128], strides = [1, 1]} : vector<16x128xf32> to vector<12x128xf32>
    %58 = vector.extract_strided_slice %29 {offsets = [0, 0], sizes = [4, 128], strides = [1, 1]} : vector<16x128xf32> to vector<4x128xf32>
    %59 = tpu.concatenate %57, %58 in 0 : vector<12x128xf32>, vector<4x128xf32> -> vector<16x128xf32>
    %c0_35 = arith.constant 0 : index
    %c4_36 = arith.constant 4 : index
    %c0_37 = arith.constant 0 : index
    %c0_38 = arith.constant 0 : index
    %60 = vector.load %arg4[%c0_35, %c4_36, %c0_37, %c0_38] : memref<2x16x16x128xf32, #tpu.memory_space<vmem>>, vector<1x1x16x128xf32>
    %61 = vector.shape_cast %60 : vector<1x1x16x128xf32> to vector<16x128xf32>
    %62 = arith.mulf %61, %59 : vector<16x128xf32>
    %63 = vector.extract_strided_slice %29 {offsets = [5, 0], sizes = [11, 128], strides = [1, 1]} : vector<16x128xf32> to vector<11x128xf32>
    %64 = vector.extract_strided_slice %29 {offsets = [0, 0], sizes = [5, 128], strides = [1, 1]} : vector<16x128xf32> to vector<5x128xf32>
    %65 = tpu.concatenate %63, %64 in 0 : vector<11x128xf32>, vector<5x128xf32> -> vector<16x128xf32>
    %c0_39 = arith.constant 0 : index
    %c5_40 = arith.constant 5 : index
    %c0_41 = arith.constant 0 : index
    %c0_42 = arith.constant 0 : index
    %66 = vector.load %arg4[%c0_39, %c5_40, %c0_41, %c0_42] : memref<2x16x16x128xf32, #tpu.memory_space<vmem>>, vector<1x1x16x128xf32>
    %67 = vector.shape_cast %66 : vector<1x1x16x128xf32> to vector<16x128xf32>
    %68 = arith.mulf %67, %65 : vector<16x128xf32>
    %69 = vector.extract_strided_slice %29 {offsets = [6, 0], sizes = [10, 128], strides = [1, 1]} : vector<16x128xf32> to vector<10x128xf32>
    %70 = vector.extract_strided_slice %29 {offsets = [0, 0], sizes = [6, 128], strides = [1, 1]} : vector<16x128xf32> to vector<6x128xf32>
    %71 = tpu.concatenate %69, %70 in 0 : vector<10x128xf32>, vector<6x128xf32> -> vector<16x128xf32>
    %c0_43 = arith.constant 0 : index
    %c6_44 = arith.constant 6 : index
    %c0_45 = arith.constant 0 : index
    %c0_46 = arith.constant 0 : index
    %72 = vector.load %arg4[%c0_43, %c6_44, %c0_45, %c0_46] : memref<2x16x16x128xf32, #tpu.memory_space<vmem>>, vector<1x1x16x128xf32>
    %73 = vector.shape_cast %72 : vector<1x1x16x128xf32> to vector<16x128xf32>
    %74 = arith.mulf %73, %71 : vector<16x128xf32>
    %75 = vector.extract_strided_slice %29 {offsets = [7, 0], sizes = [9, 128], strides = [1, 1]} : vector<16x128xf32> to vector<9x128xf32>
    %76 = vector.extract_strided_slice %29 {offsets = [0, 0], sizes = [7, 128], strides = [1, 1]} : vector<16x128xf32> to vector<7x128xf32>
    %77 = tpu.concatenate %75, %76 in 0 : vector<9x128xf32>, vector<7x128xf32> -> vector<16x128xf32>
    %c0_47 = arith.constant 0 : index
    %c7_48 = arith.constant 7 : index
    %c0_49 = arith.constant 0 : index
    %c0_50 = arith.constant 0 : index
    %78 = vector.load %arg4[%c0_47, %c7_48, %c0_49, %c0_50] : memref<2x16x16x128xf32, #tpu.memory_space<vmem>>, vector<1x1x16x128xf32>
    %79 = vector.shape_cast %78 : vector<1x1x16x128xf32> to vector<16x128xf32>
    %80 = arith.mulf %79, %77 : vector<16x128xf32>
    %81 = vector.extract_strided_slice %29 {offsets = [8, 0], sizes = [8, 128], strides = [1, 1]} : vector<16x128xf32> to vector<8x128xf32>
    %82 = vector.extract_strided_slice %29 {offsets = [0, 0], sizes = [8, 128], strides = [1, 1]} : vector<16x128xf32> to vector<8x128xf32>
    %83 = tpu.concatenate %81, %82 in 0 : vector<8x128xf32>, vector<8x128xf32> -> vector<16x128xf32>
    %c0_51 = arith.constant 0 : index
    %c8_52 = arith.constant 8 : index
    %c0_53 = arith.constant 0 : index
    %c0_54 = arith.constant 0 : index
    %84 = vector.load %arg4[%c0_51, %c8_52, %c0_53, %c0_54] : memref<2x16x16x128xf32, #tpu.memory_space<vmem>>, vector<1x1x16x128xf32>
    %85 = vector.shape_cast %84 : vector<1x1x16x128xf32> to vector<16x128xf32>
    %86 = arith.mulf %85, %83 : vector<16x128xf32>
    %87 = vector.extract_strided_slice %29 {offsets = [9, 0], sizes = [7, 128], strides = [1, 1]} : vector<16x128xf32> to vector<7x128xf32>
    %88 = vector.extract_strided_slice %29 {offsets = [0, 0], sizes = [9, 128], strides = [1, 1]} : vector<16x128xf32> to vector<9x128xf32>
    %89 = tpu.concatenate %87, %88 in 0 : vector<7x128xf32>, vector<9x128xf32> -> vector<16x128xf32>
    %c0_55 = arith.constant 0 : index
    %c9 = arith.constant 9 : index
    %c0_56 = arith.constant 0 : index
    %c0_57 = arith.constant 0 : index
    %90 = vector.load %arg4[%c0_55, %c9, %c0_56, %c0_57] : memref<2x16x16x128xf32, #tpu.memory_space<vmem>>, vector<1x1x16x128xf32>
    %91 = vector.shape_cast %90 : vector<1x1x16x128xf32> to vector<16x128xf32>
    %92 = arith.mulf %91, %89 : vector<16x128xf32>
    %93 = vector.extract_strided_slice %29 {offsets = [10, 0], sizes = [6, 128], strides = [1, 1]} : vector<16x128xf32> to vector<6x128xf32>
    %94 = vector.extract_strided_slice %29 {offsets = [0, 0], sizes = [10, 128], strides = [1, 1]} : vector<16x128xf32> to vector<10x128xf32>
    %95 = tpu.concatenate %93, %94 in 0 : vector<6x128xf32>, vector<10x128xf32> -> vector<16x128xf32>
    %c0_58 = arith.constant 0 : index
    %c10 = arith.constant 10 : index
    %c0_59 = arith.constant 0 : index
    %c0_60 = arith.constant 0 : index
    %96 = vector.load %arg4[%c0_58, %c10, %c0_59, %c0_60] : memref<2x16x16x128xf32, #tpu.memory_space<vmem>>, vector<1x1x16x128xf32>
    %97 = vector.shape_cast %96 : vector<1x1x16x128xf32> to vector<16x128xf32>
    %98 = arith.mulf %97, %95 : vector<16x128xf32>
    %99 = vector.extract_strided_slice %29 {offsets = [11, 0], sizes = [5, 128], strides = [1, 1]} : vector<16x128xf32> to vector<5x128xf32>
    %100 = vector.extract_strided_slice %29 {offsets = [0, 0], sizes = [11, 128], strides = [1, 1]} : vector<16x128xf32> to vector<11x128xf32>
    %101 = tpu.concatenate %99, %100 in 0 : vector<5x128xf32>, vector<11x128xf32> -> vector<16x128xf32>
    %c0_61 = arith.constant 0 : index
    %c11 = arith.constant 11 : index
    %c0_62 = arith.constant 0 : index
    %c0_63 = arith.constant 0 : index
    %102 = vector.load %arg4[%c0_61, %c11, %c0_62, %c0_63] : memref<2x16x16x128xf32, #tpu.memory_space<vmem>>, vector<1x1x16x128xf32>
    %103 = vector.shape_cast %102 : vector<1x1x16x128xf32> to vector<16x128xf32>
    %104 = arith.mulf %103, %101 : vector<16x128xf32>
    %105 = vector.extract_strided_slice %29 {offsets = [12, 0], sizes = [4, 128], strides = [1, 1]} : vector<16x128xf32> to vector<4x128xf32>
    %106 = vector.extract_strided_slice %29 {offsets = [0, 0], sizes = [12, 128], strides = [1, 1]} : vector<16x128xf32> to vector<12x128xf32>
    %107 = tpu.concatenate %105, %106 in 0 : vector<4x128xf32>, vector<12x128xf32> -> vector<16x128xf32>
    %c0_64 = arith.constant 0 : index
    %c12 = arith.constant 12 : index
    %c0_65 = arith.constant 0 : index
    %c0_66 = arith.constant 0 : index
    %108 = vector.load %arg4[%c0_64, %c12, %c0_65, %c0_66] : memref<2x16x16x128xf32, #tpu.memory_space<vmem>>, vector<1x1x16x128xf32>
    %109 = vector.shape_cast %108 : vector<1x1x16x128xf32> to vector<16x128xf32>
    %110 = arith.mulf %109, %107 : vector<16x128xf32>
    %111 = vector.extract_strided_slice %29 {offsets = [13, 0], sizes = [3, 128], strides = [1, 1]} : vector<16x128xf32> to vector<3x128xf32>
    %112 = vector.extract_strided_slice %29 {offsets = [0, 0], sizes = [13, 128], strides = [1, 1]} : vector<16x128xf32> to vector<13x128xf32>
    %113 = tpu.concatenate %111, %112 in 0 : vector<3x128xf32>, vector<13x128xf32> -> vector<16x128xf32>
    %c0_67 = arith.constant 0 : index
    %c13 = arith.constant 13 : index
    %c0_68 = arith.constant 0 : index
    %c0_69 = arith.constant 0 : index
    %114 = vector.load %arg4[%c0_67, %c13, %c0_68, %c0_69] : memref<2x16x16x128xf32, #tpu.memory_space<vmem>>, vector<1x1x16x128xf32>
    %115 = vector.shape_cast %114 : vector<1x1x16x128xf32> to vector<16x128xf32>
    %116 = arith.mulf %115, %113 : vector<16x128xf32>
    %117 = vector.extract_strided_slice %29 {offsets = [14, 0], sizes = [2, 128], strides = [1, 1]} : vector<16x128xf32> to vector<2x128xf32>
    %118 = vector.extract_strided_slice %29 {offsets = [0, 0], sizes = [14, 128], strides = [1, 1]} : vector<16x128xf32> to vector<14x128xf32>
    %119 = tpu.concatenate %117, %118 in 0 : vector<2x128xf32>, vector<14x128xf32> -> vector<16x128xf32>
    %c0_70 = arith.constant 0 : index
    %c14 = arith.constant 14 : index
    %c0_71 = arith.constant 0 : index
    %c0_72 = arith.constant 0 : index
    %120 = vector.load %arg4[%c0_70, %c14, %c0_71, %c0_72] : memref<2x16x16x128xf32, #tpu.memory_space<vmem>>, vector<1x1x16x128xf32>
    %121 = vector.shape_cast %120 : vector<1x1x16x128xf32> to vector<16x128xf32>
    %122 = arith.mulf %121, %119 : vector<16x128xf32>
    %123 = vector.extract_strided_slice %29 {offsets = [15, 0], sizes = [1, 128], strides = [1, 1]} : vector<16x128xf32> to vector<1x128xf32>
    %124 = vector.extract_strided_slice %29 {offsets = [0, 0], sizes = [15, 128], strides = [1, 1]} : vector<16x128xf32> to vector<15x128xf32>
    %125 = tpu.concatenate %123, %124 in 0 : vector<1x128xf32>, vector<15x128xf32> -> vector<16x128xf32>
    %c0_73 = arith.constant 0 : index
    %c15 = arith.constant 15 : index
    %c0_74 = arith.constant 0 : index
    %c0_75 = arith.constant 0 : index
    %126 = vector.load %arg4[%c0_73, %c15, %c0_74, %c0_75] : memref<2x16x16x128xf32, #tpu.memory_space<vmem>>, vector<1x1x16x128xf32>
    %127 = vector.shape_cast %126 : vector<1x1x16x128xf32> to vector<16x128xf32>
    %128 = arith.mulf %127, %125 : vector<16x128xf32>
    %129 = arith.addf %38, %44 : vector<16x128xf32>
    %130 = arith.addf %50, %56 : vector<16x128xf32>
    %131 = arith.addf %62, %68 : vector<16x128xf32>
    %132 = arith.addf %74, %80 : vector<16x128xf32>
    %133 = arith.addf %86, %92 : vector<16x128xf32>
    %134 = arith.addf %98, %104 : vector<16x128xf32>
    %135 = arith.addf %110, %116 : vector<16x128xf32>
    %136 = arith.addf %122, %128 : vector<16x128xf32>
    %137 = arith.addf %129, %130 : vector<16x128xf32>
    %138 = arith.addf %131, %132 : vector<16x128xf32>
    %139 = arith.addf %133, %134 : vector<16x128xf32>
    %140 = arith.addf %135, %136 : vector<16x128xf32>
    %141 = arith.addf %137, %138 : vector<16x128xf32>
    %142 = arith.addf %139, %140 : vector<16x128xf32>
    %143 = arith.addf %141, %142 : vector<16x128xf32>
    %144 = vector.broadcast %30 : vector<1x128xf32> to vector<16x128xf32>
    %145 = arith.addf %143, %144 : vector<16x128xf32>
    %cst_76 = arith.constant dense<0.000000e+00> : vector<16xf32>
    %146 = vector.multi_reduction <add>, %145, %cst_76 [1] : vector<16x128xf32> to vector<16xf32>
    %147 = vector.shape_cast %146 : vector<16xf32> to vector<16x1xf32>
    %cst_77 = arith.constant 1.280000e+02 : f32
    %148 = vector.broadcast %cst_77 : f32 to vector<16x1xf32>
    %149 = arith.divf %147, %148 : vector<16x1xf32>
    %150 = vector.broadcast %149 : vector<16x1xf32> to vector<16x128xf32>
    %151 = arith.subf %145, %150 : vector<16x128xf32>
    %152 = arith.mulf %151, %151 : vector<16x128xf32>
    %cst_78 = arith.constant dense<0.000000e+00> : vector<16xf32>
    %153 = vector.multi_reduction <add>, %152, %cst_78 [1] : vector<16x128xf32> to vector<16xf32>
    %154 = vector.shape_cast %153 : vector<16xf32> to vector<16x1xf32>
    %cst_79 = arith.constant 1.280000e+02 : f32
    %155 = vector.broadcast %cst_79 : f32 to vector<16x1xf32>
    %156 = arith.divf %154, %155 : vector<16x1xf32>
    %cst_80 = arith.constant 9.99999997E-7 : f32
    %157 = vector.broadcast %cst_80 : f32 to vector<16x1xf32>
    %158 = arith.addf %156, %157 : vector<16x1xf32>
    %159 = math.rsqrt %158 : vector<16x1xf32>
    %160 = vector.broadcast %159 : vector<16x1xf32> to vector<16x128xf32>
    %161 = arith.mulf %151, %160 : vector<16x128xf32>
    %162 = vector.broadcast %31 : vector<1x128xf32> to vector<16x128xf32>
    %163 = arith.mulf %161, %162 : vector<16x128xf32>
    %164 = vector.broadcast %32 : vector<1x128xf32> to vector<16x128xf32>
    %165 = arith.addf %163, %164 : vector<16x128xf32>
    %166 = arith.truncf %165 : vector<16x128xf32> to vector<16x128xbf16>
    %c0_81 = arith.constant 0 : index
    %c0_82 = arith.constant 0 : index
    %c0_83 = arith.constant 0 : index
    %167 = vector.load %arg5[%c0_81, %c0_82, %c0_83] : memref<2x128x512xbf16, #tpu.memory_space<vmem>>, vector<1x128x512xbf16>
    %168 = vector.shape_cast %167 : vector<1x128x512xbf16> to vector<128x512xbf16>
    %cst_84 = arith.constant dense<0.000000e+00> : vector<16x512xf32>
    %169 = tpu.matmul %166, %168, %cst_84 {dimension_numbers = #tpu.dot_dimension_numbers<[1], [0], [0], [1], [0, 0, 1, 1], [], []>} : vector<16x128xbf16>, vector<128x512xbf16>, vector<16x512xf32> -> vector<16x512xf32>
    %170 = vector.broadcast %33 : vector<1x512xf32> to vector<16x512xf32>
    %171 = arith.addf %169, %170 : vector<16x512xf32>
    %cst_85 = arith.constant 5.000000e-01 : f32
    %172 = vector.broadcast %cst_85 : f32 to vector<16x512xf32>
    %173 = arith.mulf %172, %171 : vector<16x512xf32>
    %cst_86 = arith.constant 4.471500e-02 : f32
    %174 = vector.broadcast %cst_86 : f32 to vector<16x512xf32>
    %175 = arith.mulf %174, %171 : vector<16x512xf32>
    %176 = arith.mulf %175, %171 : vector<16x512xf32>
    %177 = arith.mulf %176, %171 : vector<16x512xf32>
    %178 = arith.addf %171, %177 : vector<16x512xf32>
    %cst_87 = arith.constant 0.797884583 : f32
    %179 = vector.broadcast %cst_87 : f32 to vector<16x512xf32>
    %180 = arith.mulf %179, %178 : vector<16x512xf32>
    %181 = math.tanh %180 : vector<16x512xf32>
    %cst_88 = arith.constant 1.000000e+00 : f32
    %182 = vector.broadcast %cst_88 : f32 to vector<16x512xf32>
    %183 = arith.addf %182, %181 : vector<16x512xf32>
    %184 = arith.mulf %173, %183 : vector<16x512xf32>
    %185 = arith.truncf %184 : vector<16x512xf32> to vector<16x512xbf16>
    %c0_89 = arith.constant 0 : index
    %c0_90 = arith.constant 0 : index
    %c0_91 = arith.constant 0 : index
    %186 = vector.load %arg6[%c0_89, %c0_90, %c0_91] : memref<2x512x128xbf16, #tpu.memory_space<vmem>>, vector<1x512x128xbf16>
    %187 = vector.shape_cast %186 : vector<1x512x128xbf16> to vector<512x128xbf16>
    %cst_92 = arith.constant dense<0.000000e+00> : vector<16x128xf32>
    %188 = tpu.matmul %185, %187, %cst_92 {dimension_numbers = #tpu.dot_dimension_numbers<[1], [0], [0], [1], [0, 0, 1, 1], [], []>} : vector<16x512xbf16>, vector<512x128xbf16>, vector<16x128xf32> -> vector<16x128xf32>
    %189 = vector.broadcast %34 : vector<1x128xf32> to vector<16x128xf32>
    %190 = arith.addf %188, %189 : vector<16x128xf32>
    %191 = vector.broadcast %35 : vector<1x128xf32> to vector<16x128xf32>
    %192 = arith.mulf %191, %190 : vector<16x128xf32>
    %193 = arith.addf %29, %192 : vector<16x128xf32>
    %c9_93 = arith.constant 9 : index
    %c0_94 = arith.constant 0 : index
    %194 = vector.load %arg3[%c9_93, %c0_94] : memref<31x1024xf32, #tpu.memory_space<vmem>>, vector<1x128xf32>
    %c10_95 = arith.constant 10 : index
    %c0_96 = arith.constant 0 : index
    %195 = vector.load %arg3[%c10_95, %c0_96] : memref<31x1024xf32, #tpu.memory_space<vmem>>, vector<1x128xf32>
    %c11_97 = arith.constant 11 : index
    %c0_98 = arith.constant 0 : index
    %196 = vector.load %arg3[%c11_97, %c0_98] : memref<31x1024xf32, #tpu.memory_space<vmem>>, vector<1x128xf32>
    %c12_99 = arith.constant 12 : index
    %c0_100 = arith.constant 0 : index
    %197 = vector.load %arg3[%c12_99, %c0_100] : memref<31x1024xf32, #tpu.memory_space<vmem>>, vector<1x512xf32>
    %c13_101 = arith.constant 13 : index
    %c0_102 = arith.constant 0 : index
    %198 = vector.load %arg3[%c13_101, %c0_102] : memref<31x1024xf32, #tpu.memory_space<vmem>>, vector<1x128xf32>
    %c14_103 = arith.constant 14 : index
    %c0_104 = arith.constant 0 : index
    %199 = vector.load %arg3[%c14_103, %c0_104] : memref<31x1024xf32, #tpu.memory_space<vmem>>, vector<1x128xf32>
    %c1_105 = arith.constant 1 : index
    %c0_106 = arith.constant 0 : index
    %c0_107 = arith.constant 0 : index
    %c0_108 = arith.constant 0 : index
    %200 = vector.load %arg4[%c1_105, %c0_106, %c0_107, %c0_108] : memref<2x16x16x128xf32, #tpu.memory_space<vmem>>, vector<1x1x16x128xf32>
    %201 = vector.shape_cast %200 : vector<1x1x16x128xf32> to vector<16x128xf32>
    %202 = arith.mulf %201, %193 : vector<16x128xf32>
    %203 = vector.extract_strided_slice %193 {offsets = [1, 0], sizes = [15, 128], strides = [1, 1]} : vector<16x128xf32> to vector<15x128xf32>
    %204 = vector.extract_strided_slice %193 {offsets = [0, 0], sizes = [1, 128], strides = [1, 1]} : vector<16x128xf32> to vector<1x128xf32>
    %205 = tpu.concatenate %203, %204 in 0 : vector<15x128xf32>, vector<1x128xf32> -> vector<16x128xf32>
    %c1_109 = arith.constant 1 : index
    %c1_110 = arith.constant 1 : index
    %c0_111 = arith.constant 0 : index
    %c0_112 = arith.constant 0 : index
    %206 = vector.load %arg4[%c1_109, %c1_110, %c0_111, %c0_112] : memref<2x16x16x128xf32, #tpu.memory_space<vmem>>, vector<1x1x16x128xf32>
    %207 = vector.shape_cast %206 : vector<1x1x16x128xf32> to vector<16x128xf32>
    %208 = arith.mulf %207, %205 : vector<16x128xf32>
    %209 = vector.extract_strided_slice %193 {offsets = [2, 0], sizes = [14, 128], strides = [1, 1]} : vector<16x128xf32> to vector<14x128xf32>
    %210 = vector.extract_strided_slice %193 {offsets = [0, 0], sizes = [2, 128], strides = [1, 1]} : vector<16x128xf32> to vector<2x128xf32>
    %211 = tpu.concatenate %209, %210 in 0 : vector<14x128xf32>, vector<2x128xf32> -> vector<16x128xf32>
    %c1_113 = arith.constant 1 : index
    %c2_114 = arith.constant 2 : index
    %c0_115 = arith.constant 0 : index
    %c0_116 = arith.constant 0 : index
    %212 = vector.load %arg4[%c1_113, %c2_114, %c0_115, %c0_116] : memref<2x16x16x128xf32, #tpu.memory_space<vmem>>, vector<1x1x16x128xf32>
    %213 = vector.shape_cast %212 : vector<1x1x16x128xf32> to vector<16x128xf32>
    %214 = arith.mulf %213, %211 : vector<16x128xf32>
    %215 = vector.extract_strided_slice %193 {offsets = [3, 0], sizes = [13, 128], strides = [1, 1]} : vector<16x128xf32> to vector<13x128xf32>
    %216 = vector.extract_strided_slice %193 {offsets = [0, 0], sizes = [3, 128], strides = [1, 1]} : vector<16x128xf32> to vector<3x128xf32>
    %217 = tpu.concatenate %215, %216 in 0 : vector<13x128xf32>, vector<3x128xf32> -> vector<16x128xf32>
    %c1_117 = arith.constant 1 : index
    %c3_118 = arith.constant 3 : index
    %c0_119 = arith.constant 0 : index
    %c0_120 = arith.constant 0 : index
    %218 = vector.load %arg4[%c1_117, %c3_118, %c0_119, %c0_120] : memref<2x16x16x128xf32, #tpu.memory_space<vmem>>, vector<1x1x16x128xf32>
    %219 = vector.shape_cast %218 : vector<1x1x16x128xf32> to vector<16x128xf32>
    %220 = arith.mulf %219, %217 : vector<16x128xf32>
    %221 = vector.extract_strided_slice %193 {offsets = [4, 0], sizes = [12, 128], strides = [1, 1]} : vector<16x128xf32> to vector<12x128xf32>
    %222 = vector.extract_strided_slice %193 {offsets = [0, 0], sizes = [4, 128], strides = [1, 1]} : vector<16x128xf32> to vector<4x128xf32>
    %223 = tpu.concatenate %221, %222 in 0 : vector<12x128xf32>, vector<4x128xf32> -> vector<16x128xf32>
    %c1_121 = arith.constant 1 : index
    %c4_122 = arith.constant 4 : index
    %c0_123 = arith.constant 0 : index
    %c0_124 = arith.constant 0 : index
    %224 = vector.load %arg4[%c1_121, %c4_122, %c0_123, %c0_124] : memref<2x16x16x128xf32, #tpu.memory_space<vmem>>, vector<1x1x16x128xf32>
    %225 = vector.shape_cast %224 : vector<1x1x16x128xf32> to vector<16x128xf32>
    %226 = arith.mulf %225, %223 : vector<16x128xf32>
    %227 = vector.extract_strided_slice %193 {offsets = [5, 0], sizes = [11, 128], strides = [1, 1]} : vector<16x128xf32> to vector<11x128xf32>
    %228 = vector.extract_strided_slice %193 {offsets = [0, 0], sizes = [5, 128], strides = [1, 1]} : vector<16x128xf32> to vector<5x128xf32>
    %229 = tpu.concatenate %227, %228 in 0 : vector<11x128xf32>, vector<5x128xf32> -> vector<16x128xf32>
    %c1_125 = arith.constant 1 : index
    %c5_126 = arith.constant 5 : index
    %c0_127 = arith.constant 0 : index
    %c0_128 = arith.constant 0 : index
    %230 = vector.load %arg4[%c1_125, %c5_126, %c0_127, %c0_128] : memref<2x16x16x128xf32, #tpu.memory_space<vmem>>, vector<1x1x16x128xf32>
    %231 = vector.shape_cast %230 : vector<1x1x16x128xf32> to vector<16x128xf32>
    %232 = arith.mulf %231, %229 : vector<16x128xf32>
    %233 = vector.extract_strided_slice %193 {offsets = [6, 0], sizes = [10, 128], strides = [1, 1]} : vector<16x128xf32> to vector<10x128xf32>
    %234 = vector.extract_strided_slice %193 {offsets = [0, 0], sizes = [6, 128], strides = [1, 1]} : vector<16x128xf32> to vector<6x128xf32>
    %235 = tpu.concatenate %233, %234 in 0 : vector<10x128xf32>, vector<6x128xf32> -> vector<16x128xf32>
    %c1_129 = arith.constant 1 : index
    %c6_130 = arith.constant 6 : index
    %c0_131 = arith.constant 0 : index
    %c0_132 = arith.constant 0 : index
    %236 = vector.load %arg4[%c1_129, %c6_130, %c0_131, %c0_132] : memref<2x16x16x128xf32, #tpu.memory_space<vmem>>, vector<1x1x16x128xf32>
    %237 = vector.shape_cast %236 : vector<1x1x16x128xf32> to vector<16x128xf32>
    %238 = arith.mulf %237, %235 : vector<16x128xf32>
    %239 = vector.extract_strided_slice %193 {offsets = [7, 0], sizes = [9, 128], strides = [1, 1]} : vector<16x128xf32> to vector<9x128xf32>
    %240 = vector.extract_strided_slice %193 {offsets = [0, 0], sizes = [7, 128], strides = [1, 1]} : vector<16x128xf32> to vector<7x128xf32>
    %241 = tpu.concatenate %239, %240 in 0 : vector<9x128xf32>, vector<7x128xf32> -> vector<16x128xf32>
    %c1_133 = arith.constant 1 : index
    %c7_134 = arith.constant 7 : index
    %c0_135 = arith.constant 0 : index
    %c0_136 = arith.constant 0 : index
    %242 = vector.load %arg4[%c1_133, %c7_134, %c0_135, %c0_136] : memref<2x16x16x128xf32, #tpu.memory_space<vmem>>, vector<1x1x16x128xf32>
    %243 = vector.shape_cast %242 : vector<1x1x16x128xf32> to vector<16x128xf32>
    %244 = arith.mulf %243, %241 : vector<16x128xf32>
    %245 = vector.extract_strided_slice %193 {offsets = [8, 0], sizes = [8, 128], strides = [1, 1]} : vector<16x128xf32> to vector<8x128xf32>
    %246 = vector.extract_strided_slice %193 {offsets = [0, 0], sizes = [8, 128], strides = [1, 1]} : vector<16x128xf32> to vector<8x128xf32>
    %247 = tpu.concatenate %245, %246 in 0 : vector<8x128xf32>, vector<8x128xf32> -> vector<16x128xf32>
    %c1_137 = arith.constant 1 : index
    %c8_138 = arith.constant 8 : index
    %c0_139 = arith.constant 0 : index
    %c0_140 = arith.constant 0 : index
    %248 = vector.load %arg4[%c1_137, %c8_138, %c0_139, %c0_140] : memref<2x16x16x128xf32, #tpu.memory_space<vmem>>, vector<1x1x16x128xf32>
    %249 = vector.shape_cast %248 : vector<1x1x16x128xf32> to vector<16x128xf32>
    %250 = arith.mulf %249, %247 : vector<16x128xf32>
    %251 = vector.extract_strided_slice %193 {offsets = [9, 0], sizes = [7, 128], strides = [1, 1]} : vector<16x128xf32> to vector<7x128xf32>
    %252 = vector.extract_strided_slice %193 {offsets = [0, 0], sizes = [9, 128], strides = [1, 1]} : vector<16x128xf32> to vector<9x128xf32>
    %253 = tpu.concatenate %251, %252 in 0 : vector<7x128xf32>, vector<9x128xf32> -> vector<16x128xf32>
    %c1_141 = arith.constant 1 : index
    %c9_142 = arith.constant 9 : index
    %c0_143 = arith.constant 0 : index
    %c0_144 = arith.constant 0 : index
    %254 = vector.load %arg4[%c1_141, %c9_142, %c0_143, %c0_144] : memref<2x16x16x128xf32, #tpu.memory_space<vmem>>, vector<1x1x16x128xf32>
    %255 = vector.shape_cast %254 : vector<1x1x16x128xf32> to vector<16x128xf32>
    %256 = arith.mulf %255, %253 : vector<16x128xf32>
    %257 = vector.extract_strided_slice %193 {offsets = [10, 0], sizes = [6, 128], strides = [1, 1]} : vector<16x128xf32> to vector<6x128xf32>
    %258 = vector.extract_strided_slice %193 {offsets = [0, 0], sizes = [10, 128], strides = [1, 1]} : vector<16x128xf32> to vector<10x128xf32>
    %259 = tpu.concatenate %257, %258 in 0 : vector<6x128xf32>, vector<10x128xf32> -> vector<16x128xf32>
    %c1_145 = arith.constant 1 : index
    %c10_146 = arith.constant 10 : index
    %c0_147 = arith.constant 0 : index
    %c0_148 = arith.constant 0 : index
    %260 = vector.load %arg4[%c1_145, %c10_146, %c0_147, %c0_148] : memref<2x16x16x128xf32, #tpu.memory_space<vmem>>, vector<1x1x16x128xf32>
    %261 = vector.shape_cast %260 : vector<1x1x16x128xf32> to vector<16x128xf32>
    %262 = arith.mulf %261, %259 : vector<16x128xf32>
    %263 = vector.extract_strided_slice %193 {offsets = [11, 0], sizes = [5, 128], strides = [1, 1]} : vector<16x128xf32> to vector<5x128xf32>
    %264 = vector.extract_strided_slice %193 {offsets = [0, 0], sizes = [11, 128], strides = [1, 1]} : vector<16x128xf32> to vector<11x128xf32>
    %265 = tpu.concatenate %263, %264 in 0 : vector<5x128xf32>, vector<11x128xf32> -> vector<16x128xf32>
    %c1_149 = arith.constant 1 : index
    %c11_150 = arith.constant 11 : index
    %c0_151 = arith.constant 0 : index
    %c0_152 = arith.constant 0 : index
    %266 = vector.load %arg4[%c1_149, %c11_150, %c0_151, %c0_152] : memref<2x16x16x128xf32, #tpu.memory_space<vmem>>, vector<1x1x16x128xf32>
    %267 = vector.shape_cast %266 : vector<1x1x16x128xf32> to vector<16x128xf32>
    %268 = arith.mulf %267, %265 : vector<16x128xf32>
    %269 = vector.extract_strided_slice %193 {offsets = [12, 0], sizes = [4, 128], strides = [1, 1]} : vector<16x128xf32> to vector<4x128xf32>
    %270 = vector.extract_strided_slice %193 {offsets = [0, 0], sizes = [12, 128], strides = [1, 1]} : vector<16x128xf32> to vector<12x128xf32>
    %271 = tpu.concatenate %269, %270 in 0 : vector<4x128xf32>, vector<12x128xf32> -> vector<16x128xf32>
    %c1_153 = arith.constant 1 : index
    %c12_154 = arith.constant 12 : index
    %c0_155 = arith.constant 0 : index
    %c0_156 = arith.constant 0 : index
    %272 = vector.load %arg4[%c1_153, %c12_154, %c0_155, %c0_156] : memref<2x16x16x128xf32, #tpu.memory_space<vmem>>, vector<1x1x16x128xf32>
    %273 = vector.shape_cast %272 : vector<1x1x16x128xf32> to vector<16x128xf32>
    %274 = arith.mulf %273, %271 : vector<16x128xf32>
    %275 = vector.extract_strided_slice %193 {offsets = [13, 0], sizes = [3, 128], strides = [1, 1]} : vector<16x128xf32> to vector<3x128xf32>
    %276 = vector.extract_strided_slice %193 {offsets = [0, 0], sizes = [13, 128], strides = [1, 1]} : vector<16x128xf32> to vector<13x128xf32>
    %277 = tpu.concatenate %275, %276 in 0 : vector<3x128xf32>, vector<13x128xf32> -> vector<16x128xf32>
    %c1_157 = arith.constant 1 : index
    %c13_158 = arith.constant 13 : index
    %c0_159 = arith.constant 0 : index
    %c0_160 = arith.constant 0 : index
    %278 = vector.load %arg4[%c1_157, %c13_158, %c0_159, %c0_160] : memref<2x16x16x128xf32, #tpu.memory_space<vmem>>, vector<1x1x16x128xf32>
    %279 = vector.shape_cast %278 : vector<1x1x16x128xf32> to vector<16x128xf32>
    %280 = arith.mulf %279, %277 : vector<16x128xf32>
    %281 = vector.extract_strided_slice %193 {offsets = [14, 0], sizes = [2, 128], strides = [1, 1]} : vector<16x128xf32> to vector<2x128xf32>
    %282 = vector.extract_strided_slice %193 {offsets = [0, 0], sizes = [14, 128], strides = [1, 1]} : vector<16x128xf32> to vector<14x128xf32>
    %283 = tpu.concatenate %281, %282 in 0 : vector<2x128xf32>, vector<14x128xf32> -> vector<16x128xf32>
    %c1_161 = arith.constant 1 : index
    %c14_162 = arith.constant 14 : index
    %c0_163 = arith.constant 0 : index
    %c0_164 = arith.constant 0 : index
    %284 = vector.load %arg4[%c1_161, %c14_162, %c0_163, %c0_164] : memref<2x16x16x128xf32, #tpu.memory_space<vmem>>, vector<1x1x16x128xf32>
    %285 = vector.shape_cast %284 : vector<1x1x16x128xf32> to vector<16x128xf32>
    %286 = arith.mulf %285, %283 : vector<16x128xf32>
    %287 = vector.extract_strided_slice %193 {offsets = [15, 0], sizes = [1, 128], strides = [1, 1]} : vector<16x128xf32> to vector<1x128xf32>
    %288 = vector.extract_strided_slice %193 {offsets = [0, 0], sizes = [15, 128], strides = [1, 1]} : vector<16x128xf32> to vector<15x128xf32>
    %289 = tpu.concatenate %287, %288 in 0 : vector<1x128xf32>, vector<15x128xf32> -> vector<16x128xf32>
    %c1_165 = arith.constant 1 : index
    %c15_166 = arith.constant 15 : index
    %c0_167 = arith.constant 0 : index
    %c0_168 = arith.constant 0 : index
    %290 = vector.load %arg4[%c1_165, %c15_166, %c0_167, %c0_168] : memref<2x16x16x128xf32, #tpu.memory_space<vmem>>, vector<1x1x16x128xf32>
    %291 = vector.shape_cast %290 : vector<1x1x16x128xf32> to vector<16x128xf32>
    %292 = arith.mulf %291, %289 : vector<16x128xf32>
    %293 = arith.addf %202, %208 : vector<16x128xf32>
    %294 = arith.addf %214, %220 : vector<16x128xf32>
    %295 = arith.addf %226, %232 : vector<16x128xf32>
    %296 = arith.addf %238, %244 : vector<16x128xf32>
    %297 = arith.addf %250, %256 : vector<16x128xf32>
    %298 = arith.addf %262, %268 : vector<16x128xf32>
    %299 = arith.addf %274, %280 : vector<16x128xf32>
    %300 = arith.addf %286, %292 : vector<16x128xf32>
    %301 = arith.addf %293, %294 : vector<16x128xf32>
    %302 = arith.addf %295, %296 : vector<16x128xf32>
    %303 = arith.addf %297, %298 : vector<16x128xf32>
    %304 = arith.addf %299, %300 : vector<16x128xf32>
    %305 = arith.addf %301, %302 : vector<16x128xf32>
    %306 = arith.addf %303, %304 : vector<16x128xf32>
    %307 = arith.addf %305, %306 : vector<16x128xf32>
    %308 = vector.broadcast %194 : vector<1x128xf32> to vector<16x128xf32>
    %309 = arith.addf %307, %308 : vector<16x128xf32>
    %cst_169 = arith.constant dense<0.000000e+00> : vector<16xf32>
    %310 = vector.multi_reduction <add>, %309, %cst_169 [1] : vector<16x128xf32> to vector<16xf32>
    %311 = vector.shape_cast %310 : vector<16xf32> to vector<16x1xf32>
    %cst_170 = arith.constant 1.280000e+02 : f32
    %312 = vector.broadcast %cst_170 : f32 to vector<16x1xf32>
    %313 = arith.divf %311, %312 : vector<16x1xf32>
    %314 = vector.broadcast %313 : vector<16x1xf32> to vector<16x128xf32>
    %315 = arith.subf %309, %314 : vector<16x128xf32>
    %316 = arith.mulf %315, %315 : vector<16x128xf32>
    %cst_171 = arith.constant dense<0.000000e+00> : vector<16xf32>
    %317 = vector.multi_reduction <add>, %316, %cst_171 [1] : vector<16x128xf32> to vector<16xf32>
    %318 = vector.shape_cast %317 : vector<16xf32> to vector<16x1xf32>
    %cst_172 = arith.constant 1.280000e+02 : f32
    %319 = vector.broadcast %cst_172 : f32 to vector<16x1xf32>
    %320 = arith.divf %318, %319 : vector<16x1xf32>
    %cst_173 = arith.constant 9.99999997E-7 : f32
    %321 = vector.broadcast %cst_173 : f32 to vector<16x1xf32>
    %322 = arith.addf %320, %321 : vector<16x1xf32>
    %323 = math.rsqrt %322 : vector<16x1xf32>
    %324 = vector.broadcast %323 : vector<16x1xf32> to vector<16x128xf32>
    %325 = arith.mulf %315, %324 : vector<16x128xf32>
    %326 = vector.broadcast %195 : vector<1x128xf32> to vector<16x128xf32>
    %327 = arith.mulf %325, %326 : vector<16x128xf32>
    %328 = vector.broadcast %196 : vector<1x128xf32> to vector<16x128xf32>
    %329 = arith.addf %327, %328 : vector<16x128xf32>
    %330 = arith.truncf %329 : vector<16x128xf32> to vector<16x128xbf16>
    %c1_174 = arith.constant 1 : index
    %c0_175 = arith.constant 0 : index
    %c0_176 = arith.constant 0 : index
    %331 = vector.load %arg5[%c1_174, %c0_175, %c0_176] : memref<2x128x512xbf16, #tpu.memory_space<vmem>>, vector<1x128x512xbf16>
    %332 = vector.shape_cast %331 : vector<1x128x512xbf16> to vector<128x512xbf16>
    %cst_177 = arith.constant dense<0.000000e+00> : vector<16x512xf32>
    %333 = tpu.matmul %330, %332, %cst_177 {dimension_numbers = #tpu.dot_dimension_numbers<[1], [0], [0], [1], [0, 0, 1, 1], [], []>} : vector<16x128xbf16>, vector<128x512xbf16>, vector<16x512xf32> -> vector<16x512xf32>
    %334 = vector.broadcast %197 : vector<1x512xf32> to vector<16x512xf32>
    %335 = arith.addf %333, %334 : vector<16x512xf32>
    %cst_178 = arith.constant 5.000000e-01 : f32
    %336 = vector.broadcast %cst_178 : f32 to vector<16x512xf32>
    %337 = arith.mulf %336, %335 : vector<16x512xf32>
    %cst_179 = arith.constant 4.471500e-02 : f32
    %338 = vector.broadcast %cst_179 : f32 to vector<16x512xf32>
    %339 = arith.mulf %338, %335 : vector<16x512xf32>
    %340 = arith.mulf %339, %335 : vector<16x512xf32>
    %341 = arith.mulf %340, %335 : vector<16x512xf32>
    %342 = arith.addf %335, %341 : vector<16x512xf32>
    %cst_180 = arith.constant 0.797884583 : f32
    %343 = vector.broadcast %cst_180 : f32 to vector<16x512xf32>
    %344 = arith.mulf %343, %342 : vector<16x512xf32>
    %345 = math.tanh %344 : vector<16x512xf32>
    %cst_181 = arith.constant 1.000000e+00 : f32
    %346 = vector.broadcast %cst_181 : f32 to vector<16x512xf32>
    %347 = arith.addf %346, %345 : vector<16x512xf32>
    %348 = arith.mulf %337, %347 : vector<16x512xf32>
    %349 = arith.truncf %348 : vector<16x512xf32> to vector<16x512xbf16>
    %c1_182 = arith.constant 1 : index
    %c0_183 = arith.constant 0 : index
    %c0_184 = arith.constant 0 : index
    %350 = vector.load %arg6[%c1_182, %c0_183, %c0_184] : memref<2x512x128xbf16, #tpu.memory_space<vmem>>, vector<1x512x128xbf16>
    %351 = vector.shape_cast %350 : vector<1x512x128xbf16> to vector<512x128xbf16>
    %cst_185 = arith.constant dense<0.000000e+00> : vector<16x128xf32>
    %352 = tpu.matmul %349, %351, %cst_185 {dimension_numbers = #tpu.dot_dimension_numbers<[1], [0], [0], [1], [0, 0, 1, 1], [], []>} : vector<16x512xbf16>, vector<512x128xbf16>, vector<16x128xf32> -> vector<16x128xf32>
    %353 = vector.broadcast %198 : vector<1x128xf32> to vector<16x128xf32>
    %354 = arith.addf %352, %353 : vector<16x128xf32>
    %355 = vector.broadcast %199 : vector<1x128xf32> to vector<16x128xf32>
    %356 = arith.mulf %355, %354 : vector<16x128xf32>
    %357 = arith.addf %193, %356 : vector<16x128xf32>
    %c15_186 = arith.constant 15 : index
    %c0_187 = arith.constant 0 : index
    %358 = vector.load %arg3[%c15_186, %c0_187] : memref<31x1024xf32, #tpu.memory_space<vmem>>, vector<1x128xf32>
    %c16 = arith.constant 16 : index
    %c0_188 = arith.constant 0 : index
    %359 = vector.load %arg3[%c16, %c0_188] : memref<31x1024xf32, #tpu.memory_space<vmem>>, vector<1x128xf32>
    %cst_189 = arith.constant dense<0.000000e+00> : vector<16xf32>
    %360 = vector.multi_reduction <add>, %357, %cst_189 [1] : vector<16x128xf32> to vector<16xf32>
    %361 = vector.shape_cast %360 : vector<16xf32> to vector<16x1xf32>
    %cst_190 = arith.constant 1.280000e+02 : f32
    %362 = vector.broadcast %cst_190 : f32 to vector<16x1xf32>
    %363 = arith.divf %361, %362 : vector<16x1xf32>
    %364 = vector.broadcast %363 : vector<16x1xf32> to vector<16x128xf32>
    %365 = arith.subf %357, %364 : vector<16x128xf32>
    %366 = arith.mulf %365, %365 : vector<16x128xf32>
    %cst_191 = arith.constant dense<0.000000e+00> : vector<16xf32>
    %367 = vector.multi_reduction <add>, %366, %cst_191 [1] : vector<16x128xf32> to vector<16xf32>
    %368 = vector.shape_cast %367 : vector<16xf32> to vector<16x1xf32>
    %cst_192 = arith.constant 1.280000e+02 : f32
    %369 = vector.broadcast %cst_192 : f32 to vector<16x1xf32>
    %370 = arith.divf %368, %369 : vector<16x1xf32>
    %cst_193 = arith.constant 9.99999997E-7 : f32
    %371 = vector.broadcast %cst_193 : f32 to vector<16x1xf32>
    %372 = arith.addf %370, %371 : vector<16x1xf32>
    %373 = math.rsqrt %372 : vector<16x1xf32>
    %374 = vector.broadcast %373 : vector<16x1xf32> to vector<16x128xf32>
    %375 = arith.mulf %365, %374 : vector<16x128xf32>
    %376 = vector.broadcast %358 : vector<1x128xf32> to vector<16x128xf32>
    %377 = arith.mulf %375, %376 : vector<16x128xf32>
    %378 = vector.broadcast %359 : vector<1x128xf32> to vector<16x128xf32>
    %379 = arith.addf %377, %378 : vector<16x128xf32>
    %380 = vector.extract_strided_slice %379 {offsets = [0, 0], sizes = [1, 128], strides = [1, 1]} : vector<16x128xf32> to vector<1x128xf32>
    %381 = vector.extract_strided_slice %379 {offsets = [2, 0], sizes = [1, 128], strides = [1, 1]} : vector<16x128xf32> to vector<1x128xf32>
    %382 = vector.extract_strided_slice %379 {offsets = [8, 0], sizes = [1, 128], strides = [1, 1]} : vector<16x128xf32> to vector<1x128xf32>
    %383 = vector.extract_strided_slice %379 {offsets = [10, 0], sizes = [1, 128], strides = [1, 1]} : vector<16x128xf32> to vector<1x128xf32>
    %384 = tpu.concatenate %380, %381, %382, %383 in 0 : vector<1x128xf32>, vector<1x128xf32>, vector<1x128xf32>, vector<1x128xf32> -> vector<4x128xf32>
    %385 = vector.extract_strided_slice %379 {offsets = [1, 0], sizes = [1, 128], strides = [1, 1]} : vector<16x128xf32> to vector<1x128xf32>
    %386 = vector.extract_strided_slice %379 {offsets = [3, 0], sizes = [1, 128], strides = [1, 1]} : vector<16x128xf32> to vector<1x128xf32>
    %387 = vector.extract_strided_slice %379 {offsets = [9, 0], sizes = [1, 128], strides = [1, 1]} : vector<16x128xf32> to vector<1x128xf32>
    %388 = vector.extract_strided_slice %379 {offsets = [11, 0], sizes = [1, 128], strides = [1, 1]} : vector<16x128xf32> to vector<1x128xf32>
    %389 = tpu.concatenate %385, %386, %387, %388 in 0 : vector<1x128xf32>, vector<1x128xf32>, vector<1x128xf32>, vector<1x128xf32> -> vector<4x128xf32>
    %390 = vector.extract_strided_slice %379 {offsets = [4, 0], sizes = [1, 128], strides = [1, 1]} : vector<16x128xf32> to vector<1x128xf32>
    %391 = vector.extract_strided_slice %379 {offsets = [6, 0], sizes = [1, 128], strides = [1, 1]} : vector<16x128xf32> to vector<1x128xf32>
    %392 = vector.extract_strided_slice %379 {offsets = [12, 0], sizes = [1, 128], strides = [1, 1]} : vector<16x128xf32> to vector<1x128xf32>
    %393 = vector.extract_strided_slice %379 {offsets = [14, 0], sizes = [1, 128], strides = [1, 1]} : vector<16x128xf32> to vector<1x128xf32>
    %394 = tpu.concatenate %390, %391, %392, %393 in 0 : vector<1x128xf32>, vector<1x128xf32>, vector<1x128xf32>, vector<1x128xf32> -> vector<4x128xf32>
    %395 = vector.extract_strided_slice %379 {offsets = [5, 0], sizes = [1, 128], strides = [1, 1]} : vector<16x128xf32> to vector<1x128xf32>
    %396 = vector.extract_strided_slice %379 {offsets = [7, 0], sizes = [1, 128], strides = [1, 1]} : vector<16x128xf32> to vector<1x128xf32>
    %397 = vector.extract_strided_slice %379 {offsets = [13, 0], sizes = [1, 128], strides = [1, 1]} : vector<16x128xf32> to vector<1x128xf32>
    %398 = vector.extract_strided_slice %379 {offsets = [15, 0], sizes = [1, 128], strides = [1, 1]} : vector<16x128xf32> to vector<1x128xf32>
    %399 = tpu.concatenate %395, %396, %397, %398 in 0 : vector<1x128xf32>, vector<1x128xf32>, vector<1x128xf32>, vector<1x128xf32> -> vector<4x128xf32>
    %400 = tpu.concatenate %384, %389, %394, %399 in 1 : vector<4x128xf32>, vector<4x128xf32>, vector<4x128xf32>, vector<4x128xf32> -> vector<4x512xf32>
    %401 = arith.truncf %400 : vector<4x512xf32> to vector<4x512xbf16>
    %c0_194 = arith.constant 0 : index
    %c0_195 = arith.constant 0 : index
    %402 = vector.load %arg7[%c0_194, %c0_195] : memref<512x256xbf16, #tpu.memory_space<vmem>>, vector<512x256xbf16>
    %cst_196 = arith.constant dense<0.000000e+00> : vector<4x256xf32>
    %403 = tpu.matmul %401, %402, %cst_196 {dimension_numbers = #tpu.dot_dimension_numbers<[1], [0], [0], [1], [0, 0, 1, 1], [], []>} : vector<4x512xbf16>, vector<512x256xbf16>, vector<4x256xf32> -> vector<4x256xf32>
    %c17 = arith.constant 17 : index
    %c0_197 = arith.constant 0 : index
    %404 = vector.load %arg3[%c17, %c0_197] : memref<31x1024xf32, #tpu.memory_space<vmem>>, vector<1x256xf32>
    %405 = vector.broadcast %404 : vector<1x256xf32> to vector<4x256xf32>
    %406 = arith.addf %403, %405 : vector<4x256xf32>
    %c18 = arith.constant 18 : index
    %c0_198 = arith.constant 0 : index
    %407 = vector.load %arg3[%c18, %c0_198] : memref<31x1024xf32, #tpu.memory_space<vmem>>, vector<1x256xf32>
    %c19 = arith.constant 19 : index
    %c0_199 = arith.constant 0 : index
    %408 = vector.load %arg3[%c19, %c0_199] : memref<31x1024xf32, #tpu.memory_space<vmem>>, vector<1x256xf32>
    %c20 = arith.constant 20 : index
    %c0_200 = arith.constant 0 : index
    %409 = vector.load %arg3[%c20, %c0_200] : memref<31x1024xf32, #tpu.memory_space<vmem>>, vector<1x256xf32>
    %c21 = arith.constant 21 : index
    %c0_201 = arith.constant 0 : index
    %410 = vector.load %arg3[%c21, %c0_201] : memref<31x1024xf32, #tpu.memory_space<vmem>>, vector<1x1024xf32>
    %c22 = arith.constant 22 : index
    %c0_202 = arith.constant 0 : index
    %411 = vector.load %arg3[%c22, %c0_202] : memref<31x1024xf32, #tpu.memory_space<vmem>>, vector<1x256xf32>
    %c23 = arith.constant 23 : index
    %c0_203 = arith.constant 0 : index
    %412 = vector.load %arg3[%c23, %c0_203] : memref<31x1024xf32, #tpu.memory_space<vmem>>, vector<1x256xf32>
    %c0_204 = arith.constant 0 : index
    %c0_205 = arith.constant 0 : index
    %c0_206 = arith.constant 0 : index
    %c0_207 = arith.constant 0 : index
    %413 = vector.load %arg8[%c0_204, %c0_205, %c0_206, %c0_207] : memref<2x4x4x256xf32, #tpu.memory_space<vmem>>, vector<1x1x4x256xf32>
    %414 = vector.shape_cast %413 : vector<1x1x4x256xf32> to vector<4x256xf32>
    %415 = arith.mulf %414, %406 : vector<4x256xf32>
    %416 = vector.extract_strided_slice %406 {offsets = [1, 0], sizes = [3, 256], strides = [1, 1]} : vector<4x256xf32> to vector<3x256xf32>
    %417 = vector.extract_strided_slice %406 {offsets = [0, 0], sizes = [1, 256], strides = [1, 1]} : vector<4x256xf32> to vector<1x256xf32>
    %418 = tpu.concatenate %416, %417 in 0 : vector<3x256xf32>, vector<1x256xf32> -> vector<4x256xf32>
    %c0_208 = arith.constant 0 : index
    %c1_209 = arith.constant 1 : index
    %c0_210 = arith.constant 0 : index
    %c0_211 = arith.constant 0 : index
    %419 = vector.load %arg8[%c0_208, %c1_209, %c0_210, %c0_211] : memref<2x4x4x256xf32, #tpu.memory_space<vmem>>, vector<1x1x4x256xf32>
    %420 = vector.shape_cast %419 : vector<1x1x4x256xf32> to vector<4x256xf32>
    %421 = arith.mulf %420, %418 : vector<4x256xf32>
    %422 = vector.extract_strided_slice %406 {offsets = [2, 0], sizes = [2, 256], strides = [1, 1]} : vector<4x256xf32> to vector<2x256xf32>
    %423 = vector.extract_strided_slice %406 {offsets = [0, 0], sizes = [2, 256], strides = [1, 1]} : vector<4x256xf32> to vector<2x256xf32>
    %424 = tpu.concatenate %422, %423 in 0 : vector<2x256xf32>, vector<2x256xf32> -> vector<4x256xf32>
    %c0_212 = arith.constant 0 : index
    %c2_213 = arith.constant 2 : index
    %c0_214 = arith.constant 0 : index
    %c0_215 = arith.constant 0 : index
    %425 = vector.load %arg8[%c0_212, %c2_213, %c0_214, %c0_215] : memref<2x4x4x256xf32, #tpu.memory_space<vmem>>, vector<1x1x4x256xf32>
    %426 = vector.shape_cast %425 : vector<1x1x4x256xf32> to vector<4x256xf32>
    %427 = arith.mulf %426, %424 : vector<4x256xf32>
    %428 = vector.extract_strided_slice %406 {offsets = [3, 0], sizes = [1, 256], strides = [1, 1]} : vector<4x256xf32> to vector<1x256xf32>
    %429 = vector.extract_strided_slice %406 {offsets = [0, 0], sizes = [3, 256], strides = [1, 1]} : vector<4x256xf32> to vector<3x256xf32>
    %430 = tpu.concatenate %428, %429 in 0 : vector<1x256xf32>, vector<3x256xf32> -> vector<4x256xf32>
    %c0_216 = arith.constant 0 : index
    %c3_217 = arith.constant 3 : index
    %c0_218 = arith.constant 0 : index
    %c0_219 = arith.constant 0 : index
    %431 = vector.load %arg8[%c0_216, %c3_217, %c0_218, %c0_219] : memref<2x4x4x256xf32, #tpu.memory_space<vmem>>, vector<1x1x4x256xf32>
    %432 = vector.shape_cast %431 : vector<1x1x4x256xf32> to vector<4x256xf32>
    %433 = arith.mulf %432, %430 : vector<4x256xf32>
    %434 = arith.addf %415, %421 : vector<4x256xf32>
    %435 = arith.addf %427, %433 : vector<4x256xf32>
    %436 = arith.addf %434, %435 : vector<4x256xf32>
    %437 = vector.broadcast %407 : vector<1x256xf32> to vector<4x256xf32>
    %438 = arith.addf %436, %437 : vector<4x256xf32>
    %cst_220 = arith.constant dense<0.000000e+00> : vector<4xf32>
    %439 = vector.multi_reduction <add>, %438, %cst_220 [1] : vector<4x256xf32> to vector<4xf32>
    %440 = vector.shape_cast %439 : vector<4xf32> to vector<4x1xf32>
    %cst_221 = arith.constant 2.560000e+02 : f32
    %441 = vector.broadcast %cst_221 : f32 to vector<4x1xf32>
    %442 = arith.divf %440, %441 : vector<4x1xf32>
    %443 = vector.broadcast %442 : vector<4x1xf32> to vector<4x256xf32>
    %444 = arith.subf %438, %443 : vector<4x256xf32>
    %445 = arith.mulf %444, %444 : vector<4x256xf32>
    %cst_222 = arith.constant dense<0.000000e+00> : vector<4xf32>
    %446 = vector.multi_reduction <add>, %445, %cst_222 [1] : vector<4x256xf32> to vector<4xf32>
    %447 = vector.shape_cast %446 : vector<4xf32> to vector<4x1xf32>
    %cst_223 = arith.constant 2.560000e+02 : f32
    %448 = vector.broadcast %cst_223 : f32 to vector<4x1xf32>
    %449 = arith.divf %447, %448 : vector<4x1xf32>
    %cst_224 = arith.constant 9.99999997E-7 : f32
    %450 = vector.broadcast %cst_224 : f32 to vector<4x1xf32>
    %451 = arith.addf %449, %450 : vector<4x1xf32>
    %452 = math.rsqrt %451 : vector<4x1xf32>
    %453 = vector.broadcast %452 : vector<4x1xf32> to vector<4x256xf32>
    %454 = arith.mulf %444, %453 : vector<4x256xf32>
    %455 = vector.broadcast %408 : vector<1x256xf32> to vector<4x256xf32>
    %456 = arith.mulf %454, %455 : vector<4x256xf32>
    %457 = vector.broadcast %409 : vector<1x256xf32> to vector<4x256xf32>
    %458 = arith.addf %456, %457 : vector<4x256xf32>
    %459 = arith.truncf %458 : vector<4x256xf32> to vector<4x256xbf16>
    %c0_225 = arith.constant 0 : index
    %c0_226 = arith.constant 0 : index
    %c0_227 = arith.constant 0 : index
    %460 = vector.load %arg9[%c0_225, %c0_226, %c0_227] : memref<2x256x1024xbf16, #tpu.memory_space<vmem>>, vector<1x256x1024xbf16>
    %461 = vector.shape_cast %460 : vector<1x256x1024xbf16> to vector<256x1024xbf16>
    %cst_228 = arith.constant dense<0.000000e+00> : vector<4x1024xf32>
    %462 = tpu.matmul %459, %461, %cst_228 {dimension_numbers = #tpu.dot_dimension_numbers<[1], [0], [0], [1], [0, 0, 1, 1], [], []>} : vector<4x256xbf16>, vector<256x1024xbf16>, vector<4x1024xf32> -> vector<4x1024xf32>
    %463 = vector.broadcast %410 : vector<1x1024xf32> to vector<4x1024xf32>
    %464 = arith.addf %462, %463 : vector<4x1024xf32>
    %cst_229 = arith.constant 5.000000e-01 : f32
    %465 = vector.broadcast %cst_229 : f32 to vector<4x1024xf32>
    %466 = arith.mulf %465, %464 : vector<4x1024xf32>
    %cst_230 = arith.constant 4.471500e-02 : f32
    %467 = vector.broadcast %cst_230 : f32 to vector<4x1024xf32>
    %468 = arith.mulf %467, %464 : vector<4x1024xf32>
    %469 = arith.mulf %468, %464 : vector<4x1024xf32>
    %470 = arith.mulf %469, %464 : vector<4x1024xf32>
    %471 = arith.addf %464, %470 : vector<4x1024xf32>
    %cst_231 = arith.constant 0.797884583 : f32
    %472 = vector.broadcast %cst_231 : f32 to vector<4x1024xf32>
    %473 = arith.mulf %472, %471 : vector<4x1024xf32>
    %474 = math.tanh %473 : vector<4x1024xf32>
    %cst_232 = arith.constant 1.000000e+00 : f32
    %475 = vector.broadcast %cst_232 : f32 to vector<4x1024xf32>
    %476 = arith.addf %475, %474 : vector<4x1024xf32>
    %477 = arith.mulf %466, %476 : vector<4x1024xf32>
    %478 = arith.truncf %477 : vector<4x1024xf32> to vector<4x1024xbf16>
    %c0_233 = arith.constant 0 : index
    %c0_234 = arith.constant 0 : index
    %c0_235 = arith.constant 0 : index
    %479 = vector.load %arg10[%c0_233, %c0_234, %c0_235] : memref<2x1024x256xbf16, #tpu.memory_space<vmem>>, vector<1x1024x256xbf16>
    %480 = vector.shape_cast %479 : vector<1x1024x256xbf16> to vector<1024x256xbf16>
    %cst_236 = arith.constant dense<0.000000e+00> : vector<4x256xf32>
    %481 = tpu.matmul %478, %480, %cst_236 {dimension_numbers = #tpu.dot_dimension_numbers<[1], [0], [0], [1], [0, 0, 1, 1], [], []>} : vector<4x1024xbf16>, vector<1024x256xbf16>, vector<4x256xf32> -> vector<4x256xf32>
    %482 = vector.broadcast %411 : vector<1x256xf32> to vector<4x256xf32>
    %483 = arith.addf %481, %482 : vector<4x256xf32>
    %484 = vector.broadcast %412 : vector<1x256xf32> to vector<4x256xf32>
    %485 = arith.mulf %484, %483 : vector<4x256xf32>
    %486 = arith.addf %406, %485 : vector<4x256xf32>
    %c24 = arith.constant 24 : index
    %c0_237 = arith.constant 0 : index
    %487 = vector.load %arg3[%c24, %c0_237] : memref<31x1024xf32, #tpu.memory_space<vmem>>, vector<1x256xf32>
    %c25 = arith.constant 25 : index
    %c0_238 = arith.constant 0 : index
    %488 = vector.load %arg3[%c25, %c0_238] : memref<31x1024xf32, #tpu.memory_space<vmem>>, vector<1x256xf32>
    %c26 = arith.constant 26 : index
    %c0_239 = arith.constant 0 : index
    %489 = vector.load %arg3[%c26, %c0_239] : memref<31x1024xf32, #tpu.memory_space<vmem>>, vector<1x256xf32>
    %c27 = arith.constant 27 : index
    %c0_240 = arith.constant 0 : index
    %490 = vector.load %arg3[%c27, %c0_240] : memref<31x1024xf32, #tpu.memory_space<vmem>>, vector<1x1024xf32>
    %c28 = arith.constant 28 : index
    %c0_241 = arith.constant 0 : index
    %491 = vector.load %arg3[%c28, %c0_241] : memref<31x1024xf32, #tpu.memory_space<vmem>>, vector<1x256xf32>
    %c29 = arith.constant 29 : index
    %c0_242 = arith.constant 0 : index
    %492 = vector.load %arg3[%c29, %c0_242] : memref<31x1024xf32, #tpu.memory_space<vmem>>, vector<1x256xf32>
    %c1_243 = arith.constant 1 : index
    %c0_244 = arith.constant 0 : index
    %c0_245 = arith.constant 0 : index
    %c0_246 = arith.constant 0 : index
    %493 = vector.load %arg8[%c1_243, %c0_244, %c0_245, %c0_246] : memref<2x4x4x256xf32, #tpu.memory_space<vmem>>, vector<1x1x4x256xf32>
    %494 = vector.shape_cast %493 : vector<1x1x4x256xf32> to vector<4x256xf32>
    %495 = arith.mulf %494, %486 : vector<4x256xf32>
    %496 = vector.extract_strided_slice %486 {offsets = [1, 0], sizes = [3, 256], strides = [1, 1]} : vector<4x256xf32> to vector<3x256xf32>
    %497 = vector.extract_strided_slice %486 {offsets = [0, 0], sizes = [1, 256], strides = [1, 1]} : vector<4x256xf32> to vector<1x256xf32>
    %498 = tpu.concatenate %496, %497 in 0 : vector<3x256xf32>, vector<1x256xf32> -> vector<4x256xf32>
    %c1_247 = arith.constant 1 : index
    %c1_248 = arith.constant 1 : index
    %c0_249 = arith.constant 0 : index
    %c0_250 = arith.constant 0 : index
    %499 = vector.load %arg8[%c1_247, %c1_248, %c0_249, %c0_250] : memref<2x4x4x256xf32, #tpu.memory_space<vmem>>, vector<1x1x4x256xf32>
    %500 = vector.shape_cast %499 : vector<1x1x4x256xf32> to vector<4x256xf32>
    %501 = arith.mulf %500, %498 : vector<4x256xf32>
    %502 = vector.extract_strided_slice %486 {offsets = [2, 0], sizes = [2, 256], strides = [1, 1]} : vector<4x256xf32> to vector<2x256xf32>
    %503 = vector.extract_strided_slice %486 {offsets = [0, 0], sizes = [2, 256], strides = [1, 1]} : vector<4x256xf32> to vector<2x256xf32>
    %504 = tpu.concatenate %502, %503 in 0 : vector<2x256xf32>, vector<2x256xf32> -> vector<4x256xf32>
    %c1_251 = arith.constant 1 : index
    %c2_252 = arith.constant 2 : index
    %c0_253 = arith.constant 0 : index
    %c0_254 = arith.constant 0 : index
    %505 = vector.load %arg8[%c1_251, %c2_252, %c0_253, %c0_254] : memref<2x4x4x256xf32, #tpu.memory_space<vmem>>, vector<1x1x4x256xf32>
    %506 = vector.shape_cast %505 : vector<1x1x4x256xf32> to vector<4x256xf32>
    %507 = arith.mulf %506, %504 : vector<4x256xf32>
    %508 = vector.extract_strided_slice %486 {offsets = [3, 0], sizes = [1, 256], strides = [1, 1]} : vector<4x256xf32> to vector<1x256xf32>
    %509 = vector.extract_strided_slice %486 {offsets = [0, 0], sizes = [3, 256], strides = [1, 1]} : vector<4x256xf32> to vector<3x256xf32>
    %510 = tpu.concatenate %508, %509 in 0 : vector<1x256xf32>, vector<3x256xf32> -> vector<4x256xf32>
    %c1_255 = arith.constant 1 : index
    %c3_256 = arith.constant 3 : index
    %c0_257 = arith.constant 0 : index
    %c0_258 = arith.constant 0 : index
    %511 = vector.load %arg8[%c1_255, %c3_256, %c0_257, %c0_258] : memref<2x4x4x256xf32, #tpu.memory_space<vmem>>, vector<1x1x4x256xf32>
    %512 = vector.shape_cast %511 : vector<1x1x4x256xf32> to vector<4x256xf32>
    %513 = arith.mulf %512, %510 : vector<4x256xf32>
    %514 = arith.addf %495, %501 : vector<4x256xf32>
    %515 = arith.addf %507, %513 : vector<4x256xf32>
    %516 = arith.addf %514, %515 : vector<4x256xf32>
    %517 = vector.broadcast %487 : vector<1x256xf32> to vector<4x256xf32>
    %518 = arith.addf %516, %517 : vector<4x256xf32>
    %cst_259 = arith.constant dense<0.000000e+00> : vector<4xf32>
    %519 = vector.multi_reduction <add>, %518, %cst_259 [1] : vector<4x256xf32> to vector<4xf32>
    %520 = vector.shape_cast %519 : vector<4xf32> to vector<4x1xf32>
    %cst_260 = arith.constant 2.560000e+02 : f32
    %521 = vector.broadcast %cst_260 : f32 to vector<4x1xf32>
    %522 = arith.divf %520, %521 : vector<4x1xf32>
    %523 = vector.broadcast %522 : vector<4x1xf32> to vector<4x256xf32>
    %524 = arith.subf %518, %523 : vector<4x256xf32>
    %525 = arith.mulf %524, %524 : vector<4x256xf32>
    %cst_261 = arith.constant dense<0.000000e+00> : vector<4xf32>
    %526 = vector.multi_reduction <add>, %525, %cst_261 [1] : vector<4x256xf32> to vector<4xf32>
    %527 = vector.shape_cast %526 : vector<4xf32> to vector<4x1xf32>
    %cst_262 = arith.constant 2.560000e+02 : f32
    %528 = vector.broadcast %cst_262 : f32 to vector<4x1xf32>
    %529 = arith.divf %527, %528 : vector<4x1xf32>
    %cst_263 = arith.constant 9.99999997E-7 : f32
    %530 = vector.broadcast %cst_263 : f32 to vector<4x1xf32>
    %531 = arith.addf %529, %530 : vector<4x1xf32>
    %532 = math.rsqrt %531 : vector<4x1xf32>
    %533 = vector.broadcast %532 : vector<4x1xf32> to vector<4x256xf32>
    %534 = arith.mulf %524, %533 : vector<4x256xf32>
    %535 = vector.broadcast %488 : vector<1x256xf32> to vector<4x256xf32>
    %536 = arith.mulf %534, %535 : vector<4x256xf32>
    %537 = vector.broadcast %489 : vector<1x256xf32> to vector<4x256xf32>
    %538 = arith.addf %536, %537 : vector<4x256xf32>
    %539 = arith.truncf %538 : vector<4x256xf32> to vector<4x256xbf16>
    %c1_264 = arith.constant 1 : index
    %c0_265 = arith.constant 0 : index
    %c0_266 = arith.constant 0 : index
    %540 = vector.load %arg9[%c1_264, %c0_265, %c0_266] : memref<2x256x1024xbf16, #tpu.memory_space<vmem>>, vector<1x256x1024xbf16>
    %541 = vector.shape_cast %540 : vector<1x256x1024xbf16> to vector<256x1024xbf16>
    %cst_267 = arith.constant dense<0.000000e+00> : vector<4x1024xf32>
    %542 = tpu.matmul %539, %541, %cst_267 {dimension_numbers = #tpu.dot_dimension_numbers<[1], [0], [0], [1], [0, 0, 1, 1], [], []>} : vector<4x256xbf16>, vector<256x1024xbf16>, vector<4x1024xf32> -> vector<4x1024xf32>
    %543 = vector.broadcast %490 : vector<1x1024xf32> to vector<4x1024xf32>
    %544 = arith.addf %542, %543 : vector<4x1024xf32>
    %cst_268 = arith.constant 5.000000e-01 : f32
    %545 = vector.broadcast %cst_268 : f32 to vector<4x1024xf32>
    %546 = arith.mulf %545, %544 : vector<4x1024xf32>
    %cst_269 = arith.constant 4.471500e-02 : f32
    %547 = vector.broadcast %cst_269 : f32 to vector<4x1024xf32>
    %548 = arith.mulf %547, %544 : vector<4x1024xf32>
    %549 = arith.mulf %548, %544 : vector<4x1024xf32>
    %550 = arith.mulf %549, %544 : vector<4x1024xf32>
    %551 = arith.addf %544, %550 : vector<4x1024xf32>
    %cst_270 = arith.constant 0.797884583 : f32
    %552 = vector.broadcast %cst_270 : f32 to vector<4x1024xf32>
    %553 = arith.mulf %552, %551 : vector<4x1024xf32>
    %554 = math.tanh %553 : vector<4x1024xf32>
    %cst_271 = arith.constant 1.000000e+00 : f32
    %555 = vector.broadcast %cst_271 : f32 to vector<4x1024xf32>
    %556 = arith.addf %555, %554 : vector<4x1024xf32>
    %557 = arith.mulf %546, %556 : vector<4x1024xf32>
    %558 = arith.truncf %557 : vector<4x1024xf32> to vector<4x1024xbf16>
    %c1_272 = arith.constant 1 : index
    %c0_273 = arith.constant 0 : index
    %c0_274 = arith.constant 0 : index
    %559 = vector.load %arg10[%c1_272, %c0_273, %c0_274] : memref<2x1024x256xbf16, #tpu.memory_space<vmem>>, vector<1x1024x256xbf16>
    %560 = vector.shape_cast %559 : vector<1x1024x256xbf16> to vector<1024x256xbf16>
    %cst_275 = arith.constant dense<0.000000e+00> : vector<4x256xf32>
    %561 = tpu.matmul %558, %560, %cst_275 {dimension_numbers = #tpu.dot_dimension_numbers<[1], [0], [0], [1], [0, 0, 1, 1], [], []>} : vector<4x1024xbf16>, vector<1024x256xbf16>, vector<4x256xf32> -> vector<4x256xf32>
    %562 = vector.broadcast %491 : vector<1x256xf32> to vector<4x256xf32>
    %563 = arith.addf %561, %562 : vector<4x256xf32>
    %564 = vector.broadcast %492 : vector<1x256xf32> to vector<4x256xf32>
    %565 = arith.mulf %564, %563 : vector<4x256xf32>
    %566 = arith.addf %486, %565 : vector<4x256xf32>
    %cst_276 = arith.constant dense<0.000000e+00> : vector<256xf32>
    %567 = vector.multi_reduction <add>, %566, %cst_276 [0] : vector<4x256xf32> to vector<256xf32>
    %568 = vector.shape_cast %567 : vector<256xf32> to vector<1x256xf32>
    %cst_277 = arith.constant 4.000000e+00 : f32
    %569 = vector.broadcast %cst_277 : f32 to vector<1x256xf32>
    %570 = arith.divf %568, %569 : vector<1x256xf32>
    %571 = arith.truncf %570 : vector<1x256xf32> to vector<1x256xbf16>
    %c0_278 = arith.constant 0 : index
    %c0_279 = arith.constant 0 : index
    %572 = vector.load %arg11[%c0_278, %c0_279] : memref<256x128xbf16, #tpu.memory_space<vmem>>, vector<256x128xbf16>
    %cst_280 = arith.constant dense<0.000000e+00> : vector<1x128xf32>
    %573 = tpu.matmul %571, %572, %cst_280 {dimension_numbers = #tpu.dot_dimension_numbers<[1], [0], [0], [1], [0, 0, 1, 1], [], []>} : vector<1x256xbf16>, vector<256x128xbf16>, vector<1x128xf32> -> vector<1x128xf32>
    %c30 = arith.constant 30 : index
    %c0_281 = arith.constant 0 : index
    %574 = vector.load %arg3[%c30, %c0_281] : memref<31x1024xf32, #tpu.memory_space<vmem>>, vector<1x128xf32>
    %575 = arith.addf %573, %574 : vector<1x128xf32>
    %c0_282 = arith.constant 0 : index
    %c0_283 = arith.constant 0 : index
    %c0_284 = arith.constant 0 : index
    %576 = vector.load %arg12[%c0_282, %c0_283, %c0_284] : memref<1x1x128xf32, #tpu.memory_space<vmem>>, vector<1x1x128xf32>
    %577 = vector.shape_cast %576 : vector<1x1x128xf32> to vector<1x128xf32>
    %578 = vector.shape_cast %575 : vector<1x128xf32> to vector<1x1x128xf32>
    tpu.vector_store %arg12[%c0_282, %c0_283, %c0_284], %578 {strides = array<i32>} : memref<1x1x128xf32, #tpu.memory_space<vmem>>, vector<1x1x128xf32>,
    return
  }
  func.func @transform_0(%arg0: i32) -> (i32, i32, i32) {
    %c0_i32 = arith.constant 0 : i32
    %c0_i32_0 = arith.constant 0 : i32
    %c0_i32_1 = arith.constant 0 : i32
    return %arg0, %c0_i32, %c0_i32_0 : i32, i32, i32
  }
  func.func @transform_1(%arg0: i32) -> (i32, i32) {
    %c0_i32 = arith.constant 0 : i32
    %c0_i32_0 = arith.constant 0 : i32
    %c0_i32_1 = arith.constant 0 : i32
    return %c0_i32, %c0_i32_0 : i32, i32
  }
  func.func @transform_2(%arg0: i32) -> (i32, i32) {
    %c0_i32 = arith.constant 0 : i32
    %c0_i32_0 = arith.constant 0 : i32
    %c0_i32_1 = arith.constant 0 : i32
    return %c0_i32, %c0_i32_0 : i32, i32
  }
  func.func @transform_3(%arg0: i32) -> (i32, i32, i32, i32) {
    %c0_i32 = arith.constant 0 : i32
    %c0_i32_0 = arith.constant 0 : i32
    %c0_i32_1 = arith.constant 0 : i32
    %c0_i32_2 = arith.constant 0 : i32
    %c0_i32_3 = arith.constant 0 : i32
    return %c0_i32, %c0_i32_0, %c0_i32_1, %c0_i32_2 : i32, i32, i32, i32
  }
  func.func @transform_4(%arg0: i32) -> (i32, i32, i32) {
    %c0_i32 = arith.constant 0 : i32
    %c0_i32_0 = arith.constant 0 : i32
    %c0_i32_1 = arith.constant 0 : i32
    %c0_i32_2 = arith.constant 0 : i32
    return %c0_i32, %c0_i32_0, %c0_i32_1 : i32, i32, i32
  }
  func.func @transform_5(%arg0: i32) -> (i32, i32, i32) {
    %c0_i32 = arith.constant 0 : i32
    %c0_i32_0 = arith.constant 0 : i32
    %c0_i32_1 = arith.constant 0 : i32
    %c0_i32_2 = arith.constant 0 : i32
    return %c0_i32, %c0_i32_0, %c0_i32_1 : i32, i32, i32
  }
  func.func @transform_6(%arg0: i32) -> (i32, i32) {
    %c0_i32 = arith.constant 0 : i32
    %c0_i32_0 = arith.constant 0 : i32
    %c0_i32_1 = arith.constant 0 : i32
    return %c0_i32, %c0_i32_0 : i32, i32
  }
  func.func @transform_7(%arg0: i32) -> (i32, i32, i32, i32) {
    %c0_i32 = arith.constant 0 : i32
    %c0_i32_0 = arith.constant 0 : i32
    %c0_i32_1 = arith.constant 0 : i32
    %c0_i32_2 = arith.constant 0 : i32
    %c0_i32_3 = arith.constant 0 : i32
    return %c0_i32, %c0_i32_0, %c0_i32_1, %c0_i32_2 : i32, i32, i32, i32
  }
  func.func @transform_8(%arg0: i32) -> (i32, i32, i32) {
    %c0_i32 = arith.constant 0 : i32
    %c0_i32_0 = arith.constant 0 : i32
    %c0_i32_1 = arith.constant 0 : i32
    %c0_i32_2 = arith.constant 0 : i32
    return %c0_i32, %c0_i32_0, %c0_i32_1 : i32, i32, i32
  }
  func.func @transform_9(%arg0: i32) -> (i32, i32, i32) {
    %c0_i32 = arith.constant 0 : i32
    %c0_i32_0 = arith.constant 0 : i32
    %c0_i32_1 = arith.constant 0 : i32
    %c0_i32_2 = arith.constant 0 : i32
    return %c0_i32, %c0_i32_0, %c0_i32_1 : i32, i32, i32
  }
  func.func @transform_10(%arg0: i32) -> (i32, i32) {
    %c0_i32 = arith.constant 0 : i32
    %c0_i32_0 = arith.constant 0 : i32
    %c0_i32_1 = arith.constant 0 : i32
    return %c0_i32, %c0_i32_0 : i32, i32
  }
  func.func @transform_11(%arg0: i32) -> (i32, i32, i32) {
    %c0_i32 = arith.constant 0 : i32
    %c0_i32_0 = arith.constant 0 : i32
    %c0_i32_1 = arith.constant 0 : i32
    return %arg0, %c0_i32, %c0_i32_0 : i32, i32, i32
  }
}

</mosaic_0001>

<llo_original>
// kernel: tpu_custom_call.1
$region0: #{tpu_custom_call.1}
  #allocation0 [shape = 'u32[]', space=smem, size = 0x4, offset = 0x4, fixed_abs, tag = 'smem constant byte address 0x4 - core index']
  #allocation1 [shape = 'u32[144,128]{1,0:T(1,128)}', space=vmem, size = 0x12000, scoped, tag = 'internal scratch']
  %s0 = inlined_call_operand.hbm [shape: f32[2,16,128], index: 0, kind: input, shape index: {}]
  %s1 = inlined_call_operand.hbm [shape: bf16[128,128], index: 1, kind: input, shape index: {}]
  %s2 = inlined_call_operand.hbm [shape: f32[31,1024], index: 2, kind: input, shape index: {}]
  %s3 = inlined_call_operand.hbm [shape: f32[2,16,16,128], index: 3, kind: input, shape index: {}]
  %s4 = inlined_call_operand.hbm [shape: bf16[2,128,512], index: 4, kind: input, shape index: {}]
  %s5 = inlined_call_operand.hbm [shape: bf16[2,512,128], index: 5, kind: input, shape index: {}]
  %s6 = inlined_call_operand.hbm [shape: bf16[512,256], index: 6, kind: input, shape index: {}]
  %s7 = inlined_call_operand.hbm [shape: f32[2,4,4,256], index: 7, kind: input, shape index: {}]
  %s8 = inlined_call_operand.hbm [shape: bf16[2,256,1024], index: 8, kind: input, shape index: {}]
  %s9 = inlined_call_operand.hbm [shape: bf16[2,1024,256], index: 9, kind: input, shape index: {}]
  %s10 = inlined_call_operand.hbm [shape: bf16[256,128], index: 10, kind: input, shape index: {}]
  %s11 = inlined_call_operand.hbm [shape: f32[2,1,128], index: 11, kind: output, shape index: {}]
  %s12 = sld [smem:[#allocation0]]
  $region121: #{tpu_custom_call.1} parent=0
    _
  %s14 = ssub.s32 1, %s12
  %s15 = scalar_select 0, %s14, %s12
  $region1: #{tpu_custom_call.1} parent=0
    #allocation2 [shape = 'u8[16384]{0}', space=vmem, size = 0x4000, scoped, tag = 'input window, operand 0']
    #allocation3 [shape = 's32[2]{0}', space=sflag, size = 0x8, scoped, tag = 'scoped memory for tpu_custom_call.1']
    #allocation4 [shape = 's32[2]{0}', space=sflag, size = 0x8, scoped, tag = 'scoped memory for tpu_custom_call.1']
    #allocation5 [shape = 'u8[32768]{0}', space=vmem, size = 0x8000, scoped, tag = 'input window, operand 1, single buffered']
    #allocation6 [shape = 's32[1]{0}', space=sflag, size = 0x4, scoped, tag = 'scoped memory for tpu_custom_call.1']
    #allocation7 [shape = 'u8[131072]{0}', space=vmem, size = 0x20000, scoped, tag = 'input window, operand 2, single buffered']
    #allocation8 [shape = 'u8[262144]{0}', space=vmem, size = 0x40000, scoped, tag = 'input window, operand 3, single buffered']
    #allocation9 [shape = 's32[1]{0}', space=sflag, size = 0x4, scoped, tag = 'scoped memory for tpu_custom_call.1']
    #allocation10 [shape = 'u8[262144]{0}', space=vmem, size = 0x40000, scoped, tag = 'input window, operand 4, single buffered']
    #allocation11 [shape = 'u8[262144]{0}', space=vmem, size = 0x40000, scoped, tag = 'input window, operand 5, single buffered']
    #allocation12 [shape = 's32[1]{0}', space=sflag, size = 0x4, scoped, tag = 'scoped memory for tpu_custom_call.1']
    #allocation13 [shape = 'u8[262144]{0}', space=vmem, size = 0x40000, scoped, tag = 'input window, operand 6, single buffered']
    #allocation14 [shape = 'u8[32768]{0}', space=vmem, size = 0x8000, scoped, tag = 'input window, operand 7, single buffered']
    #allocation15 [shape = 's32[1]{0}', space=sflag, size = 0x4, scoped, tag = 'scoped memory for tpu_custom_call.1']
    #allocation16 [shape = 'u8[1048576]{0}', space=vmem, size = 0x100000, scoped, tag = 'input window, operand 8, single buffered']
    #allocation17 [shape = 'u8[1048576]{0}', space=vmem, size = 0x100000, scoped, tag = 'input window, operand 9, single buffered']
    #allocation18 [shape = 's32[1]{0}', space=sflag, size = 0x4, scoped, tag = 'scoped memory for tpu_custom_call.1']
    #allocation19 [shape = 'u8[65536]{0}', space=vmem, size = 0x10000, scoped, tag = 'input window, operand 10, single buffered']
    #allocation20 [shape = 'u8[1024]{0}', space=vmem, size = 0x400, scoped, tag = 'output window, operand 0']
    %16 = vsyncpa [#allocation3], 0
    %s17 = scalar_lea.sflag [#allocation3], 1
    %18 = vsyncpa %s17, 0
    %19 = vsyncpa [#allocation6], 0
    %20 = vsyncpa [#allocation9], 0
    %21 = vsyncpa [#allocation12], 0
    %22 = vsyncpa [#allocation15], 0
    %23 = vsyncpa [#allocation18], 0
    %24 = vsyncpa [#allocation4], 0
    %s25 = scalar_lea.sflag [#allocation4], 1
    %26 = vsyncpa %s25, 0
    loop: start=0, step=1, limit=4
    $region2: #{tpu_custom_call.1} parent=1 // loop_pre_header
      _
    $region3: #{tpu_custom_call.1} parent=1 // loop_header
      %s28 = sphi 0, %s32
      %p29 = scmp.ge.s32.totalorder %s28, 4
      %s38 = sphi 0, %s40
      %s41 = sphi 0, %s38
      %s42 = sphi 0, %s41
      %s58 = sphi 0, %s42
      %s62 = sphi 0, %s62
      %s64 = sphi 0, %s62
      %s65 = sphi 0, %s64
      %s79 = sphi 0, %s65
      %s83 = sphi 0, %s83
      %s85 = sphi 0, %s83
      %s86 = sphi 0, %s85
      %s100 = sphi 0, %s86
      %s104 = sphi 0, %s104
      %s106 = sphi 0, %s104
      %s107 = sphi 0, %s106
      %s121 = sphi 0, %s107
      %s125 = sphi 0, %s125
      %s127 = sphi 0, %s125
      %s128 = sphi 0, %s127
      %s142 = sphi 0, %s128
      %s146 = sphi 0, %s146
      %s148 = sphi 0, %s146
      %s149 = sphi 0, %s148
      %s163 = sphi 0, %s149
      %s167 = sphi 0, %s167
      %s169 = sphi 0, %s167
      %s170 = sphi 0, %s169
      %s184 = sphi 0, %s170
      %s188 = sphi 0, %s188
      %s190 = sphi 0, %s188
      %s191 = sphi 0, %s190
      %s205 = sphi 0, %s191
      %s209 = sphi 0, %s209
      %s211 = sphi 0, %s209
      %s212 = sphi 0, %s211
      %s226 = sphi 0, %s212
      %s230 = sphi 0, %s230
      %s232 = sphi 0, %s230
      %s233 = sphi 0, %s232
      %s247 = sphi 0, %s233
      %s251 = sphi 0, %s251
      %s253 = sphi 0, %s251
      %s254 = sphi 0, %s253
      %s268 = sphi 0, %s254
      %s274 = sphi 0, %s276
      %s277 = sphi 0, %s274
      %s278 = sphi 0, %s277
      %s294 = sphi 0, %s278
    $region4: #{tpu_custom_call.1} parent=1 // loop_header_branch
      %31 = sbr.rel (%p29) target = $region8
    $region5: #{tpu_custom_call.1} parent=1 // loop_body
      %s33 = ssub.s32 %s28, 1
      %s34 = ssub.s32 %s28, 2
      %s35 = sadd.s32 %s28, 1
      %s36 = ssub.s32 %s28, %s35
      %p37 = scmp.eq.s32.totalorder %s36, 0
      %s39 = sadd.s32 %s38, 1
      %s40 = scalar_select %p37, %s38, %s39
      %p43 = pneg %p37
      %p44 = scmp.eq.s32.totalorder %s28, 1
      %p45 = por %p43, %p44
      %p46 = scmp.ne.s32.totalorder %s38, %s41
      %p47 = scmp.eq.s32.totalorder %s28, 0
      %p48 = por %p46, %p47
      %p49 = scmp.ne.s32.totalorder %s38, %s41
      %p50 = scmp.eq.s32.totalorder %s33, 1
      %p51 = por %p49, %p50
      %p52 = scmp.ne.s32.totalorder %s41, %s42
      %p53 = scmp.eq.s32.totalorder %s33, 0
      %p54 = por %p52, %p53
      %p55 = scmp.ne.s32.totalorder %s41, %s42
      %p56 = scmp.eq.s32.totalorder %s34, 1
      %p57 = por %p55, %p56
      %p59 = scmp.ne.s32.totalorder %s42, %s58
      %p60 = scmp.eq.s32.totalorder %s34, 0
      %p61 = por %p59, %p60
      %s63 = sadd.s32 %s62, 1
      %p66 = scmp.eq.s32.totalorder %s28, 1
      %p67 = scmp.ne.s32.totalorder %s62, %s64
      %p68 = scmp.eq.s32.totalorder %s28, 0
      %p69 = por %p67, %p68
      %p70 = scmp.ne.s32.totalorder %s62, %s64
      %p71 = scmp.eq.s32.totalorder %s33, 1
      %p72 = por %p70, %p71
      %p73 = scmp.ne.s32.totalorder %s64, %s65
      %p74 = scmp.eq.s32.totalorder %s33, 0
      %p75 = por %p73, %p74
      %p76 = scmp.ne.s32.totalorder %s64, %s65
      %p77 = scmp.eq.s32.totalorder %s34, 1
      %p78 = por %p76, %p77
      %p80 = scmp.ne.s32.totalorder %s65, %s79
      %p81 = scmp.eq.s32.totalorder %s34, 0
      %p82 = por %p80, %p81
      %s84 = sadd.s32 %s83, 1
      %p87 = scmp.eq.s32.totalorder %s28, 1
      %p88 = scmp.ne.s32.totalorder %s83, %s85
      %p89 = scmp.eq.s32.totalorder %s28, 0
      %p90 = por %p88, %p89
      %p91 = scmp.ne.s32.totalorder %s83, %s85
      %p92 = scmp.eq.s32.totalorder %s33, 1
      %p93 = por %p91, %p92
      %p94 = scmp.ne.s32.totalorder %s85, %s86
      %p95 = scmp.eq.s32.totalorder %s33, 0
      %p96 = por %p94, %p95
      %p97 = scmp.ne.s32.totalorder %s85, %s86
      %p98 = scmp.eq.s32.totalorder %s34, 1
      %p99 = por %p97, %p98
      %p101 = scmp.ne.s32.totalorder %s86, %s100
      %p102 = scmp.eq.s32.totalorder %s34, 0
      %p103 = por %p101, %p102
      %s105 = sadd.s32 %s104, 1
      %p108 = scmp.eq.s32.totalorder %s28, 1
      %p109 = scmp.ne.s32.totalorder %s104, %s106
      %p110 = scmp.eq.s32.totalorder %s28, 0
      %p111 = por %p109, %p110
      %p112 = scmp.ne.s32.totalorder %s104, %s106
      %p113 = scmp.eq.s32.totalorder %s33, 1
      %p114 = por %p112, %p113
      %p115 = scmp.ne.s32.totalorder %s106, %s107
      %p116 = scmp.eq.s32.totalorder %s33, 0
      %p117 = por %p115, %p116
      %p118 = scmp.ne.s32.totalorder %s106, %s107
      %p119 = scmp.eq.s32.totalorder %s34, 1
      %p120 = por %p118, %p119
      %p122 = scmp.ne.s32.totalorder %s107, %s121
      %p123 = scmp.eq.s32.totalorder %s34, 0
      %p124 = por %p122, %p123
      %s126 = sadd.s32 %s125, 1
      %p129 = scmp.eq.s32.totalorder %s28, 1
      %p130 = scmp.ne.s32.totalorder %s125, %s127
      %p131 = scmp.eq.s32.totalorder %s28, 0
      %p132 = por %p130, %p131
      %p133 = scmp.ne.s32.totalorder %s125, %s127
      %p134 = scmp.eq.s32.totalorder %s33, 1
      %p135 = por %p133, %p134
      %p136 = scmp.ne.s32.totalorder %s127, %s128
      %p137 = scmp.eq.s32.totalorder %s33, 0
      %p138 = por %p136, %p137
      %p139 = scmp.ne.s32.totalorder %s127, %s128
      %p140 = scmp.eq.s32.totalorder %s34, 1
      %p141 = por %p139, %p140
      %p143 = scmp.ne.s32.totalorder %s128, %s142
      %p144 = scmp.eq.s32.totalorder %s34, 0
      %p145 = por %p143, %p144
      %s147 = sadd.s32 %s146, 1
      %p150 = scmp.eq.s32.totalorder %s28, 1
      %p151 = scmp.ne.s32.totalorder %s146, %s148
      %p152 = scmp.eq.s32.totalorder %s28, 0
      %p153 = por %p151, %p152
      %p154 = scmp.ne.s32.totalorder %s146, %s148
      %p155 = scmp.eq.s32.totalorder %s33, 1
      %p156 = por %p154, %p155
      %p157 = scmp.ne.s32.totalorder %s148, %s149
      %p158 = scmp.eq.s32.totalorder %s33, 0
      %p159 = por %p157, %p158
      %p160 = scmp.ne.s32.totalorder %s148, %s149
      %p161 = scmp.eq.s32.totalorder %s34, 1
      %p162 = por %p160, %p161
      %p164 = scmp.ne.s32.totalorder %s149, %s163
      %p165 = scmp.eq.s32.totalorder %s34, 0
      %p166 = por %p164, %p165
      %s168 = sadd.s32 %s167, 1
      %p171 = scmp.eq.s32.totalorder %s28, 1
      %p172 = scmp.ne.s32.totalorder %s167, %s169
      %p173 = scmp.eq.s32.totalorder %s28, 0
      %p174 = por %p172, %p173
      %p175 = scmp.ne.s32.totalorder %s167, %s169
      %p176 = scmp.eq.s32.totalorder %s33, 1
      %p177 = por %p175, %p176
      %p178 = scmp.ne.s32.totalorder %s169, %s170
      %p179 = scmp.eq.s32.totalorder %s33, 0
      %p180 = por %p178, %p179
      %p181 = scmp.ne.s32.totalorder %s169, %s170
      %p182 = scmp.eq.s32.totalorder %s34, 1
      %p183 = por %p181, %p182
      %p185 = scmp.ne.s32.totalorder %s170, %s184
      %p186 = scmp.eq.s32.totalorder %s34, 0
      %p187 = por %p185, %p186
      %s189 = sadd.s32 %s188, 1
      %p192 = scmp.eq.s32.totalorder %s28, 1
      %p193 = scmp.ne.s32.totalorder %s188, %s190
      %p194 = scmp.eq.s32.totalorder %s28, 0
      %p195 = por %p193, %p194
      %p196 = scmp.ne.s32.totalorder %s188, %s190
      %p197 = scmp.eq.s32.totalorder %s33, 1
      %p198 = por %p196, %p197
      %p199 = scmp.ne.s32.totalorder %s190, %s191
      %p200 = scmp.eq.s32.totalorder %s33, 0
      %p201 = por %p199, %p200
      %p202 = scmp.ne.s32.totalorder %s190, %s191
      %p203 = scmp.eq.s32.totalorder %s34, 1
      %p204 = por %p202, %p203
      %p206 = scmp.ne.s32.totalorder %s191, %s205
      %p207 = scmp.eq.s32.totalorder %s34, 0
      %p208 = por %p206, %p207
      %s210 = sadd.s32 %s209, 1
      %p213 = scmp.eq.s32.totalorder %s28, 1
      %p214 = scmp.ne.s32.totalorder %s209, %s211
      %p215 = scmp.eq.s32.totalorder %s28, 0
      %p216 = por %p214, %p215
      %p217 = scmp.ne.s32.totalorder %s209, %s211
      %p218 = scmp.eq.s32.totalorder %s33, 1
      %p219 = por %p217, %p218
      %p220 = scmp.ne.s32.totalorder %s211, %s212
      %p221 = scmp.eq.s32.totalorder %s33, 0
      %p222 = por %p220, %p221
      %p223 = scmp.ne.s32.totalorder %s211, %s212
      %p224 = scmp.eq.s32.totalorder %s34, 1
      %p225 = por %p223, %p224
      %p227 = scmp.ne.s32.totalorder %s212, %s226
      %p228 = scmp.eq.s32.totalorder %s34, 0
      %p229 = por %p227, %p228
      %s231 = sadd.s32 %s230, 1
      %p234 = scmp.eq.s32.totalorder %s28, 1
      %p235 = scmp.ne.s32.totalorder %s230, %s232
      %p236 = scmp.eq.s32.totalorder %s28, 0
      %p237 = por %p235, %p236
      %p238 = scmp.ne.s32.totalorder %s230, %s232
      %p239 = scmp.eq.s32.totalorder %s33, 1
      %p240 = por %p238, %p239
      %p241 = scmp.ne.s32.totalorder %s232, %s233
      %p242 = scmp.eq.s32.totalorder %s33, 0
      %p243 = por %p241, %p242
      %p244 = scmp.ne.s32.totalorder %s232, %s233
      %p245 = scmp.eq.s32.totalorder %s34, 1
      %p246 = por %p244, %p245
      %p248 = scmp.ne.s32.totalorder %s233, %s247
      %p249 = scmp.eq.s32.totalorder %s34, 0
      %p250 = por %p248, %p249
      %s252 = sadd.s32 %s251, 1
      %p255 = scmp.eq.s32.totalorder %s28, 1
      %p256 = scmp.ne.s32.totalorder %s251, %s253
      %p257 = scmp.eq.s32.totalorder %s28, 0
      %p258 = por %p256, %p257
      %p259 = scmp.ne.s32.totalorder %s251, %s253
      %p260 = scmp.eq.s32.totalorder %s33, 1
      %p261 = por %p259, %p260
      %p262 = scmp.ne.s32.totalorder %s253, %s254
      %p263 = scmp.eq.s32.totalorder %s33, 0
      %p264 = por %p262, %p263
      %p265 = scmp.ne.s32.totalorder %s253, %s254
      %p266 = scmp.eq.s32.totalorder %s34, 1
      %p267 = por %p265, %p266
      %p269 = scmp.ne.s32.totalorder %s254, %s268
      %p270 = scmp.eq.s32.totalorder %s34, 0
      %p271 = por %p269, %p270
      %s272 = ssub.s32 %s28, %s35
      %p273 = scmp.eq.s32.totalorder %s272, 0
      %s275 = sadd.s32 %s274, 1
      %s276 = scalar_select %p273, %s274, %s275
      %p279 = pneg %p273
      %p280 = scmp.eq.s32.totalorder %s28, 1
      %p281 = por %p279, %p280
      %p282 = scmp.ne.s32.totalorder %s274, %s277
      %p283 = scmp.eq.s32.totalorder %s28, 0
      %p284 = por %p282, %p283
      %p285 = scmp.ne.s32.totalorder %s274, %s277
      %p286 = scmp.eq.s32.totalorder %s33, 1
      %p287 = por %p285, %p286
      %p288 = scmp.ne.s32.totalorder %s277, %s278
      %p289 = scmp.eq.s32.totalorder %s33, 0
      %p290 = por %p288, %p289
      %p291 = scmp.ne.s32.totalorder %s277, %s278
      %p292 = scmp.eq.s32.totalorder %s34, 1
      %p293 = por %p291, %p292
      %p295 = scmp.ne.s32.totalorder %s278, %s294
      %p296 = scmp.eq.s32.totalorder %s34, 0
      %p297 = por %p295, %p296
      %p298 = scmp.le.s32.totalorder 1, %s28
      %p299 = scmp.lt.s32.totalorder %s28, 3
      %p300 = pnand %p298, %p299
      %p301 = pneg %p300
      // Predicated region
      $region9: #{tpu_custom_call.1} parent=5 // pred_check
        _
      $region10: #{tpu_custom_call.1} parent=5 // pred_check_branch
        %303 = sbr.rel (%p300) target = $region12
      $region11: #{tpu_custom_call.1} parent=5 // pred_region
        %s304 = ssub.s32 %s28, 1
        // Predicated region
        $region13: #{tpu_custom_call.1} parent=11 // pred_check
          %p305 = pneg %p75
        $region14: #{tpu_custom_call.1} parent=11 // pred_check_branch
          %307 = sbr.rel (%p305) target = $region16
        $region15: #{tpu_custom_call.1} parent=11 // pred_region
          %s309 = ssub.s32 1024, 1024
          %310 = vsyncadd [#allocation6], %s309
          %s311 = sshll.u32 [#allocation5], 4
          %s312 = int_to_ptr.vmem [resolvable:$true] %s311
          %317 = dma.hbm_to_vmem [thread:$0]  %s1, 1024, %s312, [#allocation6], 64, 64, 4
        $region16: #{tpu_custom_call.1} parent=11 // pred_fallthru
          _
        // Predicated region
        $region17: #{tpu_custom_call.1} parent=11 // pred_check
          %p318 = pneg %p96
        $region18: #{tpu_custom_call.1} parent=11 // pred_check_branch
          %320 = sbr.rel (%p318) target = $region20
        $region19: #{tpu_custom_call.1} parent=11 // pred_region
          %s322 = ssub.s32 4096, 4096
          %323 = vsyncadd [#allocation6], %s322
          %s324 = sshll.u32 [#allocation7], 4
          %s325 = int_to_ptr.vmem [resolvable:$true] %s324
          %330 = dma.hbm_to_vmem [thread:$0]  %s2, 4096, %s325, [#allocation6], 1024, 1024, 64
        $region20: #{tpu_custom_call.1} parent=11 // pred_fallthru
          _
        // Predicated region
        $region21: #{tpu_custom_call.1} parent=11 // pred_check
          %p331 = pneg %p117
        $region22: #{tpu_custom_call.1} parent=11 // pred_check_branch
          %333 = sbr.rel (%p331) target = $region24
        $region23: #{tpu_custom_call.1} parent=11 // pred_region
          %s335 = ssub.s32 8192, 8192
          %336 = vsyncadd [#allocation9], %s335
          %s337 = sshll.u32 [#allocation8], 4
          %s338 = int_to_ptr.vmem [resolvable:$true] %s337
          %343 = dma.hbm_to_vmem [thread:$0]  %s3, 8192, %s338, [#allocation9], 128, 128, 8
        $region24: #{tpu_custom_call.1} parent=11 // pred_fallthru
          _
        // Predicated region
        $region25: #{tpu_custom_call.1} parent=11 // pred_check
          %p344 = pneg %p138
        $region26: #{tpu_custom_call.1} parent=11 // pred_check_branch
          %346 = sbr.rel (%p344) target = $region28
        $region27: #{tpu_custom_call.1} parent=11 // pred_region
          %s348 = ssub.s32 8192, 8192
          %349 = vsyncadd [#allocation9], %s348
          %s350 = sshll.u32 [#allocation10], 4
          %s351 = int_to_ptr.vmem [resolvable:$true] %s350
          %356 = dma.hbm_to_vmem [thread:$0]  %s4, 8192, %s351, [#allocation9], 256, 256, 16
        $region28: #{tpu_custom_call.1} parent=11 // pred_fallthru
          _
        // Predicated region
        $region29: #{tpu_custom_call.1} parent=11 // pred_check
          %p357 = pneg %p159
        $region30: #{tpu_custom_call.1} parent=11 // pred_check_branch
          %359 = sbr.rel (%p357) target = $region32
        $region31: #{tpu_custom_call.1} parent=11 // pred_region
          %s361 = ssub.s32 8192, 8192
          %362 = vsyncadd [#allocation12], %s361
          %s363 = sshll.u32 [#allocation11], 4
          %s364 = int_to_ptr.vmem [resolvable:$true] %s363
          %369 = dma.hbm_to_vmem [thread:$0]  %s5, 8192, %s364, [#allocation12], 64, 64, 4
        $region32: #{tpu_custom_call.1} parent=11 // pred_fallthru
          _
        // Predicated region
        $region33: #{tpu_custom_call.1} parent=11 // pred_check
          %p370 = pneg %p180
        $region34: #{tpu_custom_call.1} parent=11 // pred_check_branch
          %372 = sbr.rel (%p370) target = $region36
        $region35: #{tpu_custom_call.1} parent=11 // pred_region
          %s374 = ssub.s32 8192, 8192
          %375 = vsyncadd [#allocation12], %s374
          %s376 = sshll.u32 [#allocation13], 4
          %s377 = int_to_ptr.vmem [resolvable:$true] %s376
          %382 = dma.hbm_to_vmem [thread:$0]  %s6, 8192, %s377, [#allocation12], 128, 128, 8
        $region36: #{tpu_custom_call.1} parent=11 // pred_fallthru
          _
        // Predicated region
        $region37: #{tpu_custom_call.1} parent=11 // pred_check
          %p383 = pneg %p201
        $region38: #{tpu_custom_call.1} parent=11 // pred_check_branch
          %385 = sbr.rel (%p383) target = $region40
        $region39: #{tpu_custom_call.1} parent=11 // pred_region
          %s387 = ssub.s32 1024, 1024
          %388 = vsyncadd [#allocation15], %s387
          %s389 = sshll.u32 [#allocation14], 4
          %s390 = int_to_ptr.vmem [resolvable:$true] %s389
          %395 = dma.hbm_to_vmem [thread:$0]  %s7, 1024, %s390, [#allocation15], 128, 128, 8
        $region40: #{tpu_custom_call.1} parent=11 // pred_fallthru
          _
        // Predicated region
        $region41: #{tpu_custom_call.1} parent=11 // pred_check
          %p396 = pneg %p222
        $region42: #{tpu_custom_call.1} parent=11 // pred_check_branch
          %398 = sbr.rel (%p396) target = $region44
        $region43: #{tpu_custom_call.1} parent=11 // pred_region
          %s400 = ssub.s32 32768, 32768
          %401 = vsyncadd [#allocation15], %s400
          %s402 = sshll.u32 [#allocation16], 4
          %s403 = int_to_ptr.vmem [resolvable:$true] %s402
          %408 = dma.hbm_to_vmem [thread:$0]  %s8, 32768, %s403, [#allocation15], 512, 512, 32
        $region44: #{tpu_custom_call.1} parent=11 // pred_fallthru
          _
        // Predicated region
        $region45: #{tpu_custom_call.1} parent=11 // pred_check
          %p409 = pneg %p243
        $region46: #{tpu_custom_call.1} parent=11 // pred_check_branch
          %411 = sbr.rel (%p409) target = $region48
        $region47: #{tpu_custom_call.1} parent=11 // pred_region
          %s413 = ssub.s32 32768, 32768
          %414 = vsyncadd [#allocation18], %s413
          %s415 = sshll.u32 [#allocation17], 4
          %s416 = int_to_ptr.vmem [resolvable:$true] %s415
          %421 = dma.hbm_to_vmem [thread:$0]  %s9, 32768, %s416, [#allocation18], 128, 128, 8
        $region48: #{tpu_custom_call.1} parent=11 // pred_fallthru
          _
        // Predicated region
        $region49: #{tpu_custom_call.1} parent=11 // pred_check
          %p422 = pneg %p264
        $region50: #{tpu_custom_call.1} parent=11 // pred_check_branch
          %424 = sbr.rel (%p422) target = $region52
        $region51: #{tpu_custom_call.1} parent=11 // pred_region
          %s426 = ssub.s32 2048, 2048
          %427 = vsyncadd [#allocation18], %s426
          %s428 = sshll.u32 [#allocation19], 4
          %s429 = int_to_ptr.vmem [resolvable:$true] %s428
          %434 = dma.hbm_to_vmem [thread:$0]  %s10, 2048, %s429, [#allocation18], 64, 64, 4
        $region52: #{tpu_custom_call.1} parent=11 // pred_fallthru
          _
      $region12: #{tpu_custom_call.1} parent=5 // pred_fallthru
        _
      %p435 = scmp.lt.s32.totalorder %s28, 2
      // Predicated region
      $region53: #{tpu_custom_call.1} parent=5 // pred_check
        %p436 = pneg %p435
      $region54: #{tpu_custom_call.1} parent=5 // pred_check_branch
        %438 = sbr.rel (%p436) target = $region56
      $region55: #{tpu_custom_call.1} parent=5 // pred_region
        // Predicated region
        $region57: #{tpu_custom_call.1} parent=55 // pred_check
          %p439 = pneg %p48
        $region58: #{tpu_custom_call.1} parent=55 // pred_check_branch
          %441 = sbr.rel (%p439) target = $region60
        $region59: #{tpu_custom_call.1} parent=55 // pred_region
          %s442 = sand.u32 %s38, 1
          %s443 = scalar_lea.sflag [#allocation3], %s442
          %s444 = sand.u32 %s38, 1
          %s445 = smul.addr %s444, 16
          %s446 = scalar_lea.vmem [#allocation2], %s445
          %s448 = ssub.s32 256, 256
          %449 = vsyncadd %s443, %s448
          %s450 = smul.addr %s28, 2
          %s451 = smul.addr %s450, 128
          %s452 = scalar_lea.hbm %s0, %s451
          %s453 = sshll.u32 %s446, 4
          %s454 = int_to_ptr.vmem [resolvable:$true] %s453
          %459 = dma.hbm_to_vmem [thread:$0]  %s452, 256, %s454, %s443, 128, 128, 8
        $region60: #{tpu_custom_call.1} parent=55 // pred_fallthru
          _
      $region56: #{tpu_custom_call.1} parent=5 // pred_fallthru
        _
      %p460 = scmp.le.s32.totalorder 1, %s28
      %p461 = scmp.lt.s32.totalorder %s28, 3
      %p462 = pnand %p460, %p461
      %p463 = pneg %p462
      // Predicated region
      $region61: #{tpu_custom_call.1} parent=5 // pred_check
        _
      $region62: #{tpu_custom_call.1} parent=5 // pred_check_branch
        %465 = sbr.rel (%p462) target = $region64
      $region63: #{tpu_custom_call.1} parent=5 // pred_region
        %s466 = ssub.s32 %s28, 1
        %s467 = sand.u32 %s41, 1
        %s468 = scalar_lea.sflag [#allocation3], %s467
        %s469 = sand.u32 %s41, 1
        %s470 = smul.addr %s469, 16
        %s471 = scalar_lea.vmem [#allocation2], %s470
        // Predicated region
        $region65: #{tpu_custom_call.1} parent=63 // pred_check
          %p472 = pneg %p54
        $region66: #{tpu_custom_call.1} parent=63 // pred_check_branch
          %474 = sbr.rel (%p472) target = $region68
        $region67: #{tpu_custom_call.1} parent=63 // pred_region
          %475 = dma.done %s468, 256
        $region68: #{tpu_custom_call.1} parent=63 // pred_fallthru
          _
        // Predicated region
        $region69: #{tpu_custom_call.1} parent=63 // pred_check
          %p476 = pneg %p75
        $region70: #{tpu_custom_call.1} parent=63 // pred_check_branch
          %478 = sbr.rel (%p476) target = $region72
        $region71: #{tpu_custom_call.1} parent=63 // pred_region
          %479 = dma.done [#allocation6], 1024
        $region72: #{tpu_custom_call.1} parent=63 // pred_fallthru
          _
        // Predicated region
        $region73: #{tpu_custom_call.1} parent=63 // pred_check
          %p480 = pneg %p96
        $region74: #{tpu_custom_call.1} parent=63 // pred_check_branch
          %482 = sbr.rel (%p480) target = $region76
        $region75: #{tpu_custom_call.1} parent=63 // pred_region
          %483 = dma.done [#allocation6], 4096
        $region76: #{tpu_custom_call.1} parent=63 // pred_fallthru
          _
        // Predicated region
        $region77: #{tpu_custom_call.1} parent=63 // pred_check
          %p484 = pneg %p117
        $region78: #{tpu_custom_call.1} parent=63 // pred_check_branch
          %486 = sbr.rel (%p484) target = $region80
        $region79: #{tpu_custom_call.1} parent=63 // pred_region
          %487 = dma.done [#allocation9], 8192
        $region80: #{tpu_custom_call.1} parent=63 // pred_fallthru
          _
        // Predicated region
        $region81: #{tpu_custom_call.1} parent=63 // pred_check
          %p488 = pneg %p138
        $region82: #{tpu_custom_call.1} parent=63 // pred_check_branch
          %490 = sbr.rel (%p488) target = $region84
        $region83: #{tpu_custom_call.1} parent=63 // pred_region
          %491 = dma.done [#allocation9], 8192
        $region84: #{tpu_custom_call.1} parent=63 // pred_fallthru
          _
        // Predicated region
        $region85: #{tpu_custom_call.1} parent=63 // pred_check
          %p492 = pneg %p159
        $region86: #{tpu_custom_call.1} parent=63 // pred_check_branch
          %494 = sbr.rel (%p492) target = $region88
        $region87: #{tpu_custom_call.1} parent=63 // pred_region
          %495 = dma.done [#allocation12], 8192
        $region88: #{tpu_custom_call.1} parent=63 // pred_fallthru
          _
        // Predicated region
        $region89: #{tpu_custom_call.1} parent=63 // pred_check
          %p496 = pneg %p180
        $region90: #{tpu_custom_call.1} parent=63 // pred_check_branch
          %498 = sbr.rel (%p496) target = $region92
        $region91: #{tpu_custom_call.1} parent=63 // pred_region
          %499 = dma.done [#allocation12], 8192
        $region92: #{tpu_custom_call.1} parent=63 // pred_fallthru
          _
        // Predicated region
        $region93: #{tpu_custom_call.1} parent=63 // pred_check
          %p500 = pneg %p201
        $region94: #{tpu_custom_call.1} parent=63 // pred_check_branch
          %502 = sbr.rel (%p500) target = $region96
        $region95: #{tpu_custom_call.1} parent=63 // pred_region
          %503 = dma.done [#allocation15], 1024
        $region96: #{tpu_custom_call.1} parent=63 // pred_fallthru
          _
        // Predicated region
        $region97: #{tpu_custom_call.1} parent=63 // pred_check
          %p504 = pneg %p222
        $region98: #{tpu_custom_call.1} parent=63 // pred_check_branch
          %506 = sbr.rel (%p504) target = $region100
        $region99: #{tpu_custom_call.1} parent=63 // pred_region
          %507 = dma.done [#allocation15], 32768
        $region100: #{tpu_custom_call.1} parent=63 // pred_fallthru
          _
        // Predicated region
        $region101: #{tpu_custom_call.1} parent=63 // pred_check
          %p508 = pneg %p243
        $region102: #{tpu_custom_call.1} parent=63 // pred_check_branch
          %510 = sbr.rel (%p508) target = $region104
        $region103: #{tpu_custom_call.1} parent=63 // pred_region
          %511 = dma.done [#allocation18], 32768
        $region104: #{tpu_custom_call.1} parent=63 // pred_fallthru
          _
        // Predicated region
        $region105: #{tpu_custom_call.1} parent=63 // pred_check
          %p512 = pneg %p264
        $region106: #{tpu_custom_call.1} parent=63 // pred_check_branch
          %514 = sbr.rel (%p512) target = $region108
        $region107: #{tpu_custom_call.1} parent=63 // pred_region
          %515 = dma.done [#allocation18], 2048
        $region108: #{tpu_custom_call.1} parent=63 // pred_fallthru
          _
        %s516 = sand.u32 %s41, 1
        %s517 = scalar_lea.sflag [#allocation3], %s516
        %s518 = sand.u32 %s41, 1
        %s519 = smul.addr %s518, 16
        %s520 = scalar_lea.vmem [#allocation2], %s519
        %p521 = pneg %p54
        %p522 = pneg %p51
        %p523 = pneg %p75
        %p524 = pneg %p72
        %p525 = pneg %p96
        %p526 = pneg %p93
        %p527 = pneg %p117
        %p528 = pneg %p114
        %p529 = pneg %p138
        %p530 = pneg %p135
        %p531 = pneg %p159
        %p532 = pneg %p156
        %p533 = pneg %p180
        %p534 = pneg %p177
        %p535 = pneg %p201
        %p536 = pneg %p198
        %p537 = pneg %p222
        %p538 = pneg %p219
        %p539 = pneg %p243
        %p540 = pneg %p240
        %p541 = pneg %p264
        %p542 = pneg %p261
        %p543 = pneg %p290
        %p544 = pneg %p287
        %s545 = sand.u32 %s277, 1
        %s546 = scalar_lea.sflag [#allocation4], %s545
        %s547 = sand.u32 %s277, 1
        %s548 = scalar_lea.vmem [#allocation20], %s547
        %v550 = vld [vmem:[%s471] sm:$0xff]
        %v551 = vld [vmem:[%s471 + $0x8] sm:$0xff]
        %v552 = vpack.c.bf16 %v551, %v550
        %v553 = vld [vmem:[#allocation5] sm:$0xf]
        %v554 = vld [vmem:[#allocation5 + $0x4] sm:$0xf]
        %v555 = vld [vmem:[#allocation5 + $0x8] sm:$0xf]
        %v556 = vld [vmem:[#allocation5 + $0xc] sm:$0xf]
        %v557 = vld [vmem:[#allocation5 + $0x10] sm:$0xf]
        %v558 = vld [vmem:[#allocation5 + $0x14] sm:$0xf]
        %v559 = vld [vmem:[#allocation5 + $0x18] sm:$0xf]
        %v560 = vld [vmem:[#allocation5 + $0x1c] sm:$0xf]
        %v561 = vld [vmem:[#allocation5 + $0x20] sm:$0xf]
        %v562 = vld [vmem:[#allocation5 + $0x24] sm:$0xf]
        %v563 = vld [vmem:[#allocation5 + $0x28] sm:$0xf]
        %v564 = vld [vmem:[#allocation5 + $0x2c] sm:$0xf]
        %v565 = vld [vmem:[#allocation5 + $0x30] sm:$0xf]
        %v566 = vld [vmem:[#allocation5 + $0x34] sm:$0xf]
        %v567 = vld [vmem:[#allocation5 + $0x38] sm:$0xf]
        %v568 = vld [vmem:[#allocation5 + $0x3c] sm:$0xf]
        %v569 = vld [vmem:[#allocation7] ss:$0 sm:$0xff]
        %v586 = vunpack.c.l.b16 %v553
        %v587 = vunpack.c.l.b16 %v554
        %v588 = vunpack.c.l.b16 %v555
        %v589 = vunpack.c.l.b16 %v556
        %v590 = vunpack.c.l.b16 %v557
        %v591 = vunpack.c.l.b16 %v558
        %v592 = vunpack.c.l.b16 %v559
        %v593 = vunpack.c.l.b16 %v560
        %v594 = vunpack.c.l.b16 %v561
        %v595 = vunpack.c.l.b16 %v562
        %v596 = vunpack.c.l.b16 %v563
        %v597 = vunpack.c.l.b16 %v564
        %v598 = vunpack.c.l.b16 %v565
        %v599 = vunpack.c.l.b16 %v566
        %v600 = vunpack.c.l.b16 %v567
        %v601 = vunpack.c.l.b16 %v568
        %v602 = vpack.c.b16 %v587, %v586
        %v603 = vpack.c.b16 %v589, %v588
        %v604 = vpack.c.b16 %v591, %v590
        %v605 = vpack.c.b16 %v593, %v592
        %v606 = vpack.c.b16 %v595, %v594
        %v607 = vpack.c.b16 %v597, %v596
        %v608 = vpack.c.b16 %v599, %v598
        %v609 = vpack.c.b16 %v601, %v600
        %618 = vmatprep.subr.bf16.mxu0 0
        %619 = vmatpush1.bf16.msra.mxu0 %v609
        %620 = vmatprep.subr.bf16.mxu0 0
        %621 = vmatpush1.bf16.msra.mxu0 %v608
        %622 = vmatprep.subr.bf16.mxu0 0
        %623 = vmatpush1.bf16.msra.mxu0 %v607
        %624 = vmatprep.subr.bf16.mxu0 0
        %625 = vmatpush1.bf16.msra.mxu0 %v606
        %626 = vmatprep.subr.bf16.mxu0 0
        %627 = vmatpush1.bf16.msra.mxu0 %v605
        %628 = vmatprep.subr.bf16.mxu0 0
        %629 = vmatpush1.bf16.msra.mxu0 %v604
        %630 = vmatprep.subr.bf16.mxu0 0
        %631 = vmatpush1.bf16.msra.mxu0 %v603
        %632 = vmatprep.subr.bf16.mxu0 0
        %633 = vmatpush1.bf16.msra.mxu0 %v602
        %634 = vmatprep.subr.bf16.mxu0 0
        %635 = vmatpush2.bf16.msra.mxu0 0
        %636 = vmatprep.subr.bf16.mxu0 0
        %637 = vmatpush2.bf16.msra.mxu0 0
        %638 = vmatprep.subr.bf16.mxu0 0
        %639 = vmatpush2.bf16.msra.mxu0 0
        %640 = vmatprep.subr.bf16.mxu0 0
        %641 = vmatpush2.bf16.msra.mxu0 0
        %642 = vmatprep.subr.bf16.mxu0 0
        %643 = vmatpush2.bf16.msra.mxu0 0
        %644 = vmatprep.subr.bf16.mxu0 0
        %645 = vmatpush2.bf16.msra.mxu0 0
        %646 = vmatprep.subr.bf16.mxu0 0
        %647 = vmatpush2.bf16.msra.mxu0 0
        %648 = vmatprep.subr.bf16.mxu0 0
        %649 = vmatpush2.bf16.msra.mxu0 0
        %650 = vmatprep.mubr.bf16.mxu0 0
        %651 = vmatmul.mubr.bf16.gmra.mxu0 %v552
        %v652 = vpop.f32.mrf.mxu0
        %v653 = vadd.f32 %v569, %v652
        %v654 = vpop.f32.mrf.mxu0
        %v655 = vpop.f32.mrf.mxu0
        %v656 = vadd.f32 %v569, %v655
        %v657 = vpop.f32.mrf.mxu0
        %658 = vdwg.mxu0
        %v659 = vld [vmem:[#allocation7 + $0x1] ss:$0 sm:$0xff]
        %v660 = vld [vmem:[#allocation7 + $0x2] ss:$0 sm:$0xff]
        %661 = vadd.xlane.f32.xlu0 %v653
        %v662 = vpop.xlane.xlu0 %661
        %663 = vadd.xlane.f32.xlu0 %v656
        %v664 = vpop.xlane.xlu0 %663
        %v665 = vrcp.pop 128.0
        %v666 = vmul.f32 %v662, %v665
        %v667 = vmul.f32 %v664, %v665
        %v668 = vsub.f32 %v653, %v666
        %v669 = vsub.f32 %v656, %v667
        %v670 = vmul.f32 %v668, %v668
        %v671 = vmul.f32 %v669, %v669
        %672 = vadd.xlane.f32.xlu0 %v670
        %v673 = vpop.xlane.xlu0 %672
        %674 = vadd.xlane.f32.xlu0 %v671
        %v675 = vpop.xlane.xlu0 %674
        %v676 = vmul.f32 %v673, %v665
        %v677 = vmul.f32 %v675, %v665
        %v678 = vadd.f32 %v676, 1e-06
        %v679 = vadd.f32 %v677, 1e-06
        %v680 = vrsqrt.pop %v678
        %v681 = vrsqrt.pop %v679
        %v682 = vmul.f32 %v668, %v680
        %v683 = vmul.f32 %v669, %v681
        %v684 = vmul.f32 %v682, %v659
        %v685 = vmul.f32 %v683, %v659
        %v686 = vadd.f32 %v684, %v660
        %v687 = vadd.f32 %v685, %v660
        %v688 = vld [vmem:[#allocation7 + $0x3] ss:$0 sm:$0xff]
        %v689 = vld [vmem:[#allocation7 + $0x4] ss:$0 sm:$0xff]
        %v690 = vld [vmem:[#allocation7 + $0x5] ss:$0 sm:$0xff]
        %s691 = scalar_lea.vmem [#allocation7], 6
        %v692 = vld [vmem:[%s691] ss:$8 sm:$0xf]
        %v693 = vld [vmem:[#allocation7 + $0x7] ss:$0 sm:$0xff]
        %v694 = vld [vmem:[#allocation7 + $0x40] ss:$0 sm:$0xff]
        %v695 = vld [vmem:[#allocation8] sm:$0xff]
        %v696 = vld [vmem:[#allocation8 + $0x8] sm:$0xff]
        %v697 = vmul.f32 %v695, %v686
        %v698 = vmul.f32 %v696, %v687
        %vm701 = vcmask 1046528
        %v702 = vrot.slane %v686, 1
        %v703 = vrot.slane %v687, 1
        %v704 = vsel %vm701, %v702, %v703
        %v708 = vsel %vm701, %v703, %v702
        %s709 = scalar_lea.vmem [#allocation8], 16
        %v710 = vld [vmem:[%s709] sm:$0xff]
        %v711 = vld [vmem:[%s709 + $0x8] sm:$0xff]
        %v712 = vmul.f32 %v710, %v704
        %v713 = vmul.f32 %v711, %v708
        %vm714 = vcmask 1045504
        %v715 = vrot.slane %v686, 2
        %v716 = vrot.slane %v687, 2
        %v717 = vsel %vm714, %v715, %v716
        %v721 = vsel %vm714, %v716, %v715
        %s722 = scalar_lea.vmem [#allocation8], 32
        %v723 = vld [vmem:[%s722] sm:$0xff]
        %v724 = vld [vmem:[%s722 + $0x8] sm:$0xff]
        %v725 = vmul.f32 %v723, %v717
        %v726 = vmul.f32 %v724, %v721
        %vm727 = vcmask 1044480
        %v728 = vrot.slane %v686, 3
        %v729 = vrot.slane %v687, 3
        %v730 = vsel %vm727, %v728, %v729
        %v734 = vsel %vm727, %v729, %v728
        %s735 = scalar_lea.vmem [#allocation8], 48
        %v736 = vld [vmem:[%s735] sm:$0xff]
        %v737 = vld [vmem:[%s735 + $0x8] sm:$0xff]
        %v738 = vmul.f32 %v736, %v730
        %v739 = vmul.f32 %v737, %v734
        %vm740 = vcmask 1043456
        %v741 = vrot.slane %v686, 4
        %v742 = vrot.slane %v687, 4
        %v743 = vsel %vm740, %v741, %v742
        %v747 = vsel %vm740, %v742, %v741
        %s748 = scalar_lea.vmem [#allocation8], 64
        %v749 = vld [vmem:[%s748] sm:$0xff]
        %v750 = vld [vmem:[%s748 + $0x8] sm:$0xff]
        %v751 = vmul.f32 %v749, %v743
        %v752 = vmul.f32 %v750, %v747
        %vm753 = vcmask 1042432
        %v754 = vrot.slane %v686, 5
        %v755 = vrot.slane %v687, 5
        %v756 = vsel %vm753, %v754, %v755
        %v760 = vsel %vm753, %v755, %v754
        %s761 = scalar_lea.vmem [#allocation8], 80
        %v762 = vld [vmem:[%s761] sm:$0xff]
        %v763 = vld [vmem:[%s761 + $0x8] sm:$0xff]
        %v764 = vmul.f32 %v762, %v756
        %v765 = vmul.f32 %v763, %v760
        %vm766 = vcmask 1041408
        %v767 = vrot.slane %v686, 6
        %v768 = vrot.slane %v687, 6
        %v769 = vsel %vm766, %v767, %v768
        %v773 = vsel %vm766, %v768, %v767
        %s774 = scalar_lea.vmem [#allocation8], 96
        %v775 = vld [vmem:[%s774] sm:$0xff]
        %v776 = vld [vmem:[%s774 + $0x8] sm:$0xff]
        %v777 = vmul.f32 %v775, %v769
        %v778 = vmul.f32 %v776, %v773
        %vm779 = vcmask 1040384
        %v780 = vrot.slane %v686, 7
        %v781 = vrot.slane %v687, 7
        %v782 = vsel %vm779, %v780, %v781
        %v786 = vsel %vm779, %v781, %v780
        %s787 = scalar_lea.vmem [#allocation8], 112
        %v788 = vld [vmem:[%s787] sm:$0xff]
        %v789 = vld [vmem:[%s787 + $0x8] sm:$0xff]
        %v790 = vmul.f32 %v788, %v782
        %v791 = vmul.f32 %v789, %v786
        %s792 = scalar_lea.vmem [#allocation8], 128
        %v793 = vld [vmem:[%s792] sm:$0xff]
        %v794 = vld [vmem:[%s792 + $0x8] sm:$0xff]
        %v795 = vmul.f32 %v793, %v687
        %v796 = vmul.f32 %v794, %v686
        %s797 = scalar_lea.vmem [#allocation8], 144
        %v798 = vld [vmem:[%s797] sm:$0xff]
        %v799 = vld [vmem:[%s797 + $0x8] sm:$0xff]
        %v800 = vmul.f32 %v798, %v708
        %v801 = vmul.f32 %v799, %v704
        %s802 = scalar_lea.vmem [#allocation8], 160
        %v803 = vld [vmem:[%s802] sm:$0xff]
        %v804 = vld [vmem:[%s802 + $0x8] sm:$0xff]
        %v805 = vmul.f32 %v803, %v721
        %v806 = vmul.f32 %v804, %v717
        %s807 = scalar_lea.vmem [#allocation8], 176
        %v808 = vld [vmem:[%s807] sm:$0xff]
        %v809 = vld [vmem:[%s807 + $0x8] sm:$0xff]
        %v810 = vmul.f32 %v808, %v734
        %v811 = vmul.f32 %v809, %v730
        %s812 = scalar_lea.vmem [#allocation8], 192
        %v813 = vld [vmem:[%s812] sm:$0xff]
        %v814 = vld [vmem:[%s812 + $0x8] sm:$0xff]
        %v815 = vmul.f32 %v813, %v747
        %v816 = vmul.f32 %v814, %v743
        %s817 = scalar_lea.vmem [#allocation8], 208
        %v818 = vld [vmem:[%s817] sm:$0xff]
        %v819 = vld [vmem:[%s817 + $0x8] sm:$0xff]
        %v820 = vmul.f32 %v818, %v760
        %v821 = vmul.f32 %v819, %v756
        %s822 = scalar_lea.vmem [#allocation8], 224
        %v823 = vld [vmem:[%s822] sm:$0xff]
        %v824 = vld [vmem:[%s822 + $0x8] sm:$0xff]
        %v825 = vmul.f32 %v823, %v773
        %v826 = vmul.f32 %v824, %v769
        %s827 = scalar_lea.vmem [#allocation8], 240
        %v828 = vld [vmem:[%s827] sm:$0xff]
        %v829 = vld [vmem:[%s827 + $0x8] sm:$0xff]
        %v830 = vmul.f32 %v828, %v786
        %v831 = vmul.f32 %v829, %v782
        %v832 = vadd.f32 %v697, %v712
        %v833 = vadd.f32 %v698, %v713
        %v834 = vadd.f32 %v725, %v738
        %v835 = vadd.f32 %v726, %v739
        %v836 = vadd.f32 %v751, %v764
        %v837 = vadd.f32 %v752, %v765
        %v838 = vadd.f32 %v777, %v790
        %v839 = vadd.f32 %v778, %v791
        %v840 = vadd.f32 %v795, %v800
        %v841 = vadd.f32 %v796, %v801
        %v842 = vadd.f32 %v805, %v810
        %v843 = vadd.f32 %v806, %v811
        %v844 = vadd.f32 %v815, %v820
        %v845 = vadd.f32 %v816, %v821
        %v846 = vadd.f32 %v825, %v830
        %v847 = vadd.f32 %v826, %v831
        %v848 = vadd.f32 %v832, %v834
        %v849 = vadd.f32 %v833, %v835
        %v850 = vadd.f32 %v836, %v838
        %v851 = vadd.f32 %v837, %v839
        %v852 = vadd.f32 %v840, %v842
        %v853 = vadd.f32 %v841, %v843
        %v854 = vadd.f32 %v844, %v846
        %v855 = vadd.f32 %v845, %v847
        %v856 = vadd.f32 %v848, %v850
        %v857 = vadd.f32 %v849, %v851
        %v858 = vadd.f32 %v852, %v854
        %v859 = vadd.f32 %v853, %v855
        %v860 = vadd.f32 %v856, %v858
        %v861 = vadd.f32 %v857, %v859
        %v862 = vadd.f32 %v860, %v688
        %v863 = vadd.f32 %v861, %v688
        %864 = vadd.xlane.f32.xlu0 %v862
        %v865 = vpop.xlane.xlu0 %864
        %866 = vadd.xlane.f32.xlu0 %v863
        %v867 = vpop.xlane.xlu0 %866
        %v868 = vmul.f32 %v865, %v665
        %v869 = vmul.f32 %v867, %v665
        %v870 = vsub.f32 %v862, %v868
        %v871 = vsub.f32 %v863, %v869
        %v872 = vmul.f32 %v870, %v870
        %v873 = vmul.f32 %v871, %v871
        %874 = vadd.xlane.f32.xlu0 %v872
        %v875 = vpop.xlane.xlu0 %874
        %876 = vadd.xlane.f32.xlu0 %v873
        %v877 = vpop.xlane.xlu0 %876
        %v878 = vmul.f32 %v875, %v665
        %v879 = vmul.f32 %v877, %v665
        %v880 = vadd.f32 %v878, 1e-06
        %v881 = vadd.f32 %v879, 1e-06
        %v882 = vrsqrt.pop %v880
        %v883 = vrsqrt.pop %v881
        %v884 = vmul.f32 %v870, %v882
        %v885 = vmul.f32 %v871, %v883
        %v886 = vmul.f32 %v884, %v689
        %v887 = vmul.f32 %v885, %v689
        %v888 = vadd.f32 %v886, %v690
        %v889 = vadd.f32 %v887, %v690
        %v890 = vpack.c.bf16 %v889, %v888
        %v891 = vld [vmem:[#allocation10] sm:$0xff]
        %v892 = vld [vmem:[#allocation10 + $0x8] sm:$0xff]
        %v893 = vld [vmem:[#allocation10 + $0x10] sm:$0xff]
        %v894 = vld [vmem:[#allocation10 + $0x18] sm:$0xff]
        %v895 = vld [vmem:[#allocation10 + $0x20] sm:$0xff]
        %v896 = vld [vmem:[#allocation10 + $0x28] sm:$0xff]
        %v897 = vld [vmem:[#allocation10 + $0x30] sm:$0xff]
        %v898 = vld [vmem:[#allocation10 + $0x38] sm:$0xff]
        %v899 = vld [vmem:[#allocation10 + $0x40] sm:$0xff]
        %v900 = vld [vmem:[#allocation10 + $0x48] sm:$0xff]
        %v901 = vld [vmem:[#allocation10 + $0x50] sm:$0xff]
        %v902 = vld [vmem:[#allocation10 + $0x58] sm:$0xff]
        %v903 = vld [vmem:[#allocation10 + $0x60] sm:$0xff]
        %v904 = vld [vmem:[#allocation10 + $0x68] sm:$0xff]
        %v905 = vld [vmem:[#allocation10 + $0x70] sm:$0xff]
        %v906 = vld [vmem:[#allocation10 + $0x78] sm:$0xff]
        %v907 = vld [vmem:[#allocation10 + $0x80] sm:$0xff]
        %v908 = vld [vmem:[#allocation10 + $0x88] sm:$0xff]
        %v909 = vld [vmem:[#allocation10 + $0x90] sm:$0xff]
        %v910 = vld [vmem:[#allocation10 + $0x98] sm:$0xff]
        %v911 = vld [vmem:[#allocation10 + $0xa0] sm:$0xff]
        %v912 = vld [vmem:[#allocation10 + $0xa8] sm:$0xff]
        %v913 = vld [vmem:[#allocation10 + $0xb0] sm:$0xff]
        %v914 = vld [vmem:[#allocation10 + $0xb8] sm:$0xff]
        %v915 = vld [vmem:[#allocation10 + $0xc0] sm:$0xff]
        %v916 = vld [vmem:[#allocation10 + $0xc8] sm:$0xff]
        %v917 = vld [vmem:[#allocation10 + $0xd0] sm:$0xff]
        %v918 = vld [vmem:[#allocation10 + $0xd8] sm:$0xff]
        %v919 = vld [vmem:[#allocation10 + $0xe0] sm:$0xff]
        %v920 = vld [vmem:[#allocation10 + $0xe8] sm:$0xff]
        %v921 = vld [vmem:[#allocation10 + $0xf0] sm:$0xff]
        %v922 = vld [vmem:[#allocation10 + $0xf8] sm:$0xff]
        %v924 = vlaneseq
        %v925 = vshrl.u32 %v924, 7
        %v926 = vsub.s32 0, %v925
        %v927 = vrot.slane %v692, %v926
        %v928 = vlaneseq
        %v929 = vshrl.u32 %v928, 7
        %v930 = vsub.s32 1, %v929
        %v931 = vrot.slane %v692, %v930
        %v932 = vlaneseq
        %v933 = vshrl.u32 %v932, 7
        %v934 = vsub.s32 2, %v933
        %v935 = vrot.slane %v692, %v934
        %v936 = vlaneseq
        %v937 = vshrl.u32 %v936, 7
        %v938 = vsub.s32 3, %v937
        %v939 = vrot.slane %v692, %v938
        %v976 = vunpack.c.l.b16 %v891
        %v977 = vunpack.c.h.b16 %v891
        %v978 = vunpack.c.l.b16 %v892
        %v979 = vunpack.c.h.b16 %v892
        %v980 = vunpack.c.l.b16 %v893
        %v981 = vunpack.c.h.b16 %v893
        %v982 = vunpack.c.l.b16 %v894
        %v983 = vunpack.c.h.b16 %v894
        %v984 = vunpack.c.l.b16 %v895
        %v985 = vunpack.c.h.b16 %v895
        %v986 = vunpack.c.l.b16 %v896
        %v987 = vunpack.c.h.b16 %v896
        %v988 = vunpack.c.l.b16 %v897
        %v989 = vunpack.c.h.b16 %v897
        %v990 = vunpack.c.l.b16 %v898
        %v991 = vunpack.c.h.b16 %v898
        %v992 = vunpack.c.l.b16 %v899
        %v993 = vunpack.c.h.b16 %v899
        %v994 = vunpack.c.l.b16 %v900
        %v995 = vunpack.c.h.b16 %v900
        %v996 = vunpack.c.l.b16 %v901
        %v997 = vunpack.c.h.b16 %v901
        %v998 = vunpack.c.l.b16 %v902
        %v999 = vunpack.c.h.b16 %v902
        %v1000 = vunpack.c.l.b16 %v903
        %v1001 = vunpack.c.h.b16 %v903
        %v1002 = vunpack.c.l.b16 %v904
        %v1003 = vunpack.c.h.b16 %v904
        %v1004 = vunpack.c.l.b16 %v905
        %v1005 = vunpack.c.h.b16 %v905
        %v1006 = vunpack.c.l.b16 %v906
        %v1007 = vunpack.c.h.b16 %v906
        %v1008 = vunpack.c.l.b16 %v907
        %v1009 = vunpack.c.h.b16 %v907
        %v1010 = vunpack.c.l.b16 %v908
        %v1011 = vunpack.c.h.b16 %v908
        %v1012 = vunpack.c.l.b16 %v909
        %v1013 = vunpack.c.h.b16 %v909
        %v1014 = vunpack.c.l.b16 %v910
        %v1015 = vunpack.c.h.b16 %v910
        %v1016 = vunpack.c.l.b16 %v911
        %v1017 = vunpack.c.h.b16 %v911
        %v1018 = vunpack.c.l.b16 %v912
        %v1019 = vunpack.c.h.b16 %v912
        %v1020 = vunpack.c.l.b16 %v913
        %v1021 = vunpack.c.h.b16 %v913
        %v1022 = vunpack.c.l.b16 %v914
        %v1023 = vunpack.c.h.b16 %v914
        %v1024 = vunpack.c.l.b16 %v915
        %v1025 = vunpack.c.h.b16 %v915
        %v1026 = vunpack.c.l.b16 %v916
        %v1027 = vunpack.c.h.b16 %v916
        %v1028 = vunpack.c.l.b16 %v917
        %v1029 = vunpack.c.h.b16 %v917
        %v1030 = vunpack.c.l.b16 %v918
        %v1031 = vunpack.c.h.b16 %v918
        %v1032 = vunpack.c.l.b16 %v919
        %v1033 = vunpack.c.h.b16 %v919
        %v1034 = vunpack.c.l.b16 %v920
        %v1035 = vunpack.c.h.b16 %v920
        %v1036 = vunpack.c.l.b16 %v921
        %v1037 = vunpack.c.h.b16 %v921
        %v1038 = vunpack.c.l.b16 %v922
        %v1039 = vunpack.c.h.b16 %v922
        %v1040 = vpack.c.b16 %v980, %v976
        %v1041 = vpack.c.b16 %v981, %v977
        %v1042 = vpack.c.b16 %v982, %v978
        %v1043 = vpack.c.b16 %v983, %v979
        %v1044 = vpack.c.b16 %v988, %v984
        %v1045 = vpack.c.b16 %v989, %v985
        %v1046 = vpack.c.b16 %v990, %v986
        %v1047 = vpack.c.b16 %v991, %v987
        %v1048 = vpack.c.b16 %v996, %v992
        %v1049 = vpack.c.b16 %v997, %v993
        %v1050 = vpack.c.b16 %v998, %v994
        %v1051 = vpack.c.b16 %v999, %v995
        %v1052 = vpack.c.b16 %v1004, %v1000
        %v1053 = vpack.c.b16 %v1005, %v1001
        %v1054 = vpack.c.b16 %v1006, %v1002
        %v1055 = vpack.c.b16 %v1007, %v1003
        %v1056 = vpack.c.b16 %v1012, %v1008
        %v1057 = vpack.c.b16 %v1013, %v1009
        %v1058 = vpack.c.b16 %v1014, %v1010
        %v1059 = vpack.c.b16 %v1015, %v1011
        %v1060 = vpack.c.b16 %v1020, %v1016
        %v1061 = vpack.c.b16 %v1021, %v1017
        %v1062 = vpack.c.b16 %v1022, %v1018
        %v1063 = vpack.c.b16 %v1023, %v1019
        %v1064 = vpack.c.b16 %v1028, %v1024
        %v1065 = vpack.c.b16 %v1029, %v1025
        %v1066 = vpack.c.b16 %v1030, %v1026
        %v1067 = vpack.c.b16 %v1031, %v1027
        %v1068 = vpack.c.b16 %v1036, %v1032
        %v1069 = vpack.c.b16 %v1037, %v1033
        %v1070 = vpack.c.b16 %v1038, %v1034
        %v1071 = vpack.c.b16 %v1039, %v1035
        %1104 = vmatprep.subr.bf16.mxu0 %v1069
        %1105 = vmatpush1.bf16.msra.mxu0 %v1068
        %1106 = vmatprep.subr.bf16.mxu0 %v1065
        %1107 = vmatpush1.bf16.msra.mxu0 %v1064
        %1108 = vmatprep.subr.bf16.mxu0 %v1061
        %1109 = vmatpush1.bf16.msra.mxu0 %v1060
        %1110 = vmatprep.subr.bf16.mxu0 %v1057
        %1111 = vmatpush1.bf16.msra.mxu0 %v1056
        %1112 = vmatprep.subr.bf16.mxu0 %v1053
        %1113 = vmatpush1.bf16.msra.mxu0 %v1052
        %1114 = vmatprep.subr.bf16.mxu0 %v1049
        %1115 = vmatpush1.bf16.msra.mxu0 %v1048
        %1116 = vmatprep.subr.bf16.mxu0 %v1045
        %1117 = vmatpush1.bf16.msra.mxu0 %v1044
        %1118 = vmatprep.subr.bf16.mxu0 %v1041
        %1119 = vmatpush1.bf16.msra.mxu0 %v1040
        %1120 = vmatprep.subr.bf16.mxu0 0
        %1121 = vmatpush2.bf16.msra.mxu0 0
        %1122 = vmatprep.subr.bf16.mxu0 0
        %1123 = vmatpush2.bf16.msra.mxu0 0
        %1124 = vmatprep.subr.bf16.mxu0 0
        %1125 = vmatpush2.bf16.msra.mxu0 0
        %1126 = vmatprep.subr.bf16.mxu0 0
        %1127 = vmatpush2.bf16.msra.mxu0 0
        %1128 = vmatprep.subr.bf16.mxu0 0
        %1129 = vmatpush2.bf16.msra.mxu0 0
        %1130 = vmatprep.subr.bf16.mxu0 0
        %1131 = vmatpush2.bf16.msra.mxu0 0
        %1132 = vmatprep.subr.bf16.mxu0 0
        %1133 = vmatpush2.bf16.msra.mxu0 0
        %1134 = vmatprep.subr.bf16.mxu0 0
        %1135 = vmatpush2.bf16.msra.mxu0 0
        %1136 = vmatprep.mubr.bf16.mxu0 0
        %1137 = vmatmul.mubr.bf16.gmra.mxu0 %v890
        %v1138 = vpop.f32.mrf.mxu0
        %v1139 = vadd.f32 %v927, %v1138
        %v1140 = vpop.f32.mrf.mxu0
        %v1141 = vadd.f32 %v931, %v1140
        %v1142 = vpop.f32.mrf.mxu0
        %v1143 = vadd.f32 %v927, %v1142
        %v1144 = vpop.f32.mrf.mxu0
        %v1145 = vadd.f32 %v931, %v1144
        %1146 = vdwg.mxu0
        %1147 = vmatprep.subr.bf16.mxu0 %v1071
        %1148 = vmatpush1.bf16.msra.mxu0 %v1070
        %1149 = vmatprep.subr.bf16.mxu0 %v1067
        %1150 = vmatpush1.bf16.msra.mxu0 %v1066
        %1151 = vmatprep.subr.bf16.mxu0 %v1063
        %1152 = vmatpush1.bf16.msra.mxu0 %v1062
        %1153 = vmatprep.subr.bf16.mxu0 %v1059
        %1154 = vmatpush1.bf16.msra.mxu0 %v1058
        %1155 = vmatprep.subr.bf16.mxu0 %v1055
        %1156 = vmatpush1.bf16.msra.mxu0 %v1054
        %1157 = vmatprep.subr.bf16.mxu0 %v1051
        %1158 = vmatpush1.bf16.msra.mxu0 %v1050
        %1159 = vmatprep.subr.bf16.mxu0 %v1047
        %1160 = vmatpush1.bf16.msra.mxu0 %v1046
        %1161 = vmatprep.subr.bf16.mxu0 %v1043
        %1162 = vmatpush1.bf16.msra.mxu0 %v1042
        %1163 = vmatprep.subr.bf16.mxu0 0
        %1164 = vmatpush2.bf16.msra.mxu0 0
        %1165 = vmatprep.subr.bf16.mxu0 0
        %1166 = vmatpush2.bf16.msra.mxu0 0
        %1167 = vmatprep.subr.bf16.mxu0 0
        %1168 = vmatpush2.bf16.msra.mxu0 0
        %1169 = vmatprep.subr.bf16.mxu0 0
        %1170 = vmatpush2.bf16.msra.mxu0 0
        %1171 = vmatprep.subr.bf16.mxu0 0
        %1172 = vmatpush2.bf16.msra.mxu0 0
        %1173 = vmatprep.subr.bf16.mxu0 0
        %1174 = vmatpush2.bf16.msra.mxu0 0
        %1175 = vmatprep.subr.bf16.mxu0 0
        %1176 = vmatpush2.bf16.msra.mxu0 0
        %1177 = vmatprep.subr.bf16.mxu0 0
        %1178 = vmatpush2.bf16.msra.mxu0 0
        %1179 = vmatprep.mubr.bf16.mxu0 0
        %1180 = vmatmul.mubr.bf16.gmra.mxu0 %v890
        %v1181 = vpop.f32.mrf.mxu0
        %v1182 = vadd.f32 %v935, %v1181
        %v1183 = vpop.f32.mrf.mxu0
        %v1184 = vadd.f32 %v939, %v1183
        %v1185 = vpop.f32.mrf.mxu0
        %v1186 = vadd.f32 %v935, %v1185
        %v1187 = vpop.f32.mrf.mxu0
        %v1188 = vadd.f32 %v939, %v1187
        %1189 = vdwg.mxu0
        %v1190 = vmul.f32 %v1139, 0.5
        %v1191 = vmul.f32 %v1141, 0.5
        %v1192 = vmul.f32 %v1182, 0.5
        %v1193 = vmul.f32 %v1184, 0.5
        %v1194 = vmul.f32 %v1143, 0.5
        %v1195 = vmul.f32 %v1145, 0.5
        %v1196 = vmul.f32 %v1186, 0.5
        %v1197 = vmul.f32 %v1188, 0.5
        %v1198 = vmul.f32 %v1139, 0.044715
        %v1199 = vmul.f32 %v1141, 0.044715
        %v1200 = vmul.f32 %v1182, 0.044715
        %v1201 = vmul.f32 %v1184, 0.044715
        %v1202 = vmul.f32 %v1143, 0.044715
        %v1203 = vmul.f32 %v1145, 0.044715
        %v1204 = vmul.f32 %v1186, 0.044715
        %v1205 = vmul.f32 %v1188, 0.044715
        %v1206 = vmul.f32 %v1198, %v1139
        %v1207 = vmul.f32 %v1199, %v1141
        %v1208 = vmul.f32 %v1200, %v1182
        %v1209 = vmul.f32 %v1201, %v1184
        %v1210 = vmul.f32 %v1202, %v1143
        %v1211 = vmul.f32 %v1203, %v1145
        %v1212 = vmul.f32 %v1204, %v1186
        %v1213 = vmul.f32 %v1205, %v1188
        %v1214 = vmul.f32 %v1206, %v1139
        %v1215 = vmul.f32 %v1207, %v1141
        %v1216 = vmul.f32 %v1208, %v1182
        %v1217 = vmul.f32 %v1209, %v1184
        %v1218 = vmul.f32 %v1210, %v1143
        %v1219 = vmul.f32 %v1211, %v1145
        %v1220 = vmul.f32 %v1212, %v1186
        %v1221 = vmul.f32 %v1213, %v1188
        %v1222 = vadd.f32 %v1139, %v1214
        %v1223 = vadd.f32 %v1141, %v1215
        %v1224 = vadd.f32 %v1182, %v1216
        %v1225 = vadd.f32 %v1184, %v1217
        %v1226 = vadd.f32 %v1143, %v1218
        %v1227 = vadd.f32 %v1145, %v1219
        %v1228 = vadd.f32 %v1186, %v1220
        %v1229 = vadd.f32 %v1188, %v1221
        %v1230 = vmul.f32 %v1222, 0.7978846
        %v1231 = vmul.f32 %v1223, 0.7978846
        %v1232 = vmul.f32 %v1224, 0.7978846
        %v1233 = vmul.f32 %v1225, 0.7978846
        %v1234 = vmul.f32 %v1226, 0.7978846
        %v1235 = vmul.f32 %v1227, 0.7978846
        %v1236 = vmul.f32 %v1228, 0.7978846
        %v1237 = vmul.f32 %v1229, 0.7978846
        %v1238 = vtanh.pop %v1230
        %v1239 = vtanh.pop %v1231
        %v1240 = vtanh.pop %v1232
        %v1241 = vtanh.pop %v1233
        %v1242 = vtanh.pop %v1234
        %v1243 = vtanh.pop %v1235
        %v1244 = vtanh.pop %v1236
        %v1245 = vtanh.pop %v1237
        %v1246 = vadd.f32 %v1238, 1.0
        %v1247 = vadd.f32 %v1239, 1.0
        %v1248 = vadd.f32 %v1240, 1.0
        %v1249 = vadd.f32 %v1241, 1.0
        %v1250 = vadd.f32 %v1242, 1.0
        %v1251 = vadd.f32 %v1243, 1.0
        %v1252 = vadd.f32 %v1244, 1.0
        %v1253 = vadd.f32 %v1245, 1.0
        %v1254 = vmul.f32 %v1190, %v1246
        %v1255 = vmul.f32 %v1191, %v1247
        %v1256 = vmul.f32 %v1192, %v1248
        %v1257 = vmul.f32 %v1193, %v1249
        %v1258 = vmul.f32 %v1194, %v1250
        %v1259 = vmul.f32 %v1195, %v1251
        %v1260 = vmul.f32 %v1196, %v1252
        %v1261 = vmul.f32 %v1197, %v1253
        %v1262 = vpack.c.bf16 %v1258, %v1254
        %v1263 = vpack.c.bf16 %v1259, %v1255
        %v1264 = vpack.c.bf16 %v1260, %v1256
        %v1265 = vpack.c.bf16 %v1261, %v1257
        %v1266 = vld [vmem:[#allocation11] sm:$0xf]
        %v1267 = vld [vmem:[#allocation11 + $0x4] sm:$0xf]
        %v1268 = vld [vmem:[#allocation11 + $0x8] sm:$0xf]
        %v1269 = vld [vmem:[#allocation11 + $0xc] sm:$0xf]
        %v1270 = vld [vmem:[#allocation11 + $0x10] sm:$0xf]
        %v1271 = vld [vmem:[#allocation11 + $0x14] sm:$0xf]
        %v1272 = vld [vmem:[#allocation11 + $0x18] sm:$0xf]
        %v1273 = vld [vmem:[#allocation11 + $0x1c] sm:$0xf]
        %v1274 = vld [vmem:[#allocation11 + $0x20] sm:$0xf]
        %v1275 = vld [vmem:[#allocation11 + $0x24] sm:$0xf]
        %v1276 = vld [vmem:[#allocation11 + $0x28] sm:$0xf]
        %v1277 = vld [vmem:[#allocation11 + $0x2c] sm:$0xf]
        %v1278 = vld [vmem:[#allocation11 + $0x30] sm:$0xf]
        %v1279 = vld [vmem:[#allocation11 + $0x34] sm:$0xf]
        %v1280 = vld [vmem:[#allocation11 + $0x38] sm:$0xf]
        %v1281 = vld [vmem:[#allocation11 + $0x3c] sm:$0xf]
        %v1282 = vld [vmem:[#allocation11 + $0x40] sm:$0xf]
        %v1283 = vld [vmem:[#allocation11 + $0x44] sm:$0xf]
        %v1284 = vld [vmem:[#allocation11 + $0x48] sm:$0xf]
        %v1285 = vld [vmem:[#allocation11 + $0x4c] sm:$0xf]
        %v1286 = vld [vmem:[#allocation11 + $0x50] sm:$0xf]
        %v1287 = vld [vmem:[#allocation11 + $0x54] sm:$0xf]
        %v1288 = vld [vmem:[#allocation11 + $0x58] sm:$0xf]
        %v1289 = vld [vmem:[#allocation11 + $0x5c] sm:$0xf]
        %v1290 = vld [vmem:[#allocation11 + $0x60] sm:$0xf]
        %v1291 = vld [vmem:[#allocation11 + $0x64] sm:$0xf]
        %v1292 = vld [vmem:[#allocation11 + $0x68] sm:$0xf]
        %v1293 = vld [vmem:[#allocation11 + $0x6c] sm:$0xf]
        %v1294 = vld [vmem:[#allocation11 + $0x70] sm:$0xf]
        %v1295 = vld [vmem:[#allocation11 + $0x74] sm:$0xf]
        %v1296 = vld [vmem:[#allocation11 + $0x78] sm:$0xf]
        %v1297 = vld [vmem:[#allocation11 + $0x7c] sm:$0xf]
        %v1298 = vld [vmem:[#allocation11 + $0x80] sm:$0xf]
        %v1299 = vld [vmem:[#allocation11 + $0x84] sm:$0xf]
        %v1300 = vld [vmem:[#allocation11 + $0x88] sm:$0xf]
        %v1301 = vld [vmem:[#allocation11 + $0x8c] sm:$0xf]
        %v1302 = vld [vmem:[#allocation11 + $0x90] sm:$0xf]
        %v1303 = vld [vmem:[#allocation11 + $0x94] sm:$0xf]
        %v1304 = vld [vmem:[#allocation11 + $0x98] sm:$0xf]
        %v1305 = vld [vmem:[#allocation11 + $0x9c] sm:$0xf]
        %v1306 = vld [vmem:[#allocation11 + $0xa0] sm:$0xf]
        %v1307 = vld [vmem:[#allocation11 + $0xa4] sm:$0xf]
        %v1308 = vld [vmem:[#allocation11 + $0xa8] sm:$0xf]
        %v1309 = vld [vmem:[#allocation11 + $0xac] sm:$0xf]
        %v1310 = vld [vmem:[#allocation11 + $0xb0] sm:$0xf]
        %v1311 = vld [vmem:[#allocation11 + $0xb4] sm:$0xf]
        %v1312 = vld [vmem:[#allocation11 + $0xb8] sm:$0xf]
        %v1313 = vld [vmem:[#allocation11 + $0xbc] sm:$0xf]
        %v1314 = vld [vmem:[#allocation11 + $0xc0] sm:$0xf]
        %v1315 = vld [vmem:[#allocation11 + $0xc4] sm:$0xf]
        %v1316 = vld [vmem:[#allocation11 + $0xc8] sm:$0xf]
        %v1317 = vld [vmem:[#allocation11 + $0xcc] sm:$0xf]
        %v1318 = vld [vmem:[#allocation11 + $0xd0] sm:$0xf]
        %v1319 = vld [vmem:[#allocation11 + $0xd4] sm:$0xf]
        %v1320 = vld [vmem:[#allocation11 + $0xd8] sm:$0xf]
        %v1321 = vld [vmem:[#allocation11 + $0xdc] sm:$0xf]
        %v1322 = vld [vmem:[#allocation11 + $0xe0] sm:$0xf]
        %v1323 = vld [vmem:[#allocation11 + $0xe4] sm:$0xf]
        %v1324 = vld [vmem:[#allocation11 + $0xe8] sm:$0xf]
        %v1325 = vld [vmem:[#allocation11 + $0xec] sm:$0xf]
        %v1326 = vld [vmem:[#allocation11 + $0xf0] sm:$0xf]
        %v1327 = vld [vmem:[#allocation11 + $0xf4] sm:$0xf]
        %v1328 = vld [vmem:[#allocation11 + $0xf8] sm:$0xf]
        %v1329 = vld [vmem:[#allocation11 + $0xfc] sm:$0xf]
        %v1394 = vunpack.c.l.b16 %v1266
        %v1395 = vunpack.c.l.b16 %v1267
        %v1396 = vunpack.c.l.b16 %v1268
        %v1397 = vunpack.c.l.b16 %v1269
        %v1398 = vunpack.c.l.b16 %v1270
        %v1399 = vunpack.c.l.b16 %v1271
        %v1400 = vunpack.c.l.b16 %v1272
        %v1401 = vunpack.c.l.b16 %v1273
        %v1402 = vunpack.c.l.b16 %v1274
        %v1403 = vunpack.c.l.b16 %v1275
        %v1404 = vunpack.c.l.b16 %v1276
        %v1405 = vunpack.c.l.b16 %v1277
        %v1406 = vunpack.c.l.b16 %v1278
        %v1407 = vunpack.c.l.b16 %v1279
        %v1408 = vunpack.c.l.b16 %v1280
        %v1409 = vunpack.c.l.b16 %v1281
        %v1410 = vunpack.c.l.b16 %v1282
        %v1411 = vunpack.c.l.b16 %v1283
        %v1412 = vunpack.c.l.b16 %v1284
        %v1413 = vunpack.c.l.b16 %v1285
        %v1414 = vunpack.c.l.b16 %v1286
        %v1415 = vunpack.c.l.b16 %v1287
        %v1416 = vunpack.c.l.b16 %v1288
        %v1417 = vunpack.c.l.b16 %v1289
        %v1418 = vunpack.c.l.b16 %v1290
        %v1419 = vunpack.c.l.b16 %v1291
        %v1420 = vunpack.c.l.b16 %v1292
        %v1421 = vunpack.c.l.b16 %v1293
        %v1422 = vunpack.c.l.b16 %v1294
        %v1423 = vunpack.c.l.b16 %v1295
        %v1424 = vunpack.c.l.b16 %v1296
        %v1425 = vunpack.c.l.b16 %v1297
        %v1426 = vunpack.c.l.b16 %v1298
        %v1427 = vunpack.c.l.b16 %v1299
        %v1428 = vunpack.c.l.b16 %v1300
        %v1429 = vunpack.c.l.b16 %v1301
        %v1430 = vunpack.c.l.b16 %v1302
        %v1431 = vunpack.c.l.b16 %v1303
        %v1432 = vunpack.c.l.b16 %v1304
        %v1433 = vunpack.c.l.b16 %v1305
        %v1434 = vunpack.c.l.b16 %v1306
        %v1435 = vunpack.c.l.b16 %v1307
        %v1436 = vunpack.c.l.b16 %v1308
        %v1437 = vunpack.c.l.b16 %v1309
        %v1438 = vunpack.c.l.b16 %v1310
        %v1439 = vunpack.c.l.b16 %v1311
        %v1440 = vunpack.c.l.b16 %v1312
        %v1441 = vunpack.c.l.b16 %v1313
        %v1442 = vunpack.c.l.b16 %v1314
        %v1443 = vunpack.c.l.b16 %v1315
        %v1444 = vunpack.c.l.b16 %v1316
        %v1445 = vunpack.c.l.b16 %v1317
        %v1446 = vunpack.c.l.b16 %v1318
        %v1447 = vunpack.c.l.b16 %v1319
        %v1448 = vunpack.c.l.b16 %v1320
        %v1449 = vunpack.c.l.b16 %v1321
        %v1450 = vunpack.c.l.b16 %v1322
        %v1451 = vunpack.c.l.b16 %v1323
        %v1452 = vunpack.c.l.b16 %v1324
        %v1453 = vunpack.c.l.b16 %v1325
        %v1454 = vunpack.c.l.b16 %v1326
        %v1455 = vunpack.c.l.b16 %v1327
        %v1456 = vunpack.c.l.b16 %v1328
        %v1457 = vunpack.c.l.b16 %v1329
        %v1458 = vpack.c.b16 %v1395, %v1394
        %v1459 = vpack.c.b16 %v1397, %v1396
        %v1460 = vpack.c.b16 %v1399, %v1398
        %v1461 = vpack.c.b16 %v1401, %v1400
        %v1462 = vpack.c.b16 %v1403, %v1402
        %v1463 = vpack.c.b16 %v1405, %v1404
        %v1464 = vpack.c.b16 %v1407, %v1406
        %v1465 = vpack.c.b16 %v1409, %v1408
        %v1466 = vpack.c.b16 %v1411, %v1410
        %v1467 = vpack.c.b16 %v1413, %v1412
        %v1468 = vpack.c.b16 %v1415, %v1414
        %v1469 = vpack.c.b16 %v1417, %v1416
        %v1470 = vpack.c.b16 %v1419, %v1418
        %v1471 = vpack.c.b16 %v1421, %v1420
        %v1472 = vpack.c.b16 %v1423, %v1422
        %v1473 = vpack.c.b16 %v1425, %v1424
        %v1474 = vpack.c.b16 %v1427, %v1426
        %v1475 = vpack.c.b16 %v1429, %v1428
        %v1476 = vpack.c.b16 %v1431, %v1430
        %v1477 = vpack.c.b16 %v1433, %v1432
        %v1478 = vpack.c.b16 %v1435, %v1434
        %v1479 = vpack.c.b16 %v1437, %v1436
        %v1480 = vpack.c.b16 %v1439, %v1438
        %v1481 = vpack.c.b16 %v1441, %v1440
        %v1482 = vpack.c.b16 %v1443, %v1442
        %v1483 = vpack.c.b16 %v1445, %v1444
        %v1484 = vpack.c.b16 %v1447, %v1446
        %v1485 = vpack.c.b16 %v1449, %v1448
        %v1486 = vpack.c.b16 %v1451, %v1450
        %v1487 = vpack.c.b16 %v1453, %v1452
        %v1488 = vpack.c.b16 %v1455, %v1454
        %v1489 = vpack.c.b16 %v1457, %v1456
        %1522 = vmatprep.subr.bf16.mxu0 0
        %1523 = vmatpush1.bf16.msra.mxu0 %v1465
        %1524 = vmatprep.subr.bf16.mxu0 0
        %1525 = vmatpush1.bf16.msra.mxu0 %v1464
        %1526 = vmatprep.subr.bf16.mxu0 0
        %1527 = vmatpush1.bf16.msra.mxu0 %v1463
        %1528 = vmatprep.subr.bf16.mxu0 0
        %1529 = vmatpush1.bf16.msra.mxu0 %v1462
        %1530 = vmatprep.subr.bf16.mxu0 0
        %1531 = vmatpush1.bf16.msra.mxu0 %v1461
        %1532 = vmatprep.subr.bf16.mxu0 0
        %1533 = vmatpush1.bf16.msra.mxu0 %v1460
        %1534 = vmatprep.subr.bf16.mxu0 0
        %1535 = vmatpush1.bf16.msra.mxu0 %v1459
        %1536 = vmatprep.subr.bf16.mxu0 0
        %1537 = vmatpush1.bf16.msra.mxu0 %v1458
        %1538 = vmatprep.subr.bf16.mxu0 0
        %1539 = vmatpush2.bf16.msra.mxu0 %v1473
        %1540 = vmatprep.subr.bf16.mxu0 0
        %1541 = vmatpush2.bf16.msra.mxu0 %v1472
        %1542 = vmatprep.subr.bf16.mxu0 0
        %1543 = vmatpush2.bf16.msra.mxu0 %v1471
        %1544 = vmatprep.subr.bf16.mxu0 0
        %1545 = vmatpush2.bf16.msra.mxu0 %v1470
        %1546 = vmatprep.subr.bf16.mxu0 0
        %1547 = vmatpush2.bf16.msra.mxu0 %v1469
        %1548 = vmatprep.subr.bf16.mxu0 0
        %1549 = vmatpush2.bf16.msra.mxu0 %v1468
        %1550 = vmatprep.subr.bf16.mxu0 0
        %1551 = vmatpush2.bf16.msra.mxu0 %v1467
        %1552 = vmatprep.subr.bf16.mxu0 0
        %1553 = vmatpush2.bf16.msra.mxu0 %v1466
        %1554 = vmatprep.mubr.bf16.mxu0 %v1263
        %1555 = vmatmul.mubr.bf16.gmra.mxu0 %v1262
        %v1556 = vpop.f32.mrf.mxu0
        %v1557 = vadd.f32 %v693, %v1556
        %v1558 = vpop.f32.mrf.mxu0
        %v1559 = vpop.f32.mrf.mxu0
        %v1560 = vadd.f32 %v693, %v1559
        %v1561 = vpop.f32.mrf.mxu0
        %1562 = vdwg.mxu0
        %1563 = vmatprep.subr.bf16.mxu0 0
        %1564 = vmatpush1.bf16.msra.mxu0 %v1481
        %1565 = vmatprep.subr.bf16.mxu0 0
        %1566 = vmatpush1.bf16.msra.mxu0 %v1480
        %1567 = vmatprep.subr.bf16.mxu0 0
        %1568 = vmatpush1.bf16.msra.mxu0 %v1479
        %1569 = vmatprep.subr.bf16.mxu0 0
        %1570 = vmatpush1.bf16.msra.mxu0 %v1478
        %1571 = vmatprep.subr.bf16.mxu0 0
        %1572 = vmatpush1.bf16.msra.mxu0 %v1477
        %1573 = vmatprep.subr.bf16.mxu0 0
        %1574 = vmatpush1.bf16.msra.mxu0 %v1476
        %1575 = vmatprep.subr.bf16.mxu0 0
        %1576 = vmatpush1.bf16.msra.mxu0 %v1475
        %1577 = vmatprep.subr.bf16.mxu0 0
        %1578 = vmatpush1.bf16.msra.mxu0 %v1474
        %1579 = vmatprep.subr.bf16.mxu0 0
        %1580 = vmatpush2.bf16.msra.mxu0 %v1489
        %1581 = vmatprep.subr.bf16.mxu0 0
        %1582 = vmatpush2.bf16.msra.mxu0 %v1488
        %1583 = vmatprep.subr.bf16.mxu0 0
        %1584 = vmatpush2.bf16.msra.mxu0 %v1487
        %1585 = vmatprep.subr.bf16.mxu0 0
        %1586 = vmatpush2.bf16.msra.mxu0 %v1486
        %1587 = vmatprep.subr.bf16.mxu0 0
        %1588 = vmatpush2.bf16.msra.mxu0 %v1485
        %1589 = vmatprep.subr.bf16.mxu0 0
        %1590 = vmatpush2.bf16.msra.mxu0 %v1484
        %1591 = vmatprep.subr.bf16.mxu0 0
        %1592 = vmatpush2.bf16.msra.mxu0 %v1483
        %1593 = vmatprep.subr.bf16.mxu0 0
        %1594 = vmatpush2.bf16.msra.mxu0 %v1482
        %1595 = vmatprep.mubr.bf16.mxu0 %v1265
        %1596 = vmatmul.mubr.bf16.gmra.mxu0 %v1264
        %v1597 = vpop.f32.mrf.mxu0
        %v1598 = vadd.f32 %v1557, %v1597
        %v1599 = vpop.f32.mrf.mxu0
        %v1600 = vpop.f32.mrf.mxu0
        %v1601 = vadd.f32 %v1560, %v1600
        %v1602 = vpop.f32.mrf.mxu0
        %1603 = vdwg.mxu0
        %v1604 = vmul.f32 %v694, %v1598
        %v1605 = vmul.f32 %v694, %v1601
        %v1606 = vadd.f32 %v686, %v1604
        %v1607 = vadd.f32 %v687, %v1605
        %v1608 = vld [vmem:[#allocation7 + $0x41] ss:$0 sm:$0xff]
        %v1609 = vld [vmem:[#allocation7 + $0x42] ss:$0 sm:$0xff]
        %v1610 = vld [vmem:[#allocation7 + $0x43] ss:$0 sm:$0xff]
        %s1611 = scalar_lea.vmem [#allocation7], 68
        %v1612 = vld [vmem:[%s1611] ss:$8 sm:$0xf]
        %v1613 = vld [vmem:[#allocation7 + $0x45] ss:$0 sm:$0xff]
        %v1614 = vld [vmem:[#allocation7 + $0x46] ss:$0 sm:$0xff]
        %s1615 = scalar_lea.vmem [#allocation8], 256
        %v1616 = vld [vmem:[%s1615] sm:$0xff]
        %v1617 = vld [vmem:[%s1615 + $0x8] sm:$0xff]
        %v1618 = vmul.f32 %v1616, %v1606
        %v1619 = vmul.f32 %v1617, %v1607
        %v1622 = vrot.slane %v1606, 1
        %v1623 = vrot.slane %v1607, 1
        %v1624 = vsel %vm701, %v1622, %v1623
        %v1628 = vsel %vm701, %v1623, %v1622
        %s1629 = scalar_lea.vmem [#allocation8], 272
        %v1630 = vld [vmem:[%s1629] sm:$0xff]
        %v1631 = vld [vmem:[%s1629 + $0x8] sm:$0xff]
        %v1632 = vmul.f32 %v1630, %v1624
        %v1633 = vmul.f32 %v1631, %v1628
        %v1634 = vrot.slane %v1606, 2
        %v1635 = vrot.slane %v1607, 2
        %v1636 = vsel %vm714, %v1634, %v1635
        %v1640 = vsel %vm714, %v1635, %v1634
        %s1641 = scalar_lea.vmem [#allocation8], 288
        %v1642 = vld [vmem:[%s1641] sm:$0xff]
        %v1643 = vld [vmem:[%s1641 + $0x8] sm:$0xff]
        %v1644 = vmul.f32 %v1642, %v1636
        %v1645 = vmul.f32 %v1643, %v1640
        %v1646 = vrot.slane %v1606, 3
        %v1647 = vrot.slane %v1607, 3
        %v1648 = vsel %vm727, %v1646, %v1647
        %v1652 = vsel %vm727, %v1647, %v1646
        %s1653 = scalar_lea.vmem [#allocation8], 304
        %v1654 = vld [vmem:[%s1653] sm:$0xff]
        %v1655 = vld [vmem:[%s1653 + $0x8] sm:$0xff]
        %v1656 = vmul.f32 %v1654, %v1648
        %v1657 = vmul.f32 %v1655, %v1652
        %v1658 = vrot.slane %v1606, 4
        %v1659 = vrot.slane %v1607, 4
        %v1660 = vsel %vm740, %v1658, %v1659
        %v1664 = vsel %vm740, %v1659, %v1658
        %s1665 = scalar_lea.vmem [#allocation8], 320
        %v1666 = vld [vmem:[%s1665] sm:$0xff]
        %v1667 = vld [vmem:[%s1665 + $0x8] sm:$0xff]
        %v1668 = vmul.f32 %v1666, %v1660
        %v1669 = vmul.f32 %v1667, %v1664
        %v1670 = vrot.slane %v1606, 5
        %v1671 = vrot.slane %v1607, 5
        %v1672 = vsel %vm753, %v1670, %v1671
        %v1676 = vsel %vm753, %v1671, %v1670
        %s1677 = scalar_lea.vmem [#allocation8], 336
        %v1678 = vld [vmem:[%s1677] sm:$0xff]
        %v1679 = vld [vmem:[%s1677 + $0x8] sm:$0xff]
        %v1680 = vmul.f32 %v1678, %v1672
        %v1681 = vmul.f32 %v1679, %v1676
        %v1682 = vrot.slane %v1606, 6
        %v1683 = vrot.slane %v1607, 6
        %v1684 = vsel %vm766, %v1682, %v1683
        %v1688 = vsel %vm766, %v1683, %v1682
        %s1689 = scalar_lea.vmem [#allocation8], 352
        %v1690 = vld [vmem:[%s1689] sm:$0xff]
        %v1691 = vld [vmem:[%s1689 + $0x8] sm:$0xff]
        %v1692 = vmul.f32 %v1690, %v1684
        %v1693 = vmul.f32 %v1691, %v1688
        %v1694 = vrot.slane %v1606, 7
        %v1695 = vrot.slane %v1607, 7
        %v1696 = vsel %vm779, %v1694, %v1695
        %v1700 = vsel %vm779, %v1695, %v1694
        %s1701 = scalar_lea.vmem [#allocation8], 368
        %v1702 = vld [vmem:[%s1701] sm:$0xff]
        %v1703 = vld [vmem:[%s1701 + $0x8] sm:$0xff]
        %v1704 = vmul.f32 %v1702, %v1696
        %v1705 = vmul.f32 %v1703, %v1700
        %s1706 = scalar_lea.vmem [#allocation8], 384
        %v1707 = vld [vmem:[%s1706] sm:$0xff]
        %v1708 = vld [vmem:[%s1706 + $0x8] sm:$0xff]
        %v1709 = vmul.f32 %v1707, %v1607
        %v1710 = vmul.f32 %v1708, %v1606
        %s1711 = scalar_lea.vmem [#allocation8], 400
        %v1712 = vld [vmem:[%s1711] sm:$0xff]
        %v1713 = vld [vmem:[%s1711 + $0x8] sm:$0xff]
        %v1714 = vmul.f32 %v1712, %v1628
        %v1715 = vmul.f32 %v1713, %v1624
        %s1716 = scalar_lea.vmem [#allocation8], 416
        %v1717 = vld [vmem:[%s1716] sm:$0xff]
        %v1718 = vld [vmem:[%s1716 + $0x8] sm:$0xff]
        %v1719 = vmul.f32 %v1717, %v1640
        %v1720 = vmul.f32 %v1718, %v1636
        %s1721 = scalar_lea.vmem [#allocation8], 432
        %v1722 = vld [vmem:[%s1721] sm:$0xff]
        %v1723 = vld [vmem:[%s1721 + $0x8] sm:$0xff]
        %v1724 = vmul.f32 %v1722, %v1652
        %v1725 = vmul.f32 %v1723, %v1648
        %s1726 = scalar_lea.vmem [#allocation8], 448
        %v1727 = vld [vmem:[%s1726] sm:$0xff]
        %v1728 = vld [vmem:[%s1726 + $0x8] sm:$0xff]
        %v1729 = vmul.f32 %v1727, %v1664
        %v1730 = vmul.f32 %v1728, %v1660
        %s1731 = scalar_lea.vmem [#allocation8], 464
        %v1732 = vld [vmem:[%s1731] sm:$0xff]
        %v1733 = vld [vmem:[%s1731 + $0x8] sm:$0xff]
        %v1734 = vmul.f32 %v1732, %v1676
        %v1735 = vmul.f32 %v1733, %v1672
        %s1736 = scalar_lea.vmem [#allocation8], 480
        %v1737 = vld [vmem:[%s1736] sm:$0xff]
        %v1738 = vld [vmem:[%s1736 + $0x8] sm:$0xff]
        %v1739 = vmul.f32 %v1737, %v1688
        %v1740 = vmul.f32 %v1738, %v1684
        %s1741 = scalar_lea.vmem [#allocation8], 496
        %v1742 = vld [vmem:[%s1741] sm:$0xff]
        %v1743 = vld [vmem:[%s1741 + $0x8] sm:$0xff]
        %v1744 = vmul.f32 %v1742, %v1700
        %v1745 = vmul.f32 %v1743, %v1696
        %v1746 = vadd.f32 %v1618, %v1632
        %v1747 = vadd.f32 %v1619, %v1633
        %v1748 = vadd.f32 %v1644, %v1656
        %v1749 = vadd.f32 %v1645, %v1657
        %v1750 = vadd.f32 %v1668, %v1680
        %v1751 = vadd.f32 %v1669, %v1681
        %v1752 = vadd.f32 %v1692, %v1704
        %v1753 = vadd.f32 %v1693, %v1705
        %v1754 = vadd.f32 %v1709, %v1714
        %v1755 = vadd.f32 %v1710, %v1715
        %v1756 = vadd.f32 %v1719, %v1724
        %v1757 = vadd.f32 %v1720, %v1725
        %v1758 = vadd.f32 %v1729, %v1734
        %v1759 = vadd.f32 %v1730, %v1735
        %v1760 = vadd.f32 %v1739, %v1744
        %v1761 = vadd.f32 %v1740, %v1745
        %v1762 = vadd.f32 %v1746, %v1748
        %v1763 = vadd.f32 %v1747, %v1749
        %v1764 = vadd.f32 %v1750, %v1752
        %v1765 = vadd.f32 %v1751, %v1753
        %v1766 = vadd.f32 %v1754, %v1756
        %v1767 = vadd.f32 %v1755, %v1757
        %v1768 = vadd.f32 %v1758, %v1760
        %v1769 = vadd.f32 %v1759, %v1761
        %v1770 = vadd.f32 %v1762, %v1764
        %v1771 = vadd.f32 %v1763, %v1765
        %v1772 = vadd.f32 %v1766, %v1768
        %v1773 = vadd.f32 %v1767, %v1769
        %v1774 = vadd.f32 %v1770, %v1772
        %v1775 = vadd.f32 %v1771, %v1773
        %v1776 = vadd.f32 %v1774, %v1608
        %v1777 = vadd.f32 %v1775, %v1608
        %1778 = vadd.xlane.f32.xlu0 %v1776
        %v1779 = vpop.xlane.xlu0 %1778
        %1780 = vadd.xlane.f32.xlu0 %v1777
        %v1781 = vpop.xlane.xlu0 %1780
        %v1782 = vmul.f32 %v1779, %v665
        %v1783 = vmul.f32 %v1781, %v665
        %v1784 = vsub.f32 %v1776, %v1782
        %v1785 = vsub.f32 %v1777, %v1783
        %v1786 = vmul.f32 %v1784, %v1784
        %v1787 = vmul.f32 %v1785, %v1785
        %1788 = vadd.xlane.f32.xlu0 %v1786
        %v1789 = vpop.xlane.xlu0 %1788
        %1790 = vadd.xlane.f32.xlu0 %v1787
        %v1791 = vpop.xlane.xlu0 %1790
        %v1792 = vmul.f32 %v1789, %v665
        %v1793 = vmul.f32 %v1791, %v665
        %v1794 = vadd.f32 %v1792, 1e-06
        %v1795 = vadd.f32 %v1793, 1e-06
        %v1796 = vrsqrt.pop %v1794
        %v1797 = vrsqrt.pop %v1795
        %v1798 = vmul.f32 %v1784, %v1796
        %v1799 = vmul.f32 %v1785, %v1797
        %v1800 = vmul.f32 %v1798, %v1609
        %v1801 = vmul.f32 %v1799, %v1609
        %v1802 = vadd.f32 %v1800, %v1610
        %v1803 = vadd.f32 %v1801, %v1610
        %v1804 = vpack.c.bf16 %v1803, %v1802
        %s1805 = scalar_lea.vmem [#allocation10], 256
        %v1806 = vld [vmem:[%s1805] sm:$0xff]
        %v1807 = vld [vmem:[%s1805 + $0x8] sm:$0xff]
        %v1808 = vld [vmem:[%s1805 + $0x10] sm:$0xff]
        %v1809 = vld [vmem:[%s1805 + $0x18] sm:$0xff]
        %v1810 = vld [vmem:[%s1805 + $0x20] sm:$0xff]
        %v1811 = vld [vmem:[%s1805 + $0x28] sm:$0xff]
        %v1812 = vld [vmem:[%s1805 + $0x30] sm:$0xff]
        %v1813 = vld [vmem:[%s1805 + $0x38] sm:$0xff]
        %v1814 = vld [vmem:[%s1805 + $0x40] sm:$0xff]
        %v1815 = vld [vmem:[%s1805 + $0x48] sm:$0xff]
        %v1816 = vld [vmem:[%s1805 + $0x50] sm:$0xff]
        %v1817 = vld [vmem:[%s1805 + $0x58] sm:$0xff]
        %v1818 = vld [vmem:[%s1805 + $0x60] sm:$0xff]
        %v1819 = vld [vmem:[%s1805 + $0x68] sm:$0xff]
        %v1820 = vld [vmem:[%s1805 + $0x70] sm:$0xff]
        %v1821 = vld [vmem:[%s1805 + $0x78] sm:$0xff]
        %v1822 = vld [vmem:[%s1805 + $0x80] sm:$0xff]
        %v1823 = vld [vmem:[%s1805 + $0x88] sm:$0xff]
        %v1824 = vld [vmem:[%s1805 + $0x90] sm:$0xff]
        %v1825 = vld [vmem:[%s1805 + $0x98] sm:$0xff]
        %v1826 = vld [vmem:[%s1805 + $0xa0] sm:$0xff]
        %v1827 = vld [vmem:[%s1805 + $0xa8] sm:$0xff]
        %v1828 = vld [vmem:[%s1805 + $0xb0] sm:$0xff]
        %v1829 = vld [vmem:[%s1805 + $0xb8] sm:$0xff]
        %v1830 = vld [vmem:[%s1805 + $0xc0] sm:$0xff]
        %v1831 = vld [vmem:[%s1805 + $0xc8] sm:$0xff]
        %v1832 = vld [vmem:[%s1805 + $0xd0] sm:$0xff]
        %v1833 = vld [vmem:[%s1805 + $0xd8] sm:$0xff]
        %v1834 = vld [vmem:[%s1805 + $0xe0] sm:$0xff]
        %v1835 = vld [vmem:[%s1805 + $0xe8] sm:$0xff]
        %v1836 = vld [vmem:[%s1805 + $0xf0] sm:$0xff]
        %v1837 = vld [vmem:[%s1805 + $0xf8] sm:$0xff]
        %v1839 = vlaneseq
        %v1840 = vshrl.u32 %v1839, 7
        %v1841 = vsub.s32 0, %v1840
        %v1842 = vrot.slane %v1612, %v1841
        %v1843 = vlaneseq
        %v1844 = vshrl.u32 %v1843, 7
        %v1845 = vsub.s32 1, %v1844
        %v1846 = vrot.slane %v1612, %v1845
        %v1847 = vlaneseq
        %v1848 = vshrl.u32 %v1847, 7
        %v1849 = vsub.s32 2, %v1848
        %v1850 = vrot.slane %v1612, %v1849
        %v1851 = vlaneseq
        %v1852 = vshrl.u32 %v1851, 7
        %v1853 = vsub.s32 3, %v1852
        %v1854 = vrot.slane %v1612, %v1853
        %v1891 = vunpack.c.l.b16 %v1806
        %v1892 = vunpack.c.h.b16 %v1806
        %v1893 = vunpack.c.l.b16 %v1807
        %v1894 = vunpack.c.h.b16 %v1807
        %v1895 = vunpack.c.l.b16 %v1808
        %v1896 = vunpack.c.h.b16 %v1808
        %v1897 = vunpack.c.l.b16 %v1809
        %v1898 = vunpack.c.h.b16 %v1809
        %v1899 = vunpack.c.l.b16 %v1810
        %v1900 = vunpack.c.h.b16 %v1810
        %v1901 = vunpack.c.l.b16 %v1811
        %v1902 = vunpack.c.h.b16 %v1811
        %v1903 = vunpack.c.l.b16 %v1812
        %v1904 = vunpack.c.h.b16 %v1812
        %v1905 = vunpack.c.l.b16 %v1813
        %v1906 = vunpack.c.h.b16 %v1813
        %v1907 = vunpack.c.l.b16 %v1814
        %v1908 = vunpack.c.h.b16 %v1814
        %v1909 = vunpack.c.l.b16 %v1815
        %v1910 = vunpack.c.h.b16 %v1815
        %v1911 = vunpack.c.l.b16 %v1816
        %v1912 = vunpack.c.h.b16 %v1816
        %v1913 = vunpack.c.l.b16 %v1817
        %v1914 = vunpack.c.h.b16 %v1817
        %v1915 = vunpack.c.l.b16 %v1818
        %v1916 = vunpack.c.h.b16 %v1818
        %v1917 = vunpack.c.l.b16 %v1819
        %v1918 = vunpack.c.h.b16 %v1819
        %v1919 = vunpack.c.l.b16 %v1820
        %v1920 = vunpack.c.h.b16 %v1820
        %v1921 = vunpack.c.l.b16 %v1821
        %v1922 = vunpack.c.h.b16 %v1821
        %v1923 = vunpack.c.l.b16 %v1822
        %v1924 = vunpack.c.h.b16 %v1822
        %v1925 = vunpack.c.l.b16 %v1823
        %v1926 = vunpack.c.h.b16 %v1823
        %v1927 = vunpack.c.l.b16 %v1824
        %v1928 = vunpack.c.h.b16 %v1824
        %v1929 = vunpack.c.l.b16 %v1825
        %v1930 = vunpack.c.h.b16 %v1825
        %v1931 = vunpack.c.l.b16 %v1826
        %v1932 = vunpack.c.h.b16 %v1826
        %v1933 = vunpack.c.l.b16 %v1827
        %v1934 = vunpack.c.h.b16 %v1827
        %v1935 = vunpack.c.l.b16 %v1828
        %v1936 = vunpack.c.h.b16 %v1828
        %v1937 = vunpack.c.l.b16 %v1829
        %v1938 = vunpack.c.h.b16 %v1829
        %v1939 = vunpack.c.l.b16 %v1830
        %v1940 = vunpack.c.h.b16 %v1830
        %v1941 = vunpack.c.l.b16 %v1831
        %v1942 = vunpack.c.h.b16 %v1831
        %v1943 = vunpack.c.l.b16 %v1832
        %v1944 = vunpack.c.h.b16 %v1832
        %v1945 = vunpack.c.l.b16 %v1833
        %v1946 = vunpack.c.h.b16 %v1833
        %v1947 = vunpack.c.l.b16 %v1834
        %v1948 = vunpack.c.h.b16 %v1834
        %v1949 = vunpack.c.l.b16 %v1835
        %v1950 = vunpack.c.h.b16 %v1835
        %v1951 = vunpack.c.l.b16 %v1836
        %v1952 = vunpack.c.h.b16 %v1836
        %v1953 = vunpack.c.l.b16 %v1837
        %v1954 = vunpack.c.h.b16 %v1837
        %v1955 = vpack.c.b16 %v1895, %v1891
        %v1956 = vpack.c.b16 %v1896, %v1892
        %v1957 = vpack.c.b16 %v1897, %v1893
        %v1958 = vpack.c.b16 %v1898, %v1894
        %v1959 = vpack.c.b16 %v1903, %v1899
        %v1960 = vpack.c.b16 %v1904, %v1900
        %v1961 = vpack.c.b16 %v1905, %v1901
        %v1962 = vpack.c.b16 %v1906, %v1902
        %v1963 = vpack.c.b16 %v1911, %v1907
        %v1964 = vpack.c.b16 %v1912, %v1908
        %v1965 = vpack.c.b16 %v1913, %v1909
        %v1966 = vpack.c.b16 %v1914, %v1910
        %v1967 = vpack.c.b16 %v1919, %v1915
        %v1968 = vpack.c.b16 %v1920, %v1916
        %v1969 = vpack.c.b16 %v1921, %v1917
        %v1970 = vpack.c.b16 %v1922, %v1918
        %v1971 = vpack.c.b16 %v1927, %v1923
        %v1972 = vpack.c.b16 %v1928, %v1924
        %v1973 = vpack.c.b16 %v1929, %v1925
        %v1974 = vpack.c.b16 %v1930, %v1926
        %v1975 = vpack.c.b16 %v1935, %v1931
        %v1976 = vpack.c.b16 %v1936, %v1932
        %v1977 = vpack.c.b16 %v1937, %v1933
        %v1978 = vpack.c.b16 %v1938, %v1934
        %v1979 = vpack.c.b16 %v1943, %v1939
        %v1980 = vpack.c.b16 %v1944, %v1940
        %v1981 = vpack.c.b16 %v1945, %v1941
        %v1982 = vpack.c.b16 %v1946, %v1942
        %v1983 = vpack.c.b16 %v1951, %v1947
        %v1984 = vpack.c.b16 %v1952, %v1948
        %v1985 = vpack.c.b16 %v1953, %v1949
        %v1986 = vpack.c.b16 %v1954, %v1950
        %2019 = vmatprep.subr.bf16.mxu0 %v1984
        %2020 = vmatpush1.bf16.msra.mxu0 %v1983
        %2021 = vmatprep.subr.bf16.mxu0 %v1980
        %2022 = vmatpush1.bf16.msra.mxu0 %v1979
        %2023 = vmatprep.subr.bf16.mxu0 %v1976
        %2024 = vmatpush1.bf16.msra.mxu0 %v1975
        %2025 = vmatprep.subr.bf16.mxu0 %v1972
        %2026 = vmatpush1.bf16.msra.mxu0 %v1971
        %2027 = vmatprep.subr.bf16.mxu0 %v1968
        %2028 = vmatpush1.bf16.msra.mxu0 %v1967
        %2029 = vmatprep.subr.bf16.mxu0 %v1964
        %2030 = vmatpush1.bf16.msra.mxu0 %v1963
        %2031 = vmatprep.subr.bf16.mxu0 %v1960
        %2032 = vmatpush1.bf16.msra.mxu0 %v1959
        %2033 = vmatprep.subr.bf16.mxu0 %v1956
        %2034 = vmatpush1.bf16.msra.mxu0 %v1955
        %2035 = vmatprep.subr.bf16.mxu0 0
        %2036 = vmatpush2.bf16.msra.mxu0 0
        %2037 = vmatprep.subr.bf16.mxu0 0
        %2038 = vmatpush2.bf16.msra.mxu0 0
        %2039 = vmatprep.subr.bf16.mxu0 0
        %2040 = vmatpush2.bf16.msra.mxu0 0
        %2041 = vmatprep.subr.bf16.mxu0 0
        %2042 = vmatpush2.bf16.msra.mxu0 0
        %2043 = vmatprep.subr.bf16.mxu0 0
        %2044 = vmatpush2.bf16.msra.mxu0 0
        %2045 = vmatprep.subr.bf16.mxu0 0
        %2046 = vmatpush2.bf16.msra.mxu0 0
        %2047 = vmatprep.subr.bf16.mxu0 0
        %2048 = vmatpush2.bf16.msra.mxu0 0
        %2049 = vmatprep.subr.bf16.mxu0 0
        %2050 = vmatpush2.bf16.msra.mxu0 0
        %2051 = vmatprep.mubr.bf16.mxu0 0
        %2052 = vmatmul.mubr.bf16.gmra.mxu0 %v1804
        %v2053 = vpop.f32.mrf.mxu0
        %v2054 = vadd.f32 %v1842, %v2053
        %v2055 = vpop.f32.mrf.mxu0
        %v2056 = vadd.f32 %v1846, %v2055
        %v2057 = vpop.f32.mrf.mxu0
        %v2058 = vadd.f32 %v1842, %v2057
        %v2059 = vpop.f32.mrf.mxu0
        %v2060 = vadd.f32 %v1846, %v2059
        %2061 = vdwg.mxu0
        %2062 = vmatprep.subr.bf16.mxu0 %v1986
        %2063 = vmatpush1.bf16.msra.mxu0 %v1985
        %2064 = vmatprep.subr.bf16.mxu0 %v1982
        %2065 = vmatpush1.bf16.msra.mxu0 %v1981
        %2066 = vmatprep.subr.bf16.mxu0 %v1978
        %2067 = vmatpush1.bf16.msra.mxu0 %v1977
        %2068 = vmatprep.subr.bf16.mxu0 %v1974
        %2069 = vmatpush1.bf16.msra.mxu0 %v1973
        %2070 = vmatprep.subr.bf16.mxu0 %v1970
        %2071 = vmatpush1.bf16.msra.mxu0 %v1969
        %2072 = vmatprep.subr.bf16.mxu0 %v1966
        %2073 = vmatpush1.bf16.msra.mxu0 %v1965
        %2074 = vmatprep.subr.bf16.mxu0 %v1962
        %2075 = vmatpush1.bf16.msra.mxu0 %v1961
        %2076 = vmatprep.subr.bf16.mxu0 %v1958
        %2077 = vmatpush1.bf16.msra.mxu0 %v1957
        %2078 = vmatprep.subr.bf16.mxu0 0
        %2079 = vmatpush2.bf16.msra.mxu0 0
        %2080 = vmatprep.subr.bf16.mxu0 0
        %2081 = vmatpush2.bf16.msra.mxu0 0
        %2082 = vmatprep.subr.bf16.mxu0 0
        %2083 = vmatpush2.bf16.msra.mxu0 0
        %2084 = vmatprep.subr.bf16.mxu0 0
        %2085 = vmatpush2.bf16.msra.mxu0 0
        %2086 = vmatprep.subr.bf16.mxu0 0
        %2087 = vmatpush2.bf16.msra.mxu0 0
        %2088 = vmatprep.subr.bf16.mxu0 0
        %2089 = vmatpush2.bf16.msra.mxu0 0
        %2090 = vmatprep.subr.bf16.mxu0 0
        %2091 = vmatpush2.bf16.msra.mxu0 0
        %2092 = vmatprep.subr.bf16.mxu0 0
        %2093 = vmatpush2.bf16.msra.mxu0 0
        %2094 = vmatprep.mubr.bf16.mxu0 0
        %2095 = vmatmul.mubr.bf16.gmra.mxu0 %v1804
        %v2096 = vpop.f32.mrf.mxu0
        %v2097 = vadd.f32 %v1850, %v2096
        %v2098 = vpop.f32.mrf.mxu0
        %v2099 = vadd.f32 %v1854, %v2098
        %v2100 = vpop.f32.mrf.mxu0
        %v2101 = vadd.f32 %v1850, %v2100
        %v2102 = vpop.f32.mrf.mxu0
        %v2103 = vadd.f32 %v1854, %v2102
        %2104 = vdwg.mxu0
        %v2105 = vmul.f32 %v2054, 0.5
        %v2106 = vmul.f32 %v2056, 0.5
        %v2107 = vmul.f32 %v2097, 0.5
        %v2108 = vmul.f32 %v2099, 0.5
        %v2109 = vmul.f32 %v2058, 0.5
        %v2110 = vmul.f32 %v2060, 0.5
        %v2111 = vmul.f32 %v2101, 0.5
        %v2112 = vmul.f32 %v2103, 0.5
        %v2113 = vmul.f32 %v2054, 0.044715
        %v2114 = vmul.f32 %v2056, 0.044715
        %v2115 = vmul.f32 %v2097, 0.044715
        %v2116 = vmul.f32 %v2099, 0.044715
        %v2117 = vmul.f32 %v2058, 0.044715
        %v2118 = vmul.f32 %v2060, 0.044715
        %v2119 = vmul.f32 %v2101, 0.044715
        %v2120 = vmul.f32 %v2103, 0.044715
        %v2121 = vmul.f32 %v2113, %v2054
        %v2122 = vmul.f32 %v2114, %v2056
        %v2123 = vmul.f32 %v2115, %v2097
        %v2124 = vmul.f32 %v2116, %v2099
        %v2125 = vmul.f32 %v2117, %v2058
        %v2126 = vmul.f32 %v2118, %v2060
        %v2127 = vmul.f32 %v2119, %v2101
        %v2128 = vmul.f32 %v2120, %v2103
        %v2129 = vmul.f32 %v2121, %v2054
        %v2130 = vmul.f32 %v2122, %v2056
        %v2131 = vmul.f32 %v2123, %v2097
        %v2132 = vmul.f32 %v2124, %v2099
        %v2133 = vmul.f32 %v2125, %v2058
        %v2134 = vmul.f32 %v2126, %v2060
        %v2135 = vmul.f32 %v2127, %v2101
        %v2136 = vmul.f32 %v2128, %v2103
        %v2137 = vadd.f32 %v2054, %v2129
        %v2138 = vadd.f32 %v2056, %v2130
        %v2139 = vadd.f32 %v2097, %v2131
        %v2140 = vadd.f32 %v2099, %v2132
        %v2141 = vadd.f32 %v2058, %v2133
        %v2142 = vadd.f32 %v2060, %v2134
        %v2143 = vadd.f32 %v2101, %v2135
        %v2144 = vadd.f32 %v2103, %v2136
        %v2145 = vmul.f32 %v2137, 0.7978846
        %v2146 = vmul.f32 %v2138, 0.7978846
        %v2147 = vmul.f32 %v2139, 0.7978846
        %v2148 = vmul.f32 %v2140, 0.7978846
        %v2149 = vmul.f32 %v2141, 0.7978846
        %v2150 = vmul.f32 %v2142, 0.7978846
        %v2151 = vmul.f32 %v2143, 0.7978846
        %v2152 = vmul.f32 %v2144, 0.7978846
        %v2153 = vtanh.pop %v2145
        %v2154 = vtanh.pop %v2146
        %v2155 = vtanh.pop %v2147
        %v2156 = vtanh.pop %v2148
        %v2157 = vtanh.pop %v2149
        %v2158 = vtanh.pop %v2150
        %v2159 = vtanh.pop %v2151
        %v2160 = vtanh.pop %v2152
        %v2161 = vadd.f32 %v2153, 1.0
        %v2162 = vadd.f32 %v2154, 1.0
        %v2163 = vadd.f32 %v2155, 1.0
        %v2164 = vadd.f32 %v2156, 1.0
        %v2165 = vadd.f32 %v2157, 1.0
        %v2166 = vadd.f32 %v2158, 1.0
        %v2167 = vadd.f32 %v2159, 1.0
        %v2168 = vadd.f32 %v2160, 1.0
        %v2169 = vmul.f32 %v2105, %v2161
        %v2170 = vmul.f32 %v2106, %v2162
        %v2171 = vmul.f32 %v2107, %v2163
        %v2172 = vmul.f32 %v2108, %v2164
        %v2173 = vmul.f32 %v2109, %v2165
        %v2174 = vmul.f32 %v2110, %v2166
        %v2175 = vmul.f32 %v2111, %v2167
        %v2176 = vmul.f32 %v2112, %v2168
        %v2177 = vpack.c.bf16 %v2173, %v2169
        %v2178 = vpack.c.bf16 %v2174, %v2170
        %v2179 = vpack.c.bf16 %v2175, %v2171
        %v2180 = vpack.c.bf16 %v2176, %v2172
        %s2181 = scalar_lea.vmem [#allocation11], 256
        %v2182 = vld [vmem:[%s2181] sm:$0xf]
        %v2183 = vld [vmem:[%s2181 + $0x4] sm:$0xf]
        %v2184 = vld [vmem:[%s2181 + $0x8] sm:$0xf]
        %v2185 = vld [vmem:[%s2181 + $0xc] sm:$0xf]
        %v2186 = vld [vmem:[%s2181 + $0x10] sm:$0xf]
        %v2187 = vld [vmem:[%s2181 + $0x14] sm:$0xf]
        %v2188 = vld [vmem:[%s2181 + $0x18] sm:$0xf]
        %v2189 = vld [vmem:[%s2181 + $0x1c] sm:$0xf]
        %v2190 = vld [vmem:[%s2181 + $0x20] sm:$0xf]
        %v2191 = vld [vmem:[%s2181 + $0x24] sm:$0xf]
        %v2192 = vld [vmem:[%s2181 + $0x28] sm:$0xf]
        %v2193 = vld [vmem:[%s2181 + $0x2c] sm:$0xf]
        %v2194 = vld [vmem:[%s2181 + $0x30] sm:$0xf]
        %v2195 = vld [vmem:[%s2181 + $0x34] sm:$0xf]
        %v2196 = vld [vmem:[%s2181 + $0x38] sm:$0xf]
        %v2197 = vld [vmem:[%s2181 + $0x3c] sm:$0xf]
        %v2198 = vld [vmem:[%s2181 + $0x40] sm:$0xf]
        %v2199 = vld [vmem:[%s2181 + $0x44] sm:$0xf]
        %v2200 = vld [vmem:[%s2181 + $0x48] sm:$0xf]
        %v2201 = vld [vmem:[%s2181 + $0x4c] sm:$0xf]
        %v2202 = vld [vmem:[%s2181 + $0x50] sm:$0xf]
        %v2203 = vld [vmem:[%s2181 + $0x54] sm:$0xf]
        %v2204 = vld [vmem:[%s2181 + $0x58] sm:$0xf]
        %v2205 = vld [vmem:[%s2181 + $0x5c] sm:$0xf]
        %v2206 = vld [vmem:[%s2181 + $0x60] sm:$0xf]
        %v2207 = vld [vmem:[%s2181 + $0x64] sm:$0xf]
        %v2208 = vld [vmem:[%s2181 + $0x68] sm:$0xf]
        %v2209 = vld [vmem:[%s2181 + $0x6c] sm:$0xf]
        %v2210 = vld [vmem:[%s2181 + $0x70] sm:$0xf]
        %v2211 = vld [vmem:[%s2181 + $0x74] sm:$0xf]
        %v2212 = vld [vmem:[%s2181 + $0x78] sm:$0xf]
        %v2213 = vld [vmem:[%s2181 + $0x7c] sm:$0xf]
        %v2214 = vld [vmem:[%s2181 + $0x80] sm:$0xf]
        %v2215 = vld [vmem:[%s2181 + $0x84] sm:$0xf]
        %v2216 = vld [vmem:[%s2181 + $0x88] sm:$0xf]
        %v2217 = vld [vmem:[%s2181 + $0x8c] sm:$0xf]
        %v2218 = vld [vmem:[%s2181 + $0x90] sm:$0xf]
        %v2219 = vld [vmem:[%s2181 + $0x94] sm:$0xf]
        %v2220 = vld [vmem:[%s2181 + $0x98] sm:$0xf]
        %v2221 = vld [vmem:[%s2181 + $0x9c] sm:$0xf]
        %v2222 = vld [vmem:[%s2181 + $0xa0] sm:$0xf]
        %v2223 = vld [vmem:[%s2181 + $0xa4] sm:$0xf]
        %v2224 = vld [vmem:[%s2181 + $0xa8] sm:$0xf]
        %v2225 = vld [vmem:[%s2181 + $0xac] sm:$0xf]
        %v2226 = vld [vmem:[%s2181 + $0xb0] sm:$0xf]
        %v2227 = vld [vmem:[%s2181 + $0xb4] sm:$0xf]
        %v2228 = vld [vmem:[%s2181 + $0xb8] sm:$0xf]
        %v2229 = vld [vmem:[%s2181 + $0xbc] sm:$0xf]
        %v2230 = vld [vmem:[%s2181 + $0xc0] sm:$0xf]
        %v2231 = vld [vmem:[%s2181 + $0xc4] sm:$0xf]
        %v2232 = vld [vmem:[%s2181 + $0xc8] sm:$0xf]
        %v2233 = vld [vmem:[%s2181 + $0xcc] sm:$0xf]
        %v2234 = vld [vmem:[%s2181 + $0xd0] sm:$0xf]
        %v2235 = vld [vmem:[%s2181 + $0xd4] sm:$0xf]
        %v2236 = vld [vmem:[%s2181 + $0xd8] sm:$0xf]
        %v2237 = vld [vmem:[%s2181 + $0xdc] sm:$0xf]
        %v2238 = vld [vmem:[%s2181 + $0xe0] sm:$0xf]
        %v2239 = vld [vmem:[%s2181 + $0xe4] sm:$0xf]
        %v2240 = vld [vmem:[%s2181 + $0xe8] sm:$0xf]
        %v2241 = vld [vmem:[%s2181 + $0xec] sm:$0xf]
        %v2242 = vld [vmem:[%s2181 + $0xf0] sm:$0xf]
        %v2243 = vld [vmem:[%s2181 + $0xf4] sm:$0xf]
        %v2244 = vld [vmem:[%s2181 + $0xf8] sm:$0xf]
        %v2245 = vld [vmem:[%s2181 + $0xfc] sm:$0xf]
        %v2310 = vunpack.c.l.b16 %v2182
        %v2311 = vunpack.c.l.b16 %v2183
        %v2312 = vunpack.c.l.b16 %v2184
        %v2313 = vunpack.c.l.b16 %v2185
        %v2314 = vunpack.c.l.b16 %v2186
        %v2315 = vunpack.c.l.b16 %v2187
        %v2316 = vunpack.c.l.b16 %v2188
        %v2317 = vunpack.c.l.b16 %v2189
        %v2318 = vunpack.c.l.b16 %v2190
        %v2319 = vunpack.c.l.b16 %v2191
        %v2320 = vunpack.c.l.b16 %v2192
        %v2321 = vunpack.c.l.b16 %v2193
        %v2322 = vunpack.c.l.b16 %v2194
        %v2323 = vunpack.c.l.b16 %v2195
        %v2324 = vunpack.c.l.b16 %v2196
        %v2325 = vunpack.c.l.b16 %v2197
        %v2326 = vunpack.c.l.b16 %v2198
        %v2327 = vunpack.c.l.b16 %v2199
        %v2328 = vunpack.c.l.b16 %v2200
        %v2329 = vunpack.c.l.b16 %v2201
        %v2330 = vunpack.c.l.b16 %v2202
        %v2331 = vunpack.c.l.b16 %v2203
        %v2332 = vunpack.c.l.b16 %v2204
        %v2333 = vunpack.c.l.b16 %v2205
        %v2334 = vunpack.c.l.b16 %v2206
        %v2335 = vunpack.c.l.b16 %v2207
        %v2336 = vunpack.c.l.b16 %v2208
        %v2337 = vunpack.c.l.b16 %v2209
        %v2338 = vunpack.c.l.b16 %v2210
        %v2339 = vunpack.c.l.b16 %v2211
        %v2340 = vunpack.c.l.b16 %v2212
        %v2341 = vunpack.c.l.b16 %v2213
        %v2342 = vunpack.c.l.b16 %v2214
        %v2343 = vunpack.c.l.b16 %v2215
        %v2344 = vunpack.c.l.b16 %v2216
        %v2345 = vunpack.c.l.b16 %v2217
        %v2346 = vunpack.c.l.b16 %v2218
        %v2347 = vunpack.c.l.b16 %v2219
        %v2348 = vunpack.c.l.b16 %v2220
        %v2349 = vunpack.c.l.b16 %v2221
        %v2350 = vunpack.c.l.b16 %v2222
        %v2351 = vunpack.c.l.b16 %v2223
        %v2352 = vunpack.c.l.b16 %v2224
        %v2353 = vunpack.c.l.b16 %v2225
        %v2354 = vunpack.c.l.b16 %v2226
        %v2355 = vunpack.c.l.b16 %v2227
        %v2356 = vunpack.c.l.b16 %v2228
        %v2357 = vunpack.c.l.b16 %v2229
        %v2358 = vunpack.c.l.b16 %v2230
        %v2359 = vunpack.c.l.b16 %v2231
        %v2360 = vunpack.c.l.b16 %v2232
        %v2361 = vunpack.c.l.b16 %v2233
        %v2362 = vunpack.c.l.b16 %v2234
        %v2363 = vunpack.c.l.b16 %v2235
        %v2364 = vunpack.c.l.b16 %v2236
        %v2365 = vunpack.c.l.b16 %v2237
        %v2366 = vunpack.c.l.b16 %v2238
        %v2367 = vunpack.c.l.b16 %v2239
        %v2368 = vunpack.c.l.b16 %v2240
        %v2369 = vunpack.c.l.b16 %v2241
        %v2370 = vunpack.c.l.b16 %v2242
        %v2371 = vunpack.c.l.b16 %v2243
        %v2372 = vunpack.c.l.b16 %v2244
        %v2373 = vunpack.c.l.b16 %v2245
        %v2374 = vpack.c.b16 %v2311, %v2310
        %v2375 = vpack.c.b16 %v2313, %v2312
        %v2376 = vpack.c.b16 %v2315, %v2314
        %v2377 = vpack.c.b16 %v2317, %v2316
        %v2378 = vpack.c.b16 %v2319, %v2318
        %v2379 = vpack.c.b16 %v2321, %v2320
        %v2380 = vpack.c.b16 %v2323, %v2322
        %v2381 = vpack.c.b16 %v2325, %v2324
        %v2382 = vpack.c.b16 %v2327, %v2326
        %v2383 = vpack.c.b16 %v2329, %v2328
        %v2384 = vpack.c.b16 %v2331, %v2330
        %v2385 = vpack.c.b16 %v2333, %v2332
        %v2386 = vpack.c.b16 %v2335, %v2334
        %v2387 = vpack.c.b16 %v2337, %v2336
        %v2388 = vpack.c.b16 %v2339, %v2338
        %v2389 = vpack.c.b16 %v2341, %v2340
        %v2390 = vpack.c.b16 %v2343, %v2342
        %v2391 = vpack.c.b16 %v2345, %v2344
        %v2392 = vpack.c.b16 %v2347, %v2346
        %v2393 = vpack.c.b16 %v2349, %v2348
        %v2394 = vpack.c.b16 %v2351, %v2350
        %v2395 = vpack.c.b16 %v2353, %v2352
        %v2396 = vpack.c.b16 %v2355, %v2354
        %v2397 = vpack.c.b16 %v2357, %v2356
        %v2398 = vpack.c.b16 %v2359, %v2358
        %v2399 = vpack.c.b16 %v2361, %v2360
        %v2400 = vpack.c.b16 %v2363, %v2362
        %v2401 = vpack.c.b16 %v2365, %v2364
        %v2402 = vpack.c.b16 %v2367, %v2366
        %v2403 = vpack.c.b16 %v2369, %v2368
        %v2404 = vpack.c.b16 %v2371, %v2370
        %v2405 = vpack.c.b16 %v2373, %v2372
        %2438 = vmatprep.subr.bf16.mxu0 0
        %2439 = vmatpush1.bf16.msra.mxu0 %v2381
        %2440 = vmatprep.subr.bf16.mxu0 0
        %2441 = vmatpush1.bf16.msra.mxu0 %v2380
        %2442 = vmatprep.subr.bf16.mxu0 0
        %2443 = vmatpush1.bf16.msra.mxu0 %v2379
        %2444 = vmatprep.subr.bf16.mxu0 0
        %2445 = vmatpush1.bf16.msra.mxu0 %v2378
        %2446 = vmatprep.subr.bf16.mxu0 0
        %2447 = vmatpush1.bf16.msra.mxu0 %v2377
        %2448 = vmatprep.subr.bf16.mxu0 0
        %2449 = vmatpush1.bf16.msra.mxu0 %v2376
        %2450 = vmatprep.subr.bf16.mxu0 0
        %2451 = vmatpush1.bf16.msra.mxu0 %v2375
        %2452 = vmatprep.subr.bf16.mxu0 0
        %2453 = vmatpush1.bf16.msra.mxu0 %v2374
        %2454 = vmatprep.subr.bf16.mxu0 0
        %2455 = vmatpush2.bf16.msra.mxu0 %v2389
        %2456 = vmatprep.subr.bf16.mxu0 0
        %2457 = vmatpush2.bf16.msra.mxu0 %v2388
        %2458 = vmatprep.subr.bf16.mxu0 0
        %2459 = vmatpush2.bf16.msra.mxu0 %v2387
        %2460 = vmatprep.subr.bf16.mxu0 0
        %2461 = vmatpush2.bf16.msra.mxu0 %v2386
        %2462 = vmatprep.subr.bf16.mxu0 0
        %2463 = vmatpush2.bf16.msra.mxu0 %v2385
        %2464 = vmatprep.subr.bf16.mxu0 0
        %2465 = vmatpush2.bf16.msra.mxu0 %v2384
        %2466 = vmatprep.subr.bf16.mxu0 0
        %2467 = vmatpush2.bf16.msra.mxu0 %v2383
        %2468 = vmatprep.subr.bf16.mxu0 0
        %2469 = vmatpush2.bf16.msra.mxu0 %v2382
        %2470 = vmatprep.mubr.bf16.mxu0 %v2178
        %2471 = vmatmul.mubr.bf16.gmra.mxu0 %v2177
        %v2472 = vpop.f32.mrf.mxu0
        %v2473 = vadd.f32 %v1613, %v2472
        %v2474 = vpop.f32.mrf.mxu0
        %v2475 = vpop.f32.mrf.mxu0
        %v2476 = vadd.f32 %v1613, %v2475
        %v2477 = vpop.f32.mrf.mxu0
        %2478 = vdwg.mxu0
        %2479 = vmatprep.subr.bf16.mxu0 0
        %2480 = vmatpush1.bf16.msra.mxu0 %v2397
        %2481 = vmatprep.subr.bf16.mxu0 0
        %2482 = vmatpush1.bf16.msra.mxu0 %v2396
        %2483 = vmatprep.subr.bf16.mxu0 0
        %2484 = vmatpush1.bf16.msra.mxu0 %v2395
        %2485 = vmatprep.subr.bf16.mxu0 0
        %2486 = vmatpush1.bf16.msra.mxu0 %v2394
        %2487 = vmatprep.subr.bf16.mxu0 0
        %2488 = vmatpush1.bf16.msra.mxu0 %v2393
        %2489 = vmatprep.subr.bf16.mxu0 0
        %2490 = vmatpush1.bf16.msra.mxu0 %v2392
        %2491 = vmatprep.subr.bf16.mxu0 0
        %2492 = vmatpush1.bf16.msra.mxu0 %v2391
        %2493 = vmatprep.subr.bf16.mxu0 0
        %2494 = vmatpush1.bf16.msra.mxu0 %v2390
        %2495 = vmatprep.subr.bf16.mxu0 0
        %2496 = vmatpush2.bf16.msra.mxu0 %v2405
        %2497 = vmatprep.subr.bf16.mxu0 0
        %2498 = vmatpush2.bf16.msra.mxu0 %v2404
        %2499 = vmatprep.subr.bf16.mxu0 0
        %2500 = vmatpush2.bf16.msra.mxu0 %v2403
        %2501 = vmatprep.subr.bf16.mxu0 0
        %2502 = vmatpush2.bf16.msra.mxu0 %v2402
        %2503 = vmatprep.subr.bf16.mxu0 0
        %2504 = vmatpush2.bf16.msra.mxu0 %v2401
        %2505 = vmatprep.subr.bf16.mxu0 0
        %2506 = vmatpush2.bf16.msra.mxu0 %v2400
        %2507 = vmatprep.subr.bf16.mxu0 0
        %2508 = vmatpush2.bf16.msra.mxu0 %v2399
        %2509 = vmatprep.subr.bf16.mxu0 0
        %2510 = vmatpush2.bf16.msra.mxu0 %v2398
        %2511 = vmatprep.mubr.bf16.mxu0 %v2180
        %2512 = vmatmul.mubr.bf16.gmra.mxu0 %v2179
        %v2513 = vpop.f32.mrf.mxu0
        %v2514 = vadd.f32 %v2473, %v2513
        %v2515 = vpop.f32.mrf.mxu0
        %v2516 = vpop.f32.mrf.mxu0
        %v2517 = vadd.f32 %v2476, %v2516
        %v2518 = vpop.f32.mrf.mxu0
        %2519 = vdwg.mxu0
        %v2520 = vmul.f32 %v1614, %v2514
        %v2521 = vmul.f32 %v1614, %v2517
        %v2522 = vadd.f32 %v1606, %v2520
        %v2523 = vadd.f32 %v1607, %v2521
        %v2524 = vld [vmem:[#allocation7 + $0x47] ss:$0 sm:$0xff]
        %v2525 = vld [vmem:[#allocation7 + $0x80] ss:$0 sm:$0xff]
        %2526 = vadd.xlane.f32.xlu0 %v2522
        %v2527 = vpop.xlane.xlu0 %2526
        %2528 = vadd.xlane.f32.xlu0 %v2523
        %v2529 = vpop.xlane.xlu0 %2528
        %v2530 = vmul.f32 %v2527, %v665
        %v2531 = vmul.f32 %v2529, %v665
        %v2532 = vsub.f32 %v2522, %v2530
        %v2533 = vsub.f32 %v2523, %v2531
        %v2534 = vmul.f32 %v2532, %v2532
        %v2535 = vmul.f32 %v2533, %v2533
        %2536 = vadd.xlane.f32.xlu0 %v2534
        %v2537 = vpop.xlane.xlu0 %2536
        %2538 = vadd.xlane.f32.xlu0 %v2535
        %v2539 = vpop.xlane.xlu0 %2538
        %v2540 = vmul.f32 %v2537, %v665
        %v2541 = vmul.f32 %v2539, %v665
        %v2542 = vadd.f32 %v2540, 1e-06
        %v2543 = vadd.f32 %v2541, 1e-06
        %v2544 = vrsqrt.pop %v2542
        %v2545 = vrsqrt.pop %v2543
        %v2546 = vmul.f32 %v2532, %v2544
        %v2547 = vmul.f32 %v2533, %v2545
        %v2548 = vmul.f32 %v2546, %v2524
        %v2549 = vmul.f32 %v2547, %v2524
        %v2550 = vadd.f32 %v2548, %v2525
        %v2551 = vadd.f32 %v2549, %v2525
        %v2553 = vrot.slane %v2550, 1
        %v2556 = vrot.slane %v2551, 6
        %v2558 = vrot.slane %v2551, 7
        %v2560 = vsel %vm779, %v2550, %v2553
        %v2561 = vsel %vm766, %v2560, %v2556
        %v2562 = vsel %vm753, %v2561, %v2558
        %v2563 = vrot.slane %v2550, 2
        %v2565 = vsel %vm779, %v2553, %v2563
        %v2566 = vsel %vm766, %v2565, %v2558
        %v2567 = vsel %vm753, %v2566, %v2551
        %v2568 = vrot.slane %v2550, 4
        %v2570 = vrot.slane %v2550, 5
        %v2572 = vrot.slane %v2551, 2
        %v2574 = vrot.slane %v2551, 3
        %v2576 = vsel %vm779, %v2568, %v2570
        %v2577 = vsel %vm766, %v2576, %v2572
        %v2578 = vsel %vm753, %v2577, %v2574
        %v2579 = vrot.slane %v2550, 6
        %v2581 = vrot.slane %v2551, 4
        %v2583 = vsel %vm779, %v2570, %v2579
        %v2584 = vsel %vm766, %v2583, %v2574
        %v2585 = vsel %vm753, %v2584, %v2581
        %v2586 = vpack.c.bf16 %v2562, %v2562
        %v2587 = vpack.c.bf16 %v2567, %v2567
        %v2588 = vpack.c.bf16 %v2578, %v2578
        %v2589 = vpack.c.bf16 %v2585, %v2585
        %v2590 = vld [vmem:[#allocation13] sm:$0xff]
        %v2591 = vld [vmem:[#allocation13 + $0x8] sm:$0xff]
        %v2592 = vld [vmem:[#allocation13 + $0x10] sm:$0xff]
        %v2593 = vld [vmem:[#allocation13 + $0x18] sm:$0xff]
        %v2594 = vld [vmem:[#allocation13 + $0x20] sm:$0xff]
        %v2595 = vld [vmem:[#allocation13 + $0x28] sm:$0xff]
        %v2596 = vld [vmem:[#allocation13 + $0x30] sm:$0xff]
        %v2597 = vld [vmem:[#allocation13 + $0x38] sm:$0xff]
        %v2598 = vld [vmem:[#allocation13 + $0x40] sm:$0xff]
        %v2599 = vld [vmem:[#allocation13 + $0x48] sm:$0xff]
        %v2600 = vld [vmem:[#allocation13 + $0x50] sm:$0xff]
        %v2601 = vld [vmem:[#allocation13 + $0x58] sm:$0xff]
        %v2602 = vld [vmem:[#allocation13 + $0x60] sm:$0xff]
        %v2603 = vld [vmem:[#allocation13 + $0x68] sm:$0xff]
        %v2604 = vld [vmem:[#allocation13 + $0x70] sm:$0xff]
        %v2605 = vld [vmem:[#allocation13 + $0x78] sm:$0xff]
        %v2606 = vld [vmem:[#allocation13 + $0x80] sm:$0xff]
        %v2607 = vld [vmem:[#allocation13 + $0x88] sm:$0xff]
        %v2608 = vld [vmem:[#allocation13 + $0x90] sm:$0xff]
        %v2609 = vld [vmem:[#allocation13 + $0x98] sm:$0xff]
        %v2610 = vld [vmem:[#allocation13 + $0xa0] sm:$0xff]
        %v2611 = vld [vmem:[#allocation13 + $0xa8] sm:$0xff]
        %v2612 = vld [vmem:[#allocation13 + $0xb0] sm:$0xff]
        %v2613 = vld [vmem:[#allocation13 + $0xb8] sm:$0xff]
        %v2614 = vld [vmem:[#allocation13 + $0xc0] sm:$0xff]
        %v2615 = vld [vmem:[#allocation13 + $0xc8] sm:$0xff]
        %v2616 = vld [vmem:[#allocation13 + $0xd0] sm:$0xff]
        %v2617 = vld [vmem:[#allocation13 + $0xd8] sm:$0xff]
        %v2618 = vld [vmem:[#allocation13 + $0xe0] sm:$0xff]
        %v2619 = vld [vmem:[#allocation13 + $0xe8] sm:$0xff]
        %v2620 = vld [vmem:[#allocation13 + $0xf0] sm:$0xff]
        %v2621 = vld [vmem:[#allocation13 + $0xf8] sm:$0xff]
        %v2622 = vld [vmem:[#allocation13 + $0x100] sm:$0xff]
        %v2623 = vld [vmem:[#allocation13 + $0x108] sm:$0xff]
        %v2624 = vld [vmem:[#allocation13 + $0x110] sm:$0xff]
        %v2625 = vld [vmem:[#allocation13 + $0x118] sm:$0xff]
        %v2626 = vld [vmem:[#allocation13 + $0x120] sm:$0xff]
        %v2627 = vld [vmem:[#allocation13 + $0x128] sm:$0xff]
        %v2628 = vld [vmem:[#allocation13 + $0x130] sm:$0xff]
        %v2629 = vld [vmem:[#allocation13 + $0x138] sm:$0xff]
        %v2630 = vld [vmem:[#allocation13 + $0x140] sm:$0xff]
        %v2631 = vld [vmem:[#allocation13 + $0x148] sm:$0xff]
        %v2632 = vld [vmem:[#allocation13 + $0x150] sm:$0xff]
        %v2633 = vld [vmem:[#allocation13 + $0x158] sm:$0xff]
        %v2634 = vld [vmem:[#allocation13 + $0x160] sm:$0xff]
        %v2635 = vld [vmem:[#allocation13 + $0x168] sm:$0xff]
        %v2636 = vld [vmem:[#allocation13 + $0x170] sm:$0xff]
        %v2637 = vld [vmem:[#allocation13 + $0x178] sm:$0xff]
        %v2638 = vld [vmem:[#allocation13 + $0x180] sm:$0xff]
        %v2639 = vld [vmem:[#allocation13 + $0x188] sm:$0xff]
        %v2640 = vld [vmem:[#allocation13 + $0x190] sm:$0xff]
        %v2641 = vld [vmem:[#allocation13 + $0x198] sm:$0xff]
        %v2642 = vld [vmem:[#allocation13 + $0x1a0] sm:$0xff]
        %v2643 = vld [vmem:[#allocation13 + $0x1a8] sm:$0xff]
        %v2644 = vld [vmem:[#allocation13 + $0x1b0] sm:$0xff]
        %v2645 = vld [vmem:[#allocation13 + $0x1b8] sm:$0xff]
        %v2646 = vld [vmem:[#allocation13 + $0x1c0] sm:$0xff]
        %v2647 = vld [vmem:[#allocation13 + $0x1c8] sm:$0xff]
        %v2648 = vld [vmem:[#allocation13 + $0x1d0] sm:$0xff]
        %v2649 = vld [vmem:[#allocation13 + $0x1d8] sm:$0xff]
        %v2650 = vld [vmem:[#allocation13 + $0x1e0] sm:$0xff]
        %v2651 = vld [vmem:[#allocation13 + $0x1e8] sm:$0xff]
        %v2652 = vld [vmem:[#allocation13 + $0x1f0] sm:$0xff]
        %v2653 = vld [vmem:[#allocation13 + $0x1f8] sm:$0xff]
        %s2654 = scalar_lea.vmem [#allocation7], 129
        %v2655 = vld [vmem:[%s2654] ss:$8 sm:$0x3]
        %v2657 = vlaneseq
        %v2658 = vshrl.u32 %v2657, 7
        %v2659 = vsub.s32 0, %v2658
        %v2660 = vrot.slane %v2655, %v2659
        %v2661 = vlaneseq
        %v2662 = vshrl.u32 %v2661, 7
        %v2663 = vsub.s32 1, %v2662
        %v2664 = vrot.slane %v2655, %v2663
        %v2731 = vunpack.c.l.b16 %v2590
        %v2732 = vunpack.c.h.b16 %v2590
        %v2733 = vunpack.c.l.b16 %v2591
        %v2734 = vunpack.c.h.b16 %v2591
        %v2735 = vunpack.c.l.b16 %v2592
        %v2736 = vunpack.c.h.b16 %v2592
        %v2737 = vunpack.c.l.b16 %v2593
        %v2738 = vunpack.c.h.b16 %v2593
        %v2739 = vunpack.c.l.b16 %v2594
        %v2740 = vunpack.c.h.b16 %v2594
        %v2741 = vunpack.c.l.b16 %v2595
        %v2742 = vunpack.c.h.b16 %v2595
        %v2743 = vunpack.c.l.b16 %v2596
        %v2744 = vunpack.c.h.b16 %v2596
        %v2745 = vunpack.c.l.b16 %v2597
        %v2746 = vunpack.c.h.b16 %v2597
        %v2747 = vunpack.c.l.b16 %v2598
        %v2748 = vunpack.c.h.b16 %v2598
        %v2749 = vunpack.c.l.b16 %v2599
        %v2750 = vunpack.c.h.b16 %v2599
        %v2751 = vunpack.c.l.b16 %v2600
        %v2752 = vunpack.c.h.b16 %v2600
        %v2753 = vunpack.c.l.b16 %v2601
        %v2754 = vunpack.c.h.b16 %v2601
        %v2755 = vunpack.c.l.b16 %v2602
        %v2756 = vunpack.c.h.b16 %v2602
        %v2757 = vunpack.c.l.b16 %v2603
        %v2758 = vunpack.c.h.b16 %v2603
        %v2759 = vunpack.c.l.b16 %v2604
        %v2760 = vunpack.c.h.b16 %v2604
        %v2761 = vunpack.c.l.b16 %v2605
        %v2762 = vunpack.c.h.b16 %v2605
        %v2763 = vunpack.c.l.b16 %v2606
        %v2764 = vunpack.c.h.b16 %v2606
        %v2765 = vunpack.c.l.b16 %v2607
        %v2766 = vunpack.c.h.b16 %v2607
        %v2767 = vunpack.c.l.b16 %v2608
        %v2768 = vunpack.c.h.b16 %v2608
        %v2769 = vunpack.c.l.b16 %v2609
        %v2770 = vunpack.c.h.b16 %v2609
        %v2771 = vunpack.c.l.b16 %v2610
        %v2772 = vunpack.c.h.b16 %v2610
        %v2773 = vunpack.c.l.b16 %v2611
        %v2774 = vunpack.c.h.b16 %v2611
        %v2775 = vunpack.c.l.b16 %v2612
        %v2776 = vunpack.c.h.b16 %v2612
        %v2777 = vunpack.c.l.b16 %v2613
        %v2778 = vunpack.c.h.b16 %v2613
        %v2779 = vunpack.c.l.b16 %v2614
        %v2780 = vunpack.c.h.b16 %v2614
        %v2781 = vunpack.c.l.b16 %v2615
        %v2782 = vunpack.c.h.b16 %v2615
        %v2783 = vunpack.c.l.b16 %v2616
        %v2784 = vunpack.c.h.b16 %v2616
        %v2785 = vunpack.c.l.b16 %v2617
        %v2786 = vunpack.c.h.b16 %v2617
        %v2787 = vunpack.c.l.b16 %v2618
        %v2788 = vunpack.c.h.b16 %v2618
        %v2789 = vunpack.c.l.b16 %v2619
        %v2790 = vunpack.c.h.b16 %v2619
        %v2791 = vunpack.c.l.b16 %v2620
        %v2792 = vunpack.c.h.b16 %v2620
        %v2793 = vunpack.c.l.b16 %v2621
        %v2794 = vunpack.c.h.b16 %v2621
        %v2795 = vunpack.c.l.b16 %v2622
        %v2796 = vunpack.c.h.b16 %v2622
        %v2797 = vunpack.c.l.b16 %v2623
        %v2798 = vunpack.c.h.b16 %v2623
        %v2799 = vunpack.c.l.b16 %v2624
        %v2800 = vunpack.c.h.b16 %v2624
        %v2801 = vunpack.c.l.b16 %v2625
        %v2802 = vunpack.c.h.b16 %v2625
        %v2803 = vunpack.c.l.b16 %v2626
        %v2804 = vunpack.c.h.b16 %v2626
        %v2805 = vunpack.c.l.b16 %v2627
        %v2806 = vunpack.c.h.b16 %v2627
        %v2807 = vunpack.c.l.b16 %v2628
        %v2808 = vunpack.c.h.b16 %v2628
        %v2809 = vunpack.c.l.b16 %v2629
        %v2810 = vunpack.c.h.b16 %v2629
        %v2811 = vunpack.c.l.b16 %v2630
        %v2812 = vunpack.c.h.b16 %v2630
        %v2813 = vunpack.c.l.b16 %v2631
        %v2814 = vunpack.c.h.b16 %v2631
        %v2815 = vunpack.c.l.b16 %v2632
        %v2816 = vunpack.c.h.b16 %v2632
        %v2817 = vunpack.c.l.b16 %v2633
        %v2818 = vunpack.c.h.b16 %v2633
        %v2819 = vunpack.c.l.b16 %v2634
        %v2820 = vunpack.c.h.b16 %v2634
        %v2821 = vunpack.c.l.b16 %v2635
        %v2822 = vunpack.c.h.b16 %v2635
        %v2823 = vunpack.c.l.b16 %v2636
        %v2824 = vunpack.c.h.b16 %v2636
        %v2825 = vunpack.c.l.b16 %v2637
        %v2826 = vunpack.c.h.b16 %v2637
        %v2827 = vunpack.c.l.b16 %v2638
        %v2828 = vunpack.c.h.b16 %v2638
        %v2829 = vunpack.c.l.b16 %v2639
        %v2830 = vunpack.c.h.b16 %v2639
        %v2831 = vunpack.c.l.b16 %v2640
        %v2832 = vunpack.c.h.b16 %v2640
        %v2833 = vunpack.c.l.b16 %v2641
        %v2834 = vunpack.c.h.b16 %v2641
        %v2835 = vunpack.c.l.b16 %v2642
        %v2836 = vunpack.c.h.b16 %v2642
        %v2837 = vunpack.c.l.b16 %v2643
        %v2838 = vunpack.c.h.b16 %v2643
        %v2839 = vunpack.c.l.b16 %v2644
        %v2840 = vunpack.c.h.b16 %v2644
        %v2841 = vunpack.c.l.b16 %v2645
        %v2842 = vunpack.c.h.b16 %v2645
        %v2843 = vunpack.c.l.b16 %v2646
        %v2844 = vunpack.c.h.b16 %v2646
        %v2845 = vunpack.c.l.b16 %v2647
        %v2846 = vunpack.c.h.b16 %v2647
        %v2847 = vunpack.c.l.b16 %v2648
        %v2848 = vunpack.c.h.b16 %v2648
        %v2849 = vunpack.c.l.b16 %v2649
        %v2850 = vunpack.c.h.b16 %v2649
        %v2851 = vunpack.c.l.b16 %v2650
        %v2852 = vunpack.c.h.b16 %v2650
        %v2853 = vunpack.c.l.b16 %v2651
        %v2854 = vunpack.c.h.b16 %v2651
        %v2855 = vunpack.c.l.b16 %v2652
        %v2856 = vunpack.c.h.b16 %v2652
        %v2857 = vunpack.c.l.b16 %v2653
        %v2858 = vunpack.c.h.b16 %v2653
        %v2859 = vpack.c.b16 %v2733, %v2731
        %v2860 = vpack.c.b16 %v2734, %v2732
        %v2861 = vpack.c.b16 %v2737, %v2735
        %v2862 = vpack.c.b16 %v2738, %v2736
        %v2863 = vpack.c.b16 %v2741, %v2739
        %v2864 = vpack.c.b16 %v2742, %v2740
        %v2865 = vpack.c.b16 %v2745, %v2743
        %v2866 = vpack.c.b16 %v2746, %v2744
        %v2867 = vpack.c.b16 %v2749, %v2747
        %v2868 = vpack.c.b16 %v2750, %v2748
        %v2869 = vpack.c.b16 %v2753, %v2751
        %v2870 = vpack.c.b16 %v2754, %v2752
        %v2871 = vpack.c.b16 %v2757, %v2755
        %v2872 = vpack.c.b16 %v2758, %v2756
        %v2873 = vpack.c.b16 %v2761, %v2759
        %v2874 = vpack.c.b16 %v2762, %v2760
        %v2875 = vpack.c.b16 %v2765, %v2763
        %v2876 = vpack.c.b16 %v2766, %v2764
        %v2877 = vpack.c.b16 %v2769, %v2767
        %v2878 = vpack.c.b16 %v2770, %v2768
        %v2879 = vpack.c.b16 %v2773, %v2771
        %v2880 = vpack.c.b16 %v2774, %v2772
        %v2881 = vpack.c.b16 %v2777, %v2775
        %v2882 = vpack.c.b16 %v2778, %v2776
        %v2883 = vpack.c.b16 %v2781, %v2779
        %v2884 = vpack.c.b16 %v2782, %v2780
        %v2885 = vpack.c.b16 %v2785, %v2783
        %v2886 = vpack.c.b16 %v2786, %v2784
        %v2887 = vpack.c.b16 %v2789, %v2787
        %v2888 = vpack.c.b16 %v2790, %v2788
        %v2889 = vpack.c.b16 %v2793, %v2791
        %v2890 = vpack.c.b16 %v2794, %v2792
        %v2891 = vpack.c.b16 %v2797, %v2795
        %v2892 = vpack.c.b16 %v2798, %v2796
        %v2893 = vpack.c.b16 %v2801, %v2799
        %v2894 = vpack.c.b16 %v2802, %v2800
        %v2895 = vpack.c.b16 %v2805, %v2803
        %v2896 = vpack.c.b16 %v2806, %v2804
        %v2897 = vpack.c.b16 %v2809, %v2807
        %v2898 = vpack.c.b16 %v2810, %v2808
        %v2899 = vpack.c.b16 %v2813, %v2811
        %v2900 = vpack.c.b16 %v2814, %v2812
        %v2901 = vpack.c.b16 %v2817, %v2815
        %v2902 = vpack.c.b16 %v2818, %v2816
        %v2903 = vpack.c.b16 %v2821, %v2819
        %v2904 = vpack.c.b16 %v2822, %v2820
        %v2905 = vpack.c.b16 %v2825, %v2823
        %v2906 = vpack.c.b16 %v2826, %v2824
        %v2907 = vpack.c.b16 %v2829, %v2827
        %v2908 = vpack.c.b16 %v2830, %v2828
        %v2909 = vpack.c.b16 %v2833, %v2831
        %v2910 = vpack.c.b16 %v2834, %v2832
        %v2911 = vpack.c.b16 %v2837, %v2835
        %v2912 = vpack.c.b16 %v2838, %v2836
        %v2913 = vpack.c.b16 %v2841, %v2839
        %v2914 = vpack.c.b16 %v2842, %v2840
        %v2915 = vpack.c.b16 %v2845, %v2843
        %v2916 = vpack.c.b16 %v2846, %v2844
        %v2917 = vpack.c.b16 %v2849, %v2847
        %v2918 = vpack.c.b16 %v2850, %v2848
        %v2919 = vpack.c.b16 %v2853, %v2851
        %v2920 = vpack.c.b16 %v2854, %v2852
        %v2921 = vpack.c.b16 %v2857, %v2855
        %v2922 = vpack.c.b16 %v2858, %v2856
        %2987 = vmatprep.subr.bf16.mxu0 %v2874
        %2988 = vmatpush1.bf16.msra.mxu0 %v2873
        %2989 = vmatprep.subr.bf16.mxu0 %v2872
        %2990 = vmatpush1.bf16.msra.mxu0 %v2871
        %2991 = vmatprep.subr.bf16.mxu0 %v2870
        %2992 = vmatpush1.bf16.msra.mxu0 %v2869
        %2993 = vmatprep.subr.bf16.mxu0 %v2868
        %2994 = vmatpush1.bf16.msra.mxu0 %v2867
        %2995 = vmatprep.subr.bf16.mxu0 %v2866
        %2996 = vmatpush1.bf16.msra.mxu0 %v2865
        %2997 = vmatprep.subr.bf16.mxu0 %v2864
        %2998 = vmatpush1.bf16.msra.mxu0 %v2863
        %2999 = vmatprep.subr.bf16.mxu0 %v2862
        %3000 = vmatpush1.bf16.msra.mxu0 %v2861
        %3001 = vmatprep.subr.bf16.mxu0 %v2860
        %3002 = vmatpush1.bf16.msra.mxu0 %v2859
        %3003 = vmatprep.subr.bf16.mxu0 %v2890
        %3004 = vmatpush2.bf16.msra.mxu0 %v2889
        %3005 = vmatprep.subr.bf16.mxu0 %v2888
        %3006 = vmatpush2.bf16.msra.mxu0 %v2887
        %3007 = vmatprep.subr.bf16.mxu0 %v2886
        %3008 = vmatpush2.bf16.msra.mxu0 %v2885
        %3009 = vmatprep.subr.bf16.mxu0 %v2884
        %3010 = vmatpush2.bf16.msra.mxu0 %v2883
        %3011 = vmatprep.subr.bf16.mxu0 %v2882
        %3012 = vmatpush2.bf16.msra.mxu0 %v2881
        %3013 = vmatprep.subr.bf16.mxu0 %v2880
        %3014 = vmatpush2.bf16.msra.mxu0 %v2879
        %3015 = vmatprep.subr.bf16.mxu0 %v2878
        %3016 = vmatpush2.bf16.msra.mxu0 %v2877
        %3017 = vmatprep.subr.bf16.mxu0 %v2876
        %3018 = vmatpush2.bf16.msra.mxu0 %v2875
        %3019 = vmatprep.mubr.bf16.mxu0 %v2587
        %3020 = vmatmul.mubr.bf16.gmra.mxu0 %v2586
        %v3021 = vpop.f32.mrf.mxu0
        %v3022 = vadd.f32 %v2660, %v3021
        %v3023 = vpop.f32.mrf.mxu0
        %v3024 = vadd.f32 %v2664, %v3023
        %v3025 = vpop.f32.mrf.mxu0
        %v3026 = vpop.f32.mrf.mxu0
        %3027 = vdwg.mxu0
        %3028 = vmatprep.subr.bf16.mxu0 %v2906
        %3029 = vmatpush1.bf16.msra.mxu0 %v2905
        %3030 = vmatprep.subr.bf16.mxu0 %v2904
        %3031 = vmatpush1.bf16.msra.mxu0 %v2903
        %3032 = vmatprep.subr.bf16.mxu0 %v2902
        %3033 = vmatpush1.bf16.msra.mxu0 %v2901
        %3034 = vmatprep.subr.bf16.mxu0 %v2900
        %3035 = vmatpush1.bf16.msra.mxu0 %v2899
        %3036 = vmatprep.subr.bf16.mxu0 %v2898
        %3037 = vmatpush1.bf16.msra.mxu0 %v2897
        %3038 = vmatprep.subr.bf16.mxu0 %v2896
        %3039 = vmatpush1.bf16.msra.mxu0 %v2895
        %3040 = vmatprep.subr.bf16.mxu0 %v2894
        %3041 = vmatpush1.bf16.msra.mxu0 %v2893
        %3042 = vmatprep.subr.bf16.mxu0 %v2892
        %3043 = vmatpush1.bf16.msra.mxu0 %v2891
        %3044 = vmatprep.subr.bf16.mxu0 %v2922
        %3045 = vmatpush2.bf16.msra.mxu0 %v2921
        %3046 = vmatprep.subr.bf16.mxu0 %v2920
        %3047 = vmatpush2.bf16.msra.mxu0 %v2919
        %3048 = vmatprep.subr.bf16.mxu0 %v2918
        %3049 = vmatpush2.bf16.msra.mxu0 %v2917
        %3050 = vmatprep.subr.bf16.mxu0 %v2916
        %3051 = vmatpush2.bf16.msra.mxu0 %v2915
        %3052 = vmatprep.subr.bf16.mxu0 %v2914
        %3053 = vmatpush2.bf16.msra.mxu0 %v2913
        %3054 = vmatprep.subr.bf16.mxu0 %v2912
        %3055 = vmatpush2.bf16.msra.mxu0 %v2911
        %3056 = vmatprep.subr.bf16.mxu0 %v2910
        %3057 = vmatpush2.bf16.msra.mxu0 %v2909
        %3058 = vmatprep.subr.bf16.mxu0 %v2908
        %3059 = vmatpush2.bf16.msra.mxu0 %v2907
        %3060 = vmatprep.mubr.bf16.mxu0 %v2589
        %3061 = vmatmul.mubr.bf16.gmra.mxu0 %v2588
        %v3062 = vpop.f32.mrf.mxu0
        %v3063 = vadd.f32 %v3022, %v3062
        %v3064 = vpop.f32.mrf.mxu0
        %v3065 = vadd.f32 %v3024, %v3064
        %v3066 = vpop.f32.mrf.mxu0
        %v3067 = vpop.f32.mrf.mxu0
        %3068 = vdwg.mxu0
        %s3069 = scalar_lea.vmem [#allocation7], 130
        %v3070 = vld [vmem:[%s3069] ss:$8 sm:$0x3]
        %s3071 = scalar_lea.vmem [#allocation7], 131
        %v3072 = vld [vmem:[%s3071] ss:$8 sm:$0x3]
        %s3073 = scalar_lea.vmem [#allocation7], 132
        %v3074 = vld [vmem:[%s3073] ss:$8 sm:$0x3]
        %s3075 = scalar_lea.vmem [#allocation7], 133
        %v3076 = vld [vmem:[%s3075] ss:$8 sm:$0xf]
        %v3077 = vld [vmem:[%s3075] ss:$8 sm:$0xf0]
        %v3078 = vor.u32 %v3076, %v3077
        %s3079 = scalar_lea.vmem [#allocation7], 134
        %v3080 = vld [vmem:[%s3079] ss:$8 sm:$0x3]
        %s3081 = scalar_lea.vmem [#allocation7], 135
        %v3082 = vld [vmem:[%s3081] ss:$8 sm:$0x3]
        %v3083 = vld [vmem:[#allocation14] sm:$0xff]
        %v3086 = vcombine.low %v3063, %v3065
        %v3088 = vmul.f32 %v3083, %v3086
        %v3089 = vrot.slane %v3063, 1
        %v3090 = vrot.slane %v3065, 1
        %v3093 = vrot.slane %v3063, 5
        %v3094 = vrot.slane %v3065, 5
        %v3097 = vsel %vm753, %v3089, %v3093
        %v3098 = vsel %vm753, %v3090, %v3094
        %s3099 = scalar_lea.vmem [#allocation14], 8
        %v3100 = vld [vmem:[%s3099] sm:$0xff]
        %v3103 = vcombine.low %v3097, %v3098
        %v3105 = vmul.f32 %v3100, %v3103
        %v3106 = vrot.slane %v3063, 2
        %v3107 = vrot.slane %v3065, 2
        %v3110 = vrot.slane %v3063, 6
        %v3111 = vrot.slane %v3065, 6
        %v3114 = vsel %vm766, %v3106, %v3110
        %v3115 = vsel %vm766, %v3107, %v3111
        %s3116 = scalar_lea.vmem [#allocation14], 16
        %v3117 = vld [vmem:[%s3116] sm:$0xff]
        %v3120 = vcombine.low %v3114, %v3115
        %v3122 = vmul.f32 %v3117, %v3120
        %v3123 = vrot.slane %v3063, 3
        %v3124 = vrot.slane %v3065, 3
        %v3127 = vrot.slane %v3063, 7
        %v3128 = vrot.slane %v3065, 7
        %v3131 = vsel %vm779, %v3123, %v3127
        %v3132 = vsel %vm779, %v3124, %v3128
        %s3133 = scalar_lea.vmem [#allocation14], 24
        %v3134 = vld [vmem:[%s3133] sm:$0xff]
        %v3137 = vcombine.low %v3131, %v3132
        %v3139 = vmul.f32 %v3134, %v3137
        %v3140 = vadd.f32 %v3088, %v3105
        %v3141 = vadd.f32 %v3122, %v3139
        %v3142 = vadd.f32 %v3140, %v3141
        %v3144 = vlaneseq
        %v3145 = vshrl.u32 %v3144, 7
        %v3146 = vsub.s32 0, %v3145
        %v3147 = vrot.slane %v3070, %v3146
        %v3148 = vlaneseq
        %v3149 = vshrl.u32 %v3148, 7
        %v3150 = vsub.s32 1, %v3149
        %v3151 = vrot.slane %v3070, %v3150
        %v3152 = vcombine.low %v3147, %v3151
        %v3154 = vadd.f32 %v3142, %v3152
        %v3156 = vcombine.high %v3154, %v3154
        %v3158 = vsel %vm740, %v3154, 0.0
        %v3159 = vsel %vm740, %v3156, 0.0
        %v3160 = vadd.f32 %v3158, %v3159
        %3161 = vadd.xlane.f32.xlu0 %v3160
        %v3162 = vpop.xlane.xlu0 %3161
        %v3163 = vrcp.pop 256.0
        %v3164 = vmul.f32 %v3162, %v3163
        %v3167 = vunpack.c.l.s4 839922192
        %v3168 = vunpack.c.0.s8 %v3167
        %v3169 = vlaneseq
        %v3170 = vshrl.u32 %v3169, 7
        %v3171 = vsub.s32 %v3168, %v3170
        %v3172 = vrot.slane %v3164, %v3171
        %v3174 = vsub.f32 %v3154, %v3172
        %v3175 = vmul.f32 %v3174, %v3174
        %v3177 = vcombine.high %v3175, %v3175
        %v3179 = vsel %vm740, %v3175, 0.0
        %v3180 = vsel %vm740, %v3177, 0.0
        %v3181 = vadd.f32 %v3179, %v3180
        %3182 = vadd.xlane.f32.xlu0 %v3181
        %v3183 = vpop.xlane.xlu0 %3182
        %v3184 = vmul.f32 %v3183, %v3163
        %v3185 = vadd.f32 %v3184, 1e-06
        %v3186 = vrsqrt.pop %v3185
        %v3189 = vunpack.c.l.s4 839922192
        %v3190 = vunpack.c.0.s8 %v3189
        %v3191 = vlaneseq
        %v3192 = vshrl.u32 %v3191, 7
        %v3193 = vsub.s32 %v3190, %v3192
        %v3194 = vrot.slane %v3186, %v3193
        %v3196 = vmul.f32 %v3174, %v3194
        %v3198 = vlaneseq
        %v3199 = vshrl.u32 %v3198, 7
        %v3200 = vsub.s32 0, %v3199
        %v3201 = vrot.slane %v3072, %v3200
        %v3202 = vlaneseq
        %v3203 = vshrl.u32 %v3202, 7
        %v3204 = vsub.s32 1, %v3203
        %v3205 = vrot.slane %v3072, %v3204
        %v3206 = vcombine.low %v3201, %v3205
        %v3208 = vmul.f32 %v3196, %v3206
        %v3210 = vlaneseq
        %v3211 = vshrl.u32 %v3210, 7
        %v3212 = vsub.s32 0, %v3211
        %v3213 = vrot.slane %v3074, %v3212
        %v3214 = vlaneseq
        %v3215 = vshrl.u32 %v3214, 7
        %v3216 = vsub.s32 1, %v3215
        %v3217 = vrot.slane %v3074, %v3216
        %v3218 = vcombine.low %v3213, %v3217
        %v3220 = vadd.f32 %v3208, %v3218
        %v3222 = vcombine.high %v3220, %v3220
        %v3224 = vpack.c.bf16 %v3220, %v3220
        %v3225 = vpack.c.bf16 %v3222, %v3222
        %v3226 = vld [vmem:[#allocation16] sm:$0xff]
        %v3227 = vld [vmem:[#allocation16 + $0x8] sm:$0xff]
        %v3228 = vld [vmem:[#allocation16 + $0x10] sm:$0xff]
        %v3229 = vld [vmem:[#allocation16 + $0x18] sm:$0xff]
        %v3230 = vld [vmem:[#allocation16 + $0x20] sm:$0xff]
        %v3231 = vld [vmem:[#allocation16 + $0x28] sm:$0xff]
        %v3232 = vld [vmem:[#allocation16 + $0x30] sm:$0xff]
        %v3233 = vld [vmem:[#allocation16 + $0x38] sm:$0xff]
        %v3234 = vld [vmem:[#allocation16 + $0x40] sm:$0xff]
        %v3235 = vld [vmem:[#allocation16 + $0x48] sm:$0xff]
        %v3236 = vld [vmem:[#allocation16 + $0x50] sm:$0xff]
        %v3237 = vld [vmem:[#allocation16 + $0x58] sm:$0xff]
        %v3238 = vld [vmem:[#allocation16 + $0x60] sm:$0xff]
        %v3239 = vld [vmem:[#allocation16 + $0x68] sm:$0xff]
        %v3240 = vld [vmem:[#allocation16 + $0x70] sm:$0xff]
        %v3241 = vld [vmem:[#allocation16 + $0x78] sm:$0xff]
        %v3242 = vld [vmem:[#allocation16 + $0x80] sm:$0xff]
        %v3243 = vld [vmem:[#allocation16 + $0x88] sm:$0xff]
        %v3244 = vld [vmem:[#allocation16 + $0x90] sm:$0xff]
        %v3245 = vld [vmem:[#allocation16 + $0x98] sm:$0xff]
        %v3246 = vld [vmem:[#allocation16 + $0xa0] sm:$0xff]
        %v3247 = vld [vmem:[#allocation16 + $0xa8] sm:$0xff]
        %v3248 = vld [vmem:[#allocation16 + $0xb0] sm:$0xff]
        %v3249 = vld [vmem:[#allocation16 + $0xb8] sm:$0xff]
        %v3250 = vld [vmem:[#allocation16 + $0xc0] sm:$0xff]
        %v3251 = vld [vmem:[#allocation16 + $0xc8] sm:$0xff]
        %v3252 = vld [vmem:[#allocation16 + $0xd0] sm:$0xff]
        %v3253 = vld [vmem:[#allocation16 + $0xd8] sm:$0xff]
        %v3254 = vld [vmem:[#allocation16 + $0xe0] sm:$0xff]
        %v3255 = vld [vmem:[#allocation16 + $0xe8] sm:$0xff]
        %v3256 = vld [vmem:[#allocation16 + $0xf0] sm:$0xff]
        %v3257 = vld [vmem:[#allocation16 + $0xf8] sm:$0xff]
        %v3258 = vld [vmem:[#allocation16 + $0x100] sm:$0xff]
        %v3259 = vld [vmem:[#allocation16 + $0x108] sm:$0xff]
        %v3260 = vld [vmem:[#allocation16 + $0x110] sm:$0xff]
        %v3261 = vld [vmem:[#allocation16 + $0x118] sm:$0xff]
        %v3262 = vld [vmem:[#allocation16 + $0x120] sm:$0xff]
        %v3263 = vld [vmem:[#allocation16 + $0x128] sm:$0xff]
        %v3264 = vld [vmem:[#allocation16 + $0x130] sm:$0xff]
        %v3265 = vld [vmem:[#allocation16 + $0x138] sm:$0xff]
        %v3266 = vld [vmem:[#allocation16 + $0x140] sm:$0xff]
        %v3267 = vld [vmem:[#allocation16 + $0x148] sm:$0xff]
        %v3268 = vld [vmem:[#allocation16 + $0x150] sm:$0xff]
        %v3269 = vld [vmem:[#allocation16 + $0x158] sm:$0xff]
        %v3270 = vld [vmem:[#allocation16 + $0x160] sm:$0xff]
        %v3271 = vld [vmem:[#allocation16 + $0x168] sm:$0xff]
        %v3272 = vld [vmem:[#allocation16 + $0x170] sm:$0xff]
        %v3273 = vld [vmem:[#allocation16 + $0x178] sm:$0xff]
        %v3274 = vld [vmem:[#allocation16 + $0x180] sm:$0xff]
        %v3275 = vld [vmem:[#allocation16 + $0x188] sm:$0xff]
        %v3276 = vld [vmem:[#allocation16 + $0x190] sm:$0xff]
        %v3277 = vld [vmem:[#allocation16 + $0x198] sm:$0xff]
        %v3278 = vld [vmem:[#allocation16 + $0x1a0] sm:$0xff]
        %v3279 = vld [vmem:[#allocation16 + $0x1a8] sm:$0xff]
        %v3280 = vld [vmem:[#allocation16 + $0x1b0] sm:$0xff]
        %v3281 = vld [vmem:[#allocation16 + $0x1b8] sm:$0xff]
        %v3282 = vld [vmem:[#allocation16 + $0x1c0] sm:$0xff]
        %v3283 = vld [vmem:[#allocation16 + $0x1c8] sm:$0xff]
        %v3284 = vld [vmem:[#allocation16 + $0x1d0] sm:$0xff]
        %v3285 = vld [vmem:[#allocation16 + $0x1d8] sm:$0xff]
        %v3286 = vld [vmem:[#allocation16 + $0x1e0] sm:$0xff]
        %v3287 = vld [vmem:[#allocation16 + $0x1e8] sm:$0xff]
        %v3288 = vld [vmem:[#allocation16 + $0x1f0] sm:$0xff]
        %v3289 = vld [vmem:[#allocation16 + $0x1f8] sm:$0xff]
        %v3290 = vld [vmem:[#allocation16 + $0x200] sm:$0xff]
        %v3291 = vld [vmem:[#allocation16 + $0x208] sm:$0xff]
        %v3292 = vld [vmem:[#allocation16 + $0x210] sm:$0xff]
        %v3293 = vld [vmem:[#allocation16 + $0x218] sm:$0xff]
        %v3294 = vld [vmem:[#allocation16 + $0x220] sm:$0xff]
        %v3295 = vld [vmem:[#allocation16 + $0x228] sm:$0xff]
        %v3296 = vld [vmem:[#allocation16 + $0x230] sm:$0xff]
        %v3297 = vld [vmem:[#allocation16 + $0x238] sm:$0xff]
        %v3298 = vld [vmem:[#allocation16 + $0x240] sm:$0xff]
        %v3299 = vld [vmem:[#allocation16 + $0x248] sm:$0xff]
        %v3300 = vld [vmem:[#allocation16 + $0x250] sm:$0xff]
        %v3301 = vld [vmem:[#allocation16 + $0x258] sm:$0xff]
        %v3302 = vld [vmem:[#allocation16 + $0x260] sm:$0xff]
        %v3303 = vld [vmem:[#allocation16 + $0x268] sm:$0xff]
        %v3304 = vld [vmem:[#allocation16 + $0x270] sm:$0xff]
        %v3305 = vld [vmem:[#allocation16 + $0x278] sm:$0xff]
        %v3306 = vld [vmem:[#allocation16 + $0x280] sm:$0xff]
        %v3307 = vld [vmem:[#allocation16 + $0x288] sm:$0xff]
        %v3308 = vld [vmem:[#allocation16 + $0x290] sm:$0xff]
        %v3309 = vld [vmem:[#allocation16 + $0x298] sm:$0xff]
        %v3310 = vld [vmem:[#allocation16 + $0x2a0] sm:$0xff]
        %v3311 = vld [vmem:[#allocation16 + $0x2a8] sm:$0xff]
        %v3312 = vld [vmem:[#allocation16 + $0x2b0] sm:$0xff]
        %v3313 = vld [vmem:[#allocation16 + $0x2b8] sm:$0xff]
        %v3314 = vld [vmem:[#allocation16 + $0x2c0] sm:$0xff]
        %v3315 = vld [vmem:[#allocation16 + $0x2c8] sm:$0xff]
        %v3316 = vld [vmem:[#allocation16 + $0x2d0] sm:$0xff]
        %v3317 = vld [vmem:[#allocation16 + $0x2d8] sm:$0xff]
        %v3318 = vld [vmem:[#allocation16 + $0x2e0] sm:$0xff]
        %v3319 = vld [vmem:[#allocation16 + $0x2e8] sm:$0xff]
        %v3320 = vld [vmem:[#allocation16 + $0x2f0] sm:$0xff]
        %v3321 = vld [vmem:[#allocation16 + $0x2f8] sm:$0xff]
        %v3322 = vld [vmem:[#allocation16 + $0x300] sm:$0xff]
        %v3323 = vld [vmem:[#allocation16 + $0x308] sm:$0xff]
        %v3324 = vld [vmem:[#allocation16 + $0x310] sm:$0xff]
        %v3325 = vld [vmem:[#allocation16 + $0x318] sm:$0xff]
        %v3326 = vld [vmem:[#allocation16 + $0x320] sm:$0xff]
        %v3327 = vld [vmem:[#allocation16 + $0x328] sm:$0xff]
        %v3328 = vld [vmem:[#allocation16 + $0x330] sm:$0xff]
        %v3329 = vld [vmem:[#allocation16 + $0x338] sm:$0xff]
        %v3330 = vld [vmem:[#allocation16 + $0x340] sm:$0xff]
        %v3331 = vld [vmem:[#allocation16 + $0x348] sm:$0xff]
        %v3332 = vld [vmem:[#allocation16 + $0x350] sm:$0xff]
        %v3333 = vld [vmem:[#allocation16 + $0x358] sm:$0xff]
        %v3334 = vld [vmem:[#allocation16 + $0x360] sm:$0xff]
        %v3335 = vld [vmem:[#allocation16 + $0x368] sm:$0xff]
        %v3336 = vld [vmem:[#allocation16 + $0x370] sm:$0xff]
        %v3337 = vld [vmem:[#allocation16 + $0x378] sm:$0xff]
        %v3338 = vld [vmem:[#allocation16 + $0x380] sm:$0xff]
        %v3339 = vld [vmem:[#allocation16 + $0x388] sm:$0xff]
        %v3340 = vld [vmem:[#allocation16 + $0x390] sm:$0xff]
        %v3341 = vld [vmem:[#allocation16 + $0x398] sm:$0xff]
        %v3342 = vld [vmem:[#allocation16 + $0x3a0] sm:$0xff]
        %v3343 = vld [vmem:[#allocation16 + $0x3a8] sm:$0xff]
        %v3344 = vld [vmem:[#allocation16 + $0x3b0] sm:$0xff]
        %v3345 = vld [vmem:[#allocation16 + $0x3b8] sm:$0xff]
        %v3346 = vld [vmem:[#allocation16 + $0x3c0] sm:$0xff]
        %v3347 = vld [vmem:[#allocation16 + $0x3c8] sm:$0xff]
        %v3348 = vld [vmem:[#allocation16 + $0x3d0] sm:$0xff]
        %v3349 = vld [vmem:[#allocation16 + $0x3d8] sm:$0xff]
        %v3350 = vld [vmem:[#allocation16 + $0x3e0] sm:$0xff]
        %v3351 = vld [vmem:[#allocation16 + $0x3e8] sm:$0xff]
        %v3352 = vld [vmem:[#allocation16 + $0x3f0] sm:$0xff]
        %v3353 = vld [vmem:[#allocation16 + $0x3f8] sm:$0xff]
        %v3355 = vlaneseq
        %v3356 = vshrl.u32 %v3355, 7
        %v3357 = vsub.s32 0, %v3356
        %v3358 = vrot.slane %v3078, %v3357
        %v3359 = vlaneseq
        %v3360 = vshrl.u32 %v3359, 7
        %v3361 = vsub.s32 1, %v3360
        %v3362 = vrot.slane %v3078, %v3361
        %v3363 = vlaneseq
        %v3364 = vshrl.u32 %v3363, 7
        %v3365 = vsub.s32 2, %v3364
        %v3366 = vrot.slane %v3078, %v3365
        %v3367 = vlaneseq
        %v3368 = vshrl.u32 %v3367, 7
        %v3369 = vsub.s32 3, %v3368
        %v3370 = vrot.slane %v3078, %v3369
        %v3371 = vlaneseq
        %v3372 = vshrl.u32 %v3371, 7
        %v3373 = vsub.s32 4, %v3372
        %v3374 = vrot.slane %v3078, %v3373
        %v3375 = vlaneseq
        %v3376 = vshrl.u32 %v3375, 7
        %v3377 = vsub.s32 5, %v3376
        %v3378 = vrot.slane %v3078, %v3377
        %v3379 = vlaneseq
        %v3380 = vshrl.u32 %v3379, 7
        %v3381 = vsub.s32 6, %v3380
        %v3382 = vrot.slane %v3078, %v3381
        %v3383 = vlaneseq
        %v3384 = vshrl.u32 %v3383, 7
        %v3385 = vsub.s32 7, %v3384
        %v3386 = vrot.slane %v3078, %v3385
        %v3523 = vunpack.c.l.b16 %v3226
        %v3524 = vunpack.c.h.b16 %v3226
        %v3525 = vunpack.c.l.b16 %v3227
        %v3526 = vunpack.c.h.b16 %v3227
        %v3527 = vunpack.c.l.b16 %v3228
        %v3528 = vunpack.c.h.b16 %v3228
        %v3529 = vunpack.c.l.b16 %v3229
        %v3530 = vunpack.c.h.b16 %v3229
        %v3531 = vunpack.c.l.b16 %v3230
        %v3532 = vunpack.c.h.b16 %v3230
        %v3533 = vunpack.c.l.b16 %v3231
        %v3534 = vunpack.c.h.b16 %v3231
        %v3535 = vunpack.c.l.b16 %v3232
        %v3536 = vunpack.c.h.b16 %v3232
        %v3537 = vunpack.c.l.b16 %v3233
        %v3538 = vunpack.c.h.b16 %v3233
        %v3539 = vunpack.c.l.b16 %v3234
        %v3540 = vunpack.c.h.b16 %v3234
        %v3541 = vunpack.c.l.b16 %v3235
        %v3542 = vunpack.c.h.b16 %v3235
        %v3543 = vunpack.c.l.b16 %v3236
        %v3544 = vunpack.c.h.b16 %v3236
        %v3545 = vunpack.c.l.b16 %v3237
        %v3546 = vunpack.c.h.b16 %v3237
        %v3547 = vunpack.c.l.b16 %v3238
        %v3548 = vunpack.c.h.b16 %v3238
        %v3549 = vunpack.c.l.b16 %v3239
        %v3550 = vunpack.c.h.b16 %v3239
        %v3551 = vunpack.c.l.b16 %v3240
        %v3552 = vunpack.c.h.b16 %v3240
        %v3553 = vunpack.c.l.b16 %v3241
        %v3554 = vunpack.c.h.b16 %v3241
        %v3555 = vunpack.c.l.b16 %v3242
        %v3556 = vunpack.c.h.b16 %v3242
        %v3557 = vunpack.c.l.b16 %v3243
        %v3558 = vunpack.c.h.b16 %v3243
        %v3559 = vunpack.c.l.b16 %v3244
        %v3560 = vunpack.c.h.b16 %v3244
        %v3561 = vunpack.c.l.b16 %v3245
        %v3562 = vunpack.c.h.b16 %v3245
        %v3563 = vunpack.c.l.b16 %v3246
        %v3564 = vunpack.c.h.b16 %v3246
        %v3565 = vunpack.c.l.b16 %v3247
        %v3566 = vunpack.c.h.b16 %v3247
        %v3567 = vunpack.c.l.b16 %v3248
        %v3568 = vunpack.c.h.b16 %v3248
        %v3569 = vunpack.c.l.b16 %v3249
        %v3570 = vunpack.c.h.b16 %v3249
        %v3571 = vunpack.c.l.b16 %v3250
        %v3572 = vunpack.c.h.b16 %v3250
        %v3573 = vunpack.c.l.b16 %v3251
        %v3574 = vunpack.c.h.b16 %v3251
        %v3575 = vunpack.c.l.b16 %v3252
        %v3576 = vunpack.c.h.b16 %v3252
        %v3577 = vunpack.c.l.b16 %v3253
        %v3578 = vunpack.c.h.b16 %v3253
        %v3579 = vunpack.c.l.b16 %v3254
        %v3580 = vunpack.c.h.b16 %v3254
        %v3581 = vunpack.c.l.b16 %v3255
        %v3582 = vunpack.c.h.b16 %v3255
        %v3583 = vunpack.c.l.b16 %v3256
        %v3584 = vunpack.c.h.b16 %v3256
        %v3585 = vunpack.c.l.b16 %v3257
        %v3586 = vunpack.c.h.b16 %v3257
        %v3587 = vunpack.c.l.b16 %v3258
        %v3588 = vunpack.c.h.b16 %v3258
        %v3589 = vunpack.c.l.b16 %v3259
        %v3590 = vunpack.c.h.b16 %v3259
        %v3591 = vunpack.c.l.b16 %v3260
        %v3592 = vunpack.c.h.b16 %v3260
        %v3593 = vunpack.c.l.b16 %v3261
        %v3594 = vunpack.c.h.b16 %v3261
        %v3595 = vunpack.c.l.b16 %v3262
        %v3596 = vunpack.c.h.b16 %v3262
        %v3597 = vunpack.c.l.b16 %v3263
        %v3598 = vunpack.c.h.b16 %v3263
        %v3599 = vunpack.c.l.b16 %v3264
        %v3600 = vunpack.c.h.b16 %v3264
        %v3601 = vunpack.c.l.b16 %v3265
        %v3602 = vunpack.c.h.b16 %v3265
        %v3603 = vunpack.c.l.b16 %v3266
        %v3604 = vunpack.c.h.b16 %v3266
        %v3605 = vunpack.c.l.b16 %v3267
        %v3606 = vunpack.c.h.b16 %v3267
        %v3607 = vunpack.c.l.b16 %v3268
        %v3608 = vunpack.c.h.b16 %v3268
        %v3609 = vunpack.c.l.b16 %v3269
        %v3610 = vunpack.c.h.b16 %v3269
        %v3611 = vunpack.c.l.b16 %v3270
        %v3612 = vunpack.c.h.b16 %v3270
        %v3613 = vunpack.c.l.b16 %v3271
        %v3614 = vunpack.c.h.b16 %v3271
        %v3615 = vunpack.c.l.b16 %v3272
        %v3616 = vunpack.c.h.b16 %v3272
        %v3617 = vunpack.c.l.b16 %v3273
        %v3618 = vunpack.c.h.b16 %v3273
        %v3619 = vunpack.c.l.b16 %v3274
        %v3620 = vunpack.c.h.b16 %v3274
        %v3621 = vunpack.c.l.b16 %v3275
        %v3622 = vunpack.c.h.b16 %v3275
        %v3623 = vunpack.c.l.b16 %v3276
        %v3624 = vunpack.c.h.b16 %v3276
        %v3625 = vunpack.c.l.b16 %v3277
        %v3626 = vunpack.c.h.b16 %v3277
        %v3627 = vunpack.c.l.b16 %v3278
        %v3628 = vunpack.c.h.b16 %v3278
        %v3629 = vunpack.c.l.b16 %v3279
        %v3630 = vunpack.c.h.b16 %v3279
        %v3631 = vunpack.c.l.b16 %v3280
        %v3632 = vunpack.c.h.b16 %v3280
        %v3633 = vunpack.c.l.b16 %v3281
        %v3634 = vunpack.c.h.b16 %v3281
        %v3635 = vunpack.c.l.b16 %v3282
        %v3636 = vunpack.c.h.b16 %v3282
        %v3637 = vunpack.c.l.b16 %v3283
        %v3638 = vunpack.c.h.b16 %v3283
        %v3639 = vunpack.c.l.b16 %v3284
        %v3640 = vunpack.c.h.b16 %v3284
        %v3641 = vunpack.c.l.b16 %v3285
        %v3642 = vunpack.c.h.b16 %v3285
        %v3643 = vunpack.c.l.b16 %v3286
        %v3644 = vunpack.c.h.b16 %v3286
        %v3645 = vunpack.c.l.b16 %v3287
        %v3646 = vunpack.c.h.b16 %v3287
        %v3647 = vunpack.c.l.b16 %v3288
        %v3648 = vunpack.c.h.b16 %v3288
        %v3649 = vunpack.c.l.b16 %v3289
        %v3650 = vunpack.c.h.b16 %v3289
        %v3651 = vunpack.c.l.b16 %v3290
        %v3652 = vunpack.c.h.b16 %v3290
        %v3653 = vunpack.c.l.b16 %v3291
        %v3654 = vunpack.c.h.b16 %v3291
        %v3655 = vunpack.c.l.b16 %v3292
        %v3656 = vunpack.c.h.b16 %v3292
        %v3657 = vunpack.c.l.b16 %v3293
        %v3658 = vunpack.c.h.b16 %v3293
        %v3659 = vunpack.c.l.b16 %v3294
        %v3660 = vunpack.c.h.b16 %v3294
        %v3661 = vunpack.c.l.b16 %v3295
        %v3662 = vunpack.c.h.b16 %v3295
        %v3663 = vunpack.c.l.b16 %v3296
        %v3664 = vunpack.c.h.b16 %v3296
        %v3665 = vunpack.c.l.b16 %v3297
        %v3666 = vunpack.c.h.b16 %v3297
        %v3667 = vunpack.c.l.b16 %v3298
        %v3668 = vunpack.c.h.b16 %v3298
        %v3669 = vunpack.c.l.b16 %v3299
        %v3670 = vunpack.c.h.b16 %v3299
        %v3671 = vunpack.c.l.b16 %v3300
        %v3672 = vunpack.c.h.b16 %v3300
        %v3673 = vunpack.c.l.b16 %v3301
        %v3674 = vunpack.c.h.b16 %v3301
        %v3675 = vunpack.c.l.b16 %v3302
        %v3676 = vunpack.c.h.b16 %v3302
        %v3677 = vunpack.c.l.b16 %v3303
        %v3678 = vunpack.c.h.b16 %v3303
        %v3679 = vunpack.c.l.b16 %v3304
        %v3680 = vunpack.c.h.b16 %v3304
        %v3681 = vunpack.c.l.b16 %v3305
        %v3682 = vunpack.c.h.b16 %v3305
        %v3683 = vunpack.c.l.b16 %v3306
        %v3684 = vunpack.c.h.b16 %v3306
        %v3685 = vunpack.c.l.b16 %v3307
        %v3686 = vunpack.c.h.b16 %v3307
        %v3687 = vunpack.c.l.b16 %v3308
        %v3688 = vunpack.c.h.b16 %v3308
        %v3689 = vunpack.c.l.b16 %v3309
        %v3690 = vunpack.c.h.b16 %v3309
        %v3691 = vunpack.c.l.b16 %v3310
        %v3692 = vunpack.c.h.b16 %v3310
        %v3693 = vunpack.c.l.b16 %v3311
        %v3694 = vunpack.c.h.b16 %v3311
        %v3695 = vunpack.c.l.b16 %v3312
        %v3696 = vunpack.c.h.b16 %v3312
        %v3697 = vunpack.c.l.b16 %v3313
        %v3698 = vunpack.c.h.b16 %v3313
        %v3699 = vunpack.c.l.b16 %v3314
        %v3700 = vunpack.c.h.b16 %v3314
        %v3701 = vunpack.c.l.b16 %v3315
        %v3702 = vunpack.c.h.b16 %v3315
        %v3703 = vunpack.c.l.b16 %v3316
        %v3704 = vunpack.c.h.b16 %v3316
        %v3705 = vunpack.c.l.b16 %v3317
        %v3706 = vunpack.c.h.b16 %v3317
        %v3707 = vunpack.c.l.b16 %v3318
        %v3708 = vunpack.c.h.b16 %v3318
        %v3709 = vunpack.c.l.b16 %v3319
        %v3710 = vunpack.c.h.b16 %v3319
        %v3711 = vunpack.c.l.b16 %v3320
        %v3712 = vunpack.c.h.b16 %v3320
        %v3713 = vunpack.c.l.b16 %v3321
        %v3714 = vunpack.c.h.b16 %v3321
        %v3715 = vunpack.c.l.b16 %v3322
        %v3716 = vunpack.c.h.b16 %v3322
        %v3717 = vunpack.c.l.b16 %v3323
        %v3718 = vunpack.c.h.b16 %v3323
        %v3719 = vunpack.c.l.b16 %v3324
        %v3720 = vunpack.c.h.b16 %v3324
        %v3721 = vunpack.c.l.b16 %v3325
        %v3722 = vunpack.c.h.b16 %v3325
        %v3723 = vunpack.c.l.b16 %v3326
        %v3724 = vunpack.c.h.b16 %v3326
        %v3725 = vunpack.c.l.b16 %v3327
        %v3726 = vunpack.c.h.b16 %v3327
        %v3727 = vunpack.c.l.b16 %v3328
        %v3728 = vunpack.c.h.b16 %v3328
        %v3729 = vunpack.c.l.b16 %v3329
        %v3730 = vunpack.c.h.b16 %v3329
        %v3731 = vunpack.c.l.b16 %v3330
        %v3732 = vunpack.c.h.b16 %v3330
        %v3733 = vunpack.c.l.b16 %v3331
        %v3734 = vunpack.c.h.b16 %v3331
        %v3735 = vunpack.c.l.b16 %v3332
        %v3736 = vunpack.c.h.b16 %v3332
        %v3737 = vunpack.c.l.b16 %v3333
        %v3738 = vunpack.c.h.b16 %v3333
        %v3739 = vunpack.c.l.b16 %v3334
        %v3740 = vunpack.c.h.b16 %v3334
        %v3741 = vunpack.c.l.b16 %v3335
        %v3742 = vunpack.c.h.b16 %v3335
        %v3743 = vunpack.c.l.b16 %v3336
        %v3744 = vunpack.c.h.b16 %v3336
        %v3745 = vunpack.c.l.b16 %v3337
        %v3746 = vunpack.c.h.b16 %v3337
        %v3747 = vunpack.c.l.b16 %v3338
        %v3748 = vunpack.c.h.b16 %v3338
        %v3749 = vunpack.c.l.b16 %v3339
        %v3750 = vunpack.c.h.b16 %v3339
        %v3751 = vunpack.c.l.b16 %v3340
        %v3752 = vunpack.c.h.b16 %v3340
        %v3753 = vunpack.c.l.b16 %v3341
        %v3754 = vunpack.c.h.b16 %v3341
        %v3755 = vunpack.c.l.b16 %v3342
        %v3756 = vunpack.c.h.b16 %v3342
        %v3757 = vunpack.c.l.b16 %v3343
        %v3758 = vunpack.c.h.b16 %v3343
        %v3759 = vunpack.c.l.b16 %v3344
        %v3760 = vunpack.c.h.b16 %v3344
        %v3761 = vunpack.c.l.b16 %v3345
        %v3762 = vunpack.c.h.b16 %v3345
        %v3763 = vunpack.c.l.b16 %v3346
        %v3764 = vunpack.c.h.b16 %v3346
        %v3765 = vunpack.c.l.b16 %v3347
        %v3766 = vunpack.c.h.b16 %v3347
        %v3767 = vunpack.c.l.b16 %v3348
        %v3768 = vunpack.c.h.b16 %v3348
        %v3769 = vunpack.c.l.b16 %v3349
        %v3770 = vunpack.c.h.b16 %v3349
        %v3771 = vunpack.c.l.b16 %v3350
        %v3772 = vunpack.c.h.b16 %v3350
        %v3773 = vunpack.c.l.b16 %v3351
        %v3774 = vunpack.c.h.b16 %v3351
        %v3775 = vunpack.c.l.b16 %v3352
        %v3776 = vunpack.c.h.b16 %v3352
        %v3777 = vunpack.c.l.b16 %v3353
        %v3778 = vunpack.c.h.b16 %v3353
        %v3779 = vpack.c.b16 %v3531, %v3523
        %v3780 = vpack.c.b16 %v3532, %v3524
        %v3781 = vpack.c.b16 %v3533, %v3525
        %v3782 = vpack.c.b16 %v3534, %v3526
        %v3783 = vpack.c.b16 %v3535, %v3527
        %v3784 = vpack.c.b16 %v3536, %v3528
        %v3785 = vpack.c.b16 %v3537, %v3529
        %v3786 = vpack.c.b16 %v3538, %v3530
        %v3787 = vpack.c.b16 %v3547, %v3539
        %v3788 = vpack.c.b16 %v3548, %v3540
        %v3789 = vpack.c.b16 %v3549, %v3541
        %v3790 = vpack.c.b16 %v3550, %v3542
        %v3791 = vpack.c.b16 %v3551, %v3543
        %v3792 = vpack.c.b16 %v3552, %v3544
        %v3793 = vpack.c.b16 %v3553, %v3545
        %v3794 = vpack.c.b16 %v3554, %v3546
        %v3795 = vpack.c.b16 %v3563, %v3555
        %v3796 = vpack.c.b16 %v3564, %v3556
        %v3797 = vpack.c.b16 %v3565, %v3557
        %v3798 = vpack.c.b16 %v3566, %v3558
        %v3799 = vpack.c.b16 %v3567, %v3559
        %v3800 = vpack.c.b16 %v3568, %v3560
        %v3801 = vpack.c.b16 %v3569, %v3561
        %v3802 = vpack.c.b16 %v3570, %v3562
        %v3803 = vpack.c.b16 %v3579, %v3571
        %v3804 = vpack.c.b16 %v3580, %v3572
        %v3805 = vpack.c.b16 %v3581, %v3573
        %v3806 = vpack.c.b16 %v3582, %v3574
        %v3807 = vpack.c.b16 %v3583, %v3575
        %v3808 = vpack.c.b16 %v3584, %v3576
        %v3809 = vpack.c.b16 %v3585, %v3577
        %v3810 = vpack.c.b16 %v3586, %v3578
        %v3811 = vpack.c.b16 %v3595, %v3587
        %v3812 = vpack.c.b16 %v3596, %v3588
        %v3813 = vpack.c.b16 %v3597, %v3589
        %v3814 = vpack.c.b16 %v3598, %v3590
        %v3815 = vpack.c.b16 %v3599, %v3591
        %v3816 = vpack.c.b16 %v3600, %v3592
        %v3817 = vpack.c.b16 %v3601, %v3593
        %v3818 = vpack.c.b16 %v3602, %v3594
        %v3819 = vpack.c.b16 %v3611, %v3603
        %v3820 = vpack.c.b16 %v3612, %v3604
        %v3821 = vpack.c.b16 %v3613, %v3605
        %v3822 = vpack.c.b16 %v3614, %v3606
        %v3823 = vpack.c.b16 %v3615, %v3607
        %v3824 = vpack.c.b16 %v3616, %v3608
        %v3825 = vpack.c.b16 %v3617, %v3609
        %v3826 = vpack.c.b16 %v3618, %v3610
        %v3827 = vpack.c.b16 %v3627, %v3619
        %v3828 = vpack.c.b16 %v3628, %v3620
        %v3829 = vpack.c.b16 %v3629, %v3621
        %v3830 = vpack.c.b16 %v3630, %v3622
        %v3831 = vpack.c.b16 %v3631, %v3623
        %v3832 = vpack.c.b16 %v3632, %v3624
        %v3833 = vpack.c.b16 %v3633, %v3625
        %v3834 = vpack.c.b16 %v3634, %v3626
        %v3835 = vpack.c.b16 %v3643, %v3635
        %v3836 = vpack.c.b16 %v3644, %v3636
        %v3837 = vpack.c.b16 %v3645, %v3637
        %v3838 = vpack.c.b16 %v3646, %v3638
        %v3839 = vpack.c.b16 %v3647, %v3639
        %v3840 = vpack.c.b16 %v3648, %v3640
        %v3841 = vpack.c.b16 %v3649, %v3641
        %v3842 = vpack.c.b16 %v3650, %v3642
        %v3843 = vpack.c.b16 %v3659, %v3651
        %v3844 = vpack.c.b16 %v3660, %v3652
        %v3845 = vpack.c.b16 %v3661, %v3653
        %v3846 = vpack.c.b16 %v3662, %v3654
        %v3847 = vpack.c.b16 %v3663, %v3655
        %v3848 = vpack.c.b16 %v3664, %v3656
        %v3849 = vpack.c.b16 %v3665, %v3657
        %v3850 = vpack.c.b16 %v3666, %v3658
        %v3851 = vpack.c.b16 %v3675, %v3667
        %v3852 = vpack.c.b16 %v3676, %v3668
        %v3853 = vpack.c.b16 %v3677, %v3669
        %v3854 = vpack.c.b16 %v3678, %v3670
        %v3855 = vpack.c.b16 %v3679, %v3671
        %v3856 = vpack.c.b16 %v3680, %v3672
        %v3857 = vpack.c.b16 %v3681, %v3673
        %v3858 = vpack.c.b16 %v3682, %v3674
        %v3859 = vpack.c.b16 %v3691, %v3683
        %v3860 = vpack.c.b16 %v3692, %v3684
        %v3861 = vpack.c.b16 %v3693, %v3685
        %v3862 = vpack.c.b16 %v3694, %v3686
        %v3863 = vpack.c.b16 %v3695, %v3687
        %v3864 = vpack.c.b16 %v3696, %v3688
        %v3865 = vpack.c.b16 %v3697, %v3689
        %v3866 = vpack.c.b16 %v3698, %v3690
        %v3867 = vpack.c.b16 %v3707, %v3699
        %v3868 = vpack.c.b16 %v3708, %v3700
        %v3869 = vpack.c.b16 %v3709, %v3701
        %v3870 = vpack.c.b16 %v3710, %v3702
        %v3871 = vpack.c.b16 %v3711, %v3703
        %v3872 = vpack.c.b16 %v3712, %v3704
        %v3873 = vpack.c.b16 %v3713, %v3705
        %v3874 = vpack.c.b16 %v3714, %v3706
        %v3875 = vpack.c.b16 %v3723, %v3715
        %v3876 = vpack.c.b16 %v3724, %v3716
        %v3877 = vpack.c.b16 %v3725, %v3717
        %v3878 = vpack.c.b16 %v3726, %v3718
        %v3879 = vpack.c.b16 %v3727, %v3719
        %v3880 = vpack.c.b16 %v3728, %v3720
        %v3881 = vpack.c.b16 %v3729, %v3721
        %v3882 = vpack.c.b16 %v3730, %v3722
        %v3883 = vpack.c.b16 %v3739, %v3731
        %v3884 = vpack.c.b16 %v3740, %v3732
        %v3885 = vpack.c.b16 %v3741, %v3733
        %v3886 = vpack.c.b16 %v3742, %v3734
        %v3887 = vpack.c.b16 %v3743, %v3735
        %v3888 = vpack.c.b16 %v3744, %v3736
        %v3889 = vpack.c.b16 %v3745, %v3737
        %v3890 = vpack.c.b16 %v3746, %v3738
        %v3891 = vpack.c.b16 %v3755, %v3747
        %v3892 = vpack.c.b16 %v3756, %v3748
        %v3893 = vpack.c.b16 %v3757, %v3749
        %v3894 = vpack.c.b16 %v3758, %v3750
        %v3895 = vpack.c.b16 %v3759, %v3751
        %v3896 = vpack.c.b16 %v3760, %v3752
        %v3897 = vpack.c.b16 %v3761, %v3753
        %v3898 = vpack.c.b16 %v3762, %v3754
        %v3899 = vpack.c.b16 %v3771, %v3763
        %v3900 = vpack.c.b16 %v3772, %v3764
        %v3901 = vpack.c.b16 %v3773, %v3765
        %v3902 = vpack.c.b16 %v3774, %v3766
        %v3903 = vpack.c.b16 %v3775, %v3767
        %v3904 = vpack.c.b16 %v3776, %v3768
        %v3905 = vpack.c.b16 %v3777, %v3769
        %v3906 = vpack.c.b16 %v3778, %v3770
        %4035 = vmatprep.subr.bf16.mxu0 %v3836
        %4036 = vmatpush1.bf16.msra.mxu0 %v3835
        %4037 = vmatprep.subr.bf16.mxu0 %v3828
        %4038 = vmatpush1.bf16.msra.mxu0 %v3827
        %4039 = vmatprep.subr.bf16.mxu0 %v3820
        %4040 = vmatpush1.bf16.msra.mxu0 %v3819
        %4041 = vmatprep.subr.bf16.mxu0 %v3812
        %4042 = vmatpush1.bf16.msra.mxu0 %v3811
        %4043 = vmatprep.subr.bf16.mxu0 %v3804
        %4044 = vmatpush1.bf16.msra.mxu0 %v3803
        %4045 = vmatprep.subr.bf16.mxu0 %v3796
        %4046 = vmatpush1.bf16.msra.mxu0 %v3795
        %4047 = vmatprep.subr.bf16.mxu0 %v3788
        %4048 = vmatpush1.bf16.msra.mxu0 %v3787
        %4049 = vmatprep.subr.bf16.mxu0 %v3780
        %4050 = vmatpush1.bf16.msra.mxu0 %v3779
        %4051 = vmatprep.subr.bf16.mxu0 %v3900
        %4052 = vmatpush2.bf16.msra.mxu0 %v3899
        %4053 = vmatprep.subr.bf16.mxu0 %v3892
        %4054 = vmatpush2.bf16.msra.mxu0 %v3891
        %4055 = vmatprep.subr.bf16.mxu0 %v3884
        %4056 = vmatpush2.bf16.msra.mxu0 %v3883
        %4057 = vmatprep.subr.bf16.mxu0 %v3876
        %4058 = vmatpush2.bf16.msra.mxu0 %v3875
        %4059 = vmatprep.subr.bf16.mxu0 %v3868
        %4060 = vmatpush2.bf16.msra.mxu0 %v3867
        %4061 = vmatprep.subr.bf16.mxu0 %v3860
        %4062 = vmatpush2.bf16.msra.mxu0 %v3859
        %4063 = vmatprep.subr.bf16.mxu0 %v3852
        %4064 = vmatpush2.bf16.msra.mxu0 %v3851
        %4065 = vmatprep.subr.bf16.mxu0 %v3844
        %4066 = vmatpush2.bf16.msra.mxu0 %v3843
        %4067 = vmatprep.mubr.bf16.mxu0 %v3225
        %4068 = vmatmul.mubr.bf16.gmra.mxu0 %v3224
        %v4069 = vpop.f32.mrf.mxu0
        %v4070 = vadd.f32 %v3358, %v4069
        %v4071 = vpop.f32.mrf.mxu0
        %v4072 = vadd.f32 %v3362, %v4071
        %v4073 = vpop.f32.mrf.mxu0
        %v4074 = vpop.f32.mrf.mxu0
        %4075 = vdwg.mxu0
        %4076 = vmatprep.subr.bf16.mxu0 %v3838
        %4077 = vmatpush1.bf16.msra.mxu0 %v3837
        %4078 = vmatprep.subr.bf16.mxu0 %v3830
        %4079 = vmatpush1.bf16.msra.mxu0 %v3829
        %4080 = vmatprep.subr.bf16.mxu0 %v3822
        %4081 = vmatpush1.bf16.msra.mxu0 %v3821
        %4082 = vmatprep.subr.bf16.mxu0 %v3814
        %4083 = vmatpush1.bf16.msra.mxu0 %v3813
        %4084 = vmatprep.subr.bf16.mxu0 %v3806
        %4085 = vmatpush1.bf16.msra.mxu0 %v3805
        %4086 = vmatprep.subr.bf16.mxu0 %v3798
        %4087 = vmatpush1.bf16.msra.mxu0 %v3797
        %4088 = vmatprep.subr.bf16.mxu0 %v3790
        %4089 = vmatpush1.bf16.msra.mxu0 %v3789
        %4090 = vmatprep.subr.bf16.mxu0 %v3782
        %4091 = vmatpush1.bf16.msra.mxu0 %v3781
        %4092 = vmatprep.subr.bf16.mxu0 %v3902
        %4093 = vmatpush2.bf16.msra.mxu0 %v3901
        %4094 = vmatprep.subr.bf16.mxu0 %v3894
        %4095 = vmatpush2.bf16.msra.mxu0 %v3893
        %4096 = vmatprep.subr.bf16.mxu0 %v3886
        %4097 = vmatpush2.bf16.msra.mxu0 %v3885
        %4098 = vmatprep.subr.bf16.mxu0 %v3878
        %4099 = vmatpush2.bf16.msra.mxu0 %v3877
        %4100 = vmatprep.subr.bf16.mxu0 %v3870
        %4101 = vmatpush2.bf16.msra.mxu0 %v3869
        %4102 = vmatprep.subr.bf16.mxu0 %v3862
        %4103 = vmatpush2.bf16.msra.mxu0 %v3861
        %4104 = vmatprep.subr.bf16.mxu0 %v3854
        %4105 = vmatpush2.bf16.msra.mxu0 %v3853
        %4106 = vmatprep.subr.bf16.mxu0 %v3846
        %4107 = vmatpush2.bf16.msra.mxu0 %v3845
        %4108 = vmatprep.mubr.bf16.mxu0 %v3225
        %4109 = vmatmul.mubr.bf16.gmra.mxu0 %v3224
        %v4110 = vpop.f32.mrf.mxu0
        %v4111 = vadd.f32 %v3366, %v4110
        %v4112 = vpop.f32.mrf.mxu0
        %v4113 = vadd.f32 %v3370, %v4112
        %v4114 = vpop.f32.mrf.mxu0
        %v4115 = vpop.f32.mrf.mxu0
        %4116 = vdwg.mxu0
        %4117 = vmatprep.subr.bf16.mxu0 %v3840
        %4118 = vmatpush1.bf16.msra.mxu0 %v3839
        %4119 = vmatprep.subr.bf16.mxu0 %v3832
        %4120 = vmatpush1.bf16.msra.mxu0 %v3831
        %4121 = vmatprep.subr.bf16.mxu0 %v3824
        %4122 = vmatpush1.bf16.msra.mxu0 %v3823
        %4123 = vmatprep.subr.bf16.mxu0 %v3816
        %4124 = vmatpush1.bf16.msra.mxu0 %v3815
        %4125 = vmatprep.subr.bf16.mxu0 %v3808
        %4126 = vmatpush1.bf16.msra.mxu0 %v3807
        %4127 = vmatprep.subr.bf16.mxu0 %v3800
        %4128 = vmatpush1.bf16.msra.mxu0 %v3799
        %4129 = vmatprep.subr.bf16.mxu0 %v3792
        %4130 = vmatpush1.bf16.msra.mxu0 %v3791
        %4131 = vmatprep.subr.bf16.mxu0 %v3784
        %4132 = vmatpush1.bf16.msra.mxu0 %v3783
        %4133 = vmatprep.subr.bf16.mxu0 %v3904
        %4134 = vmatpush2.bf16.msra.mxu0 %v3903
        %4135 = vmatprep.subr.bf16.mxu0 %v3896
        %4136 = vmatpush2.bf16.msra.mxu0 %v3895
        %4137 = vmatprep.subr.bf16.mxu0 %v3888
        %4138 = vmatpush2.bf16.msra.mxu0 %v3887
        %4139 = vmatprep.subr.bf16.mxu0 %v3880
        %4140 = vmatpush2.bf16.msra.mxu0 %v3879
        %4141 = vmatprep.subr.bf16.mxu0 %v3872
        %4142 = vmatpush2.bf16.msra.mxu0 %v3871
        %4143 = vmatprep.subr.bf16.mxu0 %v3864
        %4144 = vmatpush2.bf16.msra.mxu0 %v3863
        %4145 = vmatprep.subr.bf16.mxu0 %v3856
        %4146 = vmatpush2.bf16.msra.mxu0 %v3855
        %4147 = vmatprep.subr.bf16.mxu0 %v3848
        %4148 = vmatpush2.bf16.msra.mxu0 %v3847
        %4149 = vmatprep.mubr.bf16.mxu0 %v3225
        %4150 = vmatmul.mubr.bf16.gmra.mxu0 %v3224
        %v4151 = vpop.f32.mrf.mxu0
        %v4152 = vadd.f32 %v3374, %v4151
        %v4153 = vpop.f32.mrf.mxu0
        %v4154 = vadd.f32 %v3378, %v4153
        %v4155 = vpop.f32.mrf.mxu0
        %v4156 = vpop.f32.mrf.mxu0
        %4157 = vdwg.mxu0
        %4158 = vmatprep.subr.bf16.mxu0 %v3842
        %4159 = vmatpush1.bf16.msra.mxu0 %v3841
        %4160 = vmatprep.subr.bf16.mxu0 %v3834
        %4161 = vmatpush1.bf16.msra.mxu0 %v3833
        %4162 = vmatprep.subr.bf16.mxu0 %v3826
        %4163 = vmatpush1.bf16.msra.mxu0 %v3825
        %4164 = vmatprep.subr.bf16.mxu0 %v3818
        %4165 = vmatpush1.bf16.msra.mxu0 %v3817
        %4166 = vmatprep.subr.bf16.mxu0 %v3810
        %4167 = vmatpush1.bf16.msra.mxu0 %v3809
        %4168 = vmatprep.subr.bf16.mxu0 %v3802
        %4169 = vmatpush1.bf16.msra.mxu0 %v3801
        %4170 = vmatprep.subr.bf16.mxu0 %v3794
        %4171 = vmatpush1.bf16.msra.mxu0 %v3793
        %4172 = vmatprep.subr.bf16.mxu0 %v3786
        %4173 = vmatpush1.bf16.msra.mxu0 %v3785
        %4174 = vmatprep.subr.bf16.mxu0 %v3906
        %4175 = vmatpush2.bf16.msra.mxu0 %v3905
        %4176 = vmatprep.subr.bf16.mxu0 %v3898
        %4177 = vmatpush2.bf16.msra.mxu0 %v3897
        %4178 = vmatprep.subr.bf16.mxu0 %v3890
        %4179 = vmatpush2.bf16.msra.mxu0 %v3889
        %4180 = vmatprep.subr.bf16.mxu0 %v3882
        %4181 = vmatpush2.bf16.msra.mxu0 %v3881
        %4182 = vmatprep.subr.bf16.mxu0 %v3874
        %4183 = vmatpush2.bf16.msra.mxu0 %v3873
        %4184 = vmatprep.subr.bf16.mxu0 %v3866
        %4185 = vmatpush2.bf16.msra.mxu0 %v3865
        %4186 = vmatprep.subr.bf16.mxu0 %v3858
        %4187 = vmatpush2.bf16.msra.mxu0 %v3857
        %4188 = vmatprep.subr.bf16.mxu0 %v3850
        %4189 = vmatpush2.bf16.msra.mxu0 %v3849
        %4190 = vmatprep.mubr.bf16.mxu0 %v3225
        %4191 = vmatmul.mubr.bf16.gmra.mxu0 %v3224
        %v4192 = vpop.f32.mrf.mxu0
        %v4193 = vadd.f32 %v3382, %v4192
        %v4194 = vpop.f32.mrf.mxu0
        %v4195 = vadd.f32 %v3386, %v4194
        %v4196 = vpop.f32.mrf.mxu0
        %v4197 = vpop.f32.mrf.mxu0
        %4198 = vdwg.mxu0
        %v4199 = vmul.f32 %v4070, 0.5
        %v4200 = vmul.f32 %v4072, 0.5
        %v4201 = vmul.f32 %v4111, 0.5
        %v4202 = vmul.f32 %v4113, 0.5
        %v4203 = vmul.f32 %v4152, 0.5
        %v4204 = vmul.f32 %v4154, 0.5
        %v4205 = vmul.f32 %v4193, 0.5
        %v4206 = vmul.f32 %v4195, 0.5
        %v4207 = vmul.f32 %v4070, 0.044715
        %v4208 = vmul.f32 %v4072, 0.044715
        %v4209 = vmul.f32 %v4111, 0.044715
        %v4210 = vmul.f32 %v4113, 0.044715
        %v4211 = vmul.f32 %v4152, 0.044715
        %v4212 = vmul.f32 %v4154, 0.044715
        %v4213 = vmul.f32 %v4193, 0.044715
        %v4214 = vmul.f32 %v4195, 0.044715
        %v4215 = vmul.f32 %v4207, %v4070
        %v4216 = vmul.f32 %v4208, %v4072
        %v4217 = vmul.f32 %v4209, %v4111
        %v4218 = vmul.f32 %v4210, %v4113
        %v4219 = vmul.f32 %v4211, %v4152
        %v4220 = vmul.f32 %v4212, %v4154
        %v4221 = vmul.f32 %v4213, %v4193
        %v4222 = vmul.f32 %v4214, %v4195
        %v4223 = vmul.f32 %v4215, %v4070
        %v4224 = vmul.f32 %v4216, %v4072
        %v4225 = vmul.f32 %v4217, %v4111
        %v4226 = vmul.f32 %v4218, %v4113
        %v4227 = vmul.f32 %v4219, %v4152
        %v4228 = vmul.f32 %v4220, %v4154
        %v4229 = vmul.f32 %v4221, %v4193
        %v4230 = vmul.f32 %v4222, %v4195
        %v4231 = vadd.f32 %v4070, %v4223
        %v4232 = vadd.f32 %v4072, %v4224
        %v4233 = vadd.f32 %v4111, %v4225
        %v4234 = vadd.f32 %v4113, %v4226
        %v4235 = vadd.f32 %v4152, %v4227
        %v4236 = vadd.f32 %v4154, %v4228
        %v4237 = vadd.f32 %v4193, %v4229
        %v4238 = vadd.f32 %v4195, %v4230
        %v4239 = vmul.f32 %v4231, 0.7978846
        %v4240 = vmul.f32 %v4232, 0.7978846
        %v4241 = vmul.f32 %v4233, 0.7978846
        %v4242 = vmul.f32 %v4234, 0.7978846
        %v4243 = vmul.f32 %v4235, 0.7978846
        %v4244 = vmul.f32 %v4236, 0.7978846
        %v4245 = vmul.f32 %v4237, 0.7978846
        %v4246 = vmul.f32 %v4238, 0.7978846
        %v4247 = vtanh.pop %v4239
        %v4248 = vtanh.pop %v4240
        %v4249 = vtanh.pop %v4241
        %v4250 = vtanh.pop %v4242
        %v4251 = vtanh.pop %v4243
        %v4252 = vtanh.pop %v4244
        %v4253 = vtanh.pop %v4245
        %v4254 = vtanh.pop %v4246
        %v4255 = vadd.f32 %v4247, 1.0
        %v4256 = vadd.f32 %v4248, 1.0
        %v4257 = vadd.f32 %v4249, 1.0
        %v4258 = vadd.f32 %v4250, 1.0
        %v4259 = vadd.f32 %v4251, 1.0
        %v4260 = vadd.f32 %v4252, 1.0
        %v4261 = vadd.f32 %v4253, 1.0
        %v4262 = vadd.f32 %v4254, 1.0
        %v4263 = vmul.f32 %v4199, %v4255
        %v4264 = vmul.f32 %v4200, %v4256
        %v4265 = vmul.f32 %v4201, %v4257
        %v4266 = vmul.f32 %v4202, %v4258
        %v4267 = vmul.f32 %v4203, %v4259
        %v4268 = vmul.f32 %v4204, %v4260
        %v4269 = vmul.f32 %v4205, %v4261
        %v4270 = vmul.f32 %v4206, %v4262
        %v4271 = vpack.c.bf16 %v4263, %v4263
        %v4272 = vpack.c.bf16 %v4264, %v4264
        %v4273 = vpack.c.bf16 %v4265, %v4265
        %v4274 = vpack.c.bf16 %v4266, %v4266
        %v4275 = vpack.c.bf16 %v4267, %v4267
        %v4276 = vpack.c.bf16 %v4268, %v4268
        %v4277 = vpack.c.bf16 %v4269, %v4269
        %v4278 = vpack.c.bf16 %v4270, %v4270
        %v4279 = vld [vmem:[#allocation17] sm:$0xff]
        %v4280 = vld [vmem:[#allocation17 + $0x8] sm:$0xff]
        %v4281 = vld [vmem:[#allocation17 + $0x10] sm:$0xff]
        %v4282 = vld [vmem:[#allocation17 + $0x18] sm:$0xff]
        %v4283 = vld [vmem:[#allocation17 + $0x20] sm:$0xff]
        %v4284 = vld [vmem:[#allocation17 + $0x28] sm:$0xff]
        %v4285 = vld [vmem:[#allocation17 + $0x30] sm:$0xff]
        %v4286 = vld [vmem:[#allocation17 + $0x38] sm:$0xff]
        %v4287 = vld [vmem:[#allocation17 + $0x40] sm:$0xff]
        %v4288 = vld [vmem:[#allocation17 + $0x48] sm:$0xff]
        %v4289 = vld [vmem:[#allocation17 + $0x50] sm:$0xff]
        %v4290 = vld [vmem:[#allocation17 + $0x58] sm:$0xff]
        %v4291 = vld [vmem:[#allocation17 + $0x60] sm:$0xff]
        %v4292 = vld [vmem:[#allocation17 + $0x68] sm:$0xff]
        %v4293 = vld [vmem:[#allocation17 + $0x70] sm:$0xff]
        %v4294 = vld [vmem:[#allocation17 + $0x78] sm:$0xff]
        %v4295 = vld [vmem:[#allocation17 + $0x80] sm:$0xff]
        %v4296 = vld [vmem:[#allocation17 + $0x88] sm:$0xff]
        %v4297 = vld [vmem:[#allocation17 + $0x90] sm:$0xff]
        %v4298 = vld [vmem:[#allocation17 + $0x98] sm:$0xff]
        %v4299 = vld [vmem:[#allocation17 + $0xa0] sm:$0xff]
        %v4300 = vld [vmem:[#allocation17 + $0xa8] sm:$0xff]
        %v4301 = vld [vmem:[#allocation17 + $0xb0] sm:$0xff]
        %v4302 = vld [vmem:[#allocation17 + $0xb8] sm:$0xff]
        %v4303 = vld [vmem:[#allocation17 + $0xc0] sm:$0xff]
        %v4304 = vld [vmem:[#allocation17 + $0xc8] sm:$0xff]
        %v4305 = vld [vmem:[#allocation17 + $0xd0] sm:$0xff]
        %v4306 = vld [vmem:[#allocation17 + $0xd8] sm:$0xff]
        %v4307 = vld [vmem:[#allocation17 + $0xe0] sm:$0xff]
        %v4308 = vld [vmem:[#allocation17 + $0xe8] sm:$0xff]
        %v4309 = vld [vmem:[#allocation17 + $0xf0] sm:$0xff]
        %v4310 = vld [vmem:[#allocation17 + $0xf8] sm:$0xff]
        %v4311 = vld [vmem:[#allocation17 + $0x100] sm:$0xff]
        %v4312 = vld [vmem:[#allocation17 + $0x108] sm:$0xff]
        %v4313 = vld [vmem:[#allocation17 + $0x110] sm:$0xff]
        %v4314 = vld [vmem:[#allocation17 + $0x118] sm:$0xff]
        %v4315 = vld [vmem:[#allocation17 + $0x120] sm:$0xff]
        %v4316 = vld [vmem:[#allocation17 + $0x128] sm:$0xff]
        %v4317 = vld [vmem:[#allocation17 + $0x130] sm:$0xff]
        %v4318 = vld [vmem:[#allocation17 + $0x138] sm:$0xff]
        %v4319 = vld [vmem:[#allocation17 + $0x140] sm:$0xff]
        %v4320 = vld [vmem:[#allocation17 + $0x148] sm:$0xff]
        %v4321 = vld [vmem:[#allocation17 + $0x150] sm:$0xff]
        %v4322 = vld [vmem:[#allocation17 + $0x158] sm:$0xff]
        %v4323 = vld [vmem:[#allocation17 + $0x160] sm:$0xff]
        %v4324 = vld [vmem:[#allocation17 + $0x168] sm:$0xff]
        %v4325 = vld [vmem:[#allocation17 + $0x170] sm:$0xff]
        %v4326 = vld [vmem:[#allocation17 + $0x178] sm:$0xff]
        %v4327 = vld [vmem:[#allocation17 + $0x180] sm:$0xff]
        %v4328 = vld [vmem:[#allocation17 + $0x188] sm:$0xff]
        %v4329 = vld [vmem:[#allocation17 + $0x190] sm:$0xff]
        %v4330 = vld [vmem:[#allocation17 + $0x198] sm:$0xff]
        %v4331 = vld [vmem:[#allocation17 + $0x1a0] sm:$0xff]
        %v4332 = vld [vmem:[#allocation17 + $0x1a8] sm:$0xff]
        %v4333 = vld [vmem:[#allocation17 + $0x1b0] sm:$0xff]
        %v4334 = vld [vmem:[#allocation17 + $0x1b8] sm:$0xff]
        %v4335 = vld [vmem:[#allocation17 + $0x1c0] sm:$0xff]
        %v4336 = vld [vmem:[#allocation17 + $0x1c8] sm:$0xff]
        %v4337 = vld [vmem:[#allocation17 + $0x1d0] sm:$0xff]
        %v4338 = vld [vmem:[#allocation17 + $0x1d8] sm:$0xff]
        %v4339 = vld [vmem:[#allocation17 + $0x1e0] sm:$0xff]
        %v4340 = vld [vmem:[#allocation17 + $0x1e8] sm:$0xff]
        %v4341 = vld [vmem:[#allocation17 + $0x1f0] sm:$0xff]
        %v4342 = vld [vmem:[#allocation17 + $0x1f8] sm:$0xff]
        %v4343 = vld [vmem:[#allocation17 + $0x200] sm:$0xff]
        %v4344 = vld [vmem:[#allocation17 + $0x208] sm:$0xff]
        %v4345 = vld [vmem:[#allocation17 + $0x210] sm:$0xff]
        %v4346 = vld [vmem:[#allocation17 + $0x218] sm:$0xff]
        %v4347 = vld [vmem:[#allocation17 + $0x220] sm:$0xff]
        %v4348 = vld [vmem:[#allocation17 + $0x228] sm:$0xff]
        %v4349 = vld [vmem:[#allocation17 + $0x230] sm:$0xff]
        %v4350 = vld [vmem:[#allocation17 + $0x238] sm:$0xff]
        %v4351 = vld [vmem:[#allocation17 + $0x240] sm:$0xff]
        %v4352 = vld [vmem:[#allocation17 + $0x248] sm:$0xff]
        %v4353 = vld [vmem:[#allocation17 + $0x250] sm:$0xff]
        %v4354 = vld [vmem:[#allocation17 + $0x258] sm:$0xff]
        %v4355 = vld [vmem:[#allocation17 + $0x260] sm:$0xff]
        %v4356 = vld [vmem:[#allocation17 + $0x268] sm:$0xff]
        %v4357 = vld [vmem:[#allocation17 + $0x270] sm:$0xff]
        %v4358 = vld [vmem:[#allocation17 + $0x278] sm:$0xff]
        %v4359 = vld [vmem:[#allocation17 + $0x280] sm:$0xff]
        %v4360 = vld [vmem:[#allocation17 + $0x288] sm:$0xff]
        %v4361 = vld [vmem:[#allocation17 + $0x290] sm:$0xff]
        %v4362 = vld [vmem:[#allocation17 + $0x298] sm:$0xff]
        %v4363 = vld [vmem:[#allocation17 + $0x2a0] sm:$0xff]
        %v4364 = vld [vmem:[#allocation17 + $0x2a8] sm:$0xff]
        %v4365 = vld [vmem:[#allocation17 + $0x2b0] sm:$0xff]
        %v4366 = vld [vmem:[#allocation17 + $0x2b8] sm:$0xff]
        %v4367 = vld [vmem:[#allocation17 + $0x2c0] sm:$0xff]
        %v4368 = vld [vmem:[#allocation17 + $0x2c8] sm:$0xff]
        %v4369 = vld [vmem:[#allocation17 + $0x2d0] sm:$0xff]
        %v4370 = vld [vmem:[#allocation17 + $0x2d8] sm:$0xff]
        %v4371 = vld [vmem:[#allocation17 + $0x2e0] sm:$0xff]
        %v4372 = vld [vmem:[#allocation17 + $0x2e8] sm:$0xff]
        %v4373 = vld [vmem:[#allocation17 + $0x2f0] sm:$0xff]
        %v4374 = vld [vmem:[#allocation17 + $0x2f8] sm:$0xff]
        %v4375 = vld [vmem:[#allocation17 + $0x300] sm:$0xff]
        %v4376 = vld [vmem:[#allocation17 + $0x308] sm:$0xff]
        %v4377 = vld [vmem:[#allocation17 + $0x310] sm:$0xff]
        %v4378 = vld [vmem:[#allocation17 + $0x318] sm:$0xff]
        %v4379 = vld [vmem:[#allocation17 + $0x320] sm:$0xff]
        %v4380 = vld [vmem:[#allocation17 + $0x328] sm:$0xff]
        %v4381 = vld [vmem:[#allocation17 + $0x330] sm:$0xff]
        %v4382 = vld [vmem:[#allocation17 + $0x338] sm:$0xff]
        %v4383 = vld [vmem:[#allocation17 + $0x340] sm:$0xff]
        %v4384 = vld [vmem:[#allocation17 + $0x348] sm:$0xff]
        %v4385 = vld [vmem:[#allocation17 + $0x350] sm:$0xff]
        %v4386 = vld [vmem:[#allocation17 + $0x358] sm:$0xff]
        %v4387 = vld [vmem:[#allocation17 + $0x360] sm:$0xff]
        %v4388 = vld [vmem:[#allocation17 + $0x368] sm:$0xff]
        %v4389 = vld [vmem:[#allocation17 + $0x370] sm:$0xff]
        %v4390 = vld [vmem:[#allocation17 + $0x378] sm:$0xff]
        %v4391 = vld [vmem:[#allocation17 + $0x380] sm:$0xff]
        %v4392 = vld [vmem:[#allocation17 + $0x388] sm:$0xff]
        %v4393 = vld [vmem:[#allocation17 + $0x390] sm:$0xff]
        %v4394 = vld [vmem:[#allocation17 + $0x398] sm:$0xff]
        %v4395 = vld [vmem:[#allocation17 + $0x3a0] sm:$0xff]
        %v4396 = vld [vmem:[#allocation17 + $0x3a8] sm:$0xff]
        %v4397 = vld [vmem:[#allocation17 + $0x3b0] sm:$0xff]
        %v4398 = vld [vmem:[#allocation17 + $0x3b8] sm:$0xff]
        %v4399 = vld [vmem:[#allocation17 + $0x3c0] sm:$0xff]
        %v4400 = vld [vmem:[#allocation17 + $0x3c8] sm:$0xff]
        %v4401 = vld [vmem:[#allocation17 + $0x3d0] sm:$0xff]
        %v4402 = vld [vmem:[#allocation17 + $0x3d8] sm:$0xff]
        %v4403 = vld [vmem:[#allocation17 + $0x3e0] sm:$0xff]
        %v4404 = vld [vmem:[#allocation17 + $0x3e8] sm:$0xff]
        %v4405 = vld [vmem:[#allocation17 + $0x3f0] sm:$0xff]
        %v4406 = vld [vmem:[#allocation17 + $0x3f8] sm:$0xff]
        %v4408 = vlaneseq
        %v4409 = vshrl.u32 %v4408, 7
        %v4410 = vsub.s32 0, %v4409
        %v4411 = vrot.slane %v3080, %v4410
        %v4412 = vlaneseq
        %v4413 = vshrl.u32 %v4412, 7
        %v4414 = vsub.s32 1, %v4413
        %v4415 = vrot.slane %v3080, %v4414
        %v4546 = vunpack.c.l.b16 %v4279
        %v4547 = vunpack.c.h.b16 %v4279
        %v4548 = vunpack.c.l.b16 %v4280
        %v4549 = vunpack.c.h.b16 %v4280
        %v4550 = vunpack.c.l.b16 %v4281
        %v4551 = vunpack.c.h.b16 %v4281
        %v4552 = vunpack.c.l.b16 %v4282
        %v4553 = vunpack.c.h.b16 %v4282
        %v4554 = vunpack.c.l.b16 %v4283
        %v4555 = vunpack.c.h.b16 %v4283
        %v4556 = vunpack.c.l.b16 %v4284
        %v4557 = vunpack.c.h.b16 %v4284
        %v4558 = vunpack.c.l.b16 %v4285
        %v4559 = vunpack.c.h.b16 %v4285
        %v4560 = vunpack.c.l.b16 %v4286
        %v4561 = vunpack.c.h.b16 %v4286
        %v4562 = vunpack.c.l.b16 %v4287
        %v4563 = vunpack.c.h.b16 %v4287
        %v4564 = vunpack.c.l.b16 %v4288
        %v4565 = vunpack.c.h.b16 %v4288
        %v4566 = vunpack.c.l.b16 %v4289
        %v4567 = vunpack.c.h.b16 %v4289
        %v4568 = vunpack.c.l.b16 %v4290
        %v4569 = vunpack.c.h.b16 %v4290
        %v4570 = vunpack.c.l.b16 %v4291
        %v4571 = vunpack.c.h.b16 %v4291
        %v4572 = vunpack.c.l.b16 %v4292
        %v4573 = vunpack.c.h.b16 %v4292
        %v4574 = vunpack.c.l.b16 %v4293
        %v4575 = vunpack.c.h.b16 %v4293
        %v4576 = vunpack.c.l.b16 %v4294
        %v4577 = vunpack.c.h.b16 %v4294
        %v4578 = vunpack.c.l.b16 %v4295
        %v4579 = vunpack.c.h.b16 %v4295
        %v4580 = vunpack.c.l.b16 %v4296
        %v4581 = vunpack.c.h.b16 %v4296
        %v4582 = vunpack.c.l.b16 %v4297
        %v4583 = vunpack.c.h.b16 %v4297
        %v4584 = vunpack.c.l.b16 %v4298
        %v4585 = vunpack.c.h.b16 %v4298
        %v4586 = vunpack.c.l.b16 %v4299
        %v4587 = vunpack.c.h.b16 %v4299
        %v4588 = vunpack.c.l.b16 %v4300
        %v4589 = vunpack.c.h.b16 %v4300
        %v4590 = vunpack.c.l.b16 %v4301
        %v4591 = vunpack.c.h.b16 %v4301
        %v4592 = vunpack.c.l.b16 %v4302
        %v4593 = vunpack.c.h.b16 %v4302
        %v4594 = vunpack.c.l.b16 %v4303
        %v4595 = vunpack.c.h.b16 %v4303
        %v4596 = vunpack.c.l.b16 %v4304
        %v4597 = vunpack.c.h.b16 %v4304
        %v4598 = vunpack.c.l.b16 %v4305
        %v4599 = vunpack.c.h.b16 %v4305
        %v4600 = vunpack.c.l.b16 %v4306
        %v4601 = vunpack.c.h.b16 %v4306
        %v4602 = vunpack.c.l.b16 %v4307
        %v4603 = vunpack.c.h.b16 %v4307
        %v4604 = vunpack.c.l.b16 %v4308
        %v4605 = vunpack.c.h.b16 %v4308
        %v4606 = vunpack.c.l.b16 %v4309
        %v4607 = vunpack.c.h.b16 %v4309
        %v4608 = vunpack.c.l.b16 %v4310
        %v4609 = vunpack.c.h.b16 %v4310
        %v4610 = vunpack.c.l.b16 %v4311
        %v4611 = vunpack.c.h.b16 %v4311
        %v4612 = vunpack.c.l.b16 %v4312
        %v4613 = vunpack.c.h.b16 %v4312
        %v4614 = vunpack.c.l.b16 %v4313
        %v4615 = vunpack.c.h.b16 %v4313
        %v4616 = vunpack.c.l.b16 %v4314
        %v4617 = vunpack.c.h.b16 %v4314
        %v4618 = vunpack.c.l.b16 %v4315
        %v4619 = vunpack.c.h.b16 %v4315
        %v4620 = vunpack.c.l.b16 %v4316
        %v4621 = vunpack.c.h.b16 %v4316
        %v4622 = vunpack.c.l.b16 %v4317
        %v4623 = vunpack.c.h.b16 %v4317
        %v4624 = vunpack.c.l.b16 %v4318
        %v4625 = vunpack.c.h.b16 %v4318
        %v4626 = vunpack.c.l.b16 %v4319
        %v4627 = vunpack.c.h.b16 %v4319
        %v4628 = vunpack.c.l.b16 %v4320
        %v4629 = vunpack.c.h.b16 %v4320
        %v4630 = vunpack.c.l.b16 %v4321
        %v4631 = vunpack.c.h.b16 %v4321
        %v4632 = vunpack.c.l.b16 %v4322
        %v4633 = vunpack.c.h.b16 %v4322
        %v4634 = vunpack.c.l.b16 %v4323
        %v4635 = vunpack.c.h.b16 %v4323
        %v4636 = vunpack.c.l.b16 %v4324
        %v4637 = vunpack.c.h.b16 %v4324
        %v4638 = vunpack.c.l.b16 %v4325
        %v4639 = vunpack.c.h.b16 %v4325
        %v4640 = vunpack.c.l.b16 %v4326
        %v4641 = vunpack.c.h.b16 %v4326
        %v4642 = vunpack.c.l.b16 %v4327
        %v4643 = vunpack.c.h.b16 %v4327
        %v4644 = vunpack.c.l.b16 %v4328
        %v4645 = vunpack.c.h.b16 %v4328
        %v4646 = vunpack.c.l.b16 %v4329
        %v4647 = vunpack.c.h.b16 %v4329
        %v4648 = vunpack.c.l.b16 %v4330
        %v4649 = vunpack.c.h.b16 %v4330
        %v4650 = vunpack.c.l.b16 %v4331
        %v4651 = vunpack.c.h.b16 %v4331
        %v4652 = vunpack.c.l.b16 %v4332
        %v4653 = vunpack.c.h.b16 %v4332
        %v4654 = vunpack.c.l.b16 %v4333
        %v4655 = vunpack.c.h.b16 %v4333
        %v4656 = vunpack.c.l.b16 %v4334
        %v4657 = vunpack.c.h.b16 %v4334
        %v4658 = vunpack.c.l.b16 %v4335
        %v4659 = vunpack.c.h.b16 %v4335
        %v4660 = vunpack.c.l.b16 %v4336
        %v4661 = vunpack.c.h.b16 %v4336
        %v4662 = vunpack.c.l.b16 %v4337
        %v4663 = vunpack.c.h.b16 %v4337
        %v4664 = vunpack.c.l.b16 %v4338
        %v4665 = vunpack.c.h.b16 %v4338
        %v4666 = vunpack.c.l.b16 %v4339
        %v4667 = vunpack.c.h.b16 %v4339
        %v4668 = vunpack.c.l.b16 %v4340
        %v4669 = vunpack.c.h.b16 %v4340
        %v4670 = vunpack.c.l.b16 %v4341
        %v4671 = vunpack.c.h.b16 %v4341
        %v4672 = vunpack.c.l.b16 %v4342
        %v4673 = vunpack.c.h.b16 %v4342
        %v4674 = vunpack.c.l.b16 %v4343
        %v4675 = vunpack.c.h.b16 %v4343
        %v4676 = vunpack.c.l.b16 %v4344
        %v4677 = vunpack.c.h.b16 %v4344
        %v4678 = vunpack.c.l.b16 %v4345
        %v4679 = vunpack.c.h.b16 %v4345
        %v4680 = vunpack.c.l.b16 %v4346
        %v4681 = vunpack.c.h.b16 %v4346
        %v4682 = vunpack.c.l.b16 %v4347
        %v4683 = vunpack.c.h.b16 %v4347
        %v4684 = vunpack.c.l.b16 %v4348
        %v4685 = vunpack.c.h.b16 %v4348
        %v4686 = vunpack.c.l.b16 %v4349
        %v4687 = vunpack.c.h.b16 %v4349
        %v4688 = vunpack.c.l.b16 %v4350
        %v4689 = vunpack.c.h.b16 %v4350
        %v4690 = vunpack.c.l.b16 %v4351
        %v4691 = vunpack.c.h.b16 %v4351
        %v4692 = vunpack.c.l.b16 %v4352
        %v4693 = vunpack.c.h.b16 %v4352
        %v4694 = vunpack.c.l.b16 %v4353
        %v4695 = vunpack.c.h.b16 %v4353
        %v4696 = vunpack.c.l.b16 %v4354
        %v4697 = vunpack.c.h.b16 %v4354
        %v4698 = vunpack.c.l.b16 %v4355
        %v4699 = vunpack.c.h.b16 %v4355
        %v4700 = vunpack.c.l.b16 %v4356
        %v4701 = vunpack.c.h.b16 %v4356
        %v4702 = vunpack.c.l.b16 %v4357
        %v4703 = vunpack.c.h.b16 %v4357
        %v4704 = vunpack.c.l.b16 %v4358
        %v4705 = vunpack.c.h.b16 %v4358
        %v4706 = vunpack.c.l.b16 %v4359
        %v4707 = vunpack.c.h.b16 %v4359
        %v4708 = vunpack.c.l.b16 %v4360
        %v4709 = vunpack.c.h.b16 %v4360
        %v4710 = vunpack.c.l.b16 %v4361
        %v4711 = vunpack.c.h.b16 %v4361
        %v4712 = vunpack.c.l.b16 %v4362
        %v4713 = vunpack.c.h.b16 %v4362
        %v4714 = vunpack.c.l.b16 %v4363
        %v4715 = vunpack.c.h.b16 %v4363
        %v4716 = vunpack.c.l.b16 %v4364
        %v4717 = vunpack.c.h.b16 %v4364
        %v4718 = vunpack.c.l.b16 %v4365
        %v4719 = vunpack.c.h.b16 %v4365
        %v4720 = vunpack.c.l.b16 %v4366
        %v4721 = vunpack.c.h.b16 %v4366
        %v4722 = vunpack.c.l.b16 %v4367
        %v4723 = vunpack.c.h.b16 %v4367
        %v4724 = vunpack.c.l.b16 %v4368
        %v4725 = vunpack.c.h.b16 %v4368
        %v4726 = vunpack.c.l.b16 %v4369
        %v4727 = vunpack.c.h.b16 %v4369
        %v4728 = vunpack.c.l.b16 %v4370
        %v4729 = vunpack.c.h.b16 %v4370
        %v4730 = vunpack.c.l.b16 %v4371
        %v4731 = vunpack.c.h.b16 %v4371
        %v4732 = vunpack.c.l.b16 %v4372
        %v4733 = vunpack.c.h.b16 %v4372
        %v4734 = vunpack.c.l.b16 %v4373
        %v4735 = vunpack.c.h.b16 %v4373
        %v4736 = vunpack.c.l.b16 %v4374
        %v4737 = vunpack.c.h.b16 %v4374
        %v4738 = vunpack.c.l.b16 %v4375
        %v4739 = vunpack.c.h.b16 %v4375
        %v4740 = vunpack.c.l.b16 %v4376
        %v4741 = vunpack.c.h.b16 %v4376
        %v4742 = vunpack.c.l.b16 %v4377
        %v4743 = vunpack.c.h.b16 %v4377
        %v4744 = vunpack.c.l.b16 %v4378
        %v4745 = vunpack.c.h.b16 %v4378
        %v4746 = vunpack.c.l.b16 %v4379
        %v4747 = vunpack.c.h.b16 %v4379
        %v4748 = vunpack.c.l.b16 %v4380
        %v4749 = vunpack.c.h.b16 %v4380
        %v4750 = vunpack.c.l.b16 %v4381
        %v4751 = vunpack.c.h.b16 %v4381
        %v4752 = vunpack.c.l.b16 %v4382
        %v4753 = vunpack.c.h.b16 %v4382
        %v4754 = vunpack.c.l.b16 %v4383
        %v4755 = vunpack.c.h.b16 %v4383
        %v4756 = vunpack.c.l.b16 %v4384
        %v4757 = vunpack.c.h.b16 %v4384
        %v4758 = vunpack.c.l.b16 %v4385
        %v4759 = vunpack.c.h.b16 %v4385
        %v4760 = vunpack.c.l.b16 %v4386
        %v4761 = vunpack.c.h.b16 %v4386
        %v4762 = vunpack.c.l.b16 %v4387
        %v4763 = vunpack.c.h.b16 %v4387
        %v4764 = vunpack.c.l.b16 %v4388
        %v4765 = vunpack.c.h.b16 %v4388
        %v4766 = vunpack.c.l.b16 %v4389
        %v4767 = vunpack.c.h.b16 %v4389
        %v4768 = vunpack.c.l.b16 %v4390
        %v4769 = vunpack.c.h.b16 %v4390
        %v4770 = vunpack.c.l.b16 %v4391
        %v4771 = vunpack.c.h.b16 %v4391
        %v4772 = vunpack.c.l.b16 %v4392
        %v4773 = vunpack.c.h.b16 %v4392
        %v4774 = vunpack.c.l.b16 %v4393
        %v4775 = vunpack.c.h.b16 %v4393
        %v4776 = vunpack.c.l.b16 %v4394
        %v4777 = vunpack.c.h.b16 %v4394
        %v4778 = vunpack.c.l.b16 %v4395
        %v4779 = vunpack.c.h.b16 %v4395
        %v4780 = vunpack.c.l.b16 %v4396
        %v4781 = vunpack.c.h.b16 %v4396
        %v4782 = vunpack.c.l.b16 %v4397
        %v4783 = vunpack.c.h.b16 %v4397
        %v4784 = vunpack.c.l.b16 %v4398
        %v4785 = vunpack.c.h.b16 %v4398
        %v4786 = vunpack.c.l.b16 %v4399
        %v4787 = vunpack.c.h.b16 %v4399
        %v4788 = vunpack.c.l.b16 %v4400
        %v4789 = vunpack.c.h.b16 %v4400
        %v4790 = vunpack.c.l.b16 %v4401
        %v4791 = vunpack.c.h.b16 %v4401
        %v4792 = vunpack.c.l.b16 %v4402
        %v4793 = vunpack.c.h.b16 %v4402
        %v4794 = vunpack.c.l.b16 %v4403
        %v4795 = vunpack.c.h.b16 %v4403
        %v4796 = vunpack.c.l.b16 %v4404
        %v4797 = vunpack.c.h.b16 %v4404
        %v4798 = vunpack.c.l.b16 %v4405
        %v4799 = vunpack.c.h.b16 %v4405
        %v4800 = vunpack.c.l.b16 %v4406
        %v4801 = vunpack.c.h.b16 %v4406
        %v4802 = vpack.c.b16 %v4548, %v4546
        %v4803 = vpack.c.b16 %v4549, %v4547
        %v4804 = vpack.c.b16 %v4552, %v4550
        %v4805 = vpack.c.b16 %v4553, %v4551
        %v4806 = vpack.c.b16 %v4556, %v4554
        %v4807 = vpack.c.b16 %v4557, %v4555
        %v4808 = vpack.c.b16 %v4560, %v4558
        %v4809 = vpack.c.b16 %v4561, %v4559
        %v4810 = vpack.c.b16 %v4564, %v4562
        %v4811 = vpack.c.b16 %v4565, %v4563
        %v4812 = vpack.c.b16 %v4568, %v4566
        %v4813 = vpack.c.b16 %v4569, %v4567
        %v4814 = vpack.c.b16 %v4572, %v4570
        %v4815 = vpack.c.b16 %v4573, %v4571
        %v4816 = vpack.c.b16 %v4576, %v4574
        %v4817 = vpack.c.b16 %v4577, %v4575
        %v4818 = vpack.c.b16 %v4580, %v4578
        %v4819 = vpack.c.b16 %v4581, %v4579
        %v4820 = vpack.c.b16 %v4584, %v4582
        %v4821 = vpack.c.b16 %v4585, %v4583
        %v4822 = vpack.c.b16 %v4588, %v4586
        %v4823 = vpack.c.b16 %v4589, %v4587
        %v4824 = vpack.c.b16 %v4592, %v4590
        %v4825 = vpack.c.b16 %v4593, %v4591
        %v4826 = vpack.c.b16 %v4596, %v4594
        %v4827 = vpack.c.b16 %v4597, %v4595
        %v4828 = vpack.c.b16 %v4600, %v4598
        %v4829 = vpack.c.b16 %v4601, %v4599
        %v4830 = vpack.c.b16 %v4604, %v4602
        %v4831 = vpack.c.b16 %v4605, %v4603
        %v4832 = vpack.c.b16 %v4608, %v4606
        %v4833 = vpack.c.b16 %v4609, %v4607
        %v4834 = vpack.c.b16 %v4612, %v4610
        %v4835 = vpack.c.b16 %v4613, %v4611
        %v4836 = vpack.c.b16 %v4616, %v4614
        %v4837 = vpack.c.b16 %v4617, %v4615
        %v4838 = vpack.c.b16 %v4620, %v4618
        %v4839 = vpack.c.b16 %v4621, %v4619
        %v4840 = vpack.c.b16 %v4624, %v4622
        %v4841 = vpack.c.b16 %v4625, %v4623
        %v4842 = vpack.c.b16 %v4628, %v4626
        %v4843 = vpack.c.b16 %v4629, %v4627
        %v4844 = vpack.c.b16 %v4632, %v4630
        %v4845 = vpack.c.b16 %v4633, %v4631
        %v4846 = vpack.c.b16 %v4636, %v4634
        %v4847 = vpack.c.b16 %v4637, %v4635
        %v4848 = vpack.c.b16 %v4640, %v4638
        %v4849 = vpack.c.b16 %v4641, %v4639
        %v4850 = vpack.c.b16 %v4644, %v4642
        %v4851 = vpack.c.b16 %v4645, %v4643
        %v4852 = vpack.c.b16 %v4648, %v4646
        %v4853 = vpack.c.b16 %v4649, %v4647
        %v4854 = vpack.c.b16 %v4652, %v4650
        %v4855 = vpack.c.b16 %v4653, %v4651
        %v4856 = vpack.c.b16 %v4656, %v4654
        %v4857 = vpack.c.b16 %v4657, %v4655
        %v4858 = vpack.c.b16 %v4660, %v4658
        %v4859 = vpack.c.b16 %v4661, %v4659
        %v4860 = vpack.c.b16 %v4664, %v4662
        %v4861 = vpack.c.b16 %v4665, %v4663
        %v4862 = vpack.c.b16 %v4668, %v4666
        %v4863 = vpack.c.b16 %v4669, %v4667
        %v4864 = vpack.c.b16 %v4672, %v4670
        %v4865 = vpack.c.b16 %v4673, %v4671
        %v4866 = vpack.c.b16 %v4676, %v4674
        %v4867 = vpack.c.b16 %v4677, %v4675
        %v4868 = vpack.c.b16 %v4680, %v4678
        %v4869 = vpack.c.b16 %v4681, %v4679
        %v4870 = vpack.c.b16 %v4684, %v4682
        %v4871 = vpack.c.b16 %v4685, %v4683
        %v4872 = vpack.c.b16 %v4688, %v4686
        %v4873 = vpack.c.b16 %v4689, %v4687
        %v4874 = vpack.c.b16 %v4692, %v4690
        %v4875 = vpack.c.b16 %v4693, %v4691
        %v4876 = vpack.c.b16 %v4696, %v4694
        %v4877 = vpack.c.b16 %v4697, %v4695
        %v4878 = vpack.c.b16 %v4700, %v4698
        %v4879 = vpack.c.b16 %v4701, %v4699
        %v4880 = vpack.c.b16 %v4704, %v4702
        %v4881 = vpack.c.b16 %v4705, %v4703
        %v4882 = vpack.c.b16 %v4708, %v4706
        %v4883 = vpack.c.b16 %v4709, %v4707
        %v4884 = vpack.c.b16 %v4712, %v4710
        %v4885 = vpack.c.b16 %v4713, %v4711
        %v4886 = vpack.c.b16 %v4716, %v4714
        %v4887 = vpack.c.b16 %v4717, %v4715
        %v4888 = vpack.c.b16 %v4720, %v4718
        %v4889 = vpack.c.b16 %v4721, %v4719
        %v4890 = vpack.c.b16 %v4724, %v4722
        %v4891 = vpack.c.b16 %v4725, %v4723
        %v4892 = vpack.c.b16 %v4728, %v4726
        %v4893 = vpack.c.b16 %v4729, %v4727
        %v4894 = vpack.c.b16 %v4732, %v4730
        %v4895 = vpack.c.b16 %v4733, %v4731
        %v4896 = vpack.c.b16 %v4736, %v4734
        %v4897 = vpack.c.b16 %v4737, %v4735
        %v4898 = vpack.c.b16 %v4740, %v4738
        %v4899 = vpack.c.b16 %v4741, %v4739
        %v4900 = vpack.c.b16 %v4744, %v4742
        %v4901 = vpack.c.b16 %v4745, %v4743
        %v4902 = vpack.c.b16 %v4748, %v4746
        %v4903 = vpack.c.b16 %v4749, %v4747
        %v4904 = vpack.c.b16 %v4752, %v4750
        %v4905 = vpack.c.b16 %v4753, %v4751
        %v4906 = vpack.c.b16 %v4756, %v4754
        %v4907 = vpack.c.b16 %v4757, %v4755
        %v4908 = vpack.c.b16 %v4760, %v4758
        %v4909 = vpack.c.b16 %v4761, %v4759
        %v4910 = vpack.c.b16 %v4764, %v4762
        %v4911 = vpack.c.b16 %v4765, %v4763
        %v4912 = vpack.c.b16 %v4768, %v4766
        %v4913 = vpack.c.b16 %v4769, %v4767
        %v4914 = vpack.c.b16 %v4772, %v4770
        %v4915 = vpack.c.b16 %v4773, %v4771
        %v4916 = vpack.c.b16 %v4776, %v4774
        %v4917 = vpack.c.b16 %v4777, %v4775
        %v4918 = vpack.c.b16 %v4780, %v4778
        %v4919 = vpack.c.b16 %v4781, %v4779
        %v4920 = vpack.c.b16 %v4784, %v4782
        %v4921 = vpack.c.b16 %v4785, %v4783
        %v4922 = vpack.c.b16 %v4788, %v4786
        %v4923 = vpack.c.b16 %v4789, %v4787
        %v4924 = vpack.c.b16 %v4792, %v4790
        %v4925 = vpack.c.b16 %v4793, %v4791
        %v4926 = vpack.c.b16 %v4796, %v4794
        %v4927 = vpack.c.b16 %v4797, %v4795
        %v4928 = vpack.c.b16 %v4800, %v4798
        %v4929 = vpack.c.b16 %v4801, %v4799
        %5058 = vmatprep.subr.bf16.mxu0 %v4817
        %5059 = vmatpush1.bf16.msra.mxu0 %v4816
        %5060 = vmatprep.subr.bf16.mxu0 %v4815
        %5061 = vmatpush1.bf16.msra.mxu0 %v4814
        %5062 = vmatprep.subr.bf16.mxu0 %v4813
        %5063 = vmatpush1.bf16.msra.mxu0 %v4812
        %5064 = vmatprep.subr.bf16.mxu0 %v4811
        %5065 = vmatpush1.bf16.msra.mxu0 %v4810
        %5066 = vmatprep.subr.bf16.mxu0 %v4809
        %5067 = vmatpush1.bf16.msra.mxu0 %v4808
        %5068 = vmatprep.subr.bf16.mxu0 %v4807
        %5069 = vmatpush1.bf16.msra.mxu0 %v4806
        %5070 = vmatprep.subr.bf16.mxu0 %v4805
        %5071 = vmatpush1.bf16.msra.mxu0 %v4804
        %5072 = vmatprep.subr.bf16.mxu0 %v4803
        %5073 = vmatpush1.bf16.msra.mxu0 %v4802
        %5074 = vmatprep.subr.bf16.mxu0 %v4833
        %5075 = vmatpush2.bf16.msra.mxu0 %v4832
        %5076 = vmatprep.subr.bf16.mxu0 %v4831
        %5077 = vmatpush2.bf16.msra.mxu0 %v4830
        %5078 = vmatprep.subr.bf16.mxu0 %v4829
        %5079 = vmatpush2.bf16.msra.mxu0 %v4828
        %5080 = vmatprep.subr.bf16.mxu0 %v4827
        %5081 = vmatpush2.bf16.msra.mxu0 %v4826
        %5082 = vmatprep.subr.bf16.mxu0 %v4825
        %5083 = vmatpush2.bf16.msra.mxu0 %v4824
        %5084 = vmatprep.subr.bf16.mxu0 %v4823
        %5085 = vmatpush2.bf16.msra.mxu0 %v4822
        %5086 = vmatprep.subr.bf16.mxu0 %v4821
        %5087 = vmatpush2.bf16.msra.mxu0 %v4820
        %5088 = vmatprep.subr.bf16.mxu0 %v4819
        %5089 = vmatpush2.bf16.msra.mxu0 %v4818
        %5090 = vmatprep.mubr.bf16.mxu0 %v4272
        %5091 = vmatmul.mubr.bf16.gmra.mxu0 %v4271
        %v5092 = vpop.f32.mrf.mxu0
        %v5093 = vadd.f32 %v4411, %v5092
        %v5094 = vpop.f32.mrf.mxu0
        %v5095 = vadd.f32 %v4415, %v5094
        %v5096 = vpop.f32.mrf.mxu0
        %v5097 = vpop.f32.mrf.mxu0
        %5098 = vdwg.mxu0
        %5099 = vmatprep.subr.bf16.mxu0 %v4849
        %5100 = vmatpush1.bf16.msra.mxu0 %v4848
        %5101 = vmatprep.subr.bf16.mxu0 %v4847
        %5102 = vmatpush1.bf16.msra.mxu0 %v4846
        %5103 = vmatprep.subr.bf16.mxu0 %v4845
        %5104 = vmatpush1.bf16.msra.mxu0 %v4844
        %5105 = vmatprep.subr.bf16.mxu0 %v4843
        %5106 = vmatpush1.bf16.msra.mxu0 %v4842
        %5107 = vmatprep.subr.bf16.mxu0 %v4841
        %5108 = vmatpush1.bf16.msra.mxu0 %v4840
        %5109 = vmatprep.subr.bf16.mxu0 %v4839
        %5110 = vmatpush1.bf16.msra.mxu0 %v4838
        %5111 = vmatprep.subr.bf16.mxu0 %v4837
        %5112 = vmatpush1.bf16.msra.mxu0 %v4836
        %5113 = vmatprep.subr.bf16.mxu0 %v4835
        %5114 = vmatpush1.bf16.msra.mxu0 %v4834
        %5115 = vmatprep.subr.bf16.mxu0 %v4865
        %5116 = vmatpush2.bf16.msra.mxu0 %v4864
        %5117 = vmatprep.subr.bf16.mxu0 %v4863
        %5118 = vmatpush2.bf16.msra.mxu0 %v4862
        %5119 = vmatprep.subr.bf16.mxu0 %v4861
        %5120 = vmatpush2.bf16.msra.mxu0 %v4860
        %5121 = vmatprep.subr.bf16.mxu0 %v4859
        %5122 = vmatpush2.bf16.msra.mxu0 %v4858
        %5123 = vmatprep.subr.bf16.mxu0 %v4857
        %5124 = vmatpush2.bf16.msra.mxu0 %v4856
        %5125 = vmatprep.subr.bf16.mxu0 %v4855
        %5126 = vmatpush2.bf16.msra.mxu0 %v4854
        %5127 = vmatprep.subr.bf16.mxu0 %v4853
        %5128 = vmatpush2.bf16.msra.mxu0 %v4852
        %5129 = vmatprep.subr.bf16.mxu0 %v4851
        %5130 = vmatpush2.bf16.msra.mxu0 %v4850
        %5131 = vmatprep.mubr.bf16.mxu0 %v4274
        %5132 = vmatmul.mubr.bf16.gmra.mxu0 %v4273
        %v5133 = vpop.f32.mrf.mxu0
        %v5134 = vadd.f32 %v5093, %v5133
        %v5135 = vpop.f32.mrf.mxu0
        %v5136 = vadd.f32 %v5095, %v5135
        %v5137 = vpop.f32.mrf.mxu0
        %v5138 = vpop.f32.mrf.mxu0
        %5139 = vdwg.mxu0
        %5140 = vmatprep.subr.bf16.mxu0 %v4881
        %5141 = vmatpush1.bf16.msra.mxu0 %v4880
        %5142 = vmatprep.subr.bf16.mxu0 %v4879
        %5143 = vmatpush1.bf16.msra.mxu0 %v4878
        %5144 = vmatprep.subr.bf16.mxu0 %v4877
        %5145 = vmatpush1.bf16.msra.mxu0 %v4876
        %5146 = vmatprep.subr.bf16.mxu0 %v4875
        %5147 = vmatpush1.bf16.msra.mxu0 %v4874
        %5148 = vmatprep.subr.bf16.mxu0 %v4873
        %5149 = vmatpush1.bf16.msra.mxu0 %v4872
        %5150 = vmatprep.subr.bf16.mxu0 %v4871
        %5151 = vmatpush1.bf16.msra.mxu0 %v4870
        %5152 = vmatprep.subr.bf16.mxu0 %v4869
        %5153 = vmatpush1.bf16.msra.mxu0 %v4868
        %5154 = vmatprep.subr.bf16.mxu0 %v4867
        %5155 = vmatpush1.bf16.msra.mxu0 %v4866
        %5156 = vmatprep.subr.bf16.mxu0 %v4897
        %5157 = vmatpush2.bf16.msra.mxu0 %v4896
        %5158 = vmatprep.subr.bf16.mxu0 %v4895
        %5159 = vmatpush2.bf16.msra.mxu0 %v4894
        %5160 = vmatprep.subr.bf16.mxu0 %v4893
        %5161 = vmatpush2.bf16.msra.mxu0 %v4892
        %5162 = vmatprep.subr.bf16.mxu0 %v4891
        %5163 = vmatpush2.bf16.msra.mxu0 %v4890
        %5164 = vmatprep.subr.bf16.mxu0 %v4889
        %5165 = vmatpush2.bf16.msra.mxu0 %v4888
        %5166 = vmatprep.subr.bf16.mxu0 %v4887
        %5167 = vmatpush2.bf16.msra.mxu0 %v4886
        %5168 = vmatprep.subr.bf16.mxu0 %v4885
        %5169 = vmatpush2.bf16.msra.mxu0 %v4884
        %5170 = vmatprep.subr.bf16.mxu0 %v4883
        %5171 = vmatpush2.bf16.msra.mxu0 %v4882
        %5172 = vmatprep.mubr.bf16.mxu0 %v4276
        %5173 = vmatmul.mubr.bf16.gmra.mxu0 %v4275
        %v5174 = vpop.f32.mrf.mxu0
        %v5175 = vadd.f32 %v5134, %v5174
        %v5176 = vpop.f32.mrf.mxu0
        %v5177 = vadd.f32 %v5136, %v5176
        %v5178 = vpop.f32.mrf.mxu0
        %v5179 = vpop.f32.mrf.mxu0
        %5180 = vdwg.mxu0
        %5181 = vmatprep.subr.bf16.mxu0 %v4913
        %5182 = vmatpush1.bf16.msra.mxu0 %v4912
        %5183 = vmatprep.subr.bf16.mxu0 %v4911
        %5184 = vmatpush1.bf16.msra.mxu0 %v4910
        %5185 = vmatprep.subr.bf16.mxu0 %v4909
        %5186 = vmatpush1.bf16.msra.mxu0 %v4908
        %5187 = vmatprep.subr.bf16.mxu0 %v4907
        %5188 = vmatpush1.bf16.msra.mxu0 %v4906
        %5189 = vmatprep.subr.bf16.mxu0 %v4905
        %5190 = vmatpush1.bf16.msra.mxu0 %v4904
        %5191 = vmatprep.subr.bf16.mxu0 %v4903
        %5192 = vmatpush1.bf16.msra.mxu0 %v4902
        %5193 = vmatprep.subr.bf16.mxu0 %v4901
        %5194 = vmatpush1.bf16.msra.mxu0 %v4900
        %5195 = vmatprep.subr.bf16.mxu0 %v4899
        %5196 = vmatpush1.bf16.msra.mxu0 %v4898
        %5197 = vmatprep.subr.bf16.mxu0 %v4929
        %5198 = vmatpush2.bf16.msra.mxu0 %v4928
        %5199 = vmatprep.subr.bf16.mxu0 %v4927
        %5200 = vmatpush2.bf16.msra.mxu0 %v4926
        %5201 = vmatprep.subr.bf16.mxu0 %v4925
        %5202 = vmatpush2.bf16.msra.mxu0 %v4924
        %5203 = vmatprep.subr.bf16.mxu0 %v4923
        %5204 = vmatpush2.bf16.msra.mxu0 %v4922
        %5205 = vmatprep.subr.bf16.mxu0 %v4921
        %5206 = vmatpush2.bf16.msra.mxu0 %v4920
        %5207 = vmatprep.subr.bf16.mxu0 %v4919
        %5208 = vmatpush2.bf16.msra.mxu0 %v4918
        %5209 = vmatprep.subr.bf16.mxu0 %v4917
        %5210 = vmatpush2.bf16.msra.mxu0 %v4916
        %5211 = vmatprep.subr.bf16.mxu0 %v4915
        %5212 = vmatpush2.bf16.msra.mxu0 %v4914
        %5213 = vmatprep.mubr.bf16.mxu0 %v4278
        %5214 = vmatmul.mubr.bf16.gmra.mxu0 %v4277
        %v5215 = vpop.f32.mrf.mxu0
        %v5216 = vadd.f32 %v5175, %v5215
        %v5217 = vpop.f32.mrf.mxu0
        %v5218 = vadd.f32 %v5177, %v5217
        %v5219 = vpop.f32.mrf.mxu0
        %v5220 = vpop.f32.mrf.mxu0
        %5221 = vdwg.mxu0
        %v5223 = vlaneseq
        %v5224 = vshrl.u32 %v5223, 7
        %v5225 = vsub.s32 0, %v5224
        %v5226 = vrot.slane %v3082, %v5225
        %v5227 = vlaneseq
        %v5228 = vshrl.u32 %v5227, 7
        %v5229 = vsub.s32 1, %v5228
        %v5230 = vrot.slane %v3082, %v5229
        %v5233 = vmul.f32 %v5226, %v5216
        %v5234 = vmul.f32 %v5230, %v5218
        %v5235 = vadd.f32 %v3063, %v5233
        %v5236 = vadd.f32 %v3065, %v5234
        %s5237 = scalar_lea.vmem [#allocation7], 192
        %v5238 = vld [vmem:[%s5237] ss:$8 sm:$0x3]
        %s5239 = scalar_lea.vmem [#allocation7], 193
        %v5240 = vld [vmem:[%s5239] ss:$8 sm:$0x3]
        %s5241 = scalar_lea.vmem [#allocation7], 194
        %v5242 = vld [vmem:[%s5241] ss:$8 sm:$0x3]
        %s5243 = scalar_lea.vmem [#allocation7], 195
        %v5244 = vld [vmem:[%s5243] ss:$8 sm:$0xf]
        %v5245 = vld [vmem:[%s5243] ss:$8 sm:$0xf0]
        %v5246 = vor.u32 %v5244, %v5245
        %s5247 = scalar_lea.vmem [#allocation7], 196
        %v5248 = vld [vmem:[%s5247] ss:$8 sm:$0x3]
        %s5249 = scalar_lea.vmem [#allocation7], 197
        %v5250 = vld [vmem:[%s5249] ss:$8 sm:$0x3]
        %s5251 = scalar_lea.vmem [#allocation14], 32
        %v5252 = vld [vmem:[%s5251] sm:$0xff]
        %v5255 = vcombine.low %v5235, %v5236
        %v5257 = vmul.f32 %v5252, %v5255
        %v5258 = vrot.slane %v5235, 1
        %v5259 = vrot.slane %v5236, 1
        %v5262 = vrot.slane %v5235, 5
        %v5263 = vrot.slane %v5236, 5
        %v5266 = vsel %vm753, %v5258, %v5262
        %v5267 = vsel %vm753, %v5259, %v5263
        %s5268 = scalar_lea.vmem [#allocation14], 40
        %v5269 = vld [vmem:[%s5268] sm:$0xff]
        %v5272 = vcombine.low %v5266, %v5267
        %v5274 = vmul.f32 %v5269, %v5272
        %v5275 = vrot.slane %v5235, 2
        %v5276 = vrot.slane %v5236, 2
        %v5279 = vrot.slane %v5235, 6
        %v5280 = vrot.slane %v5236, 6
        %v5283 = vsel %vm766, %v5275, %v5279
        %v5284 = vsel %vm766, %v5276, %v5280
        %s5285 = scalar_lea.vmem [#allocation14], 48
        %v5286 = vld [vmem:[%s5285] sm:$0xff]
        %v5289 = vcombine.low %v5283, %v5284
        %v5291 = vmul.f32 %v5286, %v5289
        %v5292 = vrot.slane %v5235, 3
        %v5293 = vrot.slane %v5236, 3
        %v5296 = vrot.slane %v5235, 7
        %v5297 = vrot.slane %v5236, 7
        %v5300 = vsel %vm779, %v5292, %v5296
        %v5301 = vsel %vm779, %v5293, %v5297
        %s5302 = scalar_lea.vmem [#allocation14], 56
        %v5303 = vld [vmem:[%s5302] sm:$0xff]
        %v5306 = vcombine.low %v5300, %v5301
        %v5308 = vmul.f32 %v5303, %v5306
        %v5309 = vadd.f32 %v5257, %v5274
        %v5310 = vadd.f32 %v5291, %v5308
        %v5311 = vadd.f32 %v5309, %v5310
        %v5313 = vlaneseq
        %v5314 = vshrl.u32 %v5313, 7
        %v5315 = vsub.s32 0, %v5314
        %v5316 = vrot.slane %v5238, %v5315
        %v5317 = vlaneseq
        %v5318 = vshrl.u32 %v5317, 7
        %v5319 = vsub.s32 1, %v5318
        %v5320 = vrot.slane %v5238, %v5319
        %v5321 = vcombine.low %v5316, %v5320
        %v5323 = vadd.f32 %v5311, %v5321
        %v5325 = vcombine.high %v5323, %v5323
        %v5327 = vsel %vm740, %v5323, 0.0
        %v5328 = vsel %vm740, %v5325, 0.0
        %v5329 = vadd.f32 %v5327, %v5328
        %5330 = vadd.xlane.f32.xlu0 %v5329
        %v5331 = vpop.xlane.xlu0 %5330
        %v5332 = vmul.f32 %v5331, %v3163
        %v5335 = vunpack.c.l.s4 839922192
        %v5336 = vunpack.c.0.s8 %v5335
        %v5337 = vlaneseq
        %v5338 = vshrl.u32 %v5337, 7
        %v5339 = vsub.s32 %v5336, %v5338
        %v5340 = vrot.slane %v5332, %v5339
        %v5342 = vsub.f32 %v5323, %v5340
        %v5343 = vmul.f32 %v5342, %v5342
        %v5345 = vcombine.high %v5343, %v5343
        %v5347 = vsel %vm740, %v5343, 0.0
        %v5348 = vsel %vm740, %v5345, 0.0
        %v5349 = vadd.f32 %v5347, %v5348
        %5350 = vadd.xlane.f32.xlu0 %v5349
        %v5351 = vpop.xlane.xlu0 %5350
        %v5352 = vmul.f32 %v5351, %v3163
        %v5353 = vadd.f32 %v5352, 1e-06
        %v5354 = vrsqrt.pop %v5353
        %v5357 = vunpack.c.l.s4 839922192
        %v5358 = vunpack.c.0.s8 %v5357
        %v5359 = vlaneseq
        %v5360 = vshrl.u32 %v5359, 7
        %v5361 = vsub.s32 %v5358, %v5360
        %v5362 = vrot.slane %v5354, %v5361
        %v5364 = vmul.f32 %v5342, %v5362
        %v5366 = vlaneseq
        %v5367 = vshrl.u32 %v5366, 7
        %v5368 = vsub.s32 0, %v5367
        %v5369 = vrot.slane %v5240, %v5368
        %v5370 = vlaneseq
        %v5371 = vshrl.u32 %v5370, 7
        %v5372 = vsub.s32 1, %v5371
        %v5373 = vrot.slane %v5240, %v5372
        %v5374 = vcombine.low %v5369, %v5373
        %v5376 = vmul.f32 %v5364, %v5374
        %v5378 = vlaneseq
        %v5379 = vshrl.u32 %v5378, 7
        %v5380 = vsub.s32 0, %v5379
        %v5381 = vrot.slane %v5242, %v5380
        %v5382 = vlaneseq
        %v5383 = vshrl.u32 %v5382, 7
        %v5384 = vsub.s32 1, %v5383
        %v5385 = vrot.slane %v5242, %v5384
        %v5386 = vcombine.low %v5381, %v5385
        %v5388 = vadd.f32 %v5376, %v5386
        %v5390 = vcombine.high %v5388, %v5388
        %v5392 = vpack.c.bf16 %v5388, %v5388
        %v5393 = vpack.c.bf16 %v5390, %v5390
        %s5394 = scalar_lea.vmem [#allocation16], 1024
        %v5395 = vld [vmem:[%s5394] sm:$0xff]
        %v5396 = vld [vmem:[%s5394 + $0x8] sm:$0xff]
        %v5397 = vld [vmem:[%s5394 + $0x10] sm:$0xff]
        %v5398 = vld [vmem:[%s5394 + $0x18] sm:$0xff]
        %v5399 = vld [vmem:[%s5394 + $0x20] sm:$0xff]
        %v5400 = vld [vmem:[%s5394 + $0x28] sm:$0xff]
        %v5401 = vld [vmem:[%s5394 + $0x30] sm:$0xff]
        %v5402 = vld [vmem:[%s5394 + $0x38] sm:$0xff]
        %v5403 = vld [vmem:[%s5394 + $0x40] sm:$0xff]
        %v5404 = vld [vmem:[%s5394 + $0x48] sm:$0xff]
        %v5405 = vld [vmem:[%s5394 + $0x50] sm:$0xff]
        %v5406 = vld [vmem:[%s5394 + $0x58] sm:$0xff]
        %v5407 = vld [vmem:[%s5394 + $0x60] sm:$0xff]
        %v5408 = vld [vmem:[%s5394 + $0x68] sm:$0xff]
        %v5409 = vld [vmem:[%s5394 + $0x70] sm:$0xff]
        %v5410 = vld [vmem:[%s5394 + $0x78] sm:$0xff]
        %v5411 = vld [vmem:[%s5394 + $0x80] sm:$0xff]
        %v5412 = vld [vmem:[%s5394 + $0x88] sm:$0xff]
        %v5413 = vld [vmem:[%s5394 + $0x90] sm:$0xff]
        %v5414 = vld [vmem:[%s5394 + $0x98] sm:$0xff]
        %v5415 = vld [vmem:[%s5394 + $0xa0] sm:$0xff]
        %v5416 = vld [vmem:[%s5394 + $0xa8] sm:$0xff]
        %v5417 = vld [vmem:[%s5394 + $0xb0] sm:$0xff]
        %v5418 = vld [vmem:[%s5394 + $0xb8] sm:$0xff]
        %v5419 = vld [vmem:[%s5394 + $0xc0] sm:$0xff]
        %v5420 = vld [vmem:[%s5394 + $0xc8] sm:$0xff]
        %v5421 = vld [vmem:[%s5394 + $0xd0] sm:$0xff]
        %v5422 = vld [vmem:[%s5394 + $0xd8] sm:$0xff]
        %v5423 = vld [vmem:[%s5394 + $0xe0] sm:$0xff]
        %v5424 = vld [vmem:[%s5394 + $0xe8] sm:$0xff]
        %v5425 = vld [vmem:[%s5394 + $0xf0] sm:$0xff]
        %v5426 = vld [vmem:[%s5394 + $0xf8] sm:$0xff]
        %v5427 = vld [vmem:[%s5394 + $0x100] sm:$0xff]
        %v5428 = vld [vmem:[%s5394 + $0x108] sm:$0xff]
        %v5429 = vld [vmem:[%s5394 + $0x110] sm:$0xff]
        %v5430 = vld [vmem:[%s5394 + $0x118] sm:$0xff]
        %v5431 = vld [vmem:[%s5394 + $0x120] sm:$0xff]
        %v5432 = vld [vmem:[%s5394 + $0x128] sm:$0xff]
        %v5433 = vld [vmem:[%s5394 + $0x130] sm:$0xff]
        %v5434 = vld [vmem:[%s5394 + $0x138] sm:$0xff]
        %v5435 = vld [vmem:[%s5394 + $0x140] sm:$0xff]
        %v5436 = vld [vmem:[%s5394 + $0x148] sm:$0xff]
        %v5437 = vld [vmem:[%s5394 + $0x150] sm:$0xff]
        %v5438 = vld [vmem:[%s5394 + $0x158] sm:$0xff]
        %v5439 = vld [vmem:[%s5394 + $0x160] sm:$0xff]
        %v5440 = vld [vmem:[%s5394 + $0x168] sm:$0xff]
        %v5441 = vld [vmem:[%s5394 + $0x170] sm:$0xff]
        %v5442 = vld [vmem:[%s5394 + $0x178] sm:$0xff]
        %v5443 = vld [vmem:[%s5394 + $0x180] sm:$0xff]
        %v5444 = vld [vmem:[%s5394 + $0x188] sm:$0xff]
        %v5445 = vld [vmem:[%s5394 + $0x190] sm:$0xff]
        %v5446 = vld [vmem:[%s5394 + $0x198] sm:$0xff]
        %v5447 = vld [vmem:[%s5394 + $0x1a0] sm:$0xff]
        %v5448 = vld [vmem:[%s5394 + $0x1a8] sm:$0xff]
        %v5449 = vld [vmem:[%s5394 + $0x1b0] sm:$0xff]
        %v5450 = vld [vmem:[%s5394 + $0x1b8] sm:$0xff]
        %v5451 = vld [vmem:[%s5394 + $0x1c0] sm:$0xff]
        %v5452 = vld [vmem:[%s5394 + $0x1c8] sm:$0xff]
        %v5453 = vld [vmem:[%s5394 + $0x1d0] sm:$0xff]
        %v5454 = vld [vmem:[%s5394 + $0x1d8] sm:$0xff]
        %v5455 = vld [vmem:[%s5394 + $0x1e0] sm:$0xff]
        %v5456 = vld [vmem:[%s5394 + $0x1e8] sm:$0xff]
        %v5457 = vld [vmem:[%s5394 + $0x1f0] sm:$0xff]
        %v5458 = vld [vmem:[%s5394 + $0x1f8] sm:$0xff]
        %v5459 = vld [vmem:[%s5394 + $0x200] sm:$0xff]
        %v5460 = vld [vmem:[%s5394 + $0x208] sm:$0xff]
        %v5461 = vld [vmem:[%s5394 + $0x210] sm:$0xff]
        %v5462 = vld [vmem:[%s5394 + $0x218] sm:$0xff]
        %v5463 = vld [vmem:[%s5394 + $0x220] sm:$0xff]
        %v5464 = vld [vmem:[%s5394 + $0x228] sm:$0xff]
        %v5465 = vld [vmem:[%s5394 + $0x230] sm:$0xff]
        %v5466 = vld [vmem:[%s5394 + $0x238] sm:$0xff]
        %v5467 = vld [vmem:[%s5394 + $0x240] sm:$0xff]
        %v5468 = vld [vmem:[%s5394 + $0x248] sm:$0xff]
        %v5469 = vld [vmem:[%s5394 + $0x250] sm:$0xff]
        %v5470 = vld [vmem:[%s5394 + $0x258] sm:$0xff]
        %v5471 = vld [vmem:[%s5394 + $0x260] sm:$0xff]
        %v5472 = vld [vmem:[%s5394 + $0x268] sm:$0xff]
        %v5473 = vld [vmem:[%s5394 + $0x270] sm:$0xff]
        %v5474 = vld [vmem:[%s5394 + $0x278] sm:$0xff]
        %v5475 = vld [vmem:[%s5394 + $0x280] sm:$0xff]
        %v5476 = vld [vmem:[%s5394 + $0x288] sm:$0xff]
        %v5477 = vld [vmem:[%s5394 + $0x290] sm:$0xff]
        %v5478 = vld [vmem:[%s5394 + $0x298] sm:$0xff]
        %v5479 = vld [vmem:[%s5394 + $0x2a0] sm:$0xff]
        %v5480 = vld [vmem:[%s5394 + $0x2a8] sm:$0xff]
        %v5481 = vld [vmem:[%s5394 + $0x2b0] sm:$0xff]
        %v5482 = vld [vmem:[%s5394 + $0x2b8] sm:$0xff]
        %v5483 = vld [vmem:[%s5394 + $0x2c0] sm:$0xff]
        %v5484 = vld [vmem:[%s5394 + $0x2c8] sm:$0xff]
        %v5485 = vld [vmem:[%s5394 + $0x2d0] sm:$0xff]
        %v5486 = vld [vmem:[%s5394 + $0x2d8] sm:$0xff]
        %v5487 = vld [vmem:[%s5394 + $0x2e0] sm:$0xff]
        %v5488 = vld [vmem:[%s5394 + $0x2e8] sm:$0xff]
        %v5489 = vld [vmem:[%s5394 + $0x2f0] sm:$0xff]
        %v5490 = vld [vmem:[%s5394 + $0x2f8] sm:$0xff]
        %v5491 = vld [vmem:[%s5394 + $0x300] sm:$0xff]
        %v5492 = vld [vmem:[%s5394 + $0x308] sm:$0xff]
        %v5493 = vld [vmem:[%s5394 + $0x310] sm:$0xff]
        %v5494 = vld [vmem:[%s5394 + $0x318] sm:$0xff]
        %v5495 = vld [vmem:[%s5394 + $0x320] sm:$0xff]
        %v5496 = vld [vmem:[%s5394 + $0x328] sm:$0xff]
        %v5497 = vld [vmem:[%s5394 + $0x330] sm:$0xff]
        %v5498 = vld [vmem:[%s5394 + $0x338] sm:$0xff]
        %v5499 = vld [vmem:[%s5394 + $0x340] sm:$0xff]
        %v5500 = vld [vmem:[%s5394 + $0x348] sm:$0xff]
        %v5501 = vld [vmem:[%s5394 + $0x350] sm:$0xff]
        %v5502 = vld [vmem:[%s5394 + $0x358] sm:$0xff]
        %v5503 = vld [vmem:[%s5394 + $0x360] sm:$0xff]
        %v5504 = vld [vmem:[%s5394 + $0x368] sm:$0xff]
        %v5505 = vld [vmem:[%s5394 + $0x370] sm:$0xff]
        %v5506 = vld [vmem:[%s5394 + $0x378] sm:$0xff]
        %v5507 = vld [vmem:[%s5394 + $0x380] sm:$0xff]
        %v5508 = vld [vmem:[%s5394 + $0x388] sm:$0xff]
        %v5509 = vld [vmem:[%s5394 + $0x390] sm:$0xff]
        %v5510 = vld [vmem:[%s5394 + $0x398] sm:$0xff]
        %v5511 = vld [vmem:[%s5394 + $0x3a0] sm:$0xff]
        %v5512 = vld [vmem:[%s5394 + $0x3a8] sm:$0xff]
        %v5513 = vld [vmem:[%s5394 + $0x3b0] sm:$0xff]
        %v5514 = vld [vmem:[%s5394 + $0x3b8] sm:$0xff]
        %v5515 = vld [vmem:[%s5394 + $0x3c0] sm:$0xff]
        %v5516 = vld [vmem:[%s5394 + $0x3c8] sm:$0xff]
        %v5517 = vld [vmem:[%s5394 + $0x3d0] sm:$0xff]
        %v5518 = vld [vmem:[%s5394 + $0x3d8] sm:$0xff]
        %v5519 = vld [vmem:[%s5394 + $0x3e0] sm:$0xff]
        %v5520 = vld [vmem:[%s5394 + $0x3e8] sm:$0xff]
        %v5521 = vld [vmem:[%s5394 + $0x3f0] sm:$0xff]
        %v5522 = vld [vmem:[%s5394 + $0x3f8] sm:$0xff]
        %v5524 = vlaneseq
        %v5525 = vshrl.u32 %v5524, 7
        %v5526 = vsub.s32 0, %v5525
        %v5527 = vrot.slane %v5246, %v5526
        %v5528 = vlaneseq
        %v5529 = vshrl.u32 %v5528, 7
        %v5530 = vsub.s32 1, %v5529
        %v5531 = vrot.slane %v5246, %v5530
        %v5532 = vlaneseq
        %v5533 = vshrl.u32 %v5532, 7
        %v5534 = vsub.s32 2, %v5533
        %v5535 = vrot.slane %v5246, %v5534
        %v5536 = vlaneseq
        %v5537 = vshrl.u32 %v5536, 7
        %v5538 = vsub.s32 3, %v5537
        %v5539 = vrot.slane %v5246, %v5538
        %v5540 = vlaneseq
        %v5541 = vshrl.u32 %v5540, 7
        %v5542 = vsub.s32 4, %v5541
        %v5543 = vrot.slane %v5246, %v5542
        %v5544 = vlaneseq
        %v5545 = vshrl.u32 %v5544, 7
        %v5546 = vsub.s32 5, %v5545
        %v5547 = vrot.slane %v5246, %v5546
        %v5548 = vlaneseq
        %v5549 = vshrl.u32 %v5548, 7
        %v5550 = vsub.s32 6, %v5549
        %v5551 = vrot.slane %v5246, %v5550
        %v5552 = vlaneseq
        %v5553 = vshrl.u32 %v5552, 7
        %v5554 = vsub.s32 7, %v5553
        %v5555 = vrot.slane %v5246, %v5554
        %v5692 = vunpack.c.l.b16 %v5395
        %v5693 = vunpack.c.h.b16 %v5395
        %v5694 = vunpack.c.l.b16 %v5396
        %v5695 = vunpack.c.h.b16 %v5396
        %v5696 = vunpack.c.l.b16 %v5397
        %v5697 = vunpack.c.h.b16 %v5397
        %v5698 = vunpack.c.l.b16 %v5398
        %v5699 = vunpack.c.h.b16 %v5398
        %v5700 = vunpack.c.l.b16 %v5399
        %v5701 = vunpack.c.h.b16 %v5399
        %v5702 = vunpack.c.l.b16 %v5400
        %v5703 = vunpack.c.h.b16 %v5400
        %v5704 = vunpack.c.l.b16 %v5401
        %v5705 = vunpack.c.h.b16 %v5401
        %v5706 = vunpack.c.l.b16 %v5402
        %v5707 = vunpack.c.h.b16 %v5402
        %v5708 = vunpack.c.l.b16 %v5403
        %v5709 = vunpack.c.h.b16 %v5403
        %v5710 = vunpack.c.l.b16 %v5404
        %v5711 = vunpack.c.h.b16 %v5404
        %v5712 = vunpack.c.l.b16 %v5405
        %v5713 = vunpack.c.h.b16 %v5405
        %v5714 = vunpack.c.l.b16 %v5406
        %v5715 = vunpack.c.h.b16 %v5406
        %v5716 = vunpack.c.l.b16 %v5407
        %v5717 = vunpack.c.h.b16 %v5407
        %v5718 = vunpack.c.l.b16 %v5408
        %v5719 = vunpack.c.h.b16 %v5408
        %v5720 = vunpack.c.l.b16 %v5409
        %v5721 = vunpack.c.h.b16 %v5409
        %v5722 = vunpack.c.l.b16 %v5410
        %v5723 = vunpack.c.h.b16 %v5410
        %v5724 = vunpack.c.l.b16 %v5411
        %v5725 = vunpack.c.h.b16 %v5411
        %v5726 = vunpack.c.l.b16 %v5412
        %v5727 = vunpack.c.h.b16 %v5412
        %v5728 = vunpack.c.l.b16 %v5413
        %v5729 = vunpack.c.h.b16 %v5413
        %v5730 = vunpack.c.l.b16 %v5414
        %v5731 = vunpack.c.h.b16 %v5414
        %v5732 = vunpack.c.l.b16 %v5415
        %v5733 = vunpack.c.h.b16 %v5415
        %v5734 = vunpack.c.l.b16 %v5416
        %v5735 = vunpack.c.h.b16 %v5416
        %v5736 = vunpack.c.l.b16 %v5417
        %v5737 = vunpack.c.h.b16 %v5417
        %v5738 = vunpack.c.l.b16 %v5418
        %v5739 = vunpack.c.h.b16 %v5418
        %v5740 = vunpack.c.l.b16 %v5419
        %v5741 = vunpack.c.h.b16 %v5419
        %v5742 = vunpack.c.l.b16 %v5420
        %v5743 = vunpack.c.h.b16 %v5420
        %v5744 = vunpack.c.l.b16 %v5421
        %v5745 = vunpack.c.h.b16 %v5421
        %v5746 = vunpack.c.l.b16 %v5422
        %v5747 = vunpack.c.h.b16 %v5422
        %v5748 = vunpack.c.l.b16 %v5423
        %v5749 = vunpack.c.h.b16 %v5423
        %v5750 = vunpack.c.l.b16 %v5424
        %v5751 = vunpack.c.h.b16 %v5424
        %v5752 = vunpack.c.l.b16 %v5425
        %v5753 = vunpack.c.h.b16 %v5425
        %v5754 = vunpack.c.l.b16 %v5426
        %v5755 = vunpack.c.h.b16 %v5426
        %v5756 = vunpack.c.l.b16 %v5427
        %v5757 = vunpack.c.h.b16 %v5427
        %v5758 = vunpack.c.l.b16 %v5428
        %v5759 = vunpack.c.h.b16 %v5428
        %v5760 = vunpack.c.l.b16 %v5429
        %v5761 = vunpack.c.h.b16 %v5429
        %v5762 = vunpack.c.l.b16 %v5430
        %v5763 = vunpack.c.h.b16 %v5430
        %v5764 = vunpack.c.l.b16 %v5431
        %v5765 = vunpack.c.h.b16 %v5431
        %v5766 = vunpack.c.l.b16 %v5432
        %v5767 = vunpack.c.h.b16 %v5432
        %v5768 = vunpack.c.l.b16 %v5433
        %v5769 = vunpack.c.h.b16 %v5433
        %v5770 = vunpack.c.l.b16 %v5434
        %v5771 = vunpack.c.h.b16 %v5434
        %v5772 = vunpack.c.l.b16 %v5435
        %v5773 = vunpack.c.h.b16 %v5435
        %v5774 = vunpack.c.l.b16 %v5436
        %v5775 = vunpack.c.h.b16 %v5436
        %v5776 = vunpack.c.l.b16 %v5437
        %v5777 = vunpack.c.h.b16 %v5437
        %v5778 = vunpack.c.l.b16 %v5438
        %v5779 = vunpack.c.h.b16 %v5438
        %v5780 = vunpack.c.l.b16 %v5439
        %v5781 = vunpack.c.h.b16 %v5439
        %v5782 = vunpack.c.l.b16 %v5440
        %v5783 = vunpack.c.h.b16 %v5440
        %v5784 = vunpack.c.l.b16 %v5441
        %v5785 = vunpack.c.h.b16 %v5441
        %v5786 = vunpack.c.l.b16 %v5442
        %v5787 = vunpack.c.h.b16 %v5442
        %v5788 = vunpack.c.l.b16 %v5443
        %v5789 = vunpack.c.h.b16 %v5443
        %v5790 = vunpack.c.l.b16 %v5444
        %v5791 = vunpack.c.h.b16 %v5444
        %v5792 = vunpack.c.l.b16 %v5445
        %v5793 = vunpack.c.h.b16 %v5445
        %v5794 = vunpack.c.l.b16 %v5446
        %v5795 = vunpack.c.h.b16 %v5446
        %v5796 = vunpack.c.l.b16 %v5447
        %v5797 = vunpack.c.h.b16 %v5447
        %v5798 = vunpack.c.l.b16 %v5448
        %v5799 = vunpack.c.h.b16 %v5448
        %v5800 = vunpack.c.l.b16 %v5449
        %v5801 = vunpack.c.h.b16 %v5449
        %v5802 = vunpack.c.l.b16 %v5450
        %v5803 = vunpack.c.h.b16 %v5450
        %v5804 = vunpack.c.l.b16 %v5451
        %v5805 = vunpack.c.h.b16 %v5451
        %v5806 = vunpack.c.l.b16 %v5452
        %v5807 = vunpack.c.h.b16 %v5452
        %v5808 = vunpack.c.l.b16 %v5453
        %v5809 = vunpack.c.h.b16 %v5453
        %v5810 = vunpack.c.l.b16 %v5454
        %v5811 = vunpack.c.h.b16 %v5454
        %v5812 = vunpack.c.l.b16 %v5455
        %v5813 = vunpack.c.h.b16 %v5455
        %v5814 = vunpack.c.l.b16 %v5456
        %v5815 = vunpack.c.h.b16 %v5456
        %v5816 = vunpack.c.l.b16 %v5457
        %v5817 = vunpack.c.h.b16 %v5457
        %v5818 = vunpack.c.l.b16 %v5458
        %v5819 = vunpack.c.h.b16 %v5458
        %v5820 = vunpack.c.l.b16 %v5459
        %v5821 = vunpack.c.h.b16 %v5459
        %v5822 = vunpack.c.l.b16 %v5460
        %v5823 = vunpack.c.h.b16 %v5460
        %v5824 = vunpack.c.l.b16 %v5461
        %v5825 = vunpack.c.h.b16 %v5461
        %v5826 = vunpack.c.l.b16 %v5462
        %v5827 = vunpack.c.h.b16 %v5462
        %v5828 = vunpack.c.l.b16 %v5463
        %v5829 = vunpack.c.h.b16 %v5463
        %v5830 = vunpack.c.l.b16 %v5464
        %v5831 = vunpack.c.h.b16 %v5464
        %v5832 = vunpack.c.l.b16 %v5465
        %v5833 = vunpack.c.h.b16 %v5465
        %v5834 = vunpack.c.l.b16 %v5466
        %v5835 = vunpack.c.h.b16 %v5466
        %v5836 = vunpack.c.l.b16 %v5467
        %v5837 = vunpack.c.h.b16 %v5467
        %v5838 = vunpack.c.l.b16 %v5468
        %v5839 = vunpack.c.h.b16 %v5468
        %v5840 = vunpack.c.l.b16 %v5469
        %v5841 = vunpack.c.h.b16 %v5469
        %v5842 = vunpack.c.l.b16 %v5470
        %v5843 = vunpack.c.h.b16 %v5470
        %v5844 = vunpack.c.l.b16 %v5471
        %v5845 = vunpack.c.h.b16 %v5471
        %v5846 = vunpack.c.l.b16 %v5472
        %v5847 = vunpack.c.h.b16 %v5472
        %v5848 = vunpack.c.l.b16 %v5473
        %v5849 = vunpack.c.h.b16 %v5473
        %v5850 = vunpack.c.l.b16 %v5474
        %v5851 = vunpack.c.h.b16 %v5474
        %v5852 = vunpack.c.l.b16 %v5475
        %v5853 = vunpack.c.h.b16 %v5475
        %v5854 = vunpack.c.l.b16 %v5476
        %v5855 = vunpack.c.h.b16 %v5476
        %v5856 = vunpack.c.l.b16 %v5477
        %v5857 = vunpack.c.h.b16 %v5477
        %v5858 = vunpack.c.l.b16 %v5478
        %v5859 = vunpack.c.h.b16 %v5478
        %v5860 = vunpack.c.l.b16 %v5479
        %v5861 = vunpack.c.h.b16 %v5479
        %v5862 = vunpack.c.l.b16 %v5480
        %v5863 = vunpack.c.h.b16 %v5480
        %v5864 = vunpack.c.l.b16 %v5481
        %v5865 = vunpack.c.h.b16 %v5481
        %v5866 = vunpack.c.l.b16 %v5482
        %v5867 = vunpack.c.h.b16 %v5482
        %v5868 = vunpack.c.l.b16 %v5483
        %v5869 = vunpack.c.h.b16 %v5483
        %v5870 = vunpack.c.l.b16 %v5484
        %v5871 = vunpack.c.h.b16 %v5484
        %v5872 = vunpack.c.l.b16 %v5485
        %v5873 = vunpack.c.h.b16 %v5485
        %v5874 = vunpack.c.l.b16 %v5486
        %v5875 = vunpack.c.h.b16 %v5486
        %v5876 = vunpack.c.l.b16 %v5487
        %v5877 = vunpack.c.h.b16 %v5487
        %v5878 = vunpack.c.l.b16 %v5488
        %v5879 = vunpack.c.h.b16 %v5488
        %v5880 = vunpack.c.l.b16 %v5489
        %v5881 = vunpack.c.h.b16 %v5489
        %v5882 = vunpack.c.l.b16 %v5490
        %v5883 = vunpack.c.h.b16 %v5490
        %v5884 = vunpack.c.l.b16 %v5491
        %v5885 = vunpack.c.h.b16 %v5491
        %v5886 = vunpack.c.l.b16 %v5492
        %v5887 = vunpack.c.h.b16 %v5492
        %v5888 = vunpack.c.l.b16 %v5493
        %v5889 = vunpack.c.h.b16 %v5493
        %v5890 = vunpack.c.l.b16 %v5494
        %v5891 = vunpack.c.h.b16 %v5494
        %v5892 = vunpack.c.l.b16 %v5495
        %v5893 = vunpack.c.h.b16 %v5495
        %v5894 = vunpack.c.l.b16 %v5496
        %v5895 = vunpack.c.h.b16 %v5496
        %v5896 = vunpack.c.l.b16 %v5497
        %v5897 = vunpack.c.h.b16 %v5497
        %v5898 = vunpack.c.l.b16 %v5498
        %v5899 = vunpack.c.h.b16 %v5498
        %v5900 = vunpack.c.l.b16 %v5499
        %v5901 = vunpack.c.h.b16 %v5499
        %v5902 = vunpack.c.l.b16 %v5500
        %v5903 = vunpack.c.h.b16 %v5500
        %v5904 = vunpack.c.l.b16 %v5501
        %v5905 = vunpack.c.h.b16 %v5501
        %v5906 = vunpack.c.l.b16 %v5502
        %v5907 = vunpack.c.h.b16 %v5502
        %v5908 = vunpack.c.l.b16 %v5503
        %v5909 = vunpack.c.h.b16 %v5503
        %v5910 = vunpack.c.l.b16 %v5504
        %v5911 = vunpack.c.h.b16 %v5504
        %v5912 = vunpack.c.l.b16 %v5505
        %v5913 = vunpack.c.h.b16 %v5505
        %v5914 = vunpack.c.l.b16 %v5506
        %v5915 = vunpack.c.h.b16 %v5506
        %v5916 = vunpack.c.l.b16 %v5507
        %v5917 = vunpack.c.h.b16 %v5507
        %v5918 = vunpack.c.l.b16 %v5508
        %v5919 = vunpack.c.h.b16 %v5508
        %v5920 = vunpack.c.l.b16 %v5509
        %v5921 = vunpack.c.h.b16 %v5509
        %v5922 = vunpack.c.l.b16 %v5510
        %v5923 = vunpack.c.h.b16 %v5510
        %v5924 = vunpack.c.l.b16 %v5511
        %v5925 = vunpack.c.h.b16 %v5511
        %v5926 = vunpack.c.l.b16 %v5512
        %v5927 = vunpack.c.h.b16 %v5512
        %v5928 = vunpack.c.l.b16 %v5513
        %v5929 = vunpack.c.h.b16 %v5513
        %v5930 = vunpack.c.l.b16 %v5514
        %v5931 = vunpack.c.h.b16 %v5514
        %v5932 = vunpack.c.l.b16 %v5515
        %v5933 = vunpack.c.h.b16 %v5515
        %v5934 = vunpack.c.l.b16 %v5516
        %v5935 = vunpack.c.h.b16 %v5516
        %v5936 = vunpack.c.l.b16 %v5517
        %v5937 = vunpack.c.h.b16 %v5517
        %v5938 = vunpack.c.l.b16 %v5518
        %v5939 = vunpack.c.h.b16 %v5518
        %v5940 = vunpack.c.l.b16 %v5519
        %v5941 = vunpack.c.h.b16 %v5519
        %v5942 = vunpack.c.l.b16 %v5520
        %v5943 = vunpack.c.h.b16 %v5520
        %v5944 = vunpack.c.l.b16 %v5521
        %v5945 = vunpack.c.h.b16 %v5521
        %v5946 = vunpack.c.l.b16 %v5522
        %v5947 = vunpack.c.h.b16 %v5522
        %v5948 = vpack.c.b16 %v5700, %v5692
        %v5949 = vpack.c.b16 %v5701, %v5693
        %v5950 = vpack.c.b16 %v5702, %v5694
        %v5951 = vpack.c.b16 %v5703, %v5695
        %v5952 = vpack.c.b16 %v5704, %v5696
        %v5953 = vpack.c.b16 %v5705, %v5697
        %v5954 = vpack.c.b16 %v5706, %v5698
        %v5955 = vpack.c.b16 %v5707, %v5699
        %v5956 = vpack.c.b16 %v5716, %v5708
        %v5957 = vpack.c.b16 %v5717, %v5709
        %v5958 = vpack.c.b16 %v5718, %v5710
        %v5959 = vpack.c.b16 %v5719, %v5711
        %v5960 = vpack.c.b16 %v5720, %v5712
        %v5961 = vpack.c.b16 %v5721, %v5713
        %v5962 = vpack.c.b16 %v5722, %v5714
        %v5963 = vpack.c.b16 %v5723, %v5715
        %v5964 = vpack.c.b16 %v5732, %v5724
        %v5965 = vpack.c.b16 %v5733, %v5725
        %v5966 = vpack.c.b16 %v5734, %v5726
        %v5967 = vpack.c.b16 %v5735, %v5727
        %v5968 = vpack.c.b16 %v5736, %v5728
        %v5969 = vpack.c.b16 %v5737, %v5729
        %v5970 = vpack.c.b16 %v5738, %v5730
        %v5971 = vpack.c.b16 %v5739, %v5731
        %v5972 = vpack.c.b16 %v5748, %v5740
        %v5973 = vpack.c.b16 %v5749, %v5741
        %v5974 = vpack.c.b16 %v5750, %v5742
        %v5975 = vpack.c.b16 %v5751, %v5743
        %v5976 = vpack.c.b16 %v5752, %v5744
        %v5977 = vpack.c.b16 %v5753, %v5745
        %v5978 = vpack.c.b16 %v5754, %v5746
        %v5979 = vpack.c.b16 %v5755, %v5747
        %v5980 = vpack.c.b16 %v5764, %v5756
        %v5981 = vpack.c.b16 %v5765, %v5757
        %v5982 = vpack.c.b16 %v5766, %v5758
        %v5983 = vpack.c.b16 %v5767, %v5759
        %v5984 = vpack.c.b16 %v5768, %v5760
        %v5985 = vpack.c.b16 %v5769, %v5761
        %v5986 = vpack.c.b16 %v5770, %v5762
        %v5987 = vpack.c.b16 %v5771, %v5763
        %v5988 = vpack.c.b16 %v5780, %v5772
        %v5989 = vpack.c.b16 %v5781, %v5773
        %v5990 = vpack.c.b16 %v5782, %v5774
        %v5991 = vpack.c.b16 %v5783, %v5775
        %v5992 = vpack.c.b16 %v5784, %v5776
        %v5993 = vpack.c.b16 %v5785, %v5777
        %v5994 = vpack.c.b16 %v5786, %v5778
        %v5995 = vpack.c.b16 %v5787, %v5779
        %v5996 = vpack.c.b16 %v5796, %v5788
        %v5997 = vpack.c.b16 %v5797, %v5789
        %v5998 = vpack.c.b16 %v5798, %v5790
        %v5999 = vpack.c.b16 %v5799, %v5791
        %v6000 = vpack.c.b16 %v5800, %v5792
        %v6001 = vpack.c.b16 %v5801, %v5793
        %v6002 = vpack.c.b16 %v5802, %v5794
        %v6003 = vpack.c.b16 %v5803, %v5795
        %v6004 = vpack.c.b16 %v5812, %v5804
        %v6005 = vpack.c.b16 %v5813, %v5805
        %v6006 = vpack.c.b16 %v5814, %v5806
        %v6007 = vpack.c.b16 %v5815, %v5807
        %v6008 = vpack.c.b16 %v5816, %v5808
        %v6009 = vpack.c.b16 %v5817, %v5809
        %v6010 = vpack.c.b16 %v5818, %v5810
        %v6011 = vpack.c.b16 %v5819, %v5811
        %v6012 = vpack.c.b16 %v5828, %v5820
        %v6013 = vpack.c.b16 %v5829, %v5821
        %v6014 = vpack.c.b16 %v5830, %v5822
        %v6015 = vpack.c.b16 %v5831, %v5823
        %v6016 = vpack.c.b16 %v5832, %v5824
        %v6017 = vpack.c.b16 %v5833, %v5825
        %v6018 = vpack.c.b16 %v5834, %v5826
        %v6019 = vpack.c.b16 %v5835, %v5827
        %v6020 = vpack.c.b16 %v5844, %v5836
        %v6021 = vpack.c.b16 %v5845, %v5837
        %v6022 = vpack.c.b16 %v5846, %v5838
        %v6023 = vpack.c.b16 %v5847, %v5839
        %v6024 = vpack.c.b16 %v5848, %v5840
        %v6025 = vpack.c.b16 %v5849, %v5841
        %v6026 = vpack.c.b16 %v5850, %v5842
        %v6027 = vpack.c.b16 %v5851, %v5843
        %v6028 = vpack.c.b16 %v5860, %v5852
        %v6029 = vpack.c.b16 %v5861, %v5853
        %v6030 = vpack.c.b16 %v5862, %v5854
        %v6031 = vpack.c.b16 %v5863, %v5855
        %v6032 = vpack.c.b16 %v5864, %v5856
        %v6033 = vpack.c.b16 %v5865, %v5857
        %v6034 = vpack.c.b16 %v5866, %v5858
        %v6035 = vpack.c.b16 %v5867, %v5859
        %v6036 = vpack.c.b16 %v5876, %v5868
        %v6037 = vpack.c.b16 %v5877, %v5869
        %v6038 = vpack.c.b16 %v5878, %v5870
        %v6039 = vpack.c.b16 %v5879, %v5871
        %v6040 = vpack.c.b16 %v5880, %v5872
        %v6041 = vpack.c.b16 %v5881, %v5873
        %v6042 = vpack.c.b16 %v5882, %v5874
        %v6043 = vpack.c.b16 %v5883, %v5875
        %v6044 = vpack.c.b16 %v5892, %v5884
        %v6045 = vpack.c.b16 %v5893, %v5885
        %v6046 = vpack.c.b16 %v5894, %v5886
        %v6047 = vpack.c.b16 %v5895, %v5887
        %v6048 = vpack.c.b16 %v5896, %v5888
        %v6049 = vpack.c.b16 %v5897, %v5889
        %v6050 = vpack.c.b16 %v5898, %v5890
        %v6051 = vpack.c.b16 %v5899, %v5891
        %v6052 = vpack.c.b16 %v5908, %v5900
        %v6053 = vpack.c.b16 %v5909, %v5901
        %v6054 = vpack.c.b16 %v5910, %v5902
        %v6055 = vpack.c.b16 %v5911, %v5903
        %v6056 = vpack.c.b16 %v5912, %v5904
        %v6057 = vpack.c.b16 %v5913, %v5905
        %v6058 = vpack.c.b16 %v5914, %v5906
        %v6059 = vpack.c.b16 %v5915, %v5907
        %v6060 = vpack.c.b16 %v5924, %v5916
        %v6061 = vpack.c.b16 %v5925, %v5917
        %v6062 = vpack.c.b16 %v5926, %v5918
        %v6063 = vpack.c.b16 %v5927, %v5919
        %v6064 = vpack.c.b16 %v5928, %v5920
        %v6065 = vpack.c.b16 %v5929, %v5921
        %v6066 = vpack.c.b16 %v5930, %v5922
        %v6067 = vpack.c.b16 %v5931, %v5923
        %v6068 = vpack.c.b16 %v5940, %v5932
        %v6069 = vpack.c.b16 %v5941, %v5933
        %v6070 = vpack.c.b16 %v5942, %v5934
        %v6071 = vpack.c.b16 %v5943, %v5935
        %v6072 = vpack.c.b16 %v5944, %v5936
        %v6073 = vpack.c.b16 %v5945, %v5937
        %v6074 = vpack.c.b16 %v5946, %v5938
        %v6075 = vpack.c.b16 %v5947, %v5939
        %6204 = vmatprep.subr.bf16.mxu0 %v6005
        %6205 = vmatpush1.bf16.msra.mxu0 %v6004
        %6206 = vmatprep.subr.bf16.mxu0 %v5997
        %6207 = vmatpush1.bf16.msra.mxu0 %v5996
        %6208 = vmatprep.subr.bf16.mxu0 %v5989
        %6209 = vmatpush1.bf16.msra.mxu0 %v5988
        %6210 = vmatprep.subr.bf16.mxu0 %v5981
        %6211 = vmatpush1.bf16.msra.mxu0 %v5980
        %6212 = vmatprep.subr.bf16.mxu0 %v5973
        %6213 = vmatpush1.bf16.msra.mxu0 %v5972
        %6214 = vmatprep.subr.bf16.mxu0 %v5965
        %6215 = vmatpush1.bf16.msra.mxu0 %v5964
        %6216 = vmatprep.subr.bf16.mxu0 %v5957
        %6217 = vmatpush1.bf16.msra.mxu0 %v5956
        %6218 = vmatprep.subr.bf16.mxu0 %v5949
        %6219 = vmatpush1.bf16.msra.mxu0 %v5948
        %6220 = vmatprep.subr.bf16.mxu0 %v6069
        %6221 = vmatpush2.bf16.msra.mxu0 %v6068
        %6222 = vmatprep.subr.bf16.mxu0 %v6061
        %6223 = vmatpush2.bf16.msra.mxu0 %v6060
        %6224 = vmatprep.subr.bf16.mxu0 %v6053
        %6225 = vmatpush2.bf16.msra.mxu0 %v6052
        %6226 = vmatprep.subr.bf16.mxu0 %v6045
        %6227 = vmatpush2.bf16.msra.mxu0 %v6044
        %6228 = vmatprep.subr.bf16.mxu0 %v6037
        %6229 = vmatpush2.bf16.msra.mxu0 %v6036
        %6230 = vmatprep.subr.bf16.mxu0 %v6029
        %6231 = vmatpush2.bf16.msra.mxu0 %v6028
        %6232 = vmatprep.subr.bf16.mxu0 %v6021
        %6233 = vmatpush2.bf16.msra.mxu0 %v6020
        %6234 = vmatprep.subr.bf16.mxu0 %v6013
        %6235 = vmatpush2.bf16.msra.mxu0 %v6012
        %6236 = vmatprep.mubr.bf16.mxu0 %v5393
        %6237 = vmatmul.mubr.bf16.gmra.mxu0 %v5392
        %v6238 = vpop.f32.mrf.mxu0
        %v6239 = vadd.f32 %v5527, %v6238
        %v6240 = vpop.f32.mrf.mxu0
        %v6241 = vadd.f32 %v5531, %v6240
        %v6242 = vpop.f32.mrf.mxu0
        %v6243 = vpop.f32.mrf.mxu0
        %6244 = vdwg.mxu0
        %6245 = vmatprep.subr.bf16.mxu0 %v6007
        %6246 = vmatpush1.bf16.msra.mxu0 %v6006
        %6247 = vmatprep.subr.bf16.mxu0 %v5999
        %6248 = vmatpush1.bf16.msra.mxu0 %v5998
        %6249 = vmatprep.subr.bf16.mxu0 %v5991
        %6250 = vmatpush1.bf16.msra.mxu0 %v5990
        %6251 = vmatprep.subr.bf16.mxu0 %v5983
        %6252 = vmatpush1.bf16.msra.mxu0 %v5982
        %6253 = vmatprep.subr.bf16.mxu0 %v5975
        %6254 = vmatpush1.bf16.msra.mxu0 %v5974
        %6255 = vmatprep.subr.bf16.mxu0 %v5967
        %6256 = vmatpush1.bf16.msra.mxu0 %v5966
        %6257 = vmatprep.subr.bf16.mxu0 %v5959
        %6258 = vmatpush1.bf16.msra.mxu0 %v5958
        %6259 = vmatprep.subr.bf16.mxu0 %v5951
        %6260 = vmatpush1.bf16.msra.mxu0 %v5950
        %6261 = vmatprep.subr.bf16.mxu0 %v6071
        %6262 = vmatpush2.bf16.msra.mxu0 %v6070
        %6263 = vmatprep.subr.bf16.mxu0 %v6063
        %6264 = vmatpush2.bf16.msra.mxu0 %v6062
        %6265 = vmatprep.subr.bf16.mxu0 %v6055
        %6266 = vmatpush2.bf16.msra.mxu0 %v6054
        %6267 = vmatprep.subr.bf16.mxu0 %v6047
        %6268 = vmatpush2.bf16.msra.mxu0 %v6046
        %6269 = vmatprep.subr.bf16.mxu0 %v6039
        %6270 = vmatpush2.bf16.msra.mxu0 %v6038
        %6271 = vmatprep.subr.bf16.mxu0 %v6031
        %6272 = vmatpush2.bf16.msra.mxu0 %v6030
        %6273 = vmatprep.subr.bf16.mxu0 %v6023
        %6274 = vmatpush2.bf16.msra.mxu0 %v6022
        %6275 = vmatprep.subr.bf16.mxu0 %v6015
        %6276 = vmatpush2.bf16.msra.mxu0 %v6014
        %6277 = vmatprep.mubr.bf16.mxu0 %v5393
        %6278 = vmatmul.mubr.bf16.gmra.mxu0 %v5392
        %v6279 = vpop.f32.mrf.mxu0
        %v6280 = vadd.f32 %v5535, %v6279
        %v6281 = vpop.f32.mrf.mxu0
        %v6282 = vadd.f32 %v5539, %v6281
        %v6283 = vpop.f32.mrf.mxu0
        %v6284 = vpop.f32.mrf.mxu0
        %6285 = vdwg.mxu0
        %6286 = vmatprep.subr.bf16.mxu0 %v6009
        %6287 = vmatpush1.bf16.msra.mxu0 %v6008
        %6288 = vmatprep.subr.bf16.mxu0 %v6001
        %6289 = vmatpush1.bf16.msra.mxu0 %v6000
        %6290 = vmatprep.subr.bf16.mxu0 %v5993
        %6291 = vmatpush1.bf16.msra.mxu0 %v5992
        %6292 = vmatprep.subr.bf16.mxu0 %v5985
        %6293 = vmatpush1.bf16.msra.mxu0 %v5984
        %6294 = vmatprep.subr.bf16.mxu0 %v5977
        %6295 = vmatpush1.bf16.msra.mxu0 %v5976
        %6296 = vmatprep.subr.bf16.mxu0 %v5969
        %6297 = vmatpush1.bf16.msra.mxu0 %v5968
        %6298 = vmatprep.subr.bf16.mxu0 %v5961
        %6299 = vmatpush1.bf16.msra.mxu0 %v5960
        %6300 = vmatprep.subr.bf16.mxu0 %v5953
        %6301 = vmatpush1.bf16.msra.mxu0 %v5952
        %6302 = vmatprep.subr.bf16.mxu0 %v6073
        %6303 = vmatpush2.bf16.msra.mxu0 %v6072
        %6304 = vmatprep.subr.bf16.mxu0 %v6065
        %6305 = vmatpush2.bf16.msra.mxu0 %v6064
        %6306 = vmatprep.subr.bf16.mxu0 %v6057
        %6307 = vmatpush2.bf16.msra.mxu0 %v6056
        %6308 = vmatprep.subr.bf16.mxu0 %v6049
        %6309 = vmatpush2.bf16.msra.mxu0 %v6048
        %6310 = vmatprep.subr.bf16.mxu0 %v6041
        %6311 = vmatpush2.bf16.msra.mxu0 %v6040
        %6312 = vmatprep.subr.bf16.mxu0 %v6033
        %6313 = vmatpush2.bf16.msra.mxu0 %v6032
        %6314 = vmatprep.subr.bf16.mxu0 %v6025
        %6315 = vmatpush2.bf16.msra.mxu0 %v6024
        %6316 = vmatprep.subr.bf16.mxu0 %v6017
        %6317 = vmatpush2.bf16.msra.mxu0 %v6016
        %6318 = vmatprep.mubr.bf16.mxu0 %v5393
        %6319 = vmatmul.mubr.bf16.gmra.mxu0 %v5392
        %v6320 = vpop.f32.mrf.mxu0
        %v6321 = vadd.f32 %v5543, %v6320
        %v6322 = vpop.f32.mrf.mxu0
        %v6323 = vadd.f32 %v5547, %v6322
        %v6324 = vpop.f32.mrf.mxu0
        %v6325 = vpop.f32.mrf.mxu0
        %6326 = vdwg.mxu0
        %6327 = vmatprep.subr.bf16.mxu0 %v6011
        %6328 = vmatpush1.bf16.msra.mxu0 %v6010
        %6329 = vmatprep.subr.bf16.mxu0 %v6003
        %6330 = vmatpush1.bf16.msra.mxu0 %v6002
        %6331 = vmatprep.subr.bf16.mxu0 %v5995
        %6332 = vmatpush1.bf16.msra.mxu0 %v5994
        %6333 = vmatprep.subr.bf16.mxu0 %v5987
        %6334 = vmatpush1.bf16.msra.mxu0 %v5986
        %6335 = vmatprep.subr.bf16.mxu0 %v5979
        %6336 = vmatpush1.bf16.msra.mxu0 %v5978
        %6337 = vmatprep.subr.bf16.mxu0 %v5971
        %6338 = vmatpush1.bf16.msra.mxu0 %v5970
        %6339 = vmatprep.subr.bf16.mxu0 %v5963
        %6340 = vmatpush1.bf16.msra.mxu0 %v5962
        %6341 = vmatprep.subr.bf16.mxu0 %v5955
        %6342 = vmatpush1.bf16.msra.mxu0 %v5954
        %6343 = vmatprep.subr.bf16.mxu0 %v6075
        %6344 = vmatpush2.bf16.msra.mxu0 %v6074
        %6345 = vmatprep.subr.bf16.mxu0 %v6067
        %6346 = vmatpush2.bf16.msra.mxu0 %v6066
        %6347 = vmatprep.subr.bf16.mxu0 %v6059
        %6348 = vmatpush2.bf16.msra.mxu0 %v6058
        %6349 = vmatprep.subr.bf16.mxu0 %v6051
        %6350 = vmatpush2.bf16.msra.mxu0 %v6050
        %6351 = vmatprep.subr.bf16.mxu0 %v6043
        %6352 = vmatpush2.bf16.msra.mxu0 %v6042
        %6353 = vmatprep.subr.bf16.mxu0 %v6035
        %6354 = vmatpush2.bf16.msra.mxu0 %v6034
        %6355 = vmatprep.subr.bf16.mxu0 %v6027
        %6356 = vmatpush2.bf16.msra.mxu0 %v6026
        %6357 = vmatprep.subr.bf16.mxu0 %v6019
        %6358 = vmatpush2.bf16.msra.mxu0 %v6018
        %6359 = vmatprep.mubr.bf16.mxu0 %v5393
        %6360 = vmatmul.mubr.bf16.gmra.mxu0 %v5392
        %v6361 = vpop.f32.mrf.mxu0
        %v6362 = vadd.f32 %v5551, %v6361
        %v6363 = vpop.f32.mrf.mxu0
        %v6364 = vadd.f32 %v5555, %v6363
        %v6365 = vpop.f32.mrf.mxu0
        %v6366 = vpop.f32.mrf.mxu0
        %6367 = vdwg.mxu0
        %v6368 = vmul.f32 %v6239, 0.5
        %v6369 = vmul.f32 %v6241, 0.5
        %v6370 = vmul.f32 %v6280, 0.5
        %v6371 = vmul.f32 %v6282, 0.5
        %v6372 = vmul.f32 %v6321, 0.5
        %v6373 = vmul.f32 %v6323, 0.5
        %v6374 = vmul.f32 %v6362, 0.5
        %v6375 = vmul.f32 %v6364, 0.5
        %v6376 = vmul.f32 %v6239, 0.044715
        %v6377 = vmul.f32 %v6241, 0.044715
        %v6378 = vmul.f32 %v6280, 0.044715
        %v6379 = vmul.f32 %v6282, 0.044715
        %v6380 = vmul.f32 %v6321, 0.044715
        %v6381 = vmul.f32 %v6323, 0.044715
        %v6382 = vmul.f32 %v6362, 0.044715
        %v6383 = vmul.f32 %v6364, 0.044715
        %v6384 = vmul.f32 %v6376, %v6239
        %v6385 = vmul.f32 %v6377, %v6241
        %v6386 = vmul.f32 %v6378, %v6280
        %v6387 = vmul.f32 %v6379, %v6282
        %v6388 = vmul.f32 %v6380, %v6321
        %v6389 = vmul.f32 %v6381, %v6323
        %v6390 = vmul.f32 %v6382, %v6362
        %v6391 = vmul.f32 %v6383, %v6364
        %v6392 = vmul.f32 %v6384, %v6239
        %v6393 = vmul.f32 %v6385, %v6241
        %v6394 = vmul.f32 %v6386, %v6280
        %v6395 = vmul.f32 %v6387, %v6282
        %v6396 = vmul.f32 %v6388, %v6321
        %v6397 = vmul.f32 %v6389, %v6323
        %v6398 = vmul.f32 %v6390, %v6362
        %v6399 = vmul.f32 %v6391, %v6364
        %v6400 = vadd.f32 %v6239, %v6392
        %v6401 = vadd.f32 %v6241, %v6393
        %v6402 = vadd.f32 %v6280, %v6394
        %v6403 = vadd.f32 %v6282, %v6395
        %v6404 = vadd.f32 %v6321, %v6396
        %v6405 = vadd.f32 %v6323, %v6397
        %v6406 = vadd.f32 %v6362, %v6398
        %v6407 = vadd.f32 %v6364, %v6399
        %v6408 = vmul.f32 %v6400, 0.7978846
        %v6409 = vmul.f32 %v6401, 0.7978846
        %v6410 = vmul.f32 %v6402, 0.7978846
        %v6411 = vmul.f32 %v6403, 0.7978846
        %v6412 = vmul.f32 %v6404, 0.7978846
        %v6413 = vmul.f32 %v6405, 0.7978846
        %v6414 = vmul.f32 %v6406, 0.7978846
        %v6415 = vmul.f32 %v6407, 0.7978846
        %v6416 = vtanh.pop %v6408
        %v6417 = vtanh.pop %v6409
        %v6418 = vtanh.pop %v6410
        %v6419 = vtanh.pop %v6411
        %v6420 = vtanh.pop %v6412
        %v6421 = vtanh.pop %v6413
        %v6422 = vtanh.pop %v6414
        %v6423 = vtanh.pop %v6415
        %v6424 = vadd.f32 %v6416, 1.0
        %v6425 = vadd.f32 %v6417, 1.0
        %v6426 = vadd.f32 %v6418, 1.0
        %v6427 = vadd.f32 %v6419, 1.0
        %v6428 = vadd.f32 %v6420, 1.0
        %v6429 = vadd.f32 %v6421, 1.0
        %v6430 = vadd.f32 %v6422, 1.0
        %v6431 = vadd.f32 %v6423, 1.0
        %v6432 = vmul.f32 %v6368, %v6424
        %v6433 = vmul.f32 %v6369, %v6425
        %v6434 = vmul.f32 %v6370, %v6426
        %v6435 = vmul.f32 %v6371, %v6427
        %v6436 = vmul.f32 %v6372, %v6428
        %v6437 = vmul.f32 %v6373, %v6429
        %v6438 = vmul.f32 %v6374, %v6430
        %v6439 = vmul.f32 %v6375, %v6431
        %v6440 = vpack.c.bf16 %v6432, %v6432
        %v6441 = vpack.c.bf16 %v6433, %v6433
        %v6442 = vpack.c.bf16 %v6434, %v6434
        %v6443 = vpack.c.bf16 %v6435, %v6435
        %v6444 = vpack.c.bf16 %v6436, %v6436
        %v6445 = vpack.c.bf16 %v6437, %v6437
        %v6446 = vpack.c.bf16 %v6438, %v6438
        %v6447 = vpack.c.bf16 %v6439, %v6439
        %s6448 = scalar_lea.vmem [#allocation17], 1024
        %v6449 = vld [vmem:[%s6448] sm:$0xff]
        %v6450 = vld [vmem:[%s6448 + $0x8] sm:$0xff]
        %v6451 = vld [vmem:[%s6448 + $0x10] sm:$0xff]
        %v6452 = vld [vmem:[%s6448 + $0x18] sm:$0xff]
        %v6453 = vld [vmem:[%s6448 + $0x20] sm:$0xff]
        %v6454 = vld [vmem:[%s6448 + $0x28] sm:$0xff]
        %v6455 = vld [vmem:[%s6448 + $0x30] sm:$0xff]
        %v6456 = vld [vmem:[%s6448 + $0x38] sm:$0xff]
        %v6457 = vld [vmem:[%s6448 + $0x40] sm:$0xff]
        %v6458 = vld [vmem:[%s6448 + $0x48] sm:$0xff]
        %v6459 = vld [vmem:[%s6448 + $0x50] sm:$0xff]
        %v6460 = vld [vmem:[%s6448 + $0x58] sm:$0xff]
        %v6461 = vld [vmem:[%s6448 + $0x60] sm:$0xff]
        %v6462 = vld [vmem:[%s6448 + $0x68] sm:$0xff]
        %v6463 = vld [vmem:[%s6448 + $0x70] sm:$0xff]
        %v6464 = vld [vmem:[%s6448 + $0x78] sm:$0xff]
        %v6465 = vld [vmem:[%s6448 + $0x80] sm:$0xff]
        %v6466 = vld [vmem:[%s6448 + $0x88] sm:$0xff]
        %v6467 = vld [vmem:[%s6448 + $0x90] sm:$0xff]
        %v6468 = vld [vmem:[%s6448 + $0x98] sm:$0xff]
        %v6469 = vld [vmem:[%s6448 + $0xa0] sm:$0xff]
        %v6470 = vld [vmem:[%s6448 + $0xa8] sm:$0xff]
        %v6471 = vld [vmem:[%s6448 + $0xb0] sm:$0xff]
        %v6472 = vld [vmem:[%s6448 + $0xb8] sm:$0xff]
        %v6473 = vld [vmem:[%s6448 + $0xc0] sm:$0xff]
        %v6474 = vld [vmem:[%s6448 + $0xc8] sm:$0xff]
        %v6475 = vld [vmem:[%s6448 + $0xd0] sm:$0xff]
        %v6476 = vld [vmem:[%s6448 + $0xd8] sm:$0xff]
        %v6477 = vld [vmem:[%s6448 + $0xe0] sm:$0xff]
        %v6478 = vld [vmem:[%s6448 + $0xe8] sm:$0xff]
        %v6479 = vld [vmem:[%s6448 + $0xf0] sm:$0xff]
        %v6480 = vld [vmem:[%s6448 + $0xf8] sm:$0xff]
        %v6481 = vld [vmem:[%s6448 + $0x100] sm:$0xff]
        %v6482 = vld [vmem:[%s6448 + $0x108] sm:$0xff]
        %v6483 = vld [vmem:[%s6448 + $0x110] sm:$0xff]
        %v6484 = vld [vmem:[%s6448 + $0x118] sm:$0xff]
        %v6485 = vld [vmem:[%s6448 + $0x120] sm:$0xff]
        %v6486 = vld [vmem:[%s6448 + $0x128] sm:$0xff]
        %v6487 = vld [vmem:[%s6448 + $0x130] sm:$0xff]
        %v6488 = vld [vmem:[%s6448 + $0x138] sm:$0xff]
        %v6489 = vld [vmem:[%s6448 + $0x140] sm:$0xff]
        %v6490 = vld [vmem:[%s6448 + $0x148] sm:$0xff]
        %v6491 = vld [vmem:[%s6448 + $0x150] sm:$0xff]
        %v6492 = vld [vmem:[%s6448 + $0x158] sm:$0xff]
        %v6493 = vld [vmem:[%s6448 + $0x160] sm:$0xff]
        %v6494 = vld [vmem:[%s6448 + $0x168] sm:$0xff]
        %v6495 = vld [vmem:[%s6448 + $0x170] sm:$0xff]
        %v6496 = vld [vmem:[%s6448 + $0x178] sm:$0xff]
        %v6497 = vld [vmem:[%s6448 + $0x180] sm:$0xff]
        %v6498 = vld [vmem:[%s6448 + $0x188] sm:$0xff]
        %v6499 = vld [vmem:[%s6448 + $0x190] sm:$0xff]
        %v6500 = vld [vmem:[%s6448 + $0x198] sm:$0xff]
        %v6501 = vld [vmem:[%s6448 + $0x1a0] sm:$0xff]
        %v6502 = vld [vmem:[%s6448 + $0x1a8] sm:$0xff]
        %v6503 = vld [vmem:[%s6448 + $0x1b0] sm:$0xff]
        %v6504 = vld [vmem:[%s6448 + $0x1b8] sm:$0xff]
        %v6505 = vld [vmem:[%s6448 + $0x1c0] sm:$0xff]
        %v6506 = vld [vmem:[%s6448 + $0x1c8] sm:$0xff]
        %v6507 = vld [vmem:[%s6448 + $0x1d0] sm:$0xff]
        %v6508 = vld [vmem:[%s6448 + $0x1d8] sm:$0xff]
        %v6509 = vld [vmem:[%s6448 + $0x1e0] sm:$0xff]
        %v6510 = vld [vmem:[%s6448 + $0x1e8] sm:$0xff]
        %v6511 = vld [vmem:[%s6448 + $0x1f0] sm:$0xff]
        %v6512 = vld [vmem:[%s6448 + $0x1f8] sm:$0xff]
        %v6513 = vld [vmem:[%s6448 + $0x200] sm:$0xff]
        %v6514 = vld [vmem:[%s6448 + $0x208] sm:$0xff]
        %v6515 = vld [vmem:[%s6448 + $0x210] sm:$0xff]
        %v6516 = vld [vmem:[%s6448 + $0x218] sm:$0xff]
        %v6517 = vld [vmem:[%s6448 + $0x220] sm:$0xff]
        %v6518 = vld [vmem:[%s6448 + $0x228] sm:$0xff]
        %v6519 = vld [vmem:[%s6448 + $0x230] sm:$0xff]
        %v6520 = vld [vmem:[%s6448 + $0x238] sm:$0xff]
        %v6521 = vld [vmem:[%s6448 + $0x240] sm:$0xff]
        %v6522 = vld [vmem:[%s6448 + $0x248] sm:$0xff]
        %v6523 = vld [vmem:[%s6448 + $0x250] sm:$0xff]
        %v6524 = vld [vmem:[%s6448 + $0x258] sm:$0xff]
        %v6525 = vld [vmem:[%s6448 + $0x260] sm:$0xff]
        %v6526 = vld [vmem:[%s6448 + $0x268] sm:$0xff]
        %v6527 = vld [vmem:[%s6448 + $0x270] sm:$0xff]
        %v6528 = vld [vmem:[%s6448 + $0x278] sm:$0xff]
        %v6529 = vld [vmem:[%s6448 + $0x280] sm:$0xff]
        %v6530 = vld [vmem:[%s6448 + $0x288] sm:$0xff]
        %v6531 = vld [vmem:[%s6448 + $0x290] sm:$0xff]
        %v6532 = vld [vmem:[%s6448 + $0x298] sm:$0xff]
        %v6533 = vld [vmem:[%s6448 + $0x2a0] sm:$0xff]
        %v6534 = vld [vmem:[%s6448 + $0x2a8] sm:$0xff]
        %v6535 = vld [vmem:[%s6448 + $0x2b0] sm:$0xff]
        %v6536 = vld [vmem:[%s6448 + $0x2b8] sm:$0xff]
        %v6537 = vld [vmem:[%s6448 + $0x2c0] sm:$0xff]
        %v6538 = vld [vmem:[%s6448 + $0x2c8] sm:$0xff]
        %v6539 = vld [vmem:[%s6448 + $0x2d0] sm:$0xff]
        %v6540 = vld [vmem:[%s6448 + $0x2d8] sm:$0xff]
        %v6541 = vld [vmem:[%s6448 + $0x2e0] sm:$0xff]
        %v6542 = vld [vmem:[%s6448 + $0x2e8] sm:$0xff]
        %v6543 = vld [vmem:[%s6448 + $0x2f0] sm:$0xff]
        %v6544 = vld [vmem:[%s6448 + $0x2f8] sm:$0xff]
        %v6545 = vld [vmem:[%s6448 + $0x300] sm:$0xff]
        %v6546 = vld [vmem:[%s6448 + $0x308] sm:$0xff]
        %v6547 = vld [vmem:[%s6448 + $0x310] sm:$0xff]
        %v6548 = vld [vmem:[%s6448 + $0x318] sm:$0xff]
        %v6549 = vld [vmem:[%s6448 + $0x320] sm:$0xff]
        %v6550 = vld [vmem:[%s6448 + $0x328] sm:$0xff]
        %v6551 = vld [vmem:[%s6448 + $0x330] sm:$0xff]
        %v6552 = vld [vmem:[%s6448 + $0x338] sm:$0xff]
        %v6553 = vld [vmem:[%s6448 + $0x340] sm:$0xff]
        %v6554 = vld [vmem:[%s6448 + $0x348] sm:$0xff]
        %v6555 = vld [vmem:[%s6448 + $0x350] sm:$0xff]
        %v6556 = vld [vmem:[%s6448 + $0x358] sm:$0xff]
        %v6557 = vld [vmem:[%s6448 + $0x360] sm:$0xff]
        %v6558 = vld [vmem:[%s6448 + $0x368] sm:$0xff]
        %v6559 = vld [vmem:[%s6448 + $0x370] sm:$0xff]
        %v6560 = vld [vmem:[%s6448 + $0x378] sm:$0xff]
        %v6561 = vld [vmem:[%s6448 + $0x380] sm:$0xff]
        %v6562 = vld [vmem:[%s6448 + $0x388] sm:$0xff]
        %v6563 = vld [vmem:[%s6448 + $0x390] sm:$0xff]
        %v6564 = vld [vmem:[%s6448 + $0x398] sm:$0xff]
        %v6565 = vld [vmem:[%s6448 + $0x3a0] sm:$0xff]
        %v6566 = vld [vmem:[%s6448 + $0x3a8] sm:$0xff]
        %v6567 = vld [vmem:[%s6448 + $0x3b0] sm:$0xff]
        %v6568 = vld [vmem:[%s6448 + $0x3b8] sm:$0xff]
        %v6569 = vld [vmem:[%s6448 + $0x3c0] sm:$0xff]
        %v6570 = vld [vmem:[%s6448 + $0x3c8] sm:$0xff]
        %v6571 = vld [vmem:[%s6448 + $0x3d0] sm:$0xff]
        %v6572 = vld [vmem:[%s6448 + $0x3d8] sm:$0xff]
        %v6573 = vld [vmem:[%s6448 + $0x3e0] sm:$0xff]
        %v6574 = vld [vmem:[%s6448 + $0x3e8] sm:$0xff]
        %v6575 = vld [vmem:[%s6448 + $0x3f0] sm:$0xff]
        %v6576 = vld [vmem:[%s6448 + $0x3f8] sm:$0xff]
        %v6578 = vlaneseq
        %v6579 = vshrl.u32 %v6578, 7
        %v6580 = vsub.s32 0, %v6579
        %v6581 = vrot.slane %v5248, %v6580
        %v6582 = vlaneseq
        %v6583 = vshrl.u32 %v6582, 7
        %v6584 = vsub.s32 1, %v6583
        %v6585 = vrot.slane %v5248, %v6584
        %v6716 = vunpack.c.l.b16 %v6449
        %v6717 = vunpack.c.h.b16 %v6449
        %v6718 = vunpack.c.l.b16 %v6450
        %v6719 = vunpack.c.h.b16 %v6450
        %v6720 = vunpack.c.l.b16 %v6451
        %v6721 = vunpack.c.h.b16 %v6451
        %v6722 = vunpack.c.l.b16 %v6452
        %v6723 = vunpack.c.h.b16 %v6452
        %v6724 = vunpack.c.l.b16 %v6453
        %v6725 = vunpack.c.h.b16 %v6453
        %v6726 = vunpack.c.l.b16 %v6454
        %v6727 = vunpack.c.h.b16 %v6454
        %v6728 = vunpack.c.l.b16 %v6455
        %v6729 = vunpack.c.h.b16 %v6455
        %v6730 = vunpack.c.l.b16 %v6456
        %v6731 = vunpack.c.h.b16 %v6456
        %v6732 = vunpack.c.l.b16 %v6457
        %v6733 = vunpack.c.h.b16 %v6457
        %v6734 = vunpack.c.l.b16 %v6458
        %v6735 = vunpack.c.h.b16 %v6458
        %v6736 = vunpack.c.l.b16 %v6459
        %v6737 = vunpack.c.h.b16 %v6459
        %v6738 = vunpack.c.l.b16 %v6460
        %v6739 = vunpack.c.h.b16 %v6460
        %v6740 = vunpack.c.l.b16 %v6461
        %v6741 = vunpack.c.h.b16 %v6461
        %v6742 = vunpack.c.l.b16 %v6462
        %v6743 = vunpack.c.h.b16 %v6462
        %v6744 = vunpack.c.l.b16 %v6463
        %v6745 = vunpack.c.h.b16 %v6463
        %v6746 = vunpack.c.l.b16 %v6464
        %v6747 = vunpack.c.h.b16 %v6464
        %v6748 = vunpack.c.l.b16 %v6465
        %v6749 = vunpack.c.h.b16 %v6465
        %v6750 = vunpack.c.l.b16 %v6466
        %v6751 = vunpack.c.h.b16 %v6466
        %v6752 = vunpack.c.l.b16 %v6467
        %v6753 = vunpack.c.h.b16 %v6467
        %v6754 = vunpack.c.l.b16 %v6468
        %v6755 = vunpack.c.h.b16 %v6468
        %v6756 = vunpack.c.l.b16 %v6469
        %v6757 = vunpack.c.h.b16 %v6469
        %v6758 = vunpack.c.l.b16 %v6470
        %v6759 = vunpack.c.h.b16 %v6470
        %v6760 = vunpack.c.l.b16 %v6471
        %v6761 = vunpack.c.h.b16 %v6471
        %v6762 = vunpack.c.l.b16 %v6472
        %v6763 = vunpack.c.h.b16 %v6472
        %v6764 = vunpack.c.l.b16 %v6473
        %v6765 = vunpack.c.h.b16 %v6473
        %v6766 = vunpack.c.l.b16 %v6474
        %v6767 = vunpack.c.h.b16 %v6474
        %v6768 = vunpack.c.l.b16 %v6475
        %v6769 = vunpack.c.h.b16 %v6475
        %v6770 = vunpack.c.l.b16 %v6476
        %v6771 = vunpack.c.h.b16 %v6476
        %v6772 = vunpack.c.l.b16 %v6477
        %v6773 = vunpack.c.h.b16 %v6477
        %v6774 = vunpack.c.l.b16 %v6478
        %v6775 = vunpack.c.h.b16 %v6478
        %v6776 = vunpack.c.l.b16 %v6479
        %v6777 = vunpack.c.h.b16 %v6479
        %v6778 = vunpack.c.l.b16 %v6480
        %v6779 = vunpack.c.h.b16 %v6480
        %v6780 = vunpack.c.l.b16 %v6481
        %v6781 = vunpack.c.h.b16 %v6481
        %v6782 = vunpack.c.l.b16 %v6482
        %v6783 = vunpack.c.h.b16 %v6482
        %v6784 = vunpack.c.l.b16 %v6483
        %v6785 = vunpack.c.h.b16 %v6483
        %v6786 = vunpack.c.l.b16 %v6484
        %v6787 = vunpack.c.h.b16 %v6484
        %v6788 = vunpack.c.l.b16 %v6485
        %v6789 = vunpack.c.h.b16 %v6485
        %v6790 = vunpack.c.l.b16 %v6486
        %v6791 = vunpack.c.h.b16 %v6486
        %v6792 = vunpack.c.l.b16 %v6487
        %v6793 = vunpack.c.h.b16 %v6487
        %v6794 = vunpack.c.l.b16 %v6488
        %v6795 = vunpack.c.h.b16 %v6488
        %v6796 = vunpack.c.l.b16 %v6489
        %v6797 = vunpack.c.h.b16 %v6489
        %v6798 = vunpack.c.l.b16 %v6490
        %v6799 = vunpack.c.h.b16 %v6490
        %v6800 = vunpack.c.l.b16 %v6491
        %v6801 = vunpack.c.h.b16 %v6491
        %v6802 = vunpack.c.l.b16 %v6492
        %v6803 = vunpack.c.h.b16 %v6492
        %v6804 = vunpack.c.l.b16 %v6493
        %v6805 = vunpack.c.h.b16 %v6493
        %v6806 = vunpack.c.l.b16 %v6494
        %v6807 = vunpack.c.h.b16 %v6494
        %v6808 = vunpack.c.l.b16 %v6495
        %v6809 = vunpack.c.h.b16 %v6495
        %v6810 = vunpack.c.l.b16 %v6496
        %v6811 = vunpack.c.h.b16 %v6496
        %v6812 = vunpack.c.l.b16 %v6497
        %v6813 = vunpack.c.h.b16 %v6497
        %v6814 = vunpack.c.l.b16 %v6498
        %v6815 = vunpack.c.h.b16 %v6498
        %v6816 = vunpack.c.l.b16 %v6499
        %v6817 = vunpack.c.h.b16 %v6499
        %v6818 = vunpack.c.l.b16 %v6500
        %v6819 = vunpack.c.h.b16 %v6500
        %v6820 = vunpack.c.l.b16 %v6501
        %v6821 = vunpack.c.h.b16 %v6501
        %v6822 = vunpack.c.l.b16 %v6502
        %v6823 = vunpack.c.h.b16 %v6502
        %v6824 = vunpack.c.l.b16 %v6503
        %v6825 = vunpack.c.h.b16 %v6503
        %v6826 = vunpack.c.l.b16 %v6504
        %v6827 = vunpack.c.h.b16 %v6504
        %v6828 = vunpack.c.l.b16 %v6505
        %v6829 = vunpack.c.h.b16 %v6505
        %v6830 = vunpack.c.l.b16 %v6506
        %v6831 = vunpack.c.h.b16 %v6506
        %v6832 = vunpack.c.l.b16 %v6507
        %v6833 = vunpack.c.h.b16 %v6507
        %v6834 = vunpack.c.l.b16 %v6508
        %v6835 = vunpack.c.h.b16 %v6508
        %v6836 = vunpack.c.l.b16 %v6509
        %v6837 = vunpack.c.h.b16 %v6509
        %v6838 = vunpack.c.l.b16 %v6510
        %v6839 = vunpack.c.h.b16 %v6510
        %v6840 = vunpack.c.l.b16 %v6511
        %v6841 = vunpack.c.h.b16 %v6511
        %v6842 = vunpack.c.l.b16 %v6512
        %v6843 = vunpack.c.h.b16 %v6512
        %v6844 = vunpack.c.l.b16 %v6513
        %v6845 = vunpack.c.h.b16 %v6513
        %v6846 = vunpack.c.l.b16 %v6514
        %v6847 = vunpack.c.h.b16 %v6514
        %v6848 = vunpack.c.l.b16 %v6515
        %v6849 = vunpack.c.h.b16 %v6515
        %v6850 = vunpack.c.l.b16 %v6516
        %v6851 = vunpack.c.h.b16 %v6516
        %v6852 = vunpack.c.l.b16 %v6517
        %v6853 = vunpack.c.h.b16 %v6517
        %v6854 = vunpack.c.l.b16 %v6518
        %v6855 = vunpack.c.h.b16 %v6518
        %v6856 = vunpack.c.l.b16 %v6519
        %v6857 = vunpack.c.h.b16 %v6519
        %v6858 = vunpack.c.l.b16 %v6520
        %v6859 = vunpack.c.h.b16 %v6520
        %v6860 = vunpack.c.l.b16 %v6521
        %v6861 = vunpack.c.h.b16 %v6521
        %v6862 = vunpack.c.l.b16 %v6522
        %v6863 = vunpack.c.h.b16 %v6522
        %v6864 = vunpack.c.l.b16 %v6523
        %v6865 = vunpack.c.h.b16 %v6523
        %v6866 = vunpack.c.l.b16 %v6524
        %v6867 = vunpack.c.h.b16 %v6524
        %v6868 = vunpack.c.l.b16 %v6525
        %v6869 = vunpack.c.h.b16 %v6525
        %v6870 = vunpack.c.l.b16 %v6526
        %v6871 = vunpack.c.h.b16 %v6526
        %v6872 = vunpack.c.l.b16 %v6527
        %v6873 = vunpack.c.h.b16 %v6527
        %v6874 = vunpack.c.l.b16 %v6528
        %v6875 = vunpack.c.h.b16 %v6528
        %v6876 = vunpack.c.l.b16 %v6529
        %v6877 = vunpack.c.h.b16 %v6529
        %v6878 = vunpack.c.l.b16 %v6530
        %v6879 = vunpack.c.h.b16 %v6530
        %v6880 = vunpack.c.l.b16 %v6531
        %v6881 = vunpack.c.h.b16 %v6531
        %v6882 = vunpack.c.l.b16 %v6532
        %v6883 = vunpack.c.h.b16 %v6532
        %v6884 = vunpack.c.l.b16 %v6533
        %v6885 = vunpack.c.h.b16 %v6533
        %v6886 = vunpack.c.l.b16 %v6534
        %v6887 = vunpack.c.h.b16 %v6534
        %v6888 = vunpack.c.l.b16 %v6535
        %v6889 = vunpack.c.h.b16 %v6535
        %v6890 = vunpack.c.l.b16 %v6536
        %v6891 = vunpack.c.h.b16 %v6536
        %v6892 = vunpack.c.l.b16 %v6537
        %v6893 = vunpack.c.h.b16 %v6537
        %v6894 = vunpack.c.l.b16 %v6538
        %v6895 = vunpack.c.h.b16 %v6538
        %v6896 = vunpack.c.l.b16 %v6539
        %v6897 = vunpack.c.h.b16 %v6539
        %v6898 = vunpack.c.l.b16 %v6540
        %v6899 = vunpack.c.h.b16 %v6540
        %v6900 = vunpack.c.l.b16 %v6541
        %v6901 = vunpack.c.h.b16 %v6541
        %v6902 = vunpack.c.l.b16 %v6542
        %v6903 = vunpack.c.h.b16 %v6542
        %v6904 = vunpack.c.l.b16 %v6543
        %v6905 = vunpack.c.h.b16 %v6543
        %v6906 = vunpack.c.l.b16 %v6544
        %v6907 = vunpack.c.h.b16 %v6544
        %v6908 = vunpack.c.l.b16 %v6545
        %v6909 = vunpack.c.h.b16 %v6545
        %v6910 = vunpack.c.l.b16 %v6546
        %v6911 = vunpack.c.h.b16 %v6546
        %v6912 = vunpack.c.l.b16 %v6547
        %v6913 = vunpack.c.h.b16 %v6547
        %v6914 = vunpack.c.l.b16 %v6548
        %v6915 = vunpack.c.h.b16 %v6548
        %v6916 = vunpack.c.l.b16 %v6549
        %v6917 = vunpack.c.h.b16 %v6549
        %v6918 = vunpack.c.l.b16 %v6550
        %v6919 = vunpack.c.h.b16 %v6550
        %v6920 = vunpack.c.l.b16 %v6551
        %v6921 = vunpack.c.h.b16 %v6551
        %v6922 = vunpack.c.l.b16 %v6552
        %v6923 = vunpack.c.h.b16 %v6552
        %v6924 = vunpack.c.l.b16 %v6553
        %v6925 = vunpack.c.h.b16 %v6553
        %v6926 = vunpack.c.l.b16 %v6554
        %v6927 = vunpack.c.h.b16 %v6554
        %v6928 = vunpack.c.l.b16 %v6555
        %v6929 = vunpack.c.h.b16 %v6555
        %v6930 = vunpack.c.l.b16 %v6556
        %v6931 = vunpack.c.h.b16 %v6556
        %v6932 = vunpack.c.l.b16 %v6557
        %v6933 = vunpack.c.h.b16 %v6557
        %v6934 = vunpack.c.l.b16 %v6558
        %v6935 = vunpack.c.h.b16 %v6558
        %v6936 = vunpack.c.l.b16 %v6559
        %v6937 = vunpack.c.h.b16 %v6559
        %v6938 = vunpack.c.l.b16 %v6560
        %v6939 = vunpack.c.h.b16 %v6560
        %v6940 = vunpack.c.l.b16 %v6561
        %v6941 = vunpack.c.h.b16 %v6561
        %v6942 = vunpack.c.l.b16 %v6562
        %v6943 = vunpack.c.h.b16 %v6562
        %v6944 = vunpack.c.l.b16 %v6563
        %v6945 = vunpack.c.h.b16 %v6563
        %v6946 = vunpack.c.l.b16 %v6564
        %v6947 = vunpack.c.h.b16 %v6564
        %v6948 = vunpack.c.l.b16 %v6565
        %v6949 = vunpack.c.h.b16 %v6565
        %v6950 = vunpack.c.l.b16 %v6566
        %v6951 = vunpack.c.h.b16 %v6566
        %v6952 = vunpack.c.l.b16 %v6567
        %v6953 = vunpack.c.h.b16 %v6567
        %v6954 = vunpack.c.l.b16 %v6568
        %v6955 = vunpack.c.h.b16 %v6568
        %v6956 = vunpack.c.l.b16 %v6569
        %v6957 = vunpack.c.h.b16 %v6569
        %v6958 = vunpack.c.l.b16 %v6570
        %v6959 = vunpack.c.h.b16 %v6570
        %v6960 = vunpack.c.l.b16 %v6571
        %v6961 = vunpack.c.h.b16 %v6571
        %v6962 = vunpack.c.l.b16 %v6572
        %v6963 = vunpack.c.h.b16 %v6572
        %v6964 = vunpack.c.l.b16 %v6573
        %v6965 = vunpack.c.h.b16 %v6573
        %v6966 = vunpack.c.l.b16 %v6574
        %v6967 = vunpack.c.h.b16 %v6574
        %v6968 = vunpack.c.l.b16 %v6575
        %v6969 = vunpack.c.h.b16 %v6575
        %v6970 = vunpack.c.l.b16 %v6576
        %v6971 = vunpack.c.h.b16 %v6576
        %v6972 = vpack.c.b16 %v6718, %v6716
        %v6973 = vpack.c.b16 %v6719, %v6717
        %v6974 = vpack.c.b16 %v6722, %v6720
        %v6975 = vpack.c.b16 %v6723, %v6721
        %v6976 = vpack.c.b16 %v6726, %v6724
        %v6977 = vpack.c.b16 %v6727, %v6725
        %v6978 = vpack.c.b16 %v6730, %v6728
        %v6979 = vpack.c.b16 %v6731, %v6729
        %v6980 = vpack.c.b16 %v6734, %v6732
        %v6981 = vpack.c.b16 %v6735, %v6733
        %v6982 = vpack.c.b16 %v6738, %v6736
        %v6983 = vpack.c.b16 %v6739, %v6737
        %v6984 = vpack.c.b16 %v6742, %v6740
        %v6985 = vpack.c.b16 %v6743, %v6741
        %v6986 = vpack.c.b16 %v6746, %v6744
        %v6987 = vpack.c.b16 %v6747, %v6745
        %v6988 = vpack.c.b16 %v6750, %v6748
        %v6989 = vpack.c.b16 %v6751, %v6749
        %v6990 = vpack.c.b16 %v6754, %v6752
        %v6991 = vpack.c.b16 %v6755, %v6753
        %v6992 = vpack.c.b16 %v6758, %v6756
        %v6993 = vpack.c.b16 %v6759, %v6757
        %v6994 = vpack.c.b16 %v6762, %v6760
        %v6995 = vpack.c.b16 %v6763, %v6761
        %v6996 = vpack.c.b16 %v6766, %v6764
        %v6997 = vpack.c.b16 %v6767, %v6765
        %v6998 = vpack.c.b16 %v6770, %v6768
        %v6999 = vpack.c.b16 %v6771, %v6769
        %v7000 = vpack.c.b16 %v6774, %v6772
        %v7001 = vpack.c.b16 %v6775, %v6773
        %v7002 = vpack.c.b16 %v6778, %v6776
        %v7003 = vpack.c.b16 %v6779, %v6777
        %v7004 = vpack.c.b16 %v6782, %v6780
        %v7005 = vpack.c.b16 %v6783, %v6781
        %v7006 = vpack.c.b16 %v6786, %v6784
        %v7007 = vpack.c.b16 %v6787, %v6785
        %v7008 = vpack.c.b16 %v6790, %v6788
        %v7009 = vpack.c.b16 %v6791, %v6789
        %v7010 = vpack.c.b16 %v6794, %v6792
        %v7011 = vpack.c.b16 %v6795, %v6793
        %v7012 = vpack.c.b16 %v6798, %v6796
        %v7013 = vpack.c.b16 %v6799, %v6797
        %v7014 = vpack.c.b16 %v6802, %v6800
        %v7015 = vpack.c.b16 %v6803, %v6801
        %v7016 = vpack.c.b16 %v6806, %v6804
        %v7017 = vpack.c.b16 %v6807, %v6805
        %v7018 = vpack.c.b16 %v6810, %v6808
        %v7019 = vpack.c.b16 %v6811, %v6809
        %v7020 = vpack.c.b16 %v6814, %v6812
        %v7021 = vpack.c.b16 %v6815, %v6813
        %v7022 = vpack.c.b16 %v6818, %v6816
        %v7023 = vpack.c.b16 %v6819, %v6817
        %v7024 = vpack.c.b16 %v6822, %v6820
        %v7025 = vpack.c.b16 %v6823, %v6821
        %v7026 = vpack.c.b16 %v6826, %v6824
        %v7027 = vpack.c.b16 %v6827, %v6825
        %v7028 = vpack.c.b16 %v6830, %v6828
        %v7029 = vpack.c.b16 %v6831, %v6829
        %v7030 = vpack.c.b16 %v6834, %v6832
        %v7031 = vpack.c.b16 %v6835, %v6833
        %v7032 = vpack.c.b16 %v6838, %v6836
        %v7033 = vpack.c.b16 %v6839, %v6837
        %v7034 = vpack.c.b16 %v6842, %v6840
        %v7035 = vpack.c.b16 %v6843, %v6841
        %v7036 = vpack.c.b16 %v6846, %v6844
        %v7037 = vpack.c.b16 %v6847, %v6845
        %v7038 = vpack.c.b16 %v6850, %v6848
        %v7039 = vpack.c.b16 %v6851, %v6849
        %v7040 = vpack.c.b16 %v6854, %v6852
        %v7041 = vpack.c.b16 %v6855, %v6853
        %v7042 = vpack.c.b16 %v6858, %v6856
        %v7043 = vpack.c.b16 %v6859, %v6857
        %v7044 = vpack.c.b16 %v6862, %v6860
        %v7045 = vpack.c.b16 %v6863, %v6861
        %v7046 = vpack.c.b16 %v6866, %v6864
        %v7047 = vpack.c.b16 %v6867, %v6865
        %v7048 = vpack.c.b16 %v6870, %v6868
        %v7049 = vpack.c.b16 %v6871, %v6869
        %v7050 = vpack.c.b16 %v6874, %v6872
        %v7051 = vpack.c.b16 %v6875, %v6873
        %v7052 = vpack.c.b16 %v6878, %v6876
        %v7053 = vpack.c.b16 %v6879, %v6877
        %v7054 = vpack.c.b16 %v6882, %v6880
        %v7055 = vpack.c.b16 %v6883, %v6881
        %v7056 = vpack.c.b16 %v6886, %v6884
        %v7057 = vpack.c.b16 %v6887, %v6885
        %v7058 = vpack.c.b16 %v6890, %v6888
        %v7059 = vpack.c.b16 %v6891, %v6889
        %v7060 = vpack.c.b16 %v6894, %v6892
        %v7061 = vpack.c.b16 %v6895, %v6893
        %v7062 = vpack.c.b16 %v6898, %v6896
        %v7063 = vpack.c.b16 %v6899, %v6897
        %v7064 = vpack.c.b16 %v6902, %v6900
        %v7065 = vpack.c.b16 %v6903, %v6901
        %v7066 = vpack.c.b16 %v6906, %v6904
        %v7067 = vpack.c.b16 %v6907, %v6905
        %v7068 = vpack.c.b16 %v6910, %v6908
        %v7069 = vpack.c.b16 %v6911, %v6909
        %v7070 = vpack.c.b16 %v6914, %v6912
        %v7071 = vpack.c.b16 %v6915, %v6913
        %v7072 = vpack.c.b16 %v6918, %v6916
        %v7073 = vpack.c.b16 %v6919, %v6917
        %v7074 = vpack.c.b16 %v6922, %v6920
        %v7075 = vpack.c.b16 %v6923, %v6921
        %v7076 = vpack.c.b16 %v6926, %v6924
        %v7077 = vpack.c.b16 %v6927, %v6925
        %v7078 = vpack.c.b16 %v6930, %v6928
        %v7079 = vpack.c.b16 %v6931, %v6929
        %v7080 = vpack.c.b16 %v6934, %v6932
        %v7081 = vpack.c.b16 %v6935, %v6933
        %v7082 = vpack.c.b16 %v6938, %v6936
        %v7083 = vpack.c.b16 %v6939, %v6937
        %v7084 = vpack.c.b16 %v6942, %v6940
        %v7085 = vpack.c.b16 %v6943, %v6941
        %v7086 = vpack.c.b16 %v6946, %v6944
        %v7087 = vpack.c.b16 %v6947, %v6945
        %v7088 = vpack.c.b16 %v6950, %v6948
        %v7089 = vpack.c.b16 %v6951, %v6949
        %v7090 = vpack.c.b16 %v6954, %v6952
        %v7091 = vpack.c.b16 %v6955, %v6953
        %v7092 = vpack.c.b16 %v6958, %v6956
        %v7093 = vpack.c.b16 %v6959, %v6957
        %v7094 = vpack.c.b16 %v6962, %v6960
        %v7095 = vpack.c.b16 %v6963, %v6961
        %v7096 = vpack.c.b16 %v6966, %v6964
        %v7097 = vpack.c.b16 %v6967, %v6965
        %v7098 = vpack.c.b16 %v6970, %v6968
        %v7099 = vpack.c.b16 %v6971, %v6969
        %7228 = vmatprep.subr.bf16.mxu0 %v6987
        %7229 = vmatpush1.bf16.msra.mxu0 %v6986
        %7230 = vmatprep.subr.bf16.mxu0 %v6985
        %7231 = vmatpush1.bf16.msra.mxu0 %v6984
        %7232 = vmatprep.subr.bf16.mxu0 %v6983
        %7233 = vmatpush1.bf16.msra.mxu0 %v6982
        %7234 = vmatprep.subr.bf16.mxu0 %v6981
        %7235 = vmatpush1.bf16.msra.mxu0 %v6980
        %7236 = vmatprep.subr.bf16.mxu0 %v6979
        %7237 = vmatpush1.bf16.msra.mxu0 %v6978
        %7238 = vmatprep.subr.bf16.mxu0 %v6977
        %7239 = vmatpush1.bf16.msra.mxu0 %v6976
        %7240 = vmatprep.subr.bf16.mxu0 %v6975
        %7241 = vmatpush1.bf16.msra.mxu0 %v6974
        %7242 = vmatprep.subr.bf16.mxu0 %v6973
        %7243 = vmatpush1.bf16.msra.mxu0 %v6972
        %7244 = vmatprep.subr.bf16.mxu0 %v7003
        %7245 = vmatpush2.bf16.msra.mxu0 %v7002
        %7246 = vmatprep.subr.bf16.mxu0 %v7001
        %7247 = vmatpush2.bf16.msra.mxu0 %v7000
        %7248 = vmatprep.subr.bf16.mxu0 %v6999
        %7249 = vmatpush2.bf16.msra.mxu0 %v6998
        %7250 = vmatprep.subr.bf16.mxu0 %v6997
        %7251 = vmatpush2.bf16.msra.mxu0 %v6996
        %7252 = vmatprep.subr.bf16.mxu0 %v6995
        %7253 = vmatpush2.bf16.msra.mxu0 %v6994
        %7254 = vmatprep.subr.bf16.mxu0 %v6993
        %7255 = vmatpush2.bf16.msra.mxu0 %v6992
        %7256 = vmatprep.subr.bf16.mxu0 %v6991
        %7257 = vmatpush2.bf16.msra.mxu0 %v6990
        %7258 = vmatprep.subr.bf16.mxu0 %v6989
        %7259 = vmatpush2.bf16.msra.mxu0 %v6988
        %7260 = vmatprep.mubr.bf16.mxu0 %v6441
        %7261 = vmatmul.mubr.bf16.gmra.mxu0 %v6440
        %v7262 = vpop.f32.mrf.mxu0
        %v7263 = vadd.f32 %v6581, %v7262
        %v7264 = vpop.f32.mrf.mxu0
        %v7265 = vadd.f32 %v6585, %v7264
        %v7266 = vpop.f32.mrf.mxu0
        %v7267 = vpop.f32.mrf.mxu0
        %7268 = vdwg.mxu0
        %7269 = vmatprep.subr.bf16.mxu0 %v7019
        %7270 = vmatpush1.bf16.msra.mxu0 %v7018
        %7271 = vmatprep.subr.bf16.mxu0 %v7017
        %7272 = vmatpush1.bf16.msra.mxu0 %v7016
        %7273 = vmatprep.subr.bf16.mxu0 %v7015
        %7274 = vmatpush1.bf16.msra.mxu0 %v7014
        %7275 = vmatprep.subr.bf16.mxu0 %v7013
        %7276 = vmatpush1.bf16.msra.mxu0 %v7012
        %7277 = vmatprep.subr.bf16.mxu0 %v7011
        %7278 = vmatpush1.bf16.msra.mxu0 %v7010
        %7279 = vmatprep.subr.bf16.mxu0 %v7009
        %7280 = vmatpush1.bf16.msra.mxu0 %v7008
        %7281 = vmatprep.subr.bf16.mxu0 %v7007
        %7282 = vmatpush1.bf16.msra.mxu0 %v7006
        %7283 = vmatprep.subr.bf16.mxu0 %v7005
        %7284 = vmatpush1.bf16.msra.mxu0 %v7004
        %7285 = vmatprep.subr.bf16.mxu0 %v7035
        %7286 = vmatpush2.bf16.msra.mxu0 %v7034
        %7287 = vmatprep.subr.bf16.mxu0 %v7033
        %7288 = vmatpush2.bf16.msra.mxu0 %v7032
        %7289 = vmatprep.subr.bf16.mxu0 %v7031
        %7290 = vmatpush2.bf16.msra.mxu0 %v7030
        %7291 = vmatprep.subr.bf16.mxu0 %v7029
        %7292 = vmatpush2.bf16.msra.mxu0 %v7028
        %7293 = vmatprep.subr.bf16.mxu0 %v7027
        %7294 = vmatpush2.bf16.msra.mxu0 %v7026
        %7295 = vmatprep.subr.bf16.mxu0 %v7025
        %7296 = vmatpush2.bf16.msra.mxu0 %v7024
        %7297 = vmatprep.subr.bf16.mxu0 %v7023
        %7298 = vmatpush2.bf16.msra.mxu0 %v7022
        %7299 = vmatprep.subr.bf16.mxu0 %v7021
        %7300 = vmatpush2.bf16.msra.mxu0 %v7020
        %7301 = vmatprep.mubr.bf16.mxu0 %v6443
        %7302 = vmatmul.mubr.bf16.gmra.mxu0 %v6442
        %v7303 = vpop.f32.mrf.mxu0
        %v7304 = vadd.f32 %v7263, %v7303
        %v7305 = vpop.f32.mrf.mxu0
        %v7306 = vadd.f32 %v7265, %v7305
        %v7307 = vpop.f32.mrf.mxu0
        %v7308 = vpop.f32.mrf.mxu0
        %7309 = vdwg.mxu0
        %7310 = vmatprep.subr.bf16.mxu0 %v7051
        %7311 = vmatpush1.bf16.msra.mxu0 %v7050
        %7312 = vmatprep.subr.bf16.mxu0 %v7049
        %7313 = vmatpush1.bf16.msra.mxu0 %v7048
        %7314 = vmatprep.subr.bf16.mxu0 %v7047
        %7315 = vmatpush1.bf16.msra.mxu0 %v7046
        %7316 = vmatprep.subr.bf16.mxu0 %v7045
        %7317 = vmatpush1.bf16.msra.mxu0 %v7044
        %7318 = vmatprep.subr.bf16.mxu0 %v7043
        %7319 = vmatpush1.bf16.msra.mxu0 %v7042
        %7320 = vmatprep.subr.bf16.mxu0 %v7041
        %7321 = vmatpush1.bf16.msra.mxu0 %v7040
        %7322 = vmatprep.subr.bf16.mxu0 %v7039
        %7323 = vmatpush1.bf16.msra.mxu0 %v7038
        %7324 = vmatprep.subr.bf16.mxu0 %v7037
        %7325 = vmatpush1.bf16.msra.mxu0 %v7036
        %7326 = vmatprep.subr.bf16.mxu0 %v7067
        %7327 = vmatpush2.bf16.msra.mxu0 %v7066
        %7328 = vmatprep.subr.bf16.mxu0 %v7065
        %7329 = vmatpush2.bf16.msra.mxu0 %v7064
        %7330 = vmatprep.subr.bf16.mxu0 %v7063
        %7331 = vmatpush2.bf16.msra.mxu0 %v7062
        %7332 = vmatprep.subr.bf16.mxu0 %v7061
        %7333 = vmatpush2.bf16.msra.mxu0 %v7060
        %7334 = vmatprep.subr.bf16.mxu0 %v7059
        %7335 = vmatpush2.bf16.msra.mxu0 %v7058
        %7336 = vmatprep.subr.bf16.mxu0 %v7057
        %7337 = vmatpush2.bf16.msra.mxu0 %v7056
        %7338 = vmatprep.subr.bf16.mxu0 %v7055
        %7339 = vmatpush2.bf16.msra.mxu0 %v7054
        %7340 = vmatprep.subr.bf16.mxu0 %v7053
        %7341 = vmatpush2.bf16.msra.mxu0 %v7052
        %7342 = vmatprep.mubr.bf16.mxu0 %v6445
        %7343 = vmatmul.mubr.bf16.gmra.mxu0 %v6444
        %v7344 = vpop.f32.mrf.mxu0
        %v7345 = vadd.f32 %v7304, %v7344
        %v7346 = vpop.f32.mrf.mxu0
        %v7347 = vadd.f32 %v7306, %v7346
        %v7348 = vpop.f32.mrf.mxu0
        %v7349 = vpop.f32.mrf.mxu0
        %7350 = vdwg.mxu0
        %7351 = vmatprep.subr.bf16.mxu0 %v7083
        %7352 = vmatpush1.bf16.msra.mxu0 %v7082
        %7353 = vmatprep.subr.bf16.mxu0 %v7081
        %7354 = vmatpush1.bf16.msra.mxu0 %v7080
        %7355 = vmatprep.subr.bf16.mxu0 %v7079
        %7356 = vmatpush1.bf16.msra.mxu0 %v7078
        %7357 = vmatprep.subr.bf16.mxu0 %v7077
        %7358 = vmatpush1.bf16.msra.mxu0 %v7076
        %7359 = vmatprep.subr.bf16.mxu0 %v7075
        %7360 = vmatpush1.bf16.msra.mxu0 %v7074
        %7361 = vmatprep.subr.bf16.mxu0 %v7073
        %7362 = vmatpush1.bf16.msra.mxu0 %v7072
        %7363 = vmatprep.subr.bf16.mxu0 %v7071
        %7364 = vmatpush1.bf16.msra.mxu0 %v7070
        %7365 = vmatprep.subr.bf16.mxu0 %v7069
        %7366 = vmatpush1.bf16.msra.mxu0 %v7068
        %7367 = vmatprep.subr.bf16.mxu0 %v7099
        %7368 = vmatpush2.bf16.msra.mxu0 %v7098
        %7369 = vmatprep.subr.bf16.mxu0 %v7097
        %7370 = vmatpush2.bf16.msra.mxu0 %v7096
        %7371 = vmatprep.subr.bf16.mxu0 %v7095
        %7372 = vmatpush2.bf16.msra.mxu0 %v7094
        %7373 = vmatprep.subr.bf16.mxu0 %v7093
        %7374 = vmatpush2.bf16.msra.mxu0 %v7092
        %7375 = vmatprep.subr.bf16.mxu0 %v7091
        %7376 = vmatpush2.bf16.msra.mxu0 %v7090
        %7377 = vmatprep.subr.bf16.mxu0 %v7089
        %7378 = vmatpush2.bf16.msra.mxu0 %v7088
        %7379 = vmatprep.subr.bf16.mxu0 %v7087
        %7380 = vmatpush2.bf16.msra.mxu0 %v7086
        %7381 = vmatprep.subr.bf16.mxu0 %v7085
        %7382 = vmatpush2.bf16.msra.mxu0 %v7084
        %7383 = vmatprep.mubr.bf16.mxu0 %v6447
        %7384 = vmatmul.mubr.bf16.gmra.mxu0 %v6446
        %v7385 = vpop.f32.mrf.mxu0
        %v7386 = vadd.f32 %v7345, %v7385
        %v7387 = vpop.f32.mrf.mxu0
        %v7388 = vadd.f32 %v7347, %v7387
        %v7389 = vpop.f32.mrf.mxu0
        %v7390 = vpop.f32.mrf.mxu0
        %7391 = vdwg.mxu0
        %v7393 = vlaneseq
        %v7394 = vshrl.u32 %v7393, 7
        %v7395 = vsub.s32 0, %v7394
        %v7396 = vrot.slane %v5250, %v7395
        %v7397 = vlaneseq
        %v7398 = vshrl.u32 %v7397, 7
        %v7399 = vsub.s32 1, %v7398
        %v7400 = vrot.slane %v5250, %v7399
        %v7403 = vmul.f32 %v7396, %v7386
        %v7404 = vmul.f32 %v7400, %v7388
        %v7405 = vadd.f32 %v5235, %v7403
        %v7406 = vadd.f32 %v5236, %v7404
        %v7407 = vsel %vm740, %v7405, 0.0
        %v7408 = vrot.slane %v7407, 4
        %v7409 = vadd.f32 %v7407, %v7408
        %v7410 = vrot.slane %v7409, 2
        %v7411 = vadd.f32 %v7409, %v7410
        %v7412 = vrot.slane %v7411, 1
        %v7413 = vadd.f32 %v7411, %v7412
        %v7414 = vsel %vm740, %v7406, 0.0
        %v7415 = vrot.slane %v7414, 4
        %v7416 = vadd.f32 %v7414, %v7415
        %v7417 = vrot.slane %v7416, 2
        %v7418 = vadd.f32 %v7416, %v7417
        %v7419 = vrot.slane %v7418, 1
        %v7420 = vadd.f32 %v7418, %v7419
        %v7421 = vrcp.pop 4.0
        %v7422 = vmul.f32 %v7413, %v7421
        %v7423 = vmul.f32 %v7420, %v7421
        %v7424 = vpack.c.bf16 %v7422, %v7422
        %v7425 = vpack.c.bf16 %v7423, %v7423
        %v7426 = vld [vmem:[#allocation19] sm:$0xf]
        %v7427 = vld [vmem:[#allocation19 + $0x4] sm:$0xf]
        %v7428 = vld [vmem:[#allocation19 + $0x8] sm:$0xf]
        %v7429 = vld [vmem:[#allocation19 + $0xc] sm:$0xf]
        %v7430 = vld [vmem:[#allocation19 + $0x10] sm:$0xf]
        %v7431 = vld [vmem:[#allocation19 + $0x14] sm:$0xf]
        %v7432 = vld [vmem:[#allocation19 + $0x18] sm:$0xf]
        %v7433 = vld [vmem:[#allocation19 + $0x1c] sm:$0xf]
        %v7434 = vld [vmem:[#allocation19 + $0x20] sm:$0xf]
        %v7435 = vld [vmem:[#allocation19 + $0x24] sm:$0xf]
        %v7436 = vld [vmem:[#allocation19 + $0x28] sm:$0xf]
        %v7437 = vld [vmem:[#allocation19 + $0x2c] sm:$0xf]
        %v7438 = vld [vmem:[#allocation19 + $0x30] sm:$0xf]
        %v7439 = vld [vmem:[#allocation19 + $0x34] sm:$0xf]
        %v7440 = vld [vmem:[#allocation19 + $0x38] sm:$0xf]
        %v7441 = vld [vmem:[#allocation19 + $0x3c] sm:$0xf]
        %v7442 = vld [vmem:[#allocation19 + $0x40] sm:$0xf]
        %v7443 = vld [vmem:[#allocation19 + $0x44] sm:$0xf]
        %v7444 = vld [vmem:[#allocation19 + $0x48] sm:$0xf]
        %v7445 = vld [vmem:[#allocation19 + $0x4c] sm:$0xf]
        %v7446 = vld [vmem:[#allocation19 + $0x50] sm:$0xf]
        %v7447 = vld [vmem:[#allocation19 + $0x54] sm:$0xf]
        %v7448 = vld [vmem:[#allocation19 + $0x58] sm:$0xf]
        %v7449 = vld [vmem:[#allocation19 + $0x5c] sm:$0xf]
        %v7450 = vld [vmem:[#allocation19 + $0x60] sm:$0xf]
        %v7451 = vld [vmem:[#allocation19 + $0x64] sm:$0xf]
        %v7452 = vld [vmem:[#allocation19 + $0x68] sm:$0xf]
        %v7453 = vld [vmem:[#allocation19 + $0x6c] sm:$0xf]
        %v7454 = vld [vmem:[#allocation19 + $0x70] sm:$0xf]
        %v7455 = vld [vmem:[#allocation19 + $0x74] sm:$0xf]
        %v7456 = vld [vmem:[#allocation19 + $0x78] sm:$0xf]
        %v7457 = vld [vmem:[#allocation19 + $0x7c] sm:$0xf]
        %v7458 = vld [vmem:[#allocation7 + $0xc6] ss:$0 sm:$0xff]
        %v7491 = vunpack.c.l.b16 %v7426
        %v7492 = vunpack.c.l.b16 %v7427
        %v7493 = vunpack.c.l.b16 %v7428
        %v7494 = vunpack.c.l.b16 %v7429
        %v7495 = vunpack.c.l.b16 %v7430
        %v7496 = vunpack.c.l.b16 %v7431
        %v7497 = vunpack.c.l.b16 %v7432
        %v7498 = vunpack.c.l.b16 %v7433
        %v7499 = vunpack.c.l.b16 %v7434
        %v7500 = vunpack.c.l.b16 %v7435
        %v7501 = vunpack.c.l.b16 %v7436
        %v7502 = vunpack.c.l.b16 %v7437
        %v7503 = vunpack.c.l.b16 %v7438
        %v7504 = vunpack.c.l.b16 %v7439
        %v7505 = vunpack.c.l.b16 %v7440
        %v7506 = vunpack.c.l.b16 %v7441
        %v7507 = vunpack.c.l.b16 %v7442
        %v7508 = vunpack.c.l.b16 %v7443
        %v7509 = vunpack.c.l.b16 %v7444
        %v7510 = vunpack.c.l.b16 %v7445
        %v7511 = vunpack.c.l.b16 %v7446
        %v7512 = vunpack.c.l.b16 %v7447
        %v7513 = vunpack.c.l.b16 %v7448
        %v7514 = vunpack.c.l.b16 %v7449
        %v7515 = vunpack.c.l.b16 %v7450
        %v7516 = vunpack.c.l.b16 %v7451
        %v7517 = vunpack.c.l.b16 %v7452
        %v7518 = vunpack.c.l.b16 %v7453
        %v7519 = vunpack.c.l.b16 %v7454
        %v7520 = vunpack.c.l.b16 %v7455
        %v7521 = vunpack.c.l.b16 %v7456
        %v7522 = vunpack.c.l.b16 %v7457
        %v7523 = vpack.c.b16 %v7492, %v7491
        %v7524 = vpack.c.b16 %v7494, %v7493
        %v7525 = vpack.c.b16 %v7496, %v7495
        %v7526 = vpack.c.b16 %v7498, %v7497
        %v7527 = vpack.c.b16 %v7500, %v7499
        %v7528 = vpack.c.b16 %v7502, %v7501
        %v7529 = vpack.c.b16 %v7504, %v7503
        %v7530 = vpack.c.b16 %v7506, %v7505
        %v7531 = vpack.c.b16 %v7508, %v7507
        %v7532 = vpack.c.b16 %v7510, %v7509
        %v7533 = vpack.c.b16 %v7512, %v7511
        %v7534 = vpack.c.b16 %v7514, %v7513
        %v7535 = vpack.c.b16 %v7516, %v7515
        %v7536 = vpack.c.b16 %v7518, %v7517
        %v7537 = vpack.c.b16 %v7520, %v7519
        %v7538 = vpack.c.b16 %v7522, %v7521
        %7555 = vmatprep.subr.bf16.mxu0 0
        %7556 = vmatpush1.bf16.msra.mxu0 %v7530
        %7557 = vmatprep.subr.bf16.mxu0 0
        %7558 = vmatpush1.bf16.msra.mxu0 %v7529
        %7559 = vmatprep.subr.bf16.mxu0 0
        %7560 = vmatpush1.bf16.msra.mxu0 %v7528
        %7561 = vmatprep.subr.bf16.mxu0 0
        %7562 = vmatpush1.bf16.msra.mxu0 %v7527
        %7563 = vmatprep.subr.bf16.mxu0 0
        %7564 = vmatpush1.bf16.msra.mxu0 %v7526
        %7565 = vmatprep.subr.bf16.mxu0 0
        %7566 = vmatpush1.bf16.msra.mxu0 %v7525
        %7567 = vmatprep.subr.bf16.mxu0 0
        %7568 = vmatpush1.bf16.msra.mxu0 %v7524
        %7569 = vmatprep.subr.bf16.mxu0 0
        %7570 = vmatpush1.bf16.msra.mxu0 %v7523
        %7571 = vmatprep.subr.bf16.mxu0 0
        %7572 = vmatpush2.bf16.msra.mxu0 %v7538
        %7573 = vmatprep.subr.bf16.mxu0 0
        %7574 = vmatpush2.bf16.msra.mxu0 %v7537
        %7575 = vmatprep.subr.bf16.mxu0 0
        %7576 = vmatpush2.bf16.msra.mxu0 %v7536
        %7577 = vmatprep.subr.bf16.mxu0 0
        %7578 = vmatpush2.bf16.msra.mxu0 %v7535
        %7579 = vmatprep.subr.bf16.mxu0 0
        %7580 = vmatpush2.bf16.msra.mxu0 %v7534
        %7581 = vmatprep.subr.bf16.mxu0 0
        %7582 = vmatpush2.bf16.msra.mxu0 %v7533
        %7583 = vmatprep.subr.bf16.mxu0 0
        %7584 = vmatpush2.bf16.msra.mxu0 %v7532
        %7585 = vmatprep.subr.bf16.mxu0 0
        %7586 = vmatpush2.bf16.msra.mxu0 %v7531
        %7587 = vmatprep.mubr.bf16.mxu0 %v7425
        %7588 = vmatmul.mubr.bf16.gmra.mxu0 %v7424
        %v7589 = vpop.f32.mrf.mxu0
        %v7590 = vadd.f32 %v7458, %v7589
        %v7591 = vpop.f32.mrf.mxu0
        %v7592 = vpop.f32.mrf.mxu0
        %v7593 = vpop.f32.mrf.mxu0
        %7594 = vdwg.mxu0
        %7595 = vst [vmem:[%s548] sm:$0x1] %v7590
        %s7596 = sand.u32 %s277, 1
        %s7597 = scalar_lea.sflag [#allocation4], %s7596
        %s7598 = sand.u32 %s277, 1
        %s7599 = scalar_lea.vmem [#allocation20], %s7598
        // Predicated region
        $region109: #{tpu_custom_call.1} parent=63 // pred_check
          %p7600 = pneg %p287
        $region110: #{tpu_custom_call.1} parent=63 // pred_check_branch
          %7602 = sbr.rel (%p7600) target = $region112
        $region111: #{tpu_custom_call.1} parent=63 // pred_region
          %s7604 = ssub.s32 16, 16
          %7605 = vsyncadd %s7597, %s7604
          %s7606 = smul.addr %s33, 16
          %s7607 = scalar_lea.hbm %s11, %s7606
          %s7609 = sshll.u32 %s7599, 4
          %s7610 = int_to_ptr.vmem [resolvable:$true] %s7609
          %7612 = dma.vmem_to_hbm [thread:$0]  %s7610, 16, %s7607, %s7597
        $region112: #{tpu_custom_call.1} parent=63 // pred_fallthru
          _
      $region64: #{tpu_custom_call.1} parent=5 // pred_fallthru
        _
      %p7613 = scmp.le.s32.totalorder 2, %s28
      // Predicated region
      $region113: #{tpu_custom_call.1} parent=5 // pred_check
        %p7614 = pneg %p7613
      $region114: #{tpu_custom_call.1} parent=5 // pred_check_branch
        %7616 = sbr.rel (%p7614) target = $region116
      $region115: #{tpu_custom_call.1} parent=5 // pred_region
        %s7617 = ssub.s32 %s28, 2
        // Predicated region
        $region117: #{tpu_custom_call.1} parent=115 // pred_check
          %p7618 = pneg %p293
        $region118: #{tpu_custom_call.1} parent=115 // pred_check_branch
          %7620 = sbr.rel (%p7618) target = $region120
        $region119: #{tpu_custom_call.1} parent=115 // pred_region
          %s7621 = sand.u32 %s278, 1
          %s7622 = scalar_lea.sflag [#allocation4], %s7621
          %s7623 = sand.u32 %s278, 1
          %s7624 = scalar_lea.vmem [#allocation20], %s7623
          %7625 = dma.done %s7622, 16
        $region120: #{tpu_custom_call.1} parent=115 // pred_fallthru
          _
      $region116: #{tpu_custom_call.1} parent=5 // pred_fallthru
        _
    $region6: #{tpu_custom_call.1} parent=1 // loop_footer
      %s32 = sadd.s32 1, %s28
    $region7: #{tpu_custom_call.1} parent=1 // loop_footer_branch
      %27 = sbr.rel target = $region3
    $region8: #{tpu_custom_call.1} parent=1 // loop_exit
      _
    %7626 = vsyncpa [#allocation3], 1
    %s7627 = scalar_lea.sflag [#allocation3], 1
    %7628 = vsyncpa %s7627, 1
    %7629 = vsyncpa [#allocation6], 1
    %7630 = vsyncpa [#allocation9], 1
    %7631 = vsyncpa [#allocation12], 1
    %7632 = vsyncpa [#allocation15], 1
    %7633 = vsyncpa [#allocation18], 1
    %7634 = vsyncpa [#allocation4], 1
    %s7635 = scalar_lea.sflag [#allocation4], 1
    %7636 = vsyncpa %s7635, 1

</llo_original>
